<compile_context>
chip_gen: v7x
topology: tpu7x:2x2x1
jax: 0.10.0
libtpu: 0.0.40
codegen_flags: <defaults>
</compile_context>

<pallas_src>
import functools

import jax
import jax.numpy as jnp
from jax.experimental import pallas as pl
from jax.experimental.pallas import tpu as pltpu


# ----------------------------------------------------------------------------- helpers
def _round_up(x, m):
    return ((x + m - 1) // m) * m


def _pick_divisor(n, candidates):
    for c in candidates:
        if n % c == 0:
            return c
    return n


def _vmem_budget_bytes():
    """~75% of physical VMEM (48 MiB on v7x, 96 MiB on v5e/v6e), safe fallback."""
    fallback = 64 * 1024 * 1024
    try:
        info = pltpu.get_tpu_info()
        cap = getattr(info, "vmem_capacity_bytes", None)
        cap = int(cap) if cap else fallback
    except Exception:
        cap = fallback
    cap = max(64 * 1024 * 1024, min(cap, 128 * 1024 * 1024))
    return (cap * 3) // 4


def _pad_gate_weight(w, Hp, in_dim_p):
    """(4H, in_dim) PyTorch gate weight -> transposed, per-gate padded (in_dim_p, 4*Hp)."""
    four_h, in_dim = w.shape
    H = four_h // 4
    w4 = w.reshape(4, H, in_dim)
    w4 = jnp.pad(w4, ((0, 0), (0, Hp - H), (0, in_dim_p - in_dim)))
    return w4.reshape(4 * Hp, in_dim_p).T


def _pad_gate_bias(b, Hp):
    """(4H,) -> per-gate padded (4*Hp,)."""
    H = b.shape[0] // 4
    b4 = jnp.pad(b.reshape(4, H), ((0, 0), (0, Hp - H)))
    return b4.reshape(4 * Hp)


def _resident_spec(arr):
    """Grid-invariant (weight) BlockSpec, single-buffered (no redundant 2nd buffer)."""
    n = arr.ndim

    def idx(b, t):
        return (0,) * n

    return pl.BlockSpec(arr.shape, idx, pipeline_mode=pl.Buffered(1))


# ----------------------------------------------------------------------------- kernels
def _lstm_kernel(L, Tb, Hp, gate0_ref, w_hh0_ref, *refs):
    """One grid step == `Tb` timesteps of the stacked LSTM recurrence.

    gate0_ref : (Tb, Bb, 4Hp) bf16  — precomputed x_t @ W_ih0^T + bias0 (hoisted).
    w_hh0_ref : (Hp, 4Hp) bf16      — layer-0 recurrent weight.
    refs (L>1): w_fused_ref (L-1, 2Hp, 4Hp) bf16  ([W_ih; W_hh] stacked per layer),
                bias_ref    (L-1, 1, 4Hp)  f32    (b_ih + b_hh per layer),
    then:       out_ref (Tb, Bb, Hp) bf16, h_scr, c_scr (L, Bb, Hp) f32 scratch.
    """
    if L > 1:
        w_fused_ref, bias_ref = refs[0], refs[1]
        refs = refs[2:]
    out_ref, h_scr, c_scr = refs

    t_blk = pl.program_id(1)

    @pl.when(t_blk == 0)
    def _():
        h_scr[...] = jnp.zeros_like(h_scr)
        c_scr[...] = jnp.zeros_like(c_scr)

    Bb = h_scr.shape[1]
    # Hoist (small) bias broadcasts out of the time loop (JAX does not CSE broadcasts).
    bias_v = ([jnp.broadcast_to(bias_ref[i], (Bb, 4 * Hp)) for i in range(L - 1)]
              if L > 1 else [])

    def cell(gates, c_prev):
        # PyTorch gate order i, f, g, o; Hp is a multiple of 128 so slices are
        # lane-aligned. Nonlinearities and h/c state stay in f32 (v5e-safe).
        i_g = jax.nn.sigmoid(gates[:, 0 * Hp:1 * Hp])
        f_g = jax.nn.sigmoid(gates[:, 1 * Hp:2 * Hp])
        g_g = jnp.tanh(gates[:, 2 * Hp:3 * Hp])
        o_g = jax.nn.sigmoid(gates[:, 3 * Hp:4 * Hp])
        c_new = f_g * c_prev + i_g * g_g
        h_new = o_g * jnp.tanh(c_new)
        return h_new, c_new

    @pl.loop(0, Tb, unroll=Tb <= 16)
    def _(ti):
        # Layer 0: input + bias contribution precomputed outside the kernel;
        # only the recurrent h @ W_hh matmul remains (bf16 operands, f32 acc).
        gates = (gate0_ref[ti].astype(jnp.float32)
                 + jnp.dot(h_scr[0].astype(jnp.bfloat16), w_hh0_ref[...],
                           preferred_element_type=jnp.float32))
        h_new, c_new = cell(gates, c_scr[0])
        h_scr[0] = h_new
        c_scr[0] = c_new
        x = h_new
        for l in range(1, L):
            # Fused [x; h] @ [W_ih; W_hh]: one MXU push instead of two, no extra add.
            xh = jnp.concatenate(
                [x.astype(jnp.bfloat16), h_scr[l].astype(jnp.bfloat16)], axis=-1)
            gates = (jnp.dot(xh, w_fused_ref[l - 1],
                             preferred_element_type=jnp.float32) + bias_v[l - 1])
            h_new, c_new = cell(gates, c_scr[l])
            h_scr[l] = h_new
            c_scr[l] = c_new
            x = h_new
        out_ref[ti] = x.astype(out_ref.dtype)


def _proj_kernel(h_ref, w_ref, b_ref, o_ref):
    """Vocab projection tile: (RB, Hp) @ (Hp, VB) + bias."""
    o_ref[...] = (jnp.dot(h_ref[...], w_ref[...],
                          preferred_element_type=jnp.float32)
                  + b_ref[...]).astype(o_ref.dtype)


# ----------------------------------------------------------------------------- wrapper
def decoder_rnn_forward(features, captions, params, *, num_layers, hidden_size,
                        vocab_size, time_block=8, batch_block=None):
    """features: (B, E) f32, captions: (S, B) int32 -> (S+1, B, V) f32 logits."""
    B, E = features.shape
    S = captions.shape[0]
    T = S + 1
    H, V, L = hidden_size, vocab_size, num_layers

    # Hardware-tile padding: 16 on batch (bf16 sublane density), 128 on E/H/V lanes.
    Ep = _round_up(E, 128)
    Hp = _round_up(H, 128)
    Vp = _round_up(V, 128)
    Bp = _round_up(B, 16)
    Tb = max(1, time_block)
    Tp = _round_up(T, Tb)
    if batch_block is None:
        # >=2 batch blocks when possible so the "parallel" axis can shard across
        # v7x's 2 TensorCores; otherwise a single sublane-dense block.
        Bb = Bp // 2 if Bp >= 32 else Bp
    else:
        Bb = batch_block
    assert Bp % Bb == 0 and Bb % 8 == 0

    vmem_limit = _vmem_budget_bytes()

    # ---- glue: embedding gather, concat, pad -------------------------------
    emb = params["embed"][captions]                                  # (S, B, E)
    # TODO(synk): dropout == identity (eval mode).
    x = jnp.concatenate([features[None].astype(jnp.float32), emb], axis=0)
    x = jnp.pad(x, ((0, Tp - T), (0, Bp - B), (0, Ep - E)))          # (Tp, Bp, Ep)

    # ---- hoisted, time-parallel layer-0 input projection (incl. bias) ------
    # bf16 operands / f32 accumulation; result stored bf16 to halve HBM traffic.
    w_ih0_t = _pad_gate_weight(params["w_ih_0"], Hp, Ep).astype(jnp.bfloat16)
    bias0 = _pad_gate_bias(params["b_ih_0"] + params["b_hh_0"], Hp)  # (4Hp,) f32
    gate0 = (jnp.einsum("tbe,ef->tbf", x.astype(jnp.bfloat16), w_ih0_t,
                        preferred_element_type=jnp.float32)
             + bias0).astype(jnp.bfloat16)                           # (Tp, Bp, 4Hp)

    # ---- recurrent weights: bf16, per-gate padded, pre-transposed, stacked -
    w_hh0 = _pad_gate_weight(params["w_hh_0"], Hp, Hp).astype(jnp.bfloat16)  # (Hp,4Hp)
    weight_args = [w_hh0]
    if L > 1:
        w_fused = jnp.stack([
            jnp.concatenate(
                [_pad_gate_weight(params[f"w_ih_{l}"], Hp, Hp),
                 _pad_gate_weight(params[f"w_hh_{l}"], Hp, Hp)], axis=0)
            for l in range(1, L)]).astype(jnp.bfloat16)              # (L-1, 2Hp, 4Hp)
        bias_rest = jnp.stack([
            _pad_gate_bias(params[f"b_ih_{l}"] + params[f"b_hh_{l}"],
                           Hp).reshape(1, 4 * Hp)
            for l in range(1, L)]).astype(jnp.float32)               # (L-1, 1, 4Hp)
        weight_args += [w_fused, bias_rest]

    in_specs = ([pl.BlockSpec((Tb, Bb, 4 * Hp), lambda b, t: (t, b, 0))]
                + [_resident_spec(w) for w in weight_args])
    out_spec = pl.BlockSpec((Tb, Bb, Hp), lambda b, t: (t, b, 0))

    lstm_cost = pl.CostEstimate(
        flops=int(2 * Tp * Bp * 4 * Hp * Hp * (2 * L - 1)),
        transcendentals=int(5 * Tp * Bp * Hp * L),
        bytes_accessed=int(gate0.size * 2 + Tp * Bp * Hp * 2
                           + sum(int(w.size) * w.dtype.itemsize
                                 for w in weight_args)))

    hidden = pl.pallas_call(
        functools.partial(_lstm_kernel, L, Tb, Hp),
        out_shape=jax.ShapeDtypeStruct((Tp, Bp, Hp), jnp.bfloat16),
        grid_spec=pltpu.PrefetchScalarGridSpec(
            num_scalar_prefetch=0,
            grid=(Bp // Bb, Tp // Tb),              # batch "parallel", time "arbitrary"
            in_specs=in_specs,
            out_specs=out_spec,
            scratch_shapes=[pltpu.VMEM((L, Bb, Hp), jnp.float32),
                            pltpu.VMEM((L, Bb, Hp), jnp.float32)],
        ),
        compiler_params=pltpu.CompilerParams(
            dimension_semantics=("parallel", "arbitrary"),
            vmem_limit_bytes=vmem_limit),
        cost_estimate=lstm_cost,
    )(gate0, *weight_args)

    # ---- hoisted vocab projection: lane-dense, weight streamed once ---------
    w_lin_t = jnp.pad(params["w_lin"],
                      ((0, Vp - V), (0, Hp - H))).T.astype(jnp.bfloat16)  # (Hp, Vp)
    b_lin = jnp.pad(params["b_lin"], (0, Vp - V)).reshape(1, Vp).astype(jnp.float32)

    rows = Tp * Bp
    h2d = hidden.reshape(rows, Hp)
    # Keep the whole activation row set resident when small (weight streamed once);
    # otherwise tile rows.  Vocab tiles up to 2048 wide (memory-bound projection).
    RB = rows if rows <= 1024 else _pick_divisor(
        rows, (1024, 512, 256, 128, 64, 32, 16, 8))
    VB = _pick_divisor(Vp, (2048, 1024, 512, 256, 128))

    proj_cost = pl.CostEstimate(
        flops=int(2 * rows * Hp * Vp),
        transcendentals=0,
        bytes_accessed=int(rows * Hp * 2 + Hp * Vp * 2 + rows * Vp * 4))

    logits = pl.pallas_call(
        _proj_kernel,
        out_shape=jax.ShapeDtypeStruct((rows, Vp), jnp.float32),
        grid_spec=pltpu.PrefetchScalarGridSpec(
            num_scalar_prefetch=0,
            # vocab axis OUTER: each (Hp, VB) weight block is DMA'd once, not once
            # per row block.
            grid=(Vp // VB, rows // RB),
            in_specs=[pl.BlockSpec((RB, Hp), lambda v, r: (r, 0)),
                      pl.BlockSpec((Hp, VB), lambda v, r: (0, v)),
                      pl.BlockSpec((1, VB), lambda v, r: (0, v))],
            out_specs=pl.BlockSpec((RB, VB), lambda v, r: (r, v)),
        ),
        compiler_params=pltpu.CompilerParams(
            dimension_semantics=("parallel", "parallel"),
            vmem_limit_bytes=vmem_limit),
        cost_estimate=proj_cost,
    )(h2d, w_lin_t, b_lin)

    return logits.reshape(Tp, Bp, Vp)[:T, :B, :V]


# ----------------------------------------------------------------------------- reference
def reference_forward(features, captions, params, *, num_layers, hidden_size,
                      vocab_size):
    """Pure-JAX f32 reference mirroring the PyTorch module (eval-mode dropout)."""
    emb = params["embed"][captions]
    x = jnp.concatenate([features[None], emb], axis=0)   # (T, B, E)
    T, B, _ = x.shape
    H, L = hidden_size, num_layers
    h = jnp.zeros((L, B, H), jnp.float32)
    c = jnp.zeros((L, B, H), jnp.float32)
    outs = []
    for t in range(T):
        xt = x[t]
        new_h, new_c = [], []
        for l in range(L):
            gates = (xt @ params[f"w_ih_{l}"].T + h[l] @ params[f"w_hh_{l}"].T
                     + params[f"b_ih_{l}"] + params[f"b_hh_{l}"])
            i_g = jax.nn.sigmoid(gates[:, 0 * H:1 * H])
            f_g = jax.nn.sigmoid(gates[:, 1 * H:2 * H])
            g_g = jnp.tanh(gates[:, 2 * H:3 * H])
            o_g = jax.nn.sigmoid(gates[:, 3 * H:4 * H])
            cn = f_g * c[l] + i_g * g_g
            hn = o_g * jnp.tanh(cn)
            new_h.append(hn)
            new_c.append(cn)
            xt = hn
        h = jnp.stack(new_h)
        c = jnp.stack(new_c)
        outs.append(xt @ params["w_lin"].T + params["b_lin"])
    return jnp.stack(outs)


def make_params(key, embed_size, hidden_size, vocab_size, num_layers):
    E, H, V, L = embed_size, hidden_size, vocab_size, num_layers
    params = {}
    k = key
    scale = 1.0 / jnp.sqrt(H)

    def nxt():
        nonlocal k
        k, sub = jax.random.split(k)
        return sub

    params["embed"] = jax.random.normal(nxt(), (V, E), jnp.float32) * 0.1
    for l in range(L):
        in_dim = E if l == 0 else H
        params[f"w_ih_{l}"] = jax.random.uniform(
            nxt(), (4 * H, in_dim), jnp.float32, -scale, scale)
        params[f"w_hh_{l}"] = jax.random.uniform(
            nxt(), (4 * H, H), jnp.float32, -scale, scale)
        params[f"b_ih_{l}"] = jax.random.uniform(
            nxt(), (4 * H,), jnp.float32, -scale, scale)
        params[f"b_hh_{l}"] = jax.random.uniform(
            nxt(), (4 * H,), jnp.float32, -scale, scale)
    params["w_lin"] = jax.random.uniform(
        nxt(), (V, H), jnp.float32, -scale, scale)
    params["b_lin"] = jax.random.uniform(
        nxt(), (V,), jnp.float32, -scale, scale)
    return params


if __name__ == "__main__":
    embed_size, hidden_size, vocab_size, num_layers = 32, 32, 64, 2
    batch, seq = 2, 7

    key = jax.random.PRNGKey(0)
    k_params, k_feat, k_cap = jax.random.split(key, 3)

    params = make_params(k_params, embed_size, hidden_size, vocab_size,
                         num_layers)
    features = jax.random.normal(k_feat, (batch, embed_size), jnp.float32)
    captions = jax.random.randint(k_cap, (seq, batch), 0, vocab_size,
                                  dtype=jnp.int32)

    fwd = jax.jit(functools.partial(decoder_rnn_forward,
                                    num_layers=num_layers,
                                    hidden_size=hidden_size,
                                    vocab_size=vocab_size,
                                    time_block=8))
    out = jax.block_until_ready(fwd(features, captions, params))

    ref = jax.block_until_ready(
        reference_forward(features, captions, params,
                          num_layers=num_layers,
                          hidden_size=hidden_size,
                          vocab_size=vocab_size))

    assert out.shape == (seq + 1, batch, vocab_size), out.shape
    # bf16 matmul operands + bf16 gate0 storage (f32 accumulation) => loose tolerance.
    assert jnp.allclose(out, ref, atol=5e-2, rtol=5e-2), \
        float(jnp.max(jnp.abs(out - ref)))
    print("KERNEL_OK")
</pallas_src>

<mosaic_0001>
module attributes {stable_mosaic.version = 11 : i64} {
  func.func @_proj_kernel(%arg0: i32, %arg1: i32, %arg2: memref<128x128xbf16, #tpu.memory_space<vmem>>, %arg3: memref<128x128xbf16, #tpu.memory_space<vmem>>, %arg4: memref<1x128xf32, #tpu.memory_space<vmem>>, %arg5: memref<128x128xf32, #tpu.memory_space<vmem>>) attributes {dimension_semantics = [#tpu.dimension_semantics<parallel>, #tpu.dimension_semantics<parallel>], iteration_bounds = array<i64: 1, 1>, scalar_prefetch = 0 : i64, scratch_operands = 0 : i64, tpu.core_type = #tpu.core_type<tc>, window_params = [{transform_indices = @transform_0, window_bounds = array<i64: 128, 128>}, {transform_indices = @transform_1, window_bounds = array<i64: 128, 128>}, {transform_indices = @transform_2, window_bounds = array<i64: 1, 128>}, {transform_indices = @transform_3, window_bounds = array<i64: 128, 128>}]} {
    %c0 = arith.constant 0 : index
    %c0_0 = arith.constant 0 : index
    %0 = vector.load %arg2[%c0, %c0_0] : memref<128x128xbf16, #tpu.memory_space<vmem>>, vector<128x128xbf16>
    %c0_1 = arith.constant 0 : index
    %c0_2 = arith.constant 0 : index
    %1 = vector.load %arg3[%c0_1, %c0_2] : memref<128x128xbf16, #tpu.memory_space<vmem>>, vector<128x128xbf16>
    %cst = arith.constant dense<0.000000e+00> : vector<128x128xf32>
    %2 = tpu.matmul %0, %1, %cst {dimension_numbers = #tpu.dot_dimension_numbers<[1], [0], [0], [1], [0, 0, 1, 1], [], []>} : vector<128x128xbf16>, vector<128x128xbf16>, vector<128x128xf32> -> vector<128x128xf32>
    %c0_3 = arith.constant 0 : index
    %c0_4 = arith.constant 0 : index
    %3 = vector.load %arg4[%c0_3, %c0_4] : memref<1x128xf32, #tpu.memory_space<vmem>>, vector<1x128xf32>
    %4 = vector.broadcast %3 : vector<1x128xf32> to vector<128x128xf32>
    %5 = arith.addf %2, %4 : vector<128x128xf32>
    %c0_5 = arith.constant 0 : index
    %c0_6 = arith.constant 0 : index
    %6 = vector.load %arg5[%c0_5, %c0_6] : memref<128x128xf32, #tpu.memory_space<vmem>>, vector<128x128xf32>
    tpu.vector_store %arg5[%c0_5, %c0_6], %5 {strides = array<i32>} : memref<128x128xf32, #tpu.memory_space<vmem>>, vector<128x128xf32>,
    return
  }
  func.func @transform_0(%arg0: i32, %arg1: i32) -> (i32, i32) {
    %c0_i32 = arith.constant 0 : i32
    %c0_i32_0 = arith.constant 0 : i32
    return %arg1, %c0_i32 : i32, i32
  }
  func.func @transform_1(%arg0: i32, %arg1: i32) -> (i32, i32) {
    %c0_i32 = arith.constant 0 : i32
    %c0_i32_0 = arith.constant 0 : i32
    return %c0_i32, %arg0 : i32, i32
  }
  func.func @transform_2(%arg0: i32, %arg1: i32) -> (i32, i32) {
    %c0_i32 = arith.constant 0 : i32
    %c0_i32_0 = arith.constant 0 : i32
    return %c0_i32, %arg0 : i32, i32
  }
  func.func @transform_3(%arg0: i32, %arg1: i32) -> (i32, i32) {
    %c0_i32 = arith.constant 0 : i32
    return %arg1, %arg0 : i32, i32
  }
}

module attributes {stable_mosaic.version = 11 : i64} {
  func.func @_lstm_kernel(%arg0: i32, %arg1: i32, %arg2: memref<8x16x512xbf16, #tpu.memory_space<vmem>>, %arg3: memref<128x512xbf16, #tpu.memory_space<vmem>>, %arg4: memref<1x256x512xbf16, #tpu.memory_space<vmem>>, %arg5: memref<1x1x512xf32, #tpu.memory_space<vmem>>, %arg6: memref<8x16x128xbf16, #tpu.memory_space<vmem>>, %arg7: memref<2x16x128xf32, #tpu.memory_space<vmem>>, %arg8: memref<2x16x128xf32, #tpu.memory_space<vmem>>) attributes {dimension_semantics = [#tpu.dimension_semantics<parallel>, #tpu.dimension_semantics<arbitrary>], iteration_bounds = array<i64: 1, 1>, scalar_prefetch = 0 : i64, scratch_operands = 2 : i64, tpu.core_type = #tpu.core_type<tc>, window_params = [{transform_indices = @transform_0, window_bounds = array<i64: 8, 16, 512>}, {pipeline_mode = #tpu.pipeline_mode<synchronous>, transform_indices = @transform_1, window_bounds = array<i64: 128, 512>}, {pipeline_mode = #tpu.pipeline_mode<synchronous>, transform_indices = @transform_2, window_bounds = array<i64: 1, 256, 512>}, {pipeline_mode = #tpu.pipeline_mode<synchronous>, transform_indices = @transform_3, window_bounds = array<i64: 1, 1, 512>}, {transform_indices = @transform_4, window_bounds = array<i64: 8, 16, 128>}]} {
    %c0_i32 = arith.constant 0 : i32
    %0 = arith.cmpi eq, %arg1, %c0_i32 : i32
    %1 = arith.extui %0 : i1 to i32
    %c0_i32_0 = arith.constant 0 : i32
    %2 = arith.cmpi ne, %1, %c0_i32_0 : i32
    scf.if %2 {
      %cst_346 = arith.constant 0.000000e+00 : f32
      %743 = vector.broadcast %cst_346 : f32 to vector<2x16x128xf32>
      %c0_347 = arith.constant 0 : index
      %c0_348 = arith.constant 0 : index
      %c0_349 = arith.constant 0 : index
      %744 = vector.load %arg7[%c0_347, %c0_348, %c0_349] : memref<2x16x128xf32, #tpu.memory_space<vmem>>, vector<2x16x128xf32>
      tpu.vector_store %arg7[%c0_347, %c0_348, %c0_349], %743 {strides = array<i32>} : memref<2x16x128xf32, #tpu.memory_space<vmem>>, vector<2x16x128xf32>,
      %cst_350 = arith.constant 0.000000e+00 : f32
      %745 = vector.broadcast %cst_350 : f32 to vector<2x16x128xf32>
      %c0_351 = arith.constant 0 : index
      %c0_352 = arith.constant 0 : index
      %c0_353 = arith.constant 0 : index
      %746 = vector.load %arg8[%c0_351, %c0_352, %c0_353] : memref<2x16x128xf32, #tpu.memory_space<vmem>>, vector<2x16x128xf32>
      tpu.vector_store %arg8[%c0_351, %c0_352, %c0_353], %745 {strides = array<i32>} : memref<2x16x128xf32, #tpu.memory_space<vmem>>, vector<2x16x128xf32>,
    } else {
    }
    %c0 = arith.constant 0 : index
    %c0_1 = arith.constant 0 : index
    %c0_2 = arith.constant 0 : index
    %3 = vector.load %arg5[%c0, %c0_1, %c0_2] : memref<1x1x512xf32, #tpu.memory_space<vmem>>, vector<1x1x512xf32>
    %4 = vector.shape_cast %3 : vector<1x1x512xf32> to vector<1x512xf32>
    %5 = vector.shape_cast %4 : vector<1x512xf32> to vector<1x512xf32>
    %6 = vector.broadcast %5 : vector<1x512xf32> to vector<16x512xf32>
    %c0_i32_3 = arith.constant 0 : i32
    %c1_i32 = arith.constant 1 : i32
    %7 = arith.muli %c0_i32_3, %c1_i32 : i32
    %c0_i32_4 = arith.constant 0 : i32
    %8 = arith.addi %c0_i32_4, %7 : i32
    %9 = arith.index_cast %8 : i32 to index
    %c0_5 = arith.constant 0 : index
    %c0_6 = arith.constant 0 : index
    %10 = vector.load %arg2[%9, %c0_5, %c0_6] : memref<8x16x512xbf16, #tpu.memory_space<vmem>>, vector<1x16x512xbf16>
    %11 = vector.shape_cast %10 : vector<1x16x512xbf16> to vector<16x512xbf16>
    %12 = arith.extf %11 : vector<16x512xbf16> to vector<16x512xf32>
    %c0_7 = arith.constant 0 : index
    %c0_8 = arith.constant 0 : index
    %c0_9 = arith.constant 0 : index
    %13 = vector.load %arg7[%c0_7, %c0_8, %c0_9] : memref<2x16x128xf32, #tpu.memory_space<vmem>>, vector<1x16x128xf32>
    %14 = vector.shape_cast %13 : vector<1x16x128xf32> to vector<16x128xf32>
    %15 = arith.truncf %14 : vector<16x128xf32> to vector<16x128xbf16>
    %c0_10 = arith.constant 0 : index
    %c0_11 = arith.constant 0 : index
    %16 = vector.load %arg3[%c0_10, %c0_11] : memref<128x512xbf16, #tpu.memory_space<vmem>>, vector<128x512xbf16>
    %cst = arith.constant dense<0.000000e+00> : vector<16x512xf32>
    %17 = tpu.matmul %15, %16, %cst {dimension_numbers = #tpu.dot_dimension_numbers<[1], [0], [0], [1], [0, 0, 1, 1], [], []>} : vector<16x128xbf16>, vector<128x512xbf16>, vector<16x512xf32> -> vector<16x512xf32>
    %18 = arith.addf %12, %17 : vector<16x512xf32>
    %c0_12 = arith.constant 0 : index
    %c0_13 = arith.constant 0 : index
    %c0_14 = arith.constant 0 : index
    %19 = vector.load %arg8[%c0_12, %c0_13, %c0_14] : memref<2x16x128xf32, #tpu.memory_space<vmem>>, vector<1x16x128xf32>
    %20 = vector.shape_cast %19 : vector<1x16x128xf32> to vector<16x128xf32>
    %21 = vector.extract_strided_slice %18 {offsets = [0, 0], sizes = [16, 128], strides = [1, 1]} : vector<16x512xf32> to vector<16x128xf32>
    %22 = arith.negf %21 : vector<16x128xf32>
    %23 = math.exp %22 : vector<16x128xf32>
    %cst_15 = arith.constant 1.000000e+00 : f32
    %24 = vector.broadcast %cst_15 : f32 to vector<16x128xf32>
    %25 = arith.addf %24, %23 : vector<16x128xf32>
    %26 = arith.divf %24, %25 : vector<16x128xf32>
    %27 = vector.extract_strided_slice %18 {offsets = [0, 128], sizes = [16, 128], strides = [1, 1]} : vector<16x512xf32> to vector<16x128xf32>
    %28 = arith.negf %27 : vector<16x128xf32>
    %29 = math.exp %28 : vector<16x128xf32>
    %cst_16 = arith.constant 1.000000e+00 : f32
    %30 = vector.broadcast %cst_16 : f32 to vector<16x128xf32>
    %31 = arith.addf %30, %29 : vector<16x128xf32>
    %32 = arith.divf %30, %31 : vector<16x128xf32>
    %33 = vector.extract_strided_slice %18 {offsets = [0, 256], sizes = [16, 128], strides = [1, 1]} : vector<16x512xf32> to vector<16x128xf32>
    %34 = math.tanh %33 : vector<16x128xf32>
    %35 = vector.extract_strided_slice %18 {offsets = [0, 384], sizes = [16, 128], strides = [1, 1]} : vector<16x512xf32> to vector<16x128xf32>
    %36 = arith.negf %35 : vector<16x128xf32>
    %37 = math.exp %36 : vector<16x128xf32>
    %cst_17 = arith.constant 1.000000e+00 : f32
    %38 = vector.broadcast %cst_17 : f32 to vector<16x128xf32>
    %39 = arith.addf %38, %37 : vector<16x128xf32>
    %40 = arith.divf %38, %39 : vector<16x128xf32>
    %41 = arith.mulf %32, %20 : vector<16x128xf32>
    %42 = arith.mulf %26, %34 : vector<16x128xf32>
    %43 = arith.addf %41, %42 : vector<16x128xf32>
    %44 = math.tanh %43 : vector<16x128xf32>
    %45 = arith.mulf %40, %44 : vector<16x128xf32>
    %c0_18 = arith.constant 0 : index
    %c0_19 = arith.constant 0 : index
    %c0_20 = arith.constant 0 : index
    %46 = vector.load %arg7[%c0_18, %c0_19, %c0_20] : memref<2x16x128xf32, #tpu.memory_space<vmem>>, vector<1x16x128xf32>
    %47 = vector.shape_cast %46 : vector<1x16x128xf32> to vector<16x128xf32>
    %48 = vector.shape_cast %45 : vector<16x128xf32> to vector<1x16x128xf32>
    tpu.vector_store %arg7[%c0_18, %c0_19, %c0_20], %48 {strides = array<i32>} : memref<2x16x128xf32, #tpu.memory_space<vmem>>, vector<1x16x128xf32>,
    %c0_21 = arith.constant 0 : index
    %c0_22 = arith.constant 0 : index
    %c0_23 = arith.constant 0 : index
    %49 = vector.load %arg8[%c0_21, %c0_22, %c0_23] : memref<2x16x128xf32, #tpu.memory_space<vmem>>, vector<1x16x128xf32>
    %50 = vector.shape_cast %49 : vector<1x16x128xf32> to vector<16x128xf32>
    %51 = vector.shape_cast %43 : vector<16x128xf32> to vector<1x16x128xf32>
    tpu.vector_store %arg8[%c0_21, %c0_22, %c0_23], %51 {strides = array<i32>} : memref<2x16x128xf32, #tpu.memory_space<vmem>>, vector<1x16x128xf32>,
    %52 = arith.truncf %45 : vector<16x128xf32> to vector<16x128xbf16>
    %c1 = arith.constant 1 : index
    %c0_24 = arith.constant 0 : index
    %c0_25 = arith.constant 0 : index
    %53 = vector.load %arg7[%c1, %c0_24, %c0_25] : memref<2x16x128xf32, #tpu.memory_space<vmem>>, vector<1x16x128xf32>
    %54 = vector.shape_cast %53 : vector<1x16x128xf32> to vector<16x128xf32>
    %55 = arith.truncf %54 : vector<16x128xf32> to vector<16x128xbf16>
    %56 = tpu.concatenate %52, %55 in 1 : vector<16x128xbf16>, vector<16x128xbf16> -> vector<16x256xbf16>
    %c0_26 = arith.constant 0 : index
    %c0_27 = arith.constant 0 : index
    %c0_28 = arith.constant 0 : index
    %57 = vector.load %arg4[%c0_26, %c0_27, %c0_28] : memref<1x256x512xbf16, #tpu.memory_space<vmem>>, vector<1x256x512xbf16>
    %58 = vector.shape_cast %57 : vector<1x256x512xbf16> to vector<256x512xbf16>
    %cst_29 = arith.constant dense<0.000000e+00> : vector<16x512xf32>
    %59 = tpu.matmul %56, %58, %cst_29 {dimension_numbers = #tpu.dot_dimension_numbers<[1], [0], [0], [1], [0, 0, 1, 1], [], []>} : vector<16x256xbf16>, vector<256x512xbf16>, vector<16x512xf32> -> vector<16x512xf32>
    %60 = arith.addf %59, %6 : vector<16x512xf32>
    %c1_30 = arith.constant 1 : index
    %c0_31 = arith.constant 0 : index
    %c0_32 = arith.constant 0 : index
    %61 = vector.load %arg8[%c1_30, %c0_31, %c0_32] : memref<2x16x128xf32, #tpu.memory_space<vmem>>, vector<1x16x128xf32>
    %62 = vector.shape_cast %61 : vector<1x16x128xf32> to vector<16x128xf32>
    %63 = vector.extract_strided_slice %60 {offsets = [0, 0], sizes = [16, 128], strides = [1, 1]} : vector<16x512xf32> to vector<16x128xf32>
    %64 = arith.negf %63 : vector<16x128xf32>
    %65 = math.exp %64 : vector<16x128xf32>
    %cst_33 = arith.constant 1.000000e+00 : f32
    %66 = vector.broadcast %cst_33 : f32 to vector<16x128xf32>
    %67 = arith.addf %66, %65 : vector<16x128xf32>
    %68 = arith.divf %66, %67 : vector<16x128xf32>
    %69 = vector.extract_strided_slice %60 {offsets = [0, 128], sizes = [16, 128], strides = [1, 1]} : vector<16x512xf32> to vector<16x128xf32>
    %70 = arith.negf %69 : vector<16x128xf32>
    %71 = math.exp %70 : vector<16x128xf32>
    %cst_34 = arith.constant 1.000000e+00 : f32
    %72 = vector.broadcast %cst_34 : f32 to vector<16x128xf32>
    %73 = arith.addf %72, %71 : vector<16x128xf32>
    %74 = arith.divf %72, %73 : vector<16x128xf32>
    %75 = vector.extract_strided_slice %60 {offsets = [0, 256], sizes = [16, 128], strides = [1, 1]} : vector<16x512xf32> to vector<16x128xf32>
    %76 = math.tanh %75 : vector<16x128xf32>
    %77 = vector.extract_strided_slice %60 {offsets = [0, 384], sizes = [16, 128], strides = [1, 1]} : vector<16x512xf32> to vector<16x128xf32>
    %78 = arith.negf %77 : vector<16x128xf32>
    %79 = math.exp %78 : vector<16x128xf32>
    %cst_35 = arith.constant 1.000000e+00 : f32
    %80 = vector.broadcast %cst_35 : f32 to vector<16x128xf32>
    %81 = arith.addf %80, %79 : vector<16x128xf32>
    %82 = arith.divf %80, %81 : vector<16x128xf32>
    %83 = arith.mulf %74, %62 : vector<16x128xf32>
    %84 = arith.mulf %68, %76 : vector<16x128xf32>
    %85 = arith.addf %83, %84 : vector<16x128xf32>
    %86 = math.tanh %85 : vector<16x128xf32>
    %87 = arith.mulf %82, %86 : vector<16x128xf32>
    %c1_36 = arith.constant 1 : index
    %c0_37 = arith.constant 0 : index
    %c0_38 = arith.constant 0 : index
    %88 = vector.load %arg7[%c1_36, %c0_37, %c0_38] : memref<2x16x128xf32, #tpu.memory_space<vmem>>, vector<1x16x128xf32>
    %89 = vector.shape_cast %88 : vector<1x16x128xf32> to vector<16x128xf32>
    %90 = vector.shape_cast %87 : vector<16x128xf32> to vector<1x16x128xf32>
    tpu.vector_store %arg7[%c1_36, %c0_37, %c0_38], %90 {strides = array<i32>} : memref<2x16x128xf32, #tpu.memory_space<vmem>>, vector<1x16x128xf32>,
    %c1_39 = arith.constant 1 : index
    %c0_40 = arith.constant 0 : index
    %c0_41 = arith.constant 0 : index
    %91 = vector.load %arg8[%c1_39, %c0_40, %c0_41] : memref<2x16x128xf32, #tpu.memory_space<vmem>>, vector<1x16x128xf32>
    %92 = vector.shape_cast %91 : vector<1x16x128xf32> to vector<16x128xf32>
    %93 = vector.shape_cast %85 : vector<16x128xf32> to vector<1x16x128xf32>
    tpu.vector_store %arg8[%c1_39, %c0_40, %c0_41], %93 {strides = array<i32>} : memref<2x16x128xf32, #tpu.memory_space<vmem>>, vector<1x16x128xf32>,
    %94 = arith.truncf %87 : vector<16x128xf32> to vector<16x128xbf16>
    %95 = arith.index_cast %8 : i32 to index
    %c0_42 = arith.constant 0 : index
    %c0_43 = arith.constant 0 : index
    %96 = vector.load %arg6[%95, %c0_42, %c0_43] : memref<8x16x128xbf16, #tpu.memory_space<vmem>>, vector<1x16x128xbf16>
    %97 = vector.shape_cast %96 : vector<1x16x128xbf16> to vector<16x128xbf16>
    %98 = vector.shape_cast %94 : vector<16x128xbf16> to vector<1x16x128xbf16>
    tpu.vector_store %arg6[%95, %c0_42, %c0_43], %98 {strides = array<i32>} : memref<8x16x128xbf16, #tpu.memory_space<vmem>>, vector<1x16x128xbf16>,
    %c1_i32_44 = arith.constant 1 : i32
    %c1_i32_45 = arith.constant 1 : i32
    %99 = arith.muli %c1_i32_44, %c1_i32_45 : i32
    %c0_i32_46 = arith.constant 0 : i32
    %100 = arith.addi %c0_i32_46, %99 : i32
    %101 = arith.index_cast %100 : i32 to index
    %c0_47 = arith.constant 0 : index
    %c0_48 = arith.constant 0 : index
    %102 = vector.load %arg2[%101, %c0_47, %c0_48] : memref<8x16x512xbf16, #tpu.memory_space<vmem>>, vector<1x16x512xbf16>
    %103 = vector.shape_cast %102 : vector<1x16x512xbf16> to vector<16x512xbf16>
    %104 = arith.extf %103 : vector<16x512xbf16> to vector<16x512xf32>
    %c0_49 = arith.constant 0 : index
    %c0_50 = arith.constant 0 : index
    %c0_51 = arith.constant 0 : index
    %105 = vector.load %arg7[%c0_49, %c0_50, %c0_51] : memref<2x16x128xf32, #tpu.memory_space<vmem>>, vector<1x16x128xf32>
    %106 = vector.shape_cast %105 : vector<1x16x128xf32> to vector<16x128xf32>
    %107 = arith.truncf %106 : vector<16x128xf32> to vector<16x128xbf16>
    %c0_52 = arith.constant 0 : index
    %c0_53 = arith.constant 0 : index
    %108 = vector.load %arg3[%c0_52, %c0_53] : memref<128x512xbf16, #tpu.memory_space<vmem>>, vector<128x512xbf16>
    %cst_54 = arith.constant dense<0.000000e+00> : vector<16x512xf32>
    %109 = tpu.matmul %107, %108, %cst_54 {dimension_numbers = #tpu.dot_dimension_numbers<[1], [0], [0], [1], [0, 0, 1, 1], [], []>} : vector<16x128xbf16>, vector<128x512xbf16>, vector<16x512xf32> -> vector<16x512xf32>
    %110 = arith.addf %104, %109 : vector<16x512xf32>
    %c0_55 = arith.constant 0 : index
    %c0_56 = arith.constant 0 : index
    %c0_57 = arith.constant 0 : index
    %111 = vector.load %arg8[%c0_55, %c0_56, %c0_57] : memref<2x16x128xf32, #tpu.memory_space<vmem>>, vector<1x16x128xf32>
    %112 = vector.shape_cast %111 : vector<1x16x128xf32> to vector<16x128xf32>
    %113 = vector.extract_strided_slice %110 {offsets = [0, 0], sizes = [16, 128], strides = [1, 1]} : vector<16x512xf32> to vector<16x128xf32>
    %114 = arith.negf %113 : vector<16x128xf32>
    %115 = math.exp %114 : vector<16x128xf32>
    %cst_58 = arith.constant 1.000000e+00 : f32
    %116 = vector.broadcast %cst_58 : f32 to vector<16x128xf32>
    %117 = arith.addf %116, %115 : vector<16x128xf32>
    %118 = arith.divf %116, %117 : vector<16x128xf32>
    %119 = vector.extract_strided_slice %110 {offsets = [0, 128], sizes = [16, 128], strides = [1, 1]} : vector<16x512xf32> to vector<16x128xf32>
    %120 = arith.negf %119 : vector<16x128xf32>
    %121 = math.exp %120 : vector<16x128xf32>
    %cst_59 = arith.constant 1.000000e+00 : f32
    %122 = vector.broadcast %cst_59 : f32 to vector<16x128xf32>
    %123 = arith.addf %122, %121 : vector<16x128xf32>
    %124 = arith.divf %122, %123 : vector<16x128xf32>
    %125 = vector.extract_strided_slice %110 {offsets = [0, 256], sizes = [16, 128], strides = [1, 1]} : vector<16x512xf32> to vector<16x128xf32>
    %126 = math.tanh %125 : vector<16x128xf32>
    %127 = vector.extract_strided_slice %110 {offsets = [0, 384], sizes = [16, 128], strides = [1, 1]} : vector<16x512xf32> to vector<16x128xf32>
    %128 = arith.negf %127 : vector<16x128xf32>
    %129 = math.exp %128 : vector<16x128xf32>
    %cst_60 = arith.constant 1.000000e+00 : f32
    %130 = vector.broadcast %cst_60 : f32 to vector<16x128xf32>
    %131 = arith.addf %130, %129 : vector<16x128xf32>
    %132 = arith.divf %130, %131 : vector<16x128xf32>
    %133 = arith.mulf %124, %112 : vector<16x128xf32>
    %134 = arith.mulf %118, %126 : vector<16x128xf32>
    %135 = arith.addf %133, %134 : vector<16x128xf32>
    %136 = math.tanh %135 : vector<16x128xf32>
    %137 = arith.mulf %132, %136 : vector<16x128xf32>
    %c0_61 = arith.constant 0 : index
    %c0_62 = arith.constant 0 : index
    %c0_63 = arith.constant 0 : index
    %138 = vector.load %arg7[%c0_61, %c0_62, %c0_63] : memref<2x16x128xf32, #tpu.memory_space<vmem>>, vector<1x16x128xf32>
    %139 = vector.shape_cast %138 : vector<1x16x128xf32> to vector<16x128xf32>
    %140 = vector.shape_cast %137 : vector<16x128xf32> to vector<1x16x128xf32>
    tpu.vector_store %arg7[%c0_61, %c0_62, %c0_63], %140 {strides = array<i32>} : memref<2x16x128xf32, #tpu.memory_space<vmem>>, vector<1x16x128xf32>,
    %c0_64 = arith.constant 0 : index
    %c0_65 = arith.constant 0 : index
    %c0_66 = arith.constant 0 : index
    %141 = vector.load %arg8[%c0_64, %c0_65, %c0_66] : memref<2x16x128xf32, #tpu.memory_space<vmem>>, vector<1x16x128xf32>
    %142 = vector.shape_cast %141 : vector<1x16x128xf32> to vector<16x128xf32>
    %143 = vector.shape_cast %135 : vector<16x128xf32> to vector<1x16x128xf32>
    tpu.vector_store %arg8[%c0_64, %c0_65, %c0_66], %143 {strides = array<i32>} : memref<2x16x128xf32, #tpu.memory_space<vmem>>, vector<1x16x128xf32>,
    %144 = arith.truncf %137 : vector<16x128xf32> to vector<16x128xbf16>
    %c1_67 = arith.constant 1 : index
    %c0_68 = arith.constant 0 : index
    %c0_69 = arith.constant 0 : index
    %145 = vector.load %arg7[%c1_67, %c0_68, %c0_69] : memref<2x16x128xf32, #tpu.memory_space<vmem>>, vector<1x16x128xf32>
    %146 = vector.shape_cast %145 : vector<1x16x128xf32> to vector<16x128xf32>
    %147 = arith.truncf %146 : vector<16x128xf32> to vector<16x128xbf16>
    %148 = tpu.concatenate %144, %147 in 1 : vector<16x128xbf16>, vector<16x128xbf16> -> vector<16x256xbf16>
    %c0_70 = arith.constant 0 : index
    %c0_71 = arith.constant 0 : index
    %c0_72 = arith.constant 0 : index
    %149 = vector.load %arg4[%c0_70, %c0_71, %c0_72] : memref<1x256x512xbf16, #tpu.memory_space<vmem>>, vector<1x256x512xbf16>
    %150 = vector.shape_cast %149 : vector<1x256x512xbf16> to vector<256x512xbf16>
    %cst_73 = arith.constant dense<0.000000e+00> : vector<16x512xf32>
    %151 = tpu.matmul %148, %150, %cst_73 {dimension_numbers = #tpu.dot_dimension_numbers<[1], [0], [0], [1], [0, 0, 1, 1], [], []>} : vector<16x256xbf16>, vector<256x512xbf16>, vector<16x512xf32> -> vector<16x512xf32>
    %152 = arith.addf %151, %6 : vector<16x512xf32>
    %c1_74 = arith.constant 1 : index
    %c0_75 = arith.constant 0 : index
    %c0_76 = arith.constant 0 : index
    %153 = vector.load %arg8[%c1_74, %c0_75, %c0_76] : memref<2x16x128xf32, #tpu.memory_space<vmem>>, vector<1x16x128xf32>
    %154 = vector.shape_cast %153 : vector<1x16x128xf32> to vector<16x128xf32>
    %155 = vector.extract_strided_slice %152 {offsets = [0, 0], sizes = [16, 128], strides = [1, 1]} : vector<16x512xf32> to vector<16x128xf32>
    %156 = arith.negf %155 : vector<16x128xf32>
    %157 = math.exp %156 : vector<16x128xf32>
    %cst_77 = arith.constant 1.000000e+00 : f32
    %158 = vector.broadcast %cst_77 : f32 to vector<16x128xf32>
    %159 = arith.addf %158, %157 : vector<16x128xf32>
    %160 = arith.divf %158, %159 : vector<16x128xf32>
    %161 = vector.extract_strided_slice %152 {offsets = [0, 128], sizes = [16, 128], strides = [1, 1]} : vector<16x512xf32> to vector<16x128xf32>
    %162 = arith.negf %161 : vector<16x128xf32>
    %163 = math.exp %162 : vector<16x128xf32>
    %cst_78 = arith.constant 1.000000e+00 : f32
    %164 = vector.broadcast %cst_78 : f32 to vector<16x128xf32>
    %165 = arith.addf %164, %163 : vector<16x128xf32>
    %166 = arith.divf %164, %165 : vector<16x128xf32>
    %167 = vector.extract_strided_slice %152 {offsets = [0, 256], sizes = [16, 128], strides = [1, 1]} : vector<16x512xf32> to vector<16x128xf32>
    %168 = math.tanh %167 : vector<16x128xf32>
    %169 = vector.extract_strided_slice %152 {offsets = [0, 384], sizes = [16, 128], strides = [1, 1]} : vector<16x512xf32> to vector<16x128xf32>
    %170 = arith.negf %169 : vector<16x128xf32>
    %171 = math.exp %170 : vector<16x128xf32>
    %cst_79 = arith.constant 1.000000e+00 : f32
    %172 = vector.broadcast %cst_79 : f32 to vector<16x128xf32>
    %173 = arith.addf %172, %171 : vector<16x128xf32>
    %174 = arith.divf %172, %173 : vector<16x128xf32>
    %175 = arith.mulf %166, %154 : vector<16x128xf32>
    %176 = arith.mulf %160, %168 : vector<16x128xf32>
    %177 = arith.addf %175, %176 : vector<16x128xf32>
    %178 = math.tanh %177 : vector<16x128xf32>
    %179 = arith.mulf %174, %178 : vector<16x128xf32>
    %c1_80 = arith.constant 1 : index
    %c0_81 = arith.constant 0 : index
    %c0_82 = arith.constant 0 : index
    %180 = vector.load %arg7[%c1_80, %c0_81, %c0_82] : memref<2x16x128xf32, #tpu.memory_space<vmem>>, vector<1x16x128xf32>
    %181 = vector.shape_cast %180 : vector<1x16x128xf32> to vector<16x128xf32>
    %182 = vector.shape_cast %179 : vector<16x128xf32> to vector<1x16x128xf32>
    tpu.vector_store %arg7[%c1_80, %c0_81, %c0_82], %182 {strides = array<i32>} : memref<2x16x128xf32, #tpu.memory_space<vmem>>, vector<1x16x128xf32>,
    %c1_83 = arith.constant 1 : index
    %c0_84 = arith.constant 0 : index
    %c0_85 = arith.constant 0 : index
    %183 = vector.load %arg8[%c1_83, %c0_84, %c0_85] : memref<2x16x128xf32, #tpu.memory_space<vmem>>, vector<1x16x128xf32>
    %184 = vector.shape_cast %183 : vector<1x16x128xf32> to vector<16x128xf32>
    %185 = vector.shape_cast %177 : vector<16x128xf32> to vector<1x16x128xf32>
    tpu.vector_store %arg8[%c1_83, %c0_84, %c0_85], %185 {strides = array<i32>} : memref<2x16x128xf32, #tpu.memory_space<vmem>>, vector<1x16x128xf32>,
    %186 = arith.truncf %179 : vector<16x128xf32> to vector<16x128xbf16>
    %187 = arith.index_cast %100 : i32 to index
    %c0_86 = arith.constant 0 : index
    %c0_87 = arith.constant 0 : index
    %188 = vector.load %arg6[%187, %c0_86, %c0_87] : memref<8x16x128xbf16, #tpu.memory_space<vmem>>, vector<1x16x128xbf16>
    %189 = vector.shape_cast %188 : vector<1x16x128xbf16> to vector<16x128xbf16>
    %190 = vector.shape_cast %186 : vector<16x128xbf16> to vector<1x16x128xbf16>
    tpu.vector_store %arg6[%187, %c0_86, %c0_87], %190 {strides = array<i32>} : memref<8x16x128xbf16, #tpu.memory_space<vmem>>, vector<1x16x128xbf16>,
    %c2_i32 = arith.constant 2 : i32
    %c1_i32_88 = arith.constant 1 : i32
    %191 = arith.muli %c2_i32, %c1_i32_88 : i32
    %c0_i32_89 = arith.constant 0 : i32
    %192 = arith.addi %c0_i32_89, %191 : i32
    %193 = arith.index_cast %192 : i32 to index
    %c0_90 = arith.constant 0 : index
    %c0_91 = arith.constant 0 : index
    %194 = vector.load %arg2[%193, %c0_90, %c0_91] : memref<8x16x512xbf16, #tpu.memory_space<vmem>>, vector<1x16x512xbf16>
    %195 = vector.shape_cast %194 : vector<1x16x512xbf16> to vector<16x512xbf16>
    %196 = arith.extf %195 : vector<16x512xbf16> to vector<16x512xf32>
    %c0_92 = arith.constant 0 : index
    %c0_93 = arith.constant 0 : index
    %c0_94 = arith.constant 0 : index
    %197 = vector.load %arg7[%c0_92, %c0_93, %c0_94] : memref<2x16x128xf32, #tpu.memory_space<vmem>>, vector<1x16x128xf32>
    %198 = vector.shape_cast %197 : vector<1x16x128xf32> to vector<16x128xf32>
    %199 = arith.truncf %198 : vector<16x128xf32> to vector<16x128xbf16>
    %c0_95 = arith.constant 0 : index
    %c0_96 = arith.constant 0 : index
    %200 = vector.load %arg3[%c0_95, %c0_96] : memref<128x512xbf16, #tpu.memory_space<vmem>>, vector<128x512xbf16>
    %cst_97 = arith.constant dense<0.000000e+00> : vector<16x512xf32>
    %201 = tpu.matmul %199, %200, %cst_97 {dimension_numbers = #tpu.dot_dimension_numbers<[1], [0], [0], [1], [0, 0, 1, 1], [], []>} : vector<16x128xbf16>, vector<128x512xbf16>, vector<16x512xf32> -> vector<16x512xf32>
    %202 = arith.addf %196, %201 : vector<16x512xf32>
    %c0_98 = arith.constant 0 : index
    %c0_99 = arith.constant 0 : index
    %c0_100 = arith.constant 0 : index
    %203 = vector.load %arg8[%c0_98, %c0_99, %c0_100] : memref<2x16x128xf32, #tpu.memory_space<vmem>>, vector<1x16x128xf32>
    %204 = vector.shape_cast %203 : vector<1x16x128xf32> to vector<16x128xf32>
    %205 = vector.extract_strided_slice %202 {offsets = [0, 0], sizes = [16, 128], strides = [1, 1]} : vector<16x512xf32> to vector<16x128xf32>
    %206 = arith.negf %205 : vector<16x128xf32>
    %207 = math.exp %206 : vector<16x128xf32>
    %cst_101 = arith.constant 1.000000e+00 : f32
    %208 = vector.broadcast %cst_101 : f32 to vector<16x128xf32>
    %209 = arith.addf %208, %207 : vector<16x128xf32>
    %210 = arith.divf %208, %209 : vector<16x128xf32>
    %211 = vector.extract_strided_slice %202 {offsets = [0, 128], sizes = [16, 128], strides = [1, 1]} : vector<16x512xf32> to vector<16x128xf32>
    %212 = arith.negf %211 : vector<16x128xf32>
    %213 = math.exp %212 : vector<16x128xf32>
    %cst_102 = arith.constant 1.000000e+00 : f32
    %214 = vector.broadcast %cst_102 : f32 to vector<16x128xf32>
    %215 = arith.addf %214, %213 : vector<16x128xf32>
    %216 = arith.divf %214, %215 : vector<16x128xf32>
    %217 = vector.extract_strided_slice %202 {offsets = [0, 256], sizes = [16, 128], strides = [1, 1]} : vector<16x512xf32> to vector<16x128xf32>
    %218 = math.tanh %217 : vector<16x128xf32>
    %219 = vector.extract_strided_slice %202 {offsets = [0, 384], sizes = [16, 128], strides = [1, 1]} : vector<16x512xf32> to vector<16x128xf32>
    %220 = arith.negf %219 : vector<16x128xf32>
    %221 = math.exp %220 : vector<16x128xf32>
    %cst_103 = arith.constant 1.000000e+00 : f32
    %222 = vector.broadcast %cst_103 : f32 to vector<16x128xf32>
    %223 = arith.addf %222, %221 : vector<16x128xf32>
    %224 = arith.divf %222, %223 : vector<16x128xf32>
    %225 = arith.mulf %216, %204 : vector<16x128xf32>
    %226 = arith.mulf %210, %218 : vector<16x128xf32>
    %227 = arith.addf %225, %226 : vector<16x128xf32>
    %228 = math.tanh %227 : vector<16x128xf32>
    %229 = arith.mulf %224, %228 : vector<16x128xf32>
    %c0_104 = arith.constant 0 : index
    %c0_105 = arith.constant 0 : index
    %c0_106 = arith.constant 0 : index
    %230 = vector.load %arg7[%c0_104, %c0_105, %c0_106] : memref<2x16x128xf32, #tpu.memory_space<vmem>>, vector<1x16x128xf32>
    %231 = vector.shape_cast %230 : vector<1x16x128xf32> to vector<16x128xf32>
    %232 = vector.shape_cast %229 : vector<16x128xf32> to vector<1x16x128xf32>
    tpu.vector_store %arg7[%c0_104, %c0_105, %c0_106], %232 {strides = array<i32>} : memref<2x16x128xf32, #tpu.memory_space<vmem>>, vector<1x16x128xf32>,
    %c0_107 = arith.constant 0 : index
    %c0_108 = arith.constant 0 : index
    %c0_109 = arith.constant 0 : index
    %233 = vector.load %arg8[%c0_107, %c0_108, %c0_109] : memref<2x16x128xf32, #tpu.memory_space<vmem>>, vector<1x16x128xf32>
    %234 = vector.shape_cast %233 : vector<1x16x128xf32> to vector<16x128xf32>
    %235 = vector.shape_cast %227 : vector<16x128xf32> to vector<1x16x128xf32>
    tpu.vector_store %arg8[%c0_107, %c0_108, %c0_109], %235 {strides = array<i32>} : memref<2x16x128xf32, #tpu.memory_space<vmem>>, vector<1x16x128xf32>,
    %236 = arith.truncf %229 : vector<16x128xf32> to vector<16x128xbf16>
    %c1_110 = arith.constant 1 : index
    %c0_111 = arith.constant 0 : index
    %c0_112 = arith.constant 0 : index
    %237 = vector.load %arg7[%c1_110, %c0_111, %c0_112] : memref<2x16x128xf32, #tpu.memory_space<vmem>>, vector<1x16x128xf32>
    %238 = vector.shape_cast %237 : vector<1x16x128xf32> to vector<16x128xf32>
    %239 = arith.truncf %238 : vector<16x128xf32> to vector<16x128xbf16>
    %240 = tpu.concatenate %236, %239 in 1 : vector<16x128xbf16>, vector<16x128xbf16> -> vector<16x256xbf16>
    %c0_113 = arith.constant 0 : index
    %c0_114 = arith.constant 0 : index
    %c0_115 = arith.constant 0 : index
    %241 = vector.load %arg4[%c0_113, %c0_114, %c0_115] : memref<1x256x512xbf16, #tpu.memory_space<vmem>>, vector<1x256x512xbf16>
    %242 = vector.shape_cast %241 : vector<1x256x512xbf16> to vector<256x512xbf16>
    %cst_116 = arith.constant dense<0.000000e+00> : vector<16x512xf32>
    %243 = tpu.matmul %240, %242, %cst_116 {dimension_numbers = #tpu.dot_dimension_numbers<[1], [0], [0], [1], [0, 0, 1, 1], [], []>} : vector<16x256xbf16>, vector<256x512xbf16>, vector<16x512xf32> -> vector<16x512xf32>
    %244 = arith.addf %243, %6 : vector<16x512xf32>
    %c1_117 = arith.constant 1 : index
    %c0_118 = arith.constant 0 : index
    %c0_119 = arith.constant 0 : index
    %245 = vector.load %arg8[%c1_117, %c0_118, %c0_119] : memref<2x16x128xf32, #tpu.memory_space<vmem>>, vector<1x16x128xf32>
    %246 = vector.shape_cast %245 : vector<1x16x128xf32> to vector<16x128xf32>
    %247 = vector.extract_strided_slice %244 {offsets = [0, 0], sizes = [16, 128], strides = [1, 1]} : vector<16x512xf32> to vector<16x128xf32>
    %248 = arith.negf %247 : vector<16x128xf32>
    %249 = math.exp %248 : vector<16x128xf32>
    %cst_120 = arith.constant 1.000000e+00 : f32
    %250 = vector.broadcast %cst_120 : f32 to vector<16x128xf32>
    %251 = arith.addf %250, %249 : vector<16x128xf32>
    %252 = arith.divf %250, %251 : vector<16x128xf32>
    %253 = vector.extract_strided_slice %244 {offsets = [0, 128], sizes = [16, 128], strides = [1, 1]} : vector<16x512xf32> to vector<16x128xf32>
    %254 = arith.negf %253 : vector<16x128xf32>
    %255 = math.exp %254 : vector<16x128xf32>
    %cst_121 = arith.constant 1.000000e+00 : f32
    %256 = vector.broadcast %cst_121 : f32 to vector<16x128xf32>
    %257 = arith.addf %256, %255 : vector<16x128xf32>
    %258 = arith.divf %256, %257 : vector<16x128xf32>
    %259 = vector.extract_strided_slice %244 {offsets = [0, 256], sizes = [16, 128], strides = [1, 1]} : vector<16x512xf32> to vector<16x128xf32>
    %260 = math.tanh %259 : vector<16x128xf32>
    %261 = vector.extract_strided_slice %244 {offsets = [0, 384], sizes = [16, 128], strides = [1, 1]} : vector<16x512xf32> to vector<16x128xf32>
    %262 = arith.negf %261 : vector<16x128xf32>
    %263 = math.exp %262 : vector<16x128xf32>
    %cst_122 = arith.constant 1.000000e+00 : f32
    %264 = vector.broadcast %cst_122 : f32 to vector<16x128xf32>
    %265 = arith.addf %264, %263 : vector<16x128xf32>
    %266 = arith.divf %264, %265 : vector<16x128xf32>
    %267 = arith.mulf %258, %246 : vector<16x128xf32>
    %268 = arith.mulf %252, %260 : vector<16x128xf32>
    %269 = arith.addf %267, %268 : vector<16x128xf32>
    %270 = math.tanh %269 : vector<16x128xf32>
    %271 = arith.mulf %266, %270 : vector<16x128xf32>
    %c1_123 = arith.constant 1 : index
    %c0_124 = arith.constant 0 : index
    %c0_125 = arith.constant 0 : index
    %272 = vector.load %arg7[%c1_123, %c0_124, %c0_125] : memref<2x16x128xf32, #tpu.memory_space<vmem>>, vector<1x16x128xf32>
    %273 = vector.shape_cast %272 : vector<1x16x128xf32> to vector<16x128xf32>
    %274 = vector.shape_cast %271 : vector<16x128xf32> to vector<1x16x128xf32>
    tpu.vector_store %arg7[%c1_123, %c0_124, %c0_125], %274 {strides = array<i32>} : memref<2x16x128xf32, #tpu.memory_space<vmem>>, vector<1x16x128xf32>,
    %c1_126 = arith.constant 1 : index
    %c0_127 = arith.constant 0 : index
    %c0_128 = arith.constant 0 : index
    %275 = vector.load %arg8[%c1_126, %c0_127, %c0_128] : memref<2x16x128xf32, #tpu.memory_space<vmem>>, vector<1x16x128xf32>
    %276 = vector.shape_cast %275 : vector<1x16x128xf32> to vector<16x128xf32>
    %277 = vector.shape_cast %269 : vector<16x128xf32> to vector<1x16x128xf32>
    tpu.vector_store %arg8[%c1_126, %c0_127, %c0_128], %277 {strides = array<i32>} : memref<2x16x128xf32, #tpu.memory_space<vmem>>, vector<1x16x128xf32>,
    %278 = arith.truncf %271 : vector<16x128xf32> to vector<16x128xbf16>
    %279 = arith.index_cast %192 : i32 to index
    %c0_129 = arith.constant 0 : index
    %c0_130 = arith.constant 0 : index
    %280 = vector.load %arg6[%279, %c0_129, %c0_130] : memref<8x16x128xbf16, #tpu.memory_space<vmem>>, vector<1x16x128xbf16>
    %281 = vector.shape_cast %280 : vector<1x16x128xbf16> to vector<16x128xbf16>
    %282 = vector.shape_cast %278 : vector<16x128xbf16> to vector<1x16x128xbf16>
    tpu.vector_store %arg6[%279, %c0_129, %c0_130], %282 {strides = array<i32>} : memref<8x16x128xbf16, #tpu.memory_space<vmem>>, vector<1x16x128xbf16>,
    %c3_i32 = arith.constant 3 : i32
    %c1_i32_131 = arith.constant 1 : i32
    %283 = arith.muli %c3_i32, %c1_i32_131 : i32
    %c0_i32_132 = arith.constant 0 : i32
    %284 = arith.addi %c0_i32_132, %283 : i32
    %285 = arith.index_cast %284 : i32 to index
    %c0_133 = arith.constant 0 : index
    %c0_134 = arith.constant 0 : index
    %286 = vector.load %arg2[%285, %c0_133, %c0_134] : memref<8x16x512xbf16, #tpu.memory_space<vmem>>, vector<1x16x512xbf16>
    %287 = vector.shape_cast %286 : vector<1x16x512xbf16> to vector<16x512xbf16>
    %288 = arith.extf %287 : vector<16x512xbf16> to vector<16x512xf32>
    %c0_135 = arith.constant 0 : index
    %c0_136 = arith.constant 0 : index
    %c0_137 = arith.constant 0 : index
    %289 = vector.load %arg7[%c0_135, %c0_136, %c0_137] : memref<2x16x128xf32, #tpu.memory_space<vmem>>, vector<1x16x128xf32>
    %290 = vector.shape_cast %289 : vector<1x16x128xf32> to vector<16x128xf32>
    %291 = arith.truncf %290 : vector<16x128xf32> to vector<16x128xbf16>
    %c0_138 = arith.constant 0 : index
    %c0_139 = arith.constant 0 : index
    %292 = vector.load %arg3[%c0_138, %c0_139] : memref<128x512xbf16, #tpu.memory_space<vmem>>, vector<128x512xbf16>
    %cst_140 = arith.constant dense<0.000000e+00> : vector<16x512xf32>
    %293 = tpu.matmul %291, %292, %cst_140 {dimension_numbers = #tpu.dot_dimension_numbers<[1], [0], [0], [1], [0, 0, 1, 1], [], []>} : vector<16x128xbf16>, vector<128x512xbf16>, vector<16x512xf32> -> vector<16x512xf32>
    %294 = arith.addf %288, %293 : vector<16x512xf32>
    %c0_141 = arith.constant 0 : index
    %c0_142 = arith.constant 0 : index
    %c0_143 = arith.constant 0 : index
    %295 = vector.load %arg8[%c0_141, %c0_142, %c0_143] : memref<2x16x128xf32, #tpu.memory_space<vmem>>, vector<1x16x128xf32>
    %296 = vector.shape_cast %295 : vector<1x16x128xf32> to vector<16x128xf32>
    %297 = vector.extract_strided_slice %294 {offsets = [0, 0], sizes = [16, 128], strides = [1, 1]} : vector<16x512xf32> to vector<16x128xf32>
    %298 = arith.negf %297 : vector<16x128xf32>
    %299 = math.exp %298 : vector<16x128xf32>
    %cst_144 = arith.constant 1.000000e+00 : f32
    %300 = vector.broadcast %cst_144 : f32 to vector<16x128xf32>
    %301 = arith.addf %300, %299 : vector<16x128xf32>
    %302 = arith.divf %300, %301 : vector<16x128xf32>
    %303 = vector.extract_strided_slice %294 {offsets = [0, 128], sizes = [16, 128], strides = [1, 1]} : vector<16x512xf32> to vector<16x128xf32>
    %304 = arith.negf %303 : vector<16x128xf32>
    %305 = math.exp %304 : vector<16x128xf32>
    %cst_145 = arith.constant 1.000000e+00 : f32
    %306 = vector.broadcast %cst_145 : f32 to vector<16x128xf32>
    %307 = arith.addf %306, %305 : vector<16x128xf32>
    %308 = arith.divf %306, %307 : vector<16x128xf32>
    %309 = vector.extract_strided_slice %294 {offsets = [0, 256], sizes = [16, 128], strides = [1, 1]} : vector<16x512xf32> to vector<16x128xf32>
    %310 = math.tanh %309 : vector<16x128xf32>
    %311 = vector.extract_strided_slice %294 {offsets = [0, 384], sizes = [16, 128], strides = [1, 1]} : vector<16x512xf32> to vector<16x128xf32>
    %312 = arith.negf %311 : vector<16x128xf32>
    %313 = math.exp %312 : vector<16x128xf32>
    %cst_146 = arith.constant 1.000000e+00 : f32
    %314 = vector.broadcast %cst_146 : f32 to vector<16x128xf32>
    %315 = arith.addf %314, %313 : vector<16x128xf32>
    %316 = arith.divf %314, %315 : vector<16x128xf32>
    %317 = arith.mulf %308, %296 : vector<16x128xf32>
    %318 = arith.mulf %302, %310 : vector<16x128xf32>
    %319 = arith.addf %317, %318 : vector<16x128xf32>
    %320 = math.tanh %319 : vector<16x128xf32>
    %321 = arith.mulf %316, %320 : vector<16x128xf32>
    %c0_147 = arith.constant 0 : index
    %c0_148 = arith.constant 0 : index
    %c0_149 = arith.constant 0 : index
    %322 = vector.load %arg7[%c0_147, %c0_148, %c0_149] : memref<2x16x128xf32, #tpu.memory_space<vmem>>, vector<1x16x128xf32>
    %323 = vector.shape_cast %322 : vector<1x16x128xf32> to vector<16x128xf32>
    %324 = vector.shape_cast %321 : vector<16x128xf32> to vector<1x16x128xf32>
    tpu.vector_store %arg7[%c0_147, %c0_148, %c0_149], %324 {strides = array<i32>} : memref<2x16x128xf32, #tpu.memory_space<vmem>>, vector<1x16x128xf32>,
    %c0_150 = arith.constant 0 : index
    %c0_151 = arith.constant 0 : index
    %c0_152 = arith.constant 0 : index
    %325 = vector.load %arg8[%c0_150, %c0_151, %c0_152] : memref<2x16x128xf32, #tpu.memory_space<vmem>>, vector<1x16x128xf32>
    %326 = vector.shape_cast %325 : vector<1x16x128xf32> to vector<16x128xf32>
    %327 = vector.shape_cast %319 : vector<16x128xf32> to vector<1x16x128xf32>
    tpu.vector_store %arg8[%c0_150, %c0_151, %c0_152], %327 {strides = array<i32>} : memref<2x16x128xf32, #tpu.memory_space<vmem>>, vector<1x16x128xf32>,
    %328 = arith.truncf %321 : vector<16x128xf32> to vector<16x128xbf16>
    %c1_153 = arith.constant 1 : index
    %c0_154 = arith.constant 0 : index
    %c0_155 = arith.constant 0 : index
    %329 = vector.load %arg7[%c1_153, %c0_154, %c0_155] : memref<2x16x128xf32, #tpu.memory_space<vmem>>, vector<1x16x128xf32>
    %330 = vector.shape_cast %329 : vector<1x16x128xf32> to vector<16x128xf32>
    %331 = arith.truncf %330 : vector<16x128xf32> to vector<16x128xbf16>
    %332 = tpu.concatenate %328, %331 in 1 : vector<16x128xbf16>, vector<16x128xbf16> -> vector<16x256xbf16>
    %c0_156 = arith.constant 0 : index
    %c0_157 = arith.constant 0 : index
    %c0_158 = arith.constant 0 : index
    %333 = vector.load %arg4[%c0_156, %c0_157, %c0_158] : memref<1x256x512xbf16, #tpu.memory_space<vmem>>, vector<1x256x512xbf16>
    %334 = vector.shape_cast %333 : vector<1x256x512xbf16> to vector<256x512xbf16>
    %cst_159 = arith.constant dense<0.000000e+00> : vector<16x512xf32>
    %335 = tpu.matmul %332, %334, %cst_159 {dimension_numbers = #tpu.dot_dimension_numbers<[1], [0], [0], [1], [0, 0, 1, 1], [], []>} : vector<16x256xbf16>, vector<256x512xbf16>, vector<16x512xf32> -> vector<16x512xf32>
    %336 = arith.addf %335, %6 : vector<16x512xf32>
    %c1_160 = arith.constant 1 : index
    %c0_161 = arith.constant 0 : index
    %c0_162 = arith.constant 0 : index
    %337 = vector.load %arg8[%c1_160, %c0_161, %c0_162] : memref<2x16x128xf32, #tpu.memory_space<vmem>>, vector<1x16x128xf32>
    %338 = vector.shape_cast %337 : vector<1x16x128xf32> to vector<16x128xf32>
    %339 = vector.extract_strided_slice %336 {offsets = [0, 0], sizes = [16, 128], strides = [1, 1]} : vector<16x512xf32> to vector<16x128xf32>
    %340 = arith.negf %339 : vector<16x128xf32>
    %341 = math.exp %340 : vector<16x128xf32>
    %cst_163 = arith.constant 1.000000e+00 : f32
    %342 = vector.broadcast %cst_163 : f32 to vector<16x128xf32>
    %343 = arith.addf %342, %341 : vector<16x128xf32>
    %344 = arith.divf %342, %343 : vector<16x128xf32>
    %345 = vector.extract_strided_slice %336 {offsets = [0, 128], sizes = [16, 128], strides = [1, 1]} : vector<16x512xf32> to vector<16x128xf32>
    %346 = arith.negf %345 : vector<16x128xf32>
    %347 = math.exp %346 : vector<16x128xf32>
    %cst_164 = arith.constant 1.000000e+00 : f32
    %348 = vector.broadcast %cst_164 : f32 to vector<16x128xf32>
    %349 = arith.addf %348, %347 : vector<16x128xf32>
    %350 = arith.divf %348, %349 : vector<16x128xf32>
    %351 = vector.extract_strided_slice %336 {offsets = [0, 256], sizes = [16, 128], strides = [1, 1]} : vector<16x512xf32> to vector<16x128xf32>
    %352 = math.tanh %351 : vector<16x128xf32>
    %353 = vector.extract_strided_slice %336 {offsets = [0, 384], sizes = [16, 128], strides = [1, 1]} : vector<16x512xf32> to vector<16x128xf32>
    %354 = arith.negf %353 : vector<16x128xf32>
    %355 = math.exp %354 : vector<16x128xf32>
    %cst_165 = arith.constant 1.000000e+00 : f32
    %356 = vector.broadcast %cst_165 : f32 to vector<16x128xf32>
    %357 = arith.addf %356, %355 : vector<16x128xf32>
    %358 = arith.divf %356, %357 : vector<16x128xf32>
    %359 = arith.mulf %350, %338 : vector<16x128xf32>
    %360 = arith.mulf %344, %352 : vector<16x128xf32>
    %361 = arith.addf %359, %360 : vector<16x128xf32>
    %362 = math.tanh %361 : vector<16x128xf32>
    %363 = arith.mulf %358, %362 : vector<16x128xf32>
    %c1_166 = arith.constant 1 : index
    %c0_167 = arith.constant 0 : index
    %c0_168 = arith.constant 0 : index
    %364 = vector.load %arg7[%c1_166, %c0_167, %c0_168] : memref<2x16x128xf32, #tpu.memory_space<vmem>>, vector<1x16x128xf32>
    %365 = vector.shape_cast %364 : vector<1x16x128xf32> to vector<16x128xf32>
    %366 = vector.shape_cast %363 : vector<16x128xf32> to vector<1x16x128xf32>
    tpu.vector_store %arg7[%c1_166, %c0_167, %c0_168], %366 {strides = array<i32>} : memref<2x16x128xf32, #tpu.memory_space<vmem>>, vector<1x16x128xf32>,
    %c1_169 = arith.constant 1 : index
    %c0_170 = arith.constant 0 : index
    %c0_171 = arith.constant 0 : index
    %367 = vector.load %arg8[%c1_169, %c0_170, %c0_171] : memref<2x16x128xf32, #tpu.memory_space<vmem>>, vector<1x16x128xf32>
    %368 = vector.shape_cast %367 : vector<1x16x128xf32> to vector<16x128xf32>
    %369 = vector.shape_cast %361 : vector<16x128xf32> to vector<1x16x128xf32>
    tpu.vector_store %arg8[%c1_169, %c0_170, %c0_171], %369 {strides = array<i32>} : memref<2x16x128xf32, #tpu.memory_space<vmem>>, vector<1x16x128xf32>,
    %370 = arith.truncf %363 : vector<16x128xf32> to vector<16x128xbf16>
    %371 = arith.index_cast %284 : i32 to index
    %c0_172 = arith.constant 0 : index
    %c0_173 = arith.constant 0 : index
    %372 = vector.load %arg6[%371, %c0_172, %c0_173] : memref<8x16x128xbf16, #tpu.memory_space<vmem>>, vector<1x16x128xbf16>
    %373 = vector.shape_cast %372 : vector<1x16x128xbf16> to vector<16x128xbf16>
    %374 = vector.shape_cast %370 : vector<16x128xbf16> to vector<1x16x128xbf16>
    tpu.vector_store %arg6[%371, %c0_172, %c0_173], %374 {strides = array<i32>} : memref<8x16x128xbf16, #tpu.memory_space<vmem>>, vector<1x16x128xbf16>,
    %c4_i32 = arith.constant 4 : i32
    %c1_i32_174 = arith.constant 1 : i32
    %375 = arith.muli %c4_i32, %c1_i32_174 : i32
    %c0_i32_175 = arith.constant 0 : i32
    %376 = arith.addi %c0_i32_175, %375 : i32
    %377 = arith.index_cast %376 : i32 to index
    %c0_176 = arith.constant 0 : index
    %c0_177 = arith.constant 0 : index
    %378 = vector.load %arg2[%377, %c0_176, %c0_177] : memref<8x16x512xbf16, #tpu.memory_space<vmem>>, vector<1x16x512xbf16>
    %379 = vector.shape_cast %378 : vector<1x16x512xbf16> to vector<16x512xbf16>
    %380 = arith.extf %379 : vector<16x512xbf16> to vector<16x512xf32>
    %c0_178 = arith.constant 0 : index
    %c0_179 = arith.constant 0 : index
    %c0_180 = arith.constant 0 : index
    %381 = vector.load %arg7[%c0_178, %c0_179, %c0_180] : memref<2x16x128xf32, #tpu.memory_space<vmem>>, vector<1x16x128xf32>
    %382 = vector.shape_cast %381 : vector<1x16x128xf32> to vector<16x128xf32>
    %383 = arith.truncf %382 : vector<16x128xf32> to vector<16x128xbf16>
    %c0_181 = arith.constant 0 : index
    %c0_182 = arith.constant 0 : index
    %384 = vector.load %arg3[%c0_181, %c0_182] : memref<128x512xbf16, #tpu.memory_space<vmem>>, vector<128x512xbf16>
    %cst_183 = arith.constant dense<0.000000e+00> : vector<16x512xf32>
    %385 = tpu.matmul %383, %384, %cst_183 {dimension_numbers = #tpu.dot_dimension_numbers<[1], [0], [0], [1], [0, 0, 1, 1], [], []>} : vector<16x128xbf16>, vector<128x512xbf16>, vector<16x512xf32> -> vector<16x512xf32>
    %386 = arith.addf %380, %385 : vector<16x512xf32>
    %c0_184 = arith.constant 0 : index
    %c0_185 = arith.constant 0 : index
    %c0_186 = arith.constant 0 : index
    %387 = vector.load %arg8[%c0_184, %c0_185, %c0_186] : memref<2x16x128xf32, #tpu.memory_space<vmem>>, vector<1x16x128xf32>
    %388 = vector.shape_cast %387 : vector<1x16x128xf32> to vector<16x128xf32>
    %389 = vector.extract_strided_slice %386 {offsets = [0, 0], sizes = [16, 128], strides = [1, 1]} : vector<16x512xf32> to vector<16x128xf32>
    %390 = arith.negf %389 : vector<16x128xf32>
    %391 = math.exp %390 : vector<16x128xf32>
    %cst_187 = arith.constant 1.000000e+00 : f32
    %392 = vector.broadcast %cst_187 : f32 to vector<16x128xf32>
    %393 = arith.addf %392, %391 : vector<16x128xf32>
    %394 = arith.divf %392, %393 : vector<16x128xf32>
    %395 = vector.extract_strided_slice %386 {offsets = [0, 128], sizes = [16, 128], strides = [1, 1]} : vector<16x512xf32> to vector<16x128xf32>
    %396 = arith.negf %395 : vector<16x128xf32>
    %397 = math.exp %396 : vector<16x128xf32>
    %cst_188 = arith.constant 1.000000e+00 : f32
    %398 = vector.broadcast %cst_188 : f32 to vector<16x128xf32>
    %399 = arith.addf %398, %397 : vector<16x128xf32>
    %400 = arith.divf %398, %399 : vector<16x128xf32>
    %401 = vector.extract_strided_slice %386 {offsets = [0, 256], sizes = [16, 128], strides = [1, 1]} : vector<16x512xf32> to vector<16x128xf32>
    %402 = math.tanh %401 : vector<16x128xf32>
    %403 = vector.extract_strided_slice %386 {offsets = [0, 384], sizes = [16, 128], strides = [1, 1]} : vector<16x512xf32> to vector<16x128xf32>
    %404 = arith.negf %403 : vector<16x128xf32>
    %405 = math.exp %404 : vector<16x128xf32>
    %cst_189 = arith.constant 1.000000e+00 : f32
    %406 = vector.broadcast %cst_189 : f32 to vector<16x128xf32>
    %407 = arith.addf %406, %405 : vector<16x128xf32>
    %408 = arith.divf %406, %407 : vector<16x128xf32>
    %409 = arith.mulf %400, %388 : vector<16x128xf32>
    %410 = arith.mulf %394, %402 : vector<16x128xf32>
    %411 = arith.addf %409, %410 : vector<16x128xf32>
    %412 = math.tanh %411 : vector<16x128xf32>
    %413 = arith.mulf %408, %412 : vector<16x128xf32>
    %c0_190 = arith.constant 0 : index
    %c0_191 = arith.constant 0 : index
    %c0_192 = arith.constant 0 : index
    %414 = vector.load %arg7[%c0_190, %c0_191, %c0_192] : memref<2x16x128xf32, #tpu.memory_space<vmem>>, vector<1x16x128xf32>
    %415 = vector.shape_cast %414 : vector<1x16x128xf32> to vector<16x128xf32>
    %416 = vector.shape_cast %413 : vector<16x128xf32> to vector<1x16x128xf32>
    tpu.vector_store %arg7[%c0_190, %c0_191, %c0_192], %416 {strides = array<i32>} : memref<2x16x128xf32, #tpu.memory_space<vmem>>, vector<1x16x128xf32>,
    %c0_193 = arith.constant 0 : index
    %c0_194 = arith.constant 0 : index
    %c0_195 = arith.constant 0 : index
    %417 = vector.load %arg8[%c0_193, %c0_194, %c0_195] : memref<2x16x128xf32, #tpu.memory_space<vmem>>, vector<1x16x128xf32>
    %418 = vector.shape_cast %417 : vector<1x16x128xf32> to vector<16x128xf32>
    %419 = vector.shape_cast %411 : vector<16x128xf32> to vector<1x16x128xf32>
    tpu.vector_store %arg8[%c0_193, %c0_194, %c0_195], %419 {strides = array<i32>} : memref<2x16x128xf32, #tpu.memory_space<vmem>>, vector<1x16x128xf32>,
    %420 = arith.truncf %413 : vector<16x128xf32> to vector<16x128xbf16>
    %c1_196 = arith.constant 1 : index
    %c0_197 = arith.constant 0 : index
    %c0_198 = arith.constant 0 : index
    %421 = vector.load %arg7[%c1_196, %c0_197, %c0_198] : memref<2x16x128xf32, #tpu.memory_space<vmem>>, vector<1x16x128xf32>
    %422 = vector.shape_cast %421 : vector<1x16x128xf32> to vector<16x128xf32>
    %423 = arith.truncf %422 : vector<16x128xf32> to vector<16x128xbf16>
    %424 = tpu.concatenate %420, %423 in 1 : vector<16x128xbf16>, vector<16x128xbf16> -> vector<16x256xbf16>
    %c0_199 = arith.constant 0 : index
    %c0_200 = arith.constant 0 : index
    %c0_201 = arith.constant 0 : index
    %425 = vector.load %arg4[%c0_199, %c0_200, %c0_201] : memref<1x256x512xbf16, #tpu.memory_space<vmem>>, vector<1x256x512xbf16>
    %426 = vector.shape_cast %425 : vector<1x256x512xbf16> to vector<256x512xbf16>
    %cst_202 = arith.constant dense<0.000000e+00> : vector<16x512xf32>
    %427 = tpu.matmul %424, %426, %cst_202 {dimension_numbers = #tpu.dot_dimension_numbers<[1], [0], [0], [1], [0, 0, 1, 1], [], []>} : vector<16x256xbf16>, vector<256x512xbf16>, vector<16x512xf32> -> vector<16x512xf32>
    %428 = arith.addf %427, %6 : vector<16x512xf32>
    %c1_203 = arith.constant 1 : index
    %c0_204 = arith.constant 0 : index
    %c0_205 = arith.constant 0 : index
    %429 = vector.load %arg8[%c1_203, %c0_204, %c0_205] : memref<2x16x128xf32, #tpu.memory_space<vmem>>, vector<1x16x128xf32>
    %430 = vector.shape_cast %429 : vector<1x16x128xf32> to vector<16x128xf32>
    %431 = vector.extract_strided_slice %428 {offsets = [0, 0], sizes = [16, 128], strides = [1, 1]} : vector<16x512xf32> to vector<16x128xf32>
    %432 = arith.negf %431 : vector<16x128xf32>
    %433 = math.exp %432 : vector<16x128xf32>
    %cst_206 = arith.constant 1.000000e+00 : f32
    %434 = vector.broadcast %cst_206 : f32 to vector<16x128xf32>
    %435 = arith.addf %434, %433 : vector<16x128xf32>
    %436 = arith.divf %434, %435 : vector<16x128xf32>
    %437 = vector.extract_strided_slice %428 {offsets = [0, 128], sizes = [16, 128], strides = [1, 1]} : vector<16x512xf32> to vector<16x128xf32>
    %438 = arith.negf %437 : vector<16x128xf32>
    %439 = math.exp %438 : vector<16x128xf32>
    %cst_207 = arith.constant 1.000000e+00 : f32
    %440 = vector.broadcast %cst_207 : f32 to vector<16x128xf32>
    %441 = arith.addf %440, %439 : vector<16x128xf32>
    %442 = arith.divf %440, %441 : vector<16x128xf32>
    %443 = vector.extract_strided_slice %428 {offsets = [0, 256], sizes = [16, 128], strides = [1, 1]} : vector<16x512xf32> to vector<16x128xf32>
    %444 = math.tanh %443 : vector<16x128xf32>
    %445 = vector.extract_strided_slice %428 {offsets = [0, 384], sizes = [16, 128], strides = [1, 1]} : vector<16x512xf32> to vector<16x128xf32>
    %446 = arith.negf %445 : vector<16x128xf32>
    %447 = math.exp %446 : vector<16x128xf32>
    %cst_208 = arith.constant 1.000000e+00 : f32
    %448 = vector.broadcast %cst_208 : f32 to vector<16x128xf32>
    %449 = arith.addf %448, %447 : vector<16x128xf32>
    %450 = arith.divf %448, %449 : vector<16x128xf32>
    %451 = arith.mulf %442, %430 : vector<16x128xf32>
    %452 = arith.mulf %436, %444 : vector<16x128xf32>
    %453 = arith.addf %451, %452 : vector<16x128xf32>
    %454 = math.tanh %453 : vector<16x128xf32>
    %455 = arith.mulf %450, %454 : vector<16x128xf32>
    %c1_209 = arith.constant 1 : index
    %c0_210 = arith.constant 0 : index
    %c0_211 = arith.constant 0 : index
    %456 = vector.load %arg7[%c1_209, %c0_210, %c0_211] : memref<2x16x128xf32, #tpu.memory_space<vmem>>, vector<1x16x128xf32>
    %457 = vector.shape_cast %456 : vector<1x16x128xf32> to vector<16x128xf32>
    %458 = vector.shape_cast %455 : vector<16x128xf32> to vector<1x16x128xf32>
    tpu.vector_store %arg7[%c1_209, %c0_210, %c0_211], %458 {strides = array<i32>} : memref<2x16x128xf32, #tpu.memory_space<vmem>>, vector<1x16x128xf32>,
    %c1_212 = arith.constant 1 : index
    %c0_213 = arith.constant 0 : index
    %c0_214 = arith.constant 0 : index
    %459 = vector.load %arg8[%c1_212, %c0_213, %c0_214] : memref<2x16x128xf32, #tpu.memory_space<vmem>>, vector<1x16x128xf32>
    %460 = vector.shape_cast %459 : vector<1x16x128xf32> to vector<16x128xf32>
    %461 = vector.shape_cast %453 : vector<16x128xf32> to vector<1x16x128xf32>
    tpu.vector_store %arg8[%c1_212, %c0_213, %c0_214], %461 {strides = array<i32>} : memref<2x16x128xf32, #tpu.memory_space<vmem>>, vector<1x16x128xf32>,
    %462 = arith.truncf %455 : vector<16x128xf32> to vector<16x128xbf16>
    %463 = arith.index_cast %376 : i32 to index
    %c0_215 = arith.constant 0 : index
    %c0_216 = arith.constant 0 : index
    %464 = vector.load %arg6[%463, %c0_215, %c0_216] : memref<8x16x128xbf16, #tpu.memory_space<vmem>>, vector<1x16x128xbf16>
    %465 = vector.shape_cast %464 : vector<1x16x128xbf16> to vector<16x128xbf16>
    %466 = vector.shape_cast %462 : vector<16x128xbf16> to vector<1x16x128xbf16>
    tpu.vector_store %arg6[%463, %c0_215, %c0_216], %466 {strides = array<i32>} : memref<8x16x128xbf16, #tpu.memory_space<vmem>>, vector<1x16x128xbf16>,
    %c5_i32 = arith.constant 5 : i32
    %c1_i32_217 = arith.constant 1 : i32
    %467 = arith.muli %c5_i32, %c1_i32_217 : i32
    %c0_i32_218 = arith.constant 0 : i32
    %468 = arith.addi %c0_i32_218, %467 : i32
    %469 = arith.index_cast %468 : i32 to index
    %c0_219 = arith.constant 0 : index
    %c0_220 = arith.constant 0 : index
    %470 = vector.load %arg2[%469, %c0_219, %c0_220] : memref<8x16x512xbf16, #tpu.memory_space<vmem>>, vector<1x16x512xbf16>
    %471 = vector.shape_cast %470 : vector<1x16x512xbf16> to vector<16x512xbf16>
    %472 = arith.extf %471 : vector<16x512xbf16> to vector<16x512xf32>
    %c0_221 = arith.constant 0 : index
    %c0_222 = arith.constant 0 : index
    %c0_223 = arith.constant 0 : index
    %473 = vector.load %arg7[%c0_221, %c0_222, %c0_223] : memref<2x16x128xf32, #tpu.memory_space<vmem>>, vector<1x16x128xf32>
    %474 = vector.shape_cast %473 : vector<1x16x128xf32> to vector<16x128xf32>
    %475 = arith.truncf %474 : vector<16x128xf32> to vector<16x128xbf16>
    %c0_224 = arith.constant 0 : index
    %c0_225 = arith.constant 0 : index
    %476 = vector.load %arg3[%c0_224, %c0_225] : memref<128x512xbf16, #tpu.memory_space<vmem>>, vector<128x512xbf16>
    %cst_226 = arith.constant dense<0.000000e+00> : vector<16x512xf32>
    %477 = tpu.matmul %475, %476, %cst_226 {dimension_numbers = #tpu.dot_dimension_numbers<[1], [0], [0], [1], [0, 0, 1, 1], [], []>} : vector<16x128xbf16>, vector<128x512xbf16>, vector<16x512xf32> -> vector<16x512xf32>
    %478 = arith.addf %472, %477 : vector<16x512xf32>
    %c0_227 = arith.constant 0 : index
    %c0_228 = arith.constant 0 : index
    %c0_229 = arith.constant 0 : index
    %479 = vector.load %arg8[%c0_227, %c0_228, %c0_229] : memref<2x16x128xf32, #tpu.memory_space<vmem>>, vector<1x16x128xf32>
    %480 = vector.shape_cast %479 : vector<1x16x128xf32> to vector<16x128xf32>
    %481 = vector.extract_strided_slice %478 {offsets = [0, 0], sizes = [16, 128], strides = [1, 1]} : vector<16x512xf32> to vector<16x128xf32>
    %482 = arith.negf %481 : vector<16x128xf32>
    %483 = math.exp %482 : vector<16x128xf32>
    %cst_230 = arith.constant 1.000000e+00 : f32
    %484 = vector.broadcast %cst_230 : f32 to vector<16x128xf32>
    %485 = arith.addf %484, %483 : vector<16x128xf32>
    %486 = arith.divf %484, %485 : vector<16x128xf32>
    %487 = vector.extract_strided_slice %478 {offsets = [0, 128], sizes = [16, 128], strides = [1, 1]} : vector<16x512xf32> to vector<16x128xf32>
    %488 = arith.negf %487 : vector<16x128xf32>
    %489 = math.exp %488 : vector<16x128xf32>
    %cst_231 = arith.constant 1.000000e+00 : f32
    %490 = vector.broadcast %cst_231 : f32 to vector<16x128xf32>
    %491 = arith.addf %490, %489 : vector<16x128xf32>
    %492 = arith.divf %490, %491 : vector<16x128xf32>
    %493 = vector.extract_strided_slice %478 {offsets = [0, 256], sizes = [16, 128], strides = [1, 1]} : vector<16x512xf32> to vector<16x128xf32>
    %494 = math.tanh %493 : vector<16x128xf32>
    %495 = vector.extract_strided_slice %478 {offsets = [0, 384], sizes = [16, 128], strides = [1, 1]} : vector<16x512xf32> to vector<16x128xf32>
    %496 = arith.negf %495 : vector<16x128xf32>
    %497 = math.exp %496 : vector<16x128xf32>
    %cst_232 = arith.constant 1.000000e+00 : f32
    %498 = vector.broadcast %cst_232 : f32 to vector<16x128xf32>
    %499 = arith.addf %498, %497 : vector<16x128xf32>
    %500 = arith.divf %498, %499 : vector<16x128xf32>
    %501 = arith.mulf %492, %480 : vector<16x128xf32>
    %502 = arith.mulf %486, %494 : vector<16x128xf32>
    %503 = arith.addf %501, %502 : vector<16x128xf32>
    %504 = math.tanh %503 : vector<16x128xf32>
    %505 = arith.mulf %500, %504 : vector<16x128xf32>
    %c0_233 = arith.constant 0 : index
    %c0_234 = arith.constant 0 : index
    %c0_235 = arith.constant 0 : index
    %506 = vector.load %arg7[%c0_233, %c0_234, %c0_235] : memref<2x16x128xf32, #tpu.memory_space<vmem>>, vector<1x16x128xf32>
    %507 = vector.shape_cast %506 : vector<1x16x128xf32> to vector<16x128xf32>
    %508 = vector.shape_cast %505 : vector<16x128xf32> to vector<1x16x128xf32>
    tpu.vector_store %arg7[%c0_233, %c0_234, %c0_235], %508 {strides = array<i32>} : memref<2x16x128xf32, #tpu.memory_space<vmem>>, vector<1x16x128xf32>,
    %c0_236 = arith.constant 0 : index
    %c0_237 = arith.constant 0 : index
    %c0_238 = arith.constant 0 : index
    %509 = vector.load %arg8[%c0_236, %c0_237, %c0_238] : memref<2x16x128xf32, #tpu.memory_space<vmem>>, vector<1x16x128xf32>
    %510 = vector.shape_cast %509 : vector<1x16x128xf32> to vector<16x128xf32>
    %511 = vector.shape_cast %503 : vector<16x128xf32> to vector<1x16x128xf32>
    tpu.vector_store %arg8[%c0_236, %c0_237, %c0_238], %511 {strides = array<i32>} : memref<2x16x128xf32, #tpu.memory_space<vmem>>, vector<1x16x128xf32>,
    %512 = arith.truncf %505 : vector<16x128xf32> to vector<16x128xbf16>
    %c1_239 = arith.constant 1 : index
    %c0_240 = arith.constant 0 : index
    %c0_241 = arith.constant 0 : index
    %513 = vector.load %arg7[%c1_239, %c0_240, %c0_241] : memref<2x16x128xf32, #tpu.memory_space<vmem>>, vector<1x16x128xf32>
    %514 = vector.shape_cast %513 : vector<1x16x128xf32> to vector<16x128xf32>
    %515 = arith.truncf %514 : vector<16x128xf32> to vector<16x128xbf16>
    %516 = tpu.concatenate %512, %515 in 1 : vector<16x128xbf16>, vector<16x128xbf16> -> vector<16x256xbf16>
    %c0_242 = arith.constant 0 : index
    %c0_243 = arith.constant 0 : index
    %c0_244 = arith.constant 0 : index
    %517 = vector.load %arg4[%c0_242, %c0_243, %c0_244] : memref<1x256x512xbf16, #tpu.memory_space<vmem>>, vector<1x256x512xbf16>
    %518 = vector.shape_cast %517 : vector<1x256x512xbf16> to vector<256x512xbf16>
    %cst_245 = arith.constant dense<0.000000e+00> : vector<16x512xf32>
    %519 = tpu.matmul %516, %518, %cst_245 {dimension_numbers = #tpu.dot_dimension_numbers<[1], [0], [0], [1], [0, 0, 1, 1], [], []>} : vector<16x256xbf16>, vector<256x512xbf16>, vector<16x512xf32> -> vector<16x512xf32>
    %520 = arith.addf %519, %6 : vector<16x512xf32>
    %c1_246 = arith.constant 1 : index
    %c0_247 = arith.constant 0 : index
    %c0_248 = arith.constant 0 : index
    %521 = vector.load %arg8[%c1_246, %c0_247, %c0_248] : memref<2x16x128xf32, #tpu.memory_space<vmem>>, vector<1x16x128xf32>
    %522 = vector.shape_cast %521 : vector<1x16x128xf32> to vector<16x128xf32>
    %523 = vector.extract_strided_slice %520 {offsets = [0, 0], sizes = [16, 128], strides = [1, 1]} : vector<16x512xf32> to vector<16x128xf32>
    %524 = arith.negf %523 : vector<16x128xf32>
    %525 = math.exp %524 : vector<16x128xf32>
    %cst_249 = arith.constant 1.000000e+00 : f32
    %526 = vector.broadcast %cst_249 : f32 to vector<16x128xf32>
    %527 = arith.addf %526, %525 : vector<16x128xf32>
    %528 = arith.divf %526, %527 : vector<16x128xf32>
    %529 = vector.extract_strided_slice %520 {offsets = [0, 128], sizes = [16, 128], strides = [1, 1]} : vector<16x512xf32> to vector<16x128xf32>
    %530 = arith.negf %529 : vector<16x128xf32>
    %531 = math.exp %530 : vector<16x128xf32>
    %cst_250 = arith.constant 1.000000e+00 : f32
    %532 = vector.broadcast %cst_250 : f32 to vector<16x128xf32>
    %533 = arith.addf %532, %531 : vector<16x128xf32>
    %534 = arith.divf %532, %533 : vector<16x128xf32>
    %535 = vector.extract_strided_slice %520 {offsets = [0, 256], sizes = [16, 128], strides = [1, 1]} : vector<16x512xf32> to vector<16x128xf32>
    %536 = math.tanh %535 : vector<16x128xf32>
    %537 = vector.extract_strided_slice %520 {offsets = [0, 384], sizes = [16, 128], strides = [1, 1]} : vector<16x512xf32> to vector<16x128xf32>
    %538 = arith.negf %537 : vector<16x128xf32>
    %539 = math.exp %538 : vector<16x128xf32>
    %cst_251 = arith.constant 1.000000e+00 : f32
    %540 = vector.broadcast %cst_251 : f32 to vector<16x128xf32>
    %541 = arith.addf %540, %539 : vector<16x128xf32>
    %542 = arith.divf %540, %541 : vector<16x128xf32>
    %543 = arith.mulf %534, %522 : vector<16x128xf32>
    %544 = arith.mulf %528, %536 : vector<16x128xf32>
    %545 = arith.addf %543, %544 : vector<16x128xf32>
    %546 = math.tanh %545 : vector<16x128xf32>
    %547 = arith.mulf %542, %546 : vector<16x128xf32>
    %c1_252 = arith.constant 1 : index
    %c0_253 = arith.constant 0 : index
    %c0_254 = arith.constant 0 : index
    %548 = vector.load %arg7[%c1_252, %c0_253, %c0_254] : memref<2x16x128xf32, #tpu.memory_space<vmem>>, vector<1x16x128xf32>
    %549 = vector.shape_cast %548 : vector<1x16x128xf32> to vector<16x128xf32>
    %550 = vector.shape_cast %547 : vector<16x128xf32> to vector<1x16x128xf32>
    tpu.vector_store %arg7[%c1_252, %c0_253, %c0_254], %550 {strides = array<i32>} : memref<2x16x128xf32, #tpu.memory_space<vmem>>, vector<1x16x128xf32>,
    %c1_255 = arith.constant 1 : index
    %c0_256 = arith.constant 0 : index
    %c0_257 = arith.constant 0 : index
    %551 = vector.load %arg8[%c1_255, %c0_256, %c0_257] : memref<2x16x128xf32, #tpu.memory_space<vmem>>, vector<1x16x128xf32>
    %552 = vector.shape_cast %551 : vector<1x16x128xf32> to vector<16x128xf32>
    %553 = vector.shape_cast %545 : vector<16x128xf32> to vector<1x16x128xf32>
    tpu.vector_store %arg8[%c1_255, %c0_256, %c0_257], %553 {strides = array<i32>} : memref<2x16x128xf32, #tpu.memory_space<vmem>>, vector<1x16x128xf32>,
    %554 = arith.truncf %547 : vector<16x128xf32> to vector<16x128xbf16>
    %555 = arith.index_cast %468 : i32 to index
    %c0_258 = arith.constant 0 : index
    %c0_259 = arith.constant 0 : index
    %556 = vector.load %arg6[%555, %c0_258, %c0_259] : memref<8x16x128xbf16, #tpu.memory_space<vmem>>, vector<1x16x128xbf16>
    %557 = vector.shape_cast %556 : vector<1x16x128xbf16> to vector<16x128xbf16>
    %558 = vector.shape_cast %554 : vector<16x128xbf16> to vector<1x16x128xbf16>
    tpu.vector_store %arg6[%555, %c0_258, %c0_259], %558 {strides = array<i32>} : memref<8x16x128xbf16, #tpu.memory_space<vmem>>, vector<1x16x128xbf16>,
    %c6_i32 = arith.constant 6 : i32
    %c1_i32_260 = arith.constant 1 : i32
    %559 = arith.muli %c6_i32, %c1_i32_260 : i32
    %c0_i32_261 = arith.constant 0 : i32
    %560 = arith.addi %c0_i32_261, %559 : i32
    %561 = arith.index_cast %560 : i32 to index
    %c0_262 = arith.constant 0 : index
    %c0_263 = arith.constant 0 : index
    %562 = vector.load %arg2[%561, %c0_262, %c0_263] : memref<8x16x512xbf16, #tpu.memory_space<vmem>>, vector<1x16x512xbf16>
    %563 = vector.shape_cast %562 : vector<1x16x512xbf16> to vector<16x512xbf16>
    %564 = arith.extf %563 : vector<16x512xbf16> to vector<16x512xf32>
    %c0_264 = arith.constant 0 : index
    %c0_265 = arith.constant 0 : index
    %c0_266 = arith.constant 0 : index
    %565 = vector.load %arg7[%c0_264, %c0_265, %c0_266] : memref<2x16x128xf32, #tpu.memory_space<vmem>>, vector<1x16x128xf32>
    %566 = vector.shape_cast %565 : vector<1x16x128xf32> to vector<16x128xf32>
    %567 = arith.truncf %566 : vector<16x128xf32> to vector<16x128xbf16>
    %c0_267 = arith.constant 0 : index
    %c0_268 = arith.constant 0 : index
    %568 = vector.load %arg3[%c0_267, %c0_268] : memref<128x512xbf16, #tpu.memory_space<vmem>>, vector<128x512xbf16>
    %cst_269 = arith.constant dense<0.000000e+00> : vector<16x512xf32>
    %569 = tpu.matmul %567, %568, %cst_269 {dimension_numbers = #tpu.dot_dimension_numbers<[1], [0], [0], [1], [0, 0, 1, 1], [], []>} : vector<16x128xbf16>, vector<128x512xbf16>, vector<16x512xf32> -> vector<16x512xf32>
    %570 = arith.addf %564, %569 : vector<16x512xf32>
    %c0_270 = arith.constant 0 : index
    %c0_271 = arith.constant 0 : index
    %c0_272 = arith.constant 0 : index
    %571 = vector.load %arg8[%c0_270, %c0_271, %c0_272] : memref<2x16x128xf32, #tpu.memory_space<vmem>>, vector<1x16x128xf32>
    %572 = vector.shape_cast %571 : vector<1x16x128xf32> to vector<16x128xf32>
    %573 = vector.extract_strided_slice %570 {offsets = [0, 0], sizes = [16, 128], strides = [1, 1]} : vector<16x512xf32> to vector<16x128xf32>
    %574 = arith.negf %573 : vector<16x128xf32>
    %575 = math.exp %574 : vector<16x128xf32>
    %cst_273 = arith.constant 1.000000e+00 : f32
    %576 = vector.broadcast %cst_273 : f32 to vector<16x128xf32>
    %577 = arith.addf %576, %575 : vector<16x128xf32>
    %578 = arith.divf %576, %577 : vector<16x128xf32>
    %579 = vector.extract_strided_slice %570 {offsets = [0, 128], sizes = [16, 128], strides = [1, 1]} : vector<16x512xf32> to vector<16x128xf32>
    %580 = arith.negf %579 : vector<16x128xf32>
    %581 = math.exp %580 : vector<16x128xf32>
    %cst_274 = arith.constant 1.000000e+00 : f32
    %582 = vector.broadcast %cst_274 : f32 to vector<16x128xf32>
    %583 = arith.addf %582, %581 : vector<16x128xf32>
    %584 = arith.divf %582, %583 : vector<16x128xf32>
    %585 = vector.extract_strided_slice %570 {offsets = [0, 256], sizes = [16, 128], strides = [1, 1]} : vector<16x512xf32> to vector<16x128xf32>
    %586 = math.tanh %585 : vector<16x128xf32>
    %587 = vector.extract_strided_slice %570 {offsets = [0, 384], sizes = [16, 128], strides = [1, 1]} : vector<16x512xf32> to vector<16x128xf32>
    %588 = arith.negf %587 : vector<16x128xf32>
    %589 = math.exp %588 : vector<16x128xf32>
    %cst_275 = arith.constant 1.000000e+00 : f32
    %590 = vector.broadcast %cst_275 : f32 to vector<16x128xf32>
    %591 = arith.addf %590, %589 : vector<16x128xf32>
    %592 = arith.divf %590, %591 : vector<16x128xf32>
    %593 = arith.mulf %584, %572 : vector<16x128xf32>
    %594 = arith.mulf %578, %586 : vector<16x128xf32>
    %595 = arith.addf %593, %594 : vector<16x128xf32>
    %596 = math.tanh %595 : vector<16x128xf32>
    %597 = arith.mulf %592, %596 : vector<16x128xf32>
    %c0_276 = arith.constant 0 : index
    %c0_277 = arith.constant 0 : index
    %c0_278 = arith.constant 0 : index
    %598 = vector.load %arg7[%c0_276, %c0_277, %c0_278] : memref<2x16x128xf32, #tpu.memory_space<vmem>>, vector<1x16x128xf32>
    %599 = vector.shape_cast %598 : vector<1x16x128xf32> to vector<16x128xf32>
    %600 = vector.shape_cast %597 : vector<16x128xf32> to vector<1x16x128xf32>
    tpu.vector_store %arg7[%c0_276, %c0_277, %c0_278], %600 {strides = array<i32>} : memref<2x16x128xf32, #tpu.memory_space<vmem>>, vector<1x16x128xf32>,
    %c0_279 = arith.constant 0 : index
    %c0_280 = arith.constant 0 : index
    %c0_281 = arith.constant 0 : index
    %601 = vector.load %arg8[%c0_279, %c0_280, %c0_281] : memref<2x16x128xf32, #tpu.memory_space<vmem>>, vector<1x16x128xf32>
    %602 = vector.shape_cast %601 : vector<1x16x128xf32> to vector<16x128xf32>
    %603 = vector.shape_cast %595 : vector<16x128xf32> to vector<1x16x128xf32>
    tpu.vector_store %arg8[%c0_279, %c0_280, %c0_281], %603 {strides = array<i32>} : memref<2x16x128xf32, #tpu.memory_space<vmem>>, vector<1x16x128xf32>,
    %604 = arith.truncf %597 : vector<16x128xf32> to vector<16x128xbf16>
    %c1_282 = arith.constant 1 : index
    %c0_283 = arith.constant 0 : index
    %c0_284 = arith.constant 0 : index
    %605 = vector.load %arg7[%c1_282, %c0_283, %c0_284] : memref<2x16x128xf32, #tpu.memory_space<vmem>>, vector<1x16x128xf32>
    %606 = vector.shape_cast %605 : vector<1x16x128xf32> to vector<16x128xf32>
    %607 = arith.truncf %606 : vector<16x128xf32> to vector<16x128xbf16>
    %608 = tpu.concatenate %604, %607 in 1 : vector<16x128xbf16>, vector<16x128xbf16> -> vector<16x256xbf16>
    %c0_285 = arith.constant 0 : index
    %c0_286 = arith.constant 0 : index
    %c0_287 = arith.constant 0 : index
    %609 = vector.load %arg4[%c0_285, %c0_286, %c0_287] : memref<1x256x512xbf16, #tpu.memory_space<vmem>>, vector<1x256x512xbf16>
    %610 = vector.shape_cast %609 : vector<1x256x512xbf16> to vector<256x512xbf16>
    %cst_288 = arith.constant dense<0.000000e+00> : vector<16x512xf32>
    %611 = tpu.matmul %608, %610, %cst_288 {dimension_numbers = #tpu.dot_dimension_numbers<[1], [0], [0], [1], [0, 0, 1, 1], [], []>} : vector<16x256xbf16>, vector<256x512xbf16>, vector<16x512xf32> -> vector<16x512xf32>
    %612 = arith.addf %611, %6 : vector<16x512xf32>
    %c1_289 = arith.constant 1 : index
    %c0_290 = arith.constant 0 : index
    %c0_291 = arith.constant 0 : index
    %613 = vector.load %arg8[%c1_289, %c0_290, %c0_291] : memref<2x16x128xf32, #tpu.memory_space<vmem>>, vector<1x16x128xf32>
    %614 = vector.shape_cast %613 : vector<1x16x128xf32> to vector<16x128xf32>
    %615 = vector.extract_strided_slice %612 {offsets = [0, 0], sizes = [16, 128], strides = [1, 1]} : vector<16x512xf32> to vector<16x128xf32>
    %616 = arith.negf %615 : vector<16x128xf32>
    %617 = math.exp %616 : vector<16x128xf32>
    %cst_292 = arith.constant 1.000000e+00 : f32
    %618 = vector.broadcast %cst_292 : f32 to vector<16x128xf32>
    %619 = arith.addf %618, %617 : vector<16x128xf32>
    %620 = arith.divf %618, %619 : vector<16x128xf32>
    %621 = vector.extract_strided_slice %612 {offsets = [0, 128], sizes = [16, 128], strides = [1, 1]} : vector<16x512xf32> to vector<16x128xf32>
    %622 = arith.negf %621 : vector<16x128xf32>
    %623 = math.exp %622 : vector<16x128xf32>
    %cst_293 = arith.constant 1.000000e+00 : f32
    %624 = vector.broadcast %cst_293 : f32 to vector<16x128xf32>
    %625 = arith.addf %624, %623 : vector<16x128xf32>
    %626 = arith.divf %624, %625 : vector<16x128xf32>
    %627 = vector.extract_strided_slice %612 {offsets = [0, 256], sizes = [16, 128], strides = [1, 1]} : vector<16x512xf32> to vector<16x128xf32>
    %628 = math.tanh %627 : vector<16x128xf32>
    %629 = vector.extract_strided_slice %612 {offsets = [0, 384], sizes = [16, 128], strides = [1, 1]} : vector<16x512xf32> to vector<16x128xf32>
    %630 = arith.negf %629 : vector<16x128xf32>
    %631 = math.exp %630 : vector<16x128xf32>
    %cst_294 = arith.constant 1.000000e+00 : f32
    %632 = vector.broadcast %cst_294 : f32 to vector<16x128xf32>
    %633 = arith.addf %632, %631 : vector<16x128xf32>
    %634 = arith.divf %632, %633 : vector<16x128xf32>
    %635 = arith.mulf %626, %614 : vector<16x128xf32>
    %636 = arith.mulf %620, %628 : vector<16x128xf32>
    %637 = arith.addf %635, %636 : vector<16x128xf32>
    %638 = math.tanh %637 : vector<16x128xf32>
    %639 = arith.mulf %634, %638 : vector<16x128xf32>
    %c1_295 = arith.constant 1 : index
    %c0_296 = arith.constant 0 : index
    %c0_297 = arith.constant 0 : index
    %640 = vector.load %arg7[%c1_295, %c0_296, %c0_297] : memref<2x16x128xf32, #tpu.memory_space<vmem>>, vector<1x16x128xf32>
    %641 = vector.shape_cast %640 : vector<1x16x128xf32> to vector<16x128xf32>
    %642 = vector.shape_cast %639 : vector<16x128xf32> to vector<1x16x128xf32>
    tpu.vector_store %arg7[%c1_295, %c0_296, %c0_297], %642 {strides = array<i32>} : memref<2x16x128xf32, #tpu.memory_space<vmem>>, vector<1x16x128xf32>,
    %c1_298 = arith.constant 1 : index
    %c0_299 = arith.constant 0 : index
    %c0_300 = arith.constant 0 : index
    %643 = vector.load %arg8[%c1_298, %c0_299, %c0_300] : memref<2x16x128xf32, #tpu.memory_space<vmem>>, vector<1x16x128xf32>
    %644 = vector.shape_cast %643 : vector<1x16x128xf32> to vector<16x128xf32>
    %645 = vector.shape_cast %637 : vector<16x128xf32> to vector<1x16x128xf32>
    tpu.vector_store %arg8[%c1_298, %c0_299, %c0_300], %645 {strides = array<i32>} : memref<2x16x128xf32, #tpu.memory_space<vmem>>, vector<1x16x128xf32>,
    %646 = arith.truncf %639 : vector<16x128xf32> to vector<16x128xbf16>
    %647 = arith.index_cast %560 : i32 to index
    %c0_301 = arith.constant 0 : index
    %c0_302 = arith.constant 0 : index
    %648 = vector.load %arg6[%647, %c0_301, %c0_302] : memref<8x16x128xbf16, #tpu.memory_space<vmem>>, vector<1x16x128xbf16>
    %649 = vector.shape_cast %648 : vector<1x16x128xbf16> to vector<16x128xbf16>
    %650 = vector.shape_cast %646 : vector<16x128xbf16> to vector<1x16x128xbf16>
    tpu.vector_store %arg6[%647, %c0_301, %c0_302], %650 {strides = array<i32>} : memref<8x16x128xbf16, #tpu.memory_space<vmem>>, vector<1x16x128xbf16>,
    %c7_i32 = arith.constant 7 : i32
    %c1_i32_303 = arith.constant 1 : i32
    %651 = arith.muli %c7_i32, %c1_i32_303 : i32
    %c0_i32_304 = arith.constant 0 : i32
    %652 = arith.addi %c0_i32_304, %651 : i32
    %653 = arith.index_cast %652 : i32 to index
    %c0_305 = arith.constant 0 : index
    %c0_306 = arith.constant 0 : index
    %654 = vector.load %arg2[%653, %c0_305, %c0_306] : memref<8x16x512xbf16, #tpu.memory_space<vmem>>, vector<1x16x512xbf16>
    %655 = vector.shape_cast %654 : vector<1x16x512xbf16> to vector<16x512xbf16>
    %656 = arith.extf %655 : vector<16x512xbf16> to vector<16x512xf32>
    %c0_307 = arith.constant 0 : index
    %c0_308 = arith.constant 0 : index
    %c0_309 = arith.constant 0 : index
    %657 = vector.load %arg7[%c0_307, %c0_308, %c0_309] : memref<2x16x128xf32, #tpu.memory_space<vmem>>, vector<1x16x128xf32>
    %658 = vector.shape_cast %657 : vector<1x16x128xf32> to vector<16x128xf32>
    %659 = arith.truncf %658 : vector<16x128xf32> to vector<16x128xbf16>
    %c0_310 = arith.constant 0 : index
    %c0_311 = arith.constant 0 : index
    %660 = vector.load %arg3[%c0_310, %c0_311] : memref<128x512xbf16, #tpu.memory_space<vmem>>, vector<128x512xbf16>
    %cst_312 = arith.constant dense<0.000000e+00> : vector<16x512xf32>
    %661 = tpu.matmul %659, %660, %cst_312 {dimension_numbers = #tpu.dot_dimension_numbers<[1], [0], [0], [1], [0, 0, 1, 1], [], []>} : vector<16x128xbf16>, vector<128x512xbf16>, vector<16x512xf32> -> vector<16x512xf32>
    %662 = arith.addf %656, %661 : vector<16x512xf32>
    %c0_313 = arith.constant 0 : index
    %c0_314 = arith.constant 0 : index
    %c0_315 = arith.constant 0 : index
    %663 = vector.load %arg8[%c0_313, %c0_314, %c0_315] : memref<2x16x128xf32, #tpu.memory_space<vmem>>, vector<1x16x128xf32>
    %664 = vector.shape_cast %663 : vector<1x16x128xf32> to vector<16x128xf32>
    %665 = vector.extract_strided_slice %662 {offsets = [0, 0], sizes = [16, 128], strides = [1, 1]} : vector<16x512xf32> to vector<16x128xf32>
    %666 = arith.negf %665 : vector<16x128xf32>
    %667 = math.exp %666 : vector<16x128xf32>
    %cst_316 = arith.constant 1.000000e+00 : f32
    %668 = vector.broadcast %cst_316 : f32 to vector<16x128xf32>
    %669 = arith.addf %668, %667 : vector<16x128xf32>
    %670 = arith.divf %668, %669 : vector<16x128xf32>
    %671 = vector.extract_strided_slice %662 {offsets = [0, 128], sizes = [16, 128], strides = [1, 1]} : vector<16x512xf32> to vector<16x128xf32>
    %672 = arith.negf %671 : vector<16x128xf32>
    %673 = math.exp %672 : vector<16x128xf32>
    %cst_317 = arith.constant 1.000000e+00 : f32
    %674 = vector.broadcast %cst_317 : f32 to vector<16x128xf32>
    %675 = arith.addf %674, %673 : vector<16x128xf32>
    %676 = arith.divf %674, %675 : vector<16x128xf32>
    %677 = vector.extract_strided_slice %662 {offsets = [0, 256], sizes = [16, 128], strides = [1, 1]} : vector<16x512xf32> to vector<16x128xf32>
    %678 = math.tanh %677 : vector<16x128xf32>
    %679 = vector.extract_strided_slice %662 {offsets = [0, 384], sizes = [16, 128], strides = [1, 1]} : vector<16x512xf32> to vector<16x128xf32>
    %680 = arith.negf %679 : vector<16x128xf32>
    %681 = math.exp %680 : vector<16x128xf32>
    %cst_318 = arith.constant 1.000000e+00 : f32
    %682 = vector.broadcast %cst_318 : f32 to vector<16x128xf32>
    %683 = arith.addf %682, %681 : vector<16x128xf32>
    %684 = arith.divf %682, %683 : vector<16x128xf32>
    %685 = arith.mulf %676, %664 : vector<16x128xf32>
    %686 = arith.mulf %670, %678 : vector<16x128xf32>
    %687 = arith.addf %685, %686 : vector<16x128xf32>
    %688 = math.tanh %687 : vector<16x128xf32>
    %689 = arith.mulf %684, %688 : vector<16x128xf32>
    %c0_319 = arith.constant 0 : index
    %c0_320 = arith.constant 0 : index
    %c0_321 = arith.constant 0 : index
    %690 = vector.load %arg7[%c0_319, %c0_320, %c0_321] : memref<2x16x128xf32, #tpu.memory_space<vmem>>, vector<1x16x128xf32>
    %691 = vector.shape_cast %690 : vector<1x16x128xf32> to vector<16x128xf32>
    %692 = vector.shape_cast %689 : vector<16x128xf32> to vector<1x16x128xf32>
    tpu.vector_store %arg7[%c0_319, %c0_320, %c0_321], %692 {strides = array<i32>} : memref<2x16x128xf32, #tpu.memory_space<vmem>>, vector<1x16x128xf32>,
    %c0_322 = arith.constant 0 : index
    %c0_323 = arith.constant 0 : index
    %c0_324 = arith.constant 0 : index
    %693 = vector.load %arg8[%c0_322, %c0_323, %c0_324] : memref<2x16x128xf32, #tpu.memory_space<vmem>>, vector<1x16x128xf32>
    %694 = vector.shape_cast %693 : vector<1x16x128xf32> to vector<16x128xf32>
    %695 = vector.shape_cast %687 : vector<16x128xf32> to vector<1x16x128xf32>
    tpu.vector_store %arg8[%c0_322, %c0_323, %c0_324], %695 {strides = array<i32>} : memref<2x16x128xf32, #tpu.memory_space<vmem>>, vector<1x16x128xf32>,
    %696 = arith.truncf %689 : vector<16x128xf32> to vector<16x128xbf16>
    %c1_325 = arith.constant 1 : index
    %c0_326 = arith.constant 0 : index
    %c0_327 = arith.constant 0 : index
    %697 = vector.load %arg7[%c1_325, %c0_326, %c0_327] : memref<2x16x128xf32, #tpu.memory_space<vmem>>, vector<1x16x128xf32>
    %698 = vector.shape_cast %697 : vector<1x16x128xf32> to vector<16x128xf32>
    %699 = arith.truncf %698 : vector<16x128xf32> to vector<16x128xbf16>
    %700 = tpu.concatenate %696, %699 in 1 : vector<16x128xbf16>, vector<16x128xbf16> -> vector<16x256xbf16>
    %c0_328 = arith.constant 0 : index
    %c0_329 = arith.constant 0 : index
    %c0_330 = arith.constant 0 : index
    %701 = vector.load %arg4[%c0_328, %c0_329, %c0_330] : memref<1x256x512xbf16, #tpu.memory_space<vmem>>, vector<1x256x512xbf16>
    %702 = vector.shape_cast %701 : vector<1x256x512xbf16> to vector<256x512xbf16>
    %cst_331 = arith.constant dense<0.000000e+00> : vector<16x512xf32>
    %703 = tpu.matmul %700, %702, %cst_331 {dimension_numbers = #tpu.dot_dimension_numbers<[1], [0], [0], [1], [0, 0, 1, 1], [], []>} : vector<16x256xbf16>, vector<256x512xbf16>, vector<16x512xf32> -> vector<16x512xf32>
    %704 = arith.addf %703, %6 : vector<16x512xf32>
    %c1_332 = arith.constant 1 : index
    %c0_333 = arith.constant 0 : index
    %c0_334 = arith.constant 0 : index
    %705 = vector.load %arg8[%c1_332, %c0_333, %c0_334] : memref<2x16x128xf32, #tpu.memory_space<vmem>>, vector<1x16x128xf32>
    %706 = vector.shape_cast %705 : vector<1x16x128xf32> to vector<16x128xf32>
    %707 = vector.extract_strided_slice %704 {offsets = [0, 0], sizes = [16, 128], strides = [1, 1]} : vector<16x512xf32> to vector<16x128xf32>
    %708 = arith.negf %707 : vector<16x128xf32>
    %709 = math.exp %708 : vector<16x128xf32>
    %cst_335 = arith.constant 1.000000e+00 : f32
    %710 = vector.broadcast %cst_335 : f32 to vector<16x128xf32>
    %711 = arith.addf %710, %709 : vector<16x128xf32>
    %712 = arith.divf %710, %711 : vector<16x128xf32>
    %713 = vector.extract_strided_slice %704 {offsets = [0, 128], sizes = [16, 128], strides = [1, 1]} : vector<16x512xf32> to vector<16x128xf32>
    %714 = arith.negf %713 : vector<16x128xf32>
    %715 = math.exp %714 : vector<16x128xf32>
    %cst_336 = arith.constant 1.000000e+00 : f32
    %716 = vector.broadcast %cst_336 : f32 to vector<16x128xf32>
    %717 = arith.addf %716, %715 : vector<16x128xf32>
    %718 = arith.divf %716, %717 : vector<16x128xf32>
    %719 = vector.extract_strided_slice %704 {offsets = [0, 256], sizes = [16, 128], strides = [1, 1]} : vector<16x512xf32> to vector<16x128xf32>
    %720 = math.tanh %719 : vector<16x128xf32>
    %721 = vector.extract_strided_slice %704 {offsets = [0, 384], sizes = [16, 128], strides = [1, 1]} : vector<16x512xf32> to vector<16x128xf32>
    %722 = arith.negf %721 : vector<16x128xf32>
    %723 = math.exp %722 : vector<16x128xf32>
    %cst_337 = arith.constant 1.000000e+00 : f32
    %724 = vector.broadcast %cst_337 : f32 to vector<16x128xf32>
    %725 = arith.addf %724, %723 : vector<16x128xf32>
    %726 = arith.divf %724, %725 : vector<16x128xf32>
    %727 = arith.mulf %718, %706 : vector<16x128xf32>
    %728 = arith.mulf %712, %720 : vector<16x128xf32>
    %729 = arith.addf %727, %728 : vector<16x128xf32>
    %730 = math.tanh %729 : vector<16x128xf32>
    %731 = arith.mulf %726, %730 : vector<16x128xf32>
    %c1_338 = arith.constant 1 : index
    %c0_339 = arith.constant 0 : index
    %c0_340 = arith.constant 0 : index
    %732 = vector.load %arg7[%c1_338, %c0_339, %c0_340] : memref<2x16x128xf32, #tpu.memory_space<vmem>>, vector<1x16x128xf32>
    %733 = vector.shape_cast %732 : vector<1x16x128xf32> to vector<16x128xf32>
    %734 = vector.shape_cast %731 : vector<16x128xf32> to vector<1x16x128xf32>
    tpu.vector_store %arg7[%c1_338, %c0_339, %c0_340], %734 {strides = array<i32>} : memref<2x16x128xf32, #tpu.memory_space<vmem>>, vector<1x16x128xf32>,
    %c1_341 = arith.constant 1 : index
    %c0_342 = arith.constant 0 : index
    %c0_343 = arith.constant 0 : index
    %735 = vector.load %arg8[%c1_341, %c0_342, %c0_343] : memref<2x16x128xf32, #tpu.memory_space<vmem>>, vector<1x16x128xf32>
    %736 = vector.shape_cast %735 : vector<1x16x128xf32> to vector<16x128xf32>
    %737 = vector.shape_cast %729 : vector<16x128xf32> to vector<1x16x128xf32>
    tpu.vector_store %arg8[%c1_341, %c0_342, %c0_343], %737 {strides = array<i32>} : memref<2x16x128xf32, #tpu.memory_space<vmem>>, vector<1x16x128xf32>,
    %738 = arith.truncf %731 : vector<16x128xf32> to vector<16x128xbf16>
    %739 = arith.index_cast %652 : i32 to index
    %c0_344 = arith.constant 0 : index
    %c0_345 = arith.constant 0 : index
    %740 = vector.load %arg6[%739, %c0_344, %c0_345] : memref<8x16x128xbf16, #tpu.memory_space<vmem>>, vector<1x16x128xbf16>
    %741 = vector.shape_cast %740 : vector<1x16x128xbf16> to vector<16x128xbf16>
    %742 = vector.shape_cast %738 : vector<16x128xbf16> to vector<1x16x128xbf16>
    tpu.vector_store %arg6[%739, %c0_344, %c0_345], %742 {strides = array<i32>} : memref<8x16x128xbf16, #tpu.memory_space<vmem>>, vector<1x16x128xbf16>,
    %c8_i32 = arith.constant 8 : i32
    return
  }
  func.func @transform_0(%arg0: i32, %arg1: i32) -> (i32, i32, i32) {
    %c0_i32 = arith.constant 0 : i32
    %c0_i32_0 = arith.constant 0 : i32
    return %arg1, %arg0, %c0_i32 : i32, i32, i32
  }
  func.func @transform_1(%arg0: i32, %arg1: i32) -> (i32, i32) {
    %c0_i32 = arith.constant 0 : i32
    %c0_i32_0 = arith.constant 0 : i32
    %c0_i32_1 = arith.constant 0 : i32
    return %c0_i32, %c0_i32_0 : i32, i32
  }
  func.func @transform_2(%arg0: i32, %arg1: i32) -> (i32, i32, i32) {
    %c0_i32 = arith.constant 0 : i32
    %c0_i32_0 = arith.constant 0 : i32
    %c0_i32_1 = arith.constant 0 : i32
    %c0_i32_2 = arith.constant 0 : i32
    return %c0_i32, %c0_i32_0, %c0_i32_1 : i32, i32, i32
  }
  func.func @transform_3(%arg0: i32, %arg1: i32) -> (i32, i32, i32) {
    %c0_i32 = arith.constant 0 : i32
    %c0_i32_0 = arith.constant 0 : i32
    %c0_i32_1 = arith.constant 0 : i32
    %c0_i32_2 = arith.constant 0 : i32
    return %c0_i32, %c0_i32_0, %c0_i32_1 : i32, i32, i32
  }
  func.func @transform_4(%arg0: i32, %arg1: i32) -> (i32, i32, i32) {
    %c0_i32 = arith.constant 0 : i32
    %c0_i32_0 = arith.constant 0 : i32
    return %arg1, %arg0, %c0_i32 : i32, i32, i32
  }
}

</mosaic_0001>

<llo_original>
// kernel: decoder_rnn_forward.3
$region0: #{decoder_rnn_forward.3}
  #allocation0 [shape = 'u32[]', space=smem, size = 0x4, offset = 0x4, fixed_abs, tag = 'smem constant byte address 0x4 - core index']
  #allocation1 [shape = 'u32[144,128]{1,0:T(1,128)}', space=vmem, size = 0x12000, scoped, tag = 'internal scratch']
  %s0 = inlined_call_operand.vmem [shape: bf16[128,128], index: 0, kind: input, shape index: {}]
  %s1 = inlined_call_operand.vmem [shape: bf16[128,128], index: 1, kind: input, shape index: {}]
  %s2 = inlined_call_operand.vmem [shape: f32[1,128], index: 2, kind: input, shape index: {}]
  %s3 = inlined_call_operand.vmem [shape: f32[128,128], index: 3, kind: output, shape index: {}]
  %s4 = sld [smem:[#allocation0]]
  $region22: #{decoder_rnn_forward.3} parent=0
    _
  %s6 = ssub.s32 1, %s4
  %s7 = scalar_select 0, %s6, %s4
  // Predicated region
  $region2: #{decoder_rnn_forward.3} parent=0 // pred_check
    _
  $region3: #{decoder_rnn_forward.3} parent=0 // pred_check_branch
    %9 = sbr.rel (0) target = $region5
  $region4: #{decoder_rnn_forward.3} parent=0 // pred_region
    _
  $region5: #{decoder_rnn_forward.3} parent=0 // pred_fallthru
    _
  // Predicated region
  $region6: #{decoder_rnn_forward.3} parent=0 // pred_check
    _
  $region7: #{decoder_rnn_forward.3} parent=0 // pred_check_branch
    %11 = sbr.rel (0) target = $region9
  $region8: #{decoder_rnn_forward.3} parent=0 // pred_region
    _
  $region9: #{decoder_rnn_forward.3} parent=0 // pred_fallthru
    _
  // Predicated region
  $region10: #{decoder_rnn_forward.3} parent=0 // pred_check
    _
  $region11: #{decoder_rnn_forward.3} parent=0 // pred_check_branch
    %13 = sbr.rel (0) target = $region13
  $region12: #{decoder_rnn_forward.3} parent=0 // pred_region
    _
  $region13: #{decoder_rnn_forward.3} parent=0 // pred_fallthru
    _
  %v15 = vld [vmem:[%s0] sm:$0xf]
  %v16 = vld [vmem:[%s0 + $0x4] sm:$0xf]
  %v17 = vld [vmem:[%s0 + $0x8] sm:$0xf]
  %v18 = vld [vmem:[%s0 + $0xc] sm:$0xf]
  %v19 = vld [vmem:[%s0 + $0x10] sm:$0xf]
  %v20 = vld [vmem:[%s0 + $0x14] sm:$0xf]
  %v21 = vld [vmem:[%s0 + $0x18] sm:$0xf]
  %v22 = vld [vmem:[%s0 + $0x1c] sm:$0xf]
  %v23 = vld [vmem:[%s0 + $0x20] sm:$0xf]
  %v24 = vld [vmem:[%s0 + $0x24] sm:$0xf]
  %v25 = vld [vmem:[%s0 + $0x28] sm:$0xf]
  %v26 = vld [vmem:[%s0 + $0x2c] sm:$0xf]
  %v27 = vld [vmem:[%s0 + $0x30] sm:$0xf]
  %v28 = vld [vmem:[%s0 + $0x34] sm:$0xf]
  %v29 = vld [vmem:[%s0 + $0x38] sm:$0xf]
  %v30 = vld [vmem:[%s0 + $0x3c] sm:$0xf]
  %v31 = vld [vmem:[%s1] sm:$0xf]
  %v32 = vld [vmem:[%s1 + $0x4] sm:$0xf]
  %v33 = vld [vmem:[%s1 + $0x8] sm:$0xf]
  %v34 = vld [vmem:[%s1 + $0xc] sm:$0xf]
  %v35 = vld [vmem:[%s1 + $0x10] sm:$0xf]
  %v36 = vld [vmem:[%s1 + $0x14] sm:$0xf]
  %v37 = vld [vmem:[%s1 + $0x18] sm:$0xf]
  %v38 = vld [vmem:[%s1 + $0x1c] sm:$0xf]
  %v39 = vld [vmem:[%s1 + $0x20] sm:$0xf]
  %v40 = vld [vmem:[%s1 + $0x24] sm:$0xf]
  %v41 = vld [vmem:[%s1 + $0x28] sm:$0xf]
  %v42 = vld [vmem:[%s1 + $0x2c] sm:$0xf]
  %v43 = vld [vmem:[%s1 + $0x30] sm:$0xf]
  %v44 = vld [vmem:[%s1 + $0x34] sm:$0xf]
  %v45 = vld [vmem:[%s1 + $0x38] sm:$0xf]
  %v46 = vld [vmem:[%s1 + $0x3c] sm:$0xf]
  %v47 = vld [vmem:[%s2] sm:$0x1]
  %v49 = vlaneseq
  %v50 = vshrl.u32 %v49, 7
  %v51 = vsub.s32 0, %v50
  %v52 = vrot.slane %v47, %v51
  %v70 = vunpack.c.l.b16 %v15
  %v71 = vunpack.c.l.b16 %v16
  %v72 = vunpack.c.l.b16 %v17
  %v73 = vunpack.c.l.b16 %v18
  %v74 = vunpack.c.l.b16 %v19
  %v75 = vunpack.c.l.b16 %v20
  %v76 = vunpack.c.l.b16 %v21
  %v77 = vunpack.c.l.b16 %v22
  %v78 = vunpack.c.l.b16 %v23
  %v79 = vunpack.c.l.b16 %v24
  %v80 = vunpack.c.l.b16 %v25
  %v81 = vunpack.c.l.b16 %v26
  %v82 = vunpack.c.l.b16 %v27
  %v83 = vunpack.c.l.b16 %v28
  %v84 = vunpack.c.l.b16 %v29
  %v85 = vunpack.c.l.b16 %v30
  %v86 = vpack.c.b16 %v71, %v70
  %v87 = vpack.c.b16 %v73, %v72
  %v88 = vpack.c.b16 %v75, %v74
  %v89 = vpack.c.b16 %v77, %v76
  %v90 = vpack.c.b16 %v79, %v78
  %v91 = vpack.c.b16 %v81, %v80
  %v92 = vpack.c.b16 %v83, %v82
  %v93 = vpack.c.b16 %v85, %v84
  %v118 = vunpack.c.l.b16 %v31
  %v119 = vunpack.c.l.b16 %v32
  %v120 = vunpack.c.l.b16 %v33
  %v121 = vunpack.c.l.b16 %v34
  %v122 = vunpack.c.l.b16 %v35
  %v123 = vunpack.c.l.b16 %v36
  %v124 = vunpack.c.l.b16 %v37
  %v125 = vunpack.c.l.b16 %v38
  %v126 = vunpack.c.l.b16 %v39
  %v127 = vunpack.c.l.b16 %v40
  %v128 = vunpack.c.l.b16 %v41
  %v129 = vunpack.c.l.b16 %v42
  %v130 = vunpack.c.l.b16 %v43
  %v131 = vunpack.c.l.b16 %v44
  %v132 = vunpack.c.l.b16 %v45
  %v133 = vunpack.c.l.b16 %v46
  %v134 = vpack.c.b16 %v119, %v118
  %v135 = vpack.c.b16 %v121, %v120
  %v136 = vpack.c.b16 %v123, %v122
  %v137 = vpack.c.b16 %v125, %v124
  %v138 = vpack.c.b16 %v127, %v126
  %v139 = vpack.c.b16 %v129, %v128
  %v140 = vpack.c.b16 %v131, %v130
  %v141 = vpack.c.b16 %v133, %v132
  %150 = vmatprep.subr.bf16.mxu0 0
  %151 = vmatpush1.bf16.msra.mxu0 %v134
  %152 = vmatprep.subr.bf16.mxu0 0
  %153 = vmatpush1.bf16.msra.mxu0 %v135
  %154 = vmatprep.subr.bf16.mxu0 0
  %155 = vmatpush1.bf16.msra.mxu0 %v136
  %156 = vmatprep.subr.bf16.mxu0 0
  %157 = vmatpush1.bf16.msra.mxu0 %v137
  %158 = vmatprep.subr.bf16.mxu0 0
  %159 = vmatpush1.bf16.msra.mxu0 %v138
  %160 = vmatprep.subr.bf16.mxu0 0
  %161 = vmatpush1.bf16.msra.mxu0 %v139
  %162 = vmatprep.subr.bf16.mxu0 0
  %163 = vmatpush1.bf16.msra.mxu0 %v140
  %164 = vmatprep.subr.bf16.mxu0 0
  %165 = vmatpush1.bf16.msra.mxu0 %v141
  %166 = vmatprep.subr.bf16.mxu0 0
  %167 = vmatpush1.bf16.msra.mxu0 0
  %168 = vmatprep.subr.bf16.mxu0 0
  %169 = vmatpush1.bf16.msra.mxu0 0
  %170 = vmatprep.subr.bf16.mxu0 0
  %171 = vmatpush1.bf16.msra.mxu0 0
  %172 = vmatprep.subr.bf16.mxu0 0
  %173 = vmatpush1.bf16.msra.mxu0 0
  %174 = vmatprep.subr.bf16.mxu0 0
  %175 = vmatpush1.bf16.msra.mxu0 0
  %176 = vmatprep.subr.bf16.mxu0 0
  %177 = vmatpush1.bf16.msra.mxu0 0
  %178 = vmatprep.subr.bf16.mxu0 0
  %179 = vmatpush1.bf16.msra.mxu0 0
  %180 = vmatprep.subr.bf16.mxu0 0
  %181 = vmatpush1.bf16.msra.mxu0 0
  %182 = vmatprep.mubr.bf16.mxu0 0
  %183 = vmatmul.mubr.bf16.gmra.mrb[0].mxu0 %v86
  %v184 = vpop.f32.mrb[0].mxu0
  %v185 = vadd.f32 %v52, %v184
  %v186 = vpop.f32.mrb[0].mxu0
  %v187 = vpop.f32.mrb[0].mxu0
  %v188 = vadd.f32 %v52, %v187
  %v189 = vpop.f32.mrb[0].mxu0
  %190 = vmatprep.mubr.bf16.mxu0 0
  %191 = vmatmul.mubr.bf16.gmra.mrb[0].mxu0 %v87
  %v192 = vpop.f32.mrb[0].mxu0
  %v193 = vadd.f32 %v52, %v192
  %v194 = vpop.f32.mrb[0].mxu0
  %v195 = vpop.f32.mrb[0].mxu0
  %v196 = vadd.f32 %v52, %v195
  %v197 = vpop.f32.mrb[0].mxu0
  %198 = vmatprep.mubr.bf16.mxu0 0
  %199 = vmatmul.mubr.bf16.gmra.mrb[0].mxu0 %v88
  %v200 = vpop.f32.mrb[0].mxu0
  %v201 = vadd.f32 %v52, %v200
  %v202 = vpop.f32.mrb[0].mxu0
  %v203 = vpop.f32.mrb[0].mxu0
  %v204 = vadd.f32 %v52, %v203
  %v205 = vpop.f32.mrb[0].mxu0
  %206 = vmatprep.mubr.bf16.mxu0 0
  %207 = vmatmul.mubr.bf16.gmra.mrb[0].mxu0 %v89
  %v208 = vpop.f32.mrb[0].mxu0
  %v209 = vadd.f32 %v52, %v208
  %v210 = vpop.f32.mrb[0].mxu0
  %v211 = vpop.f32.mrb[0].mxu0
  %v212 = vadd.f32 %v52, %v211
  %v213 = vpop.f32.mrb[0].mxu0
  %214 = vmatprep.mubr.bf16.mxu0 0
  %215 = vmatmul.mubr.bf16.gmra.mrb[0].mxu0 %v90
  %v216 = vpop.f32.mrb[0].mxu0
  %v217 = vadd.f32 %v52, %v216
  %v218 = vpop.f32.mrb[0].mxu0
  %v219 = vpop.f32.mrb[0].mxu0
  %v220 = vadd.f32 %v52, %v219
  %v221 = vpop.f32.mrb[0].mxu0
  %222 = vmatprep.mubr.bf16.mxu0 0
  %223 = vmatmul.mubr.bf16.gmra.mrb[0].mxu0 %v91
  %v224 = vpop.f32.mrb[0].mxu0
  %v225 = vadd.f32 %v52, %v224
  %v226 = vpop.f32.mrb[0].mxu0
  %v227 = vpop.f32.mrb[0].mxu0
  %v228 = vadd.f32 %v52, %v227
  %v229 = vpop.f32.mrb[0].mxu0
  %230 = vmatprep.mubr.bf16.mxu0 0
  %231 = vmatmul.mubr.bf16.gmra.mrb[0].mxu0 %v92
  %v232 = vpop.f32.mrb[0].mxu0
  %v233 = vadd.f32 %v52, %v232
  %v234 = vpop.f32.mrb[0].mxu0
  %v235 = vpop.f32.mrb[0].mxu0
  %v236 = vadd.f32 %v52, %v235
  %v237 = vpop.f32.mrb[0].mxu0
  %238 = vmatprep.mubr.bf16.mxu0 0
  %239 = vmatmul.mubr.bf16.gmra.mrb[0].mxu0 %v93
  %v240 = vpop.f32.mrb[0].mxu0
  %v241 = vadd.f32 %v52, %v240
  %v242 = vpop.f32.mrb[0].mxu0
  %v243 = vpop.f32.mrb[0].mxu0
  %v244 = vadd.f32 %v52, %v243
  %v245 = vpop.f32.mrb[0].mxu0
  %246 = vdwg.mxu0
  %247 = vst [vmem:[%s3] sm:$0xff] %v185
  %248 = vst [vmem:[%s3 + $0x8] sm:$0xff] %v188
  %249 = vst [vmem:[%s3 + $0x10] sm:$0xff] %v193
  %250 = vst [vmem:[%s3 + $0x18] sm:$0xff] %v196
  %251 = vst [vmem:[%s3 + $0x20] sm:$0xff] %v201
  %252 = vst [vmem:[%s3 + $0x28] sm:$0xff] %v204
  %253 = vst [vmem:[%s3 + $0x30] sm:$0xff] %v209
  %254 = vst [vmem:[%s3 + $0x38] sm:$0xff] %v212
  %255 = vst [vmem:[%s3 + $0x40] sm:$0xff] %v217
  %256 = vst [vmem:[%s3 + $0x48] sm:$0xff] %v220
  %257 = vst [vmem:[%s3 + $0x50] sm:$0xff] %v225
  %258 = vst [vmem:[%s3 + $0x58] sm:$0xff] %v228
  %259 = vst [vmem:[%s3 + $0x60] sm:$0xff] %v233
  %260 = vst [vmem:[%s3 + $0x68] sm:$0xff] %v236
  %261 = vst [vmem:[%s3 + $0x70] sm:$0xff] %v241
  %262 = vst [vmem:[%s3 + $0x78] sm:$0xff] %v244
  // Predicated region
  $region14: #{decoder_rnn_forward.3} parent=0 // pred_check
    _
  $region15: #{decoder_rnn_forward.3} parent=0 // pred_check_branch
    %264 = sbr.rel (0) target = $region17
  $region16: #{decoder_rnn_forward.3} parent=0 // pred_region
    _
  $region17: #{decoder_rnn_forward.3} parent=0 // pred_fallthru
    _
  // Predicated region
  $region18: #{decoder_rnn_forward.3} parent=0 // pred_check
    _
  $region19: #{decoder_rnn_forward.3} parent=0 // pred_check_branch
    %266 = sbr.rel (0) target = $region21
  $region20: #{decoder_rnn_forward.3} parent=0 // pred_region
    _
  $region21: #{decoder_rnn_forward.3} parent=0 // pred_fallthru
    _

// kernel: decoder_rnn_forward.2
$region0: #{decoder_rnn_forward.2}
  #allocation0 [shape = 'u32[]', space=smem, size = 0x4, offset = 0x4, fixed_abs, tag = 'smem constant byte address 0x4 - core index']
  #allocation1 [shape = 'u32[144,128]{1,0:T(1,128)}', space=vmem, size = 0x12000, scoped, tag = 'internal scratch']
  #allocation2 [shape = 'f32[2,16,128]{2,1,0:T(8,128)}', space=vmem, size = 0x4000, scoped, tag = 'scratch operand']
  #allocation3 [shape = 'f32[2,16,128]{2,1,0:T(8,128)}', space=vmem, size = 0x4000, scoped, tag = 'scratch operand']
  %s0 = inlined_call_operand.vmem [shape: bf16[8,16,512], index: 0, kind: input, shape index: {}]
  %s1 = inlined_call_operand.vmem [shape: bf16[128,512], index: 1, kind: input, shape index: {}]
  %s2 = inlined_call_operand.vmem [shape: bf16[1,256,512], index: 2, kind: input, shape index: {}]
  %s3 = inlined_call_operand.vmem [shape: f32[1,1,512], index: 3, kind: input, shape index: {}]
  %s4 = inlined_call_operand.vmem [shape: bf16[8,16,128], index: 4, kind: output, shape index: {}]
  %s5 = sld [smem:[#allocation0]]
  $region30: #{decoder_rnn_forward.2} parent=0
    _
  %s7 = ssub.s32 1, %s5
  %s8 = scalar_select 0, %s7, %s5
  // Predicated region
  $region2: #{decoder_rnn_forward.2} parent=0 // pred_check
    _
  $region3: #{decoder_rnn_forward.2} parent=0 // pred_check_branch
    %10 = sbr.rel (0) target = $region5
  $region4: #{decoder_rnn_forward.2} parent=0 // pred_region
    _
  $region5: #{decoder_rnn_forward.2} parent=0 // pred_fallthru
    _
  // Predicated region
  $region6: #{decoder_rnn_forward.2} parent=0 // pred_check
    _
  $region7: #{decoder_rnn_forward.2} parent=0 // pred_check_branch
    %12 = sbr.rel (0) target = $region9
  $region8: #{decoder_rnn_forward.2} parent=0 // pred_region
    _
  $region9: #{decoder_rnn_forward.2} parent=0 // pred_fallthru
    _
  // Predicated region
  $region10: #{decoder_rnn_forward.2} parent=0 // pred_check
    _
  $region11: #{decoder_rnn_forward.2} parent=0 // pred_check_branch
    %14 = sbr.rel (0) target = $region13
  $region12: #{decoder_rnn_forward.2} parent=0 // pred_region
    _
  $region13: #{decoder_rnn_forward.2} parent=0 // pred_fallthru
    _
  // Predicated region
  $region14: #{decoder_rnn_forward.2} parent=0 // pred_check
    _
  $region15: #{decoder_rnn_forward.2} parent=0 // pred_check_branch
    %16 = sbr.rel (0) target = $region17
  $region16: #{decoder_rnn_forward.2} parent=0 // pred_region
    _
  $region17: #{decoder_rnn_forward.2} parent=0 // pred_fallthru
    _
  %p18 = scmp.eq.s32.totalorder 0, 0
  // Predicated region
  $region18: #{decoder_rnn_forward.2} parent=0 // pred_check
    %p19 = pneg %p18
  $region19: #{decoder_rnn_forward.2} parent=0 // pred_check_branch
    %21 = sbr.rel (%p19) target = $region21
  $region20: #{decoder_rnn_forward.2} parent=0 // pred_region
    %22 = vst [vmem:[#allocation2] sm:$0xff] 0.0
    %23 = vst [vmem:[#allocation2 + $0x8] sm:$0xff] 0.0
    %24 = vst [vmem:[#allocation2 + $0x10] sm:$0xff] 0.0
    %25 = vst [vmem:[#allocation2 + $0x18] sm:$0xff] 0.0
    %26 = vst [vmem:[#allocation3] sm:$0xff] 0.0
    %27 = vst [vmem:[#allocation3 + $0x8] sm:$0xff] 0.0
    %28 = vst [vmem:[#allocation3 + $0x10] sm:$0xff] 0.0
    %29 = vst [vmem:[#allocation3 + $0x18] sm:$0xff] 0.0
  $region21: #{decoder_rnn_forward.2} parent=0 // pred_fallthru
    _
  %v30 = vld [vmem:[%s3] sm:$0xf]
  %v32 = vlaneseq
  %v33 = vshrl.u32 %v32, 7
  %v34 = vsub.s32 0, %v33
  %v35 = vrot.slane %v30, %v34
  %v36 = vlaneseq
  %v37 = vshrl.u32 %v36, 7
  %v38 = vsub.s32 1, %v37
  %v39 = vrot.slane %v30, %v38
  %v40 = vlaneseq
  %v41 = vshrl.u32 %v40, 7
  %v42 = vsub.s32 2, %v41
  %v43 = vrot.slane %v30, %v42
  %v44 = vlaneseq
  %v45 = vshrl.u32 %v44, 7
  %v46 = vsub.s32 3, %v45
  %v47 = vrot.slane %v30, %v46
  %v52 = vld [vmem:[%s0] sm:$0xff]
  %v53 = vld [vmem:[%s0 + $0x8] sm:$0xff]
  %v54 = vld [vmem:[%s0 + $0x10] sm:$0xff]
  %v55 = vld [vmem:[%s0 + $0x18] sm:$0xff]
  %v56 = vunpack.c.l.bf16 %v52
  %v57 = vunpack.c.h.bf16 %v52
  %v58 = vunpack.c.l.bf16 %v53
  %v59 = vunpack.c.h.bf16 %v53
  %v60 = vunpack.c.l.bf16 %v54
  %v61 = vunpack.c.h.bf16 %v54
  %v62 = vunpack.c.l.bf16 %v55
  %v63 = vunpack.c.h.bf16 %v55
  %v64 = vld [vmem:[#allocation2] sm:$0xff]
  %v65 = vld [vmem:[#allocation2 + $0x8] sm:$0xff]
  %v66 = vpack.c.bf16 %v65, %v64
  %v67 = vld [vmem:[%s1] sm:$0xff]
  %v68 = vld [vmem:[%s1 + $0x8] sm:$0xff]
  %v69 = vld [vmem:[%s1 + $0x10] sm:$0xff]
  %v70 = vld [vmem:[%s1 + $0x18] sm:$0xff]
  %v71 = vld [vmem:[%s1 + $0x20] sm:$0xff]
  %v72 = vld [vmem:[%s1 + $0x28] sm:$0xff]
  %v73 = vld [vmem:[%s1 + $0x30] sm:$0xff]
  %v74 = vld [vmem:[%s1 + $0x38] sm:$0xff]
  %v75 = vld [vmem:[%s1 + $0x40] sm:$0xff]
  %v76 = vld [vmem:[%s1 + $0x48] sm:$0xff]
  %v77 = vld [vmem:[%s1 + $0x50] sm:$0xff]
  %v78 = vld [vmem:[%s1 + $0x58] sm:$0xff]
  %v79 = vld [vmem:[%s1 + $0x60] sm:$0xff]
  %v80 = vld [vmem:[%s1 + $0x68] sm:$0xff]
  %v81 = vld [vmem:[%s1 + $0x70] sm:$0xff]
  %v82 = vld [vmem:[%s1 + $0x78] sm:$0xff]
  %v83 = vld [vmem:[%s1 + $0x80] sm:$0xff]
  %v84 = vld [vmem:[%s1 + $0x88] sm:$0xff]
  %v85 = vld [vmem:[%s1 + $0x90] sm:$0xff]
  %v86 = vld [vmem:[%s1 + $0x98] sm:$0xff]
  %v87 = vld [vmem:[%s1 + $0xa0] sm:$0xff]
  %v88 = vld [vmem:[%s1 + $0xa8] sm:$0xff]
  %v89 = vld [vmem:[%s1 + $0xb0] sm:$0xff]
  %v90 = vld [vmem:[%s1 + $0xb8] sm:$0xff]
  %v91 = vld [vmem:[%s1 + $0xc0] sm:$0xff]
  %v92 = vld [vmem:[%s1 + $0xc8] sm:$0xff]
  %v93 = vld [vmem:[%s1 + $0xd0] sm:$0xff]
  %v94 = vld [vmem:[%s1 + $0xd8] sm:$0xff]
  %v95 = vld [vmem:[%s1 + $0xe0] sm:$0xff]
  %v96 = vld [vmem:[%s1 + $0xe8] sm:$0xff]
  %v97 = vld [vmem:[%s1 + $0xf0] sm:$0xff]
  %v98 = vld [vmem:[%s1 + $0xf8] sm:$0xff]
  %v131 = vunpack.c.l.b16 %v67
  %v132 = vunpack.c.h.b16 %v67
  %v133 = vunpack.c.l.b16 %v68
  %v134 = vunpack.c.h.b16 %v68
  %v135 = vunpack.c.l.b16 %v69
  %v136 = vunpack.c.h.b16 %v69
  %v137 = vunpack.c.l.b16 %v70
  %v138 = vunpack.c.h.b16 %v70
  %v139 = vunpack.c.l.b16 %v71
  %v140 = vunpack.c.h.b16 %v71
  %v141 = vunpack.c.l.b16 %v72
  %v142 = vunpack.c.h.b16 %v72
  %v143 = vunpack.c.l.b16 %v73
  %v144 = vunpack.c.h.b16 %v73
  %v145 = vunpack.c.l.b16 %v74
  %v146 = vunpack.c.h.b16 %v74
  %v147 = vunpack.c.l.b16 %v75
  %v148 = vunpack.c.h.b16 %v75
  %v149 = vunpack.c.l.b16 %v76
  %v150 = vunpack.c.h.b16 %v76
  %v151 = vunpack.c.l.b16 %v77
  %v152 = vunpack.c.h.b16 %v77
  %v153 = vunpack.c.l.b16 %v78
  %v154 = vunpack.c.h.b16 %v78
  %v155 = vunpack.c.l.b16 %v79
  %v156 = vunpack.c.h.b16 %v79
  %v157 = vunpack.c.l.b16 %v80
  %v158 = vunpack.c.h.b16 %v80
  %v159 = vunpack.c.l.b16 %v81
  %v160 = vunpack.c.h.b16 %v81
  %v161 = vunpack.c.l.b16 %v82
  %v162 = vunpack.c.h.b16 %v82
  %v163 = vunpack.c.l.b16 %v83
  %v164 = vunpack.c.h.b16 %v83
  %v165 = vunpack.c.l.b16 %v84
  %v166 = vunpack.c.h.b16 %v84
  %v167 = vunpack.c.l.b16 %v85
  %v168 = vunpack.c.h.b16 %v85
  %v169 = vunpack.c.l.b16 %v86
  %v170 = vunpack.c.h.b16 %v86
  %v171 = vunpack.c.l.b16 %v87
  %v172 = vunpack.c.h.b16 %v87
  %v173 = vunpack.c.l.b16 %v88
  %v174 = vunpack.c.h.b16 %v88
  %v175 = vunpack.c.l.b16 %v89
  %v176 = vunpack.c.h.b16 %v89
  %v177 = vunpack.c.l.b16 %v90
  %v178 = vunpack.c.h.b16 %v90
  %v179 = vunpack.c.l.b16 %v91
  %v180 = vunpack.c.h.b16 %v91
  %v181 = vunpack.c.l.b16 %v92
  %v182 = vunpack.c.h.b16 %v92
  %v183 = vunpack.c.l.b16 %v93
  %v184 = vunpack.c.h.b16 %v93
  %v185 = vunpack.c.l.b16 %v94
  %v186 = vunpack.c.h.b16 %v94
  %v187 = vunpack.c.l.b16 %v95
  %v188 = vunpack.c.h.b16 %v95
  %v189 = vunpack.c.l.b16 %v96
  %v190 = vunpack.c.h.b16 %v96
  %v191 = vunpack.c.l.b16 %v97
  %v192 = vunpack.c.h.b16 %v97
  %v193 = vunpack.c.l.b16 %v98
  %v194 = vunpack.c.h.b16 %v98
  %v195 = vpack.c.b16 %v135, %v131
  %v196 = vpack.c.b16 %v136, %v132
  %v197 = vpack.c.b16 %v137, %v133
  %v198 = vpack.c.b16 %v138, %v134
  %v199 = vpack.c.b16 %v143, %v139
  %v200 = vpack.c.b16 %v144, %v140
  %v201 = vpack.c.b16 %v145, %v141
  %v202 = vpack.c.b16 %v146, %v142
  %v203 = vpack.c.b16 %v151, %v147
  %v204 = vpack.c.b16 %v152, %v148
  %v205 = vpack.c.b16 %v153, %v149
  %v206 = vpack.c.b16 %v154, %v150
  %v207 = vpack.c.b16 %v159, %v155
  %v208 = vpack.c.b16 %v160, %v156
  %v209 = vpack.c.b16 %v161, %v157
  %v210 = vpack.c.b16 %v162, %v158
  %v211 = vpack.c.b16 %v167, %v163
  %v212 = vpack.c.b16 %v168, %v164
  %v213 = vpack.c.b16 %v169, %v165
  %v214 = vpack.c.b16 %v170, %v166
  %v215 = vpack.c.b16 %v175, %v171
  %v216 = vpack.c.b16 %v176, %v172
  %v217 = vpack.c.b16 %v177, %v173
  %v218 = vpack.c.b16 %v178, %v174
  %v219 = vpack.c.b16 %v183, %v179
  %v220 = vpack.c.b16 %v184, %v180
  %v221 = vpack.c.b16 %v185, %v181
  %v222 = vpack.c.b16 %v186, %v182
  %v223 = vpack.c.b16 %v191, %v187
  %v224 = vpack.c.b16 %v192, %v188
  %v225 = vpack.c.b16 %v193, %v189
  %v226 = vpack.c.b16 %v194, %v190
  %259 = vmatprep.subr.bf16.mxu0 %v196
  %260 = vmatpush1.bf16.msra.mxu0 %v195
  %261 = vmatprep.subr.bf16.mxu0 %v200
  %262 = vmatpush1.bf16.msra.mxu0 %v199
  %263 = vmatprep.subr.bf16.mxu0 %v204
  %264 = vmatpush1.bf16.msra.mxu0 %v203
  %265 = vmatprep.subr.bf16.mxu0 %v208
  %266 = vmatpush1.bf16.msra.mxu0 %v207
  %267 = vmatprep.subr.bf16.mxu0 %v212
  %268 = vmatpush1.bf16.msra.mxu0 %v211
  %269 = vmatprep.subr.bf16.mxu0 %v216
  %270 = vmatpush1.bf16.msra.mxu0 %v215
  %271 = vmatprep.subr.bf16.mxu0 %v220
  %272 = vmatpush1.bf16.msra.mxu0 %v219
  %273 = vmatprep.subr.bf16.mxu0 %v224
  %274 = vmatpush1.bf16.msra.mxu0 %v223
  %275 = vmatprep.subr.bf16.mxu0 0
  %276 = vmatpush1.bf16.msra.mxu0 0
  %277 = vmatprep.subr.bf16.mxu0 0
  %278 = vmatpush1.bf16.msra.mxu0 0
  %279 = vmatprep.subr.bf16.mxu0 0
  %280 = vmatpush1.bf16.msra.mxu0 0
  %281 = vmatprep.subr.bf16.mxu0 0
  %282 = vmatpush1.bf16.msra.mxu0 0
  %283 = vmatprep.subr.bf16.mxu0 0
  %284 = vmatpush1.bf16.msra.mxu0 0
  %285 = vmatprep.subr.bf16.mxu0 0
  %286 = vmatpush1.bf16.msra.mxu0 0
  %287 = vmatprep.subr.bf16.mxu0 0
  %288 = vmatpush1.bf16.msra.mxu0 0
  %289 = vmatprep.subr.bf16.mxu0 0
  %290 = vmatpush1.bf16.msra.mxu0 0
  %291 = vmatprep.mubr.bf16.mxu0 0
  %292 = vmatmul.mubr.bf16.gmra.mrb[0].mxu0 %v66
  %v293 = vpop.f32.mrb[0].mxu0
  %v294 = vadd.f32 0.0, %v293
  %v295 = vpop.f32.mrb[0].mxu0
  %v296 = vadd.f32 0.0, %v295
  %v297 = vpop.f32.mrb[0].mxu0
  %v298 = vadd.f32 0.0, %v297
  %v299 = vpop.f32.mrb[0].mxu0
  %v300 = vadd.f32 0.0, %v299
  %301 = vdwg.mxu0
  %302 = vmatprep.subr.bf16.mxu0 %v198
  %303 = vmatpush1.bf16.msra.mxu0 %v197
  %304 = vmatprep.subr.bf16.mxu0 %v202
  %305 = vmatpush1.bf16.msra.mxu0 %v201
  %306 = vmatprep.subr.bf16.mxu0 %v206
  %307 = vmatpush1.bf16.msra.mxu0 %v205
  %308 = vmatprep.subr.bf16.mxu0 %v210
  %309 = vmatpush1.bf16.msra.mxu0 %v209
  %310 = vmatprep.subr.bf16.mxu0 %v214
  %311 = vmatpush1.bf16.msra.mxu0 %v213
  %312 = vmatprep.subr.bf16.mxu0 %v218
  %313 = vmatpush1.bf16.msra.mxu0 %v217
  %314 = vmatprep.subr.bf16.mxu0 %v222
  %315 = vmatpush1.bf16.msra.mxu0 %v221
  %316 = vmatprep.subr.bf16.mxu0 %v226
  %317 = vmatpush1.bf16.msra.mxu0 %v225
  %318 = vmatprep.subr.bf16.mxu0 0
  %319 = vmatpush1.bf16.msra.mxu0 0
  %320 = vmatprep.subr.bf16.mxu0 0
  %321 = vmatpush1.bf16.msra.mxu0 0
  %322 = vmatprep.subr.bf16.mxu0 0
  %323 = vmatpush1.bf16.msra.mxu0 0
  %324 = vmatprep.subr.bf16.mxu0 0
  %325 = vmatpush1.bf16.msra.mxu0 0
  %326 = vmatprep.subr.bf16.mxu0 0
  %327 = vmatpush1.bf16.msra.mxu0 0
  %328 = vmatprep.subr.bf16.mxu0 0
  %329 = vmatpush1.bf16.msra.mxu0 0
  %330 = vmatprep.subr.bf16.mxu0 0
  %331 = vmatpush1.bf16.msra.mxu0 0
  %332 = vmatprep.subr.bf16.mxu0 0
  %333 = vmatpush1.bf16.msra.mxu0 0
  %334 = vmatprep.mubr.bf16.mxu0 0
  %335 = vmatmul.mubr.bf16.gmra.mrb[0].mxu0 %v66
  %v336 = vpop.f32.mrb[0].mxu0
  %v337 = vadd.f32 0.0, %v336
  %v338 = vpop.f32.mrb[0].mxu0
  %v339 = vadd.f32 0.0, %v338
  %v340 = vpop.f32.mrb[0].mxu0
  %v341 = vadd.f32 0.0, %v340
  %v342 = vpop.f32.mrb[0].mxu0
  %v343 = vadd.f32 0.0, %v342
  %344 = vdwg.mxu0
  %v345 = vadd.f32 %v56, %v294
  %v346 = vadd.f32 %v57, %v296
  %v347 = vadd.f32 %v58, %v337
  %v348 = vadd.f32 %v59, %v339
  %v349 = vadd.f32 %v60, %v298
  %v350 = vadd.f32 %v61, %v300
  %v351 = vadd.f32 %v62, %v341
  %v352 = vadd.f32 %v63, %v343
  %v353 = vld [vmem:[#allocation3] sm:$0xff]
  %v354 = vld [vmem:[#allocation3 + $0x8] sm:$0xff]
  %v355 = vxor.u32 %v345, 2147483648
  %v356 = vxor.u32 %v349, 2147483648
  %v357 = vmul.f32 %v355, 1.442695
  %v358 = vpow.pop %v357
  %v359 = vmul.f32 %v356, 1.442695
  %v360 = vpow.pop %v359
  %v361 = vadd.f32 %v358, 1.0
  %v362 = vadd.f32 %v360, 1.0
  %v363 = vrcp.pop %v361
  %v364 = vmul.f32 1.0, %v363
  %v365 = vrcp.pop %v362
  %v366 = vmul.f32 1.0, %v365
  %v367 = vxor.u32 %v346, 2147483648
  %v368 = vxor.u32 %v350, 2147483648
  %v369 = vmul.f32 %v367, 1.442695
  %v370 = vpow.pop %v369
  %v371 = vmul.f32 %v368, 1.442695
  %v372 = vpow.pop %v371
  %v373 = vadd.f32 %v370, 1.0
  %v374 = vadd.f32 %v372, 1.0
  %v375 = vrcp.pop %v373
  %v376 = vmul.f32 1.0, %v375
  %v377 = vrcp.pop %v374
  %v378 = vmul.f32 1.0, %v377
  %v379 = vtanh.pop %v347
  %v380 = vtanh.pop %v351
  %v381 = vxor.u32 %v348, 2147483648
  %v382 = vxor.u32 %v352, 2147483648
  %v383 = vmul.f32 %v381, 1.442695
  %v384 = vpow.pop %v383
  %v385 = vmul.f32 %v382, 1.442695
  %v386 = vpow.pop %v385
  %v387 = vadd.f32 %v384, 1.0
  %v388 = vadd.f32 %v386, 1.0
  %v389 = vrcp.pop %v387
  %v390 = vmul.f32 1.0, %v389
  %v391 = vrcp.pop %v388
  %v392 = vmul.f32 1.0, %v391
  %v393 = vmul.f32 %v376, %v353
  %v394 = vmul.f32 %v378, %v354
  %v395 = vmul.f32 %v364, %v379
  %v396 = vmul.f32 %v366, %v380
  %v397 = vadd.f32 %v393, %v395
  %v398 = vadd.f32 %v394, %v396
  %v399 = vtanh.pop %v397
  %v400 = vtanh.pop %v398
  %v401 = vmul.f32 %v390, %v399
  %v402 = vmul.f32 %v392, %v400
  %403 = vst [vmem:[#allocation2] sm:$0xff] %v401
  %404 = vst [vmem:[#allocation2 + $0x8] sm:$0xff] %v402
  %405 = vst [vmem:[#allocation3] sm:$0xff] %v397
  %406 = vst [vmem:[#allocation3 + $0x8] sm:$0xff] %v398
  %v407 = vpack.c.bf16 %v402, %v401
  %s408 = scalar_lea.vmem [#allocation2], 16
  %v409 = vld [vmem:[%s408] sm:$0xff]
  %v410 = vld [vmem:[%s408 + $0x8] sm:$0xff]
  %v411 = vpack.c.bf16 %v410, %v409
  %v412 = vld [vmem:[%s2] sm:$0xff]
  %v413 = vld [vmem:[%s2 + $0x8] sm:$0xff]
  %v414 = vld [vmem:[%s2 + $0x10] sm:$0xff]
  %v415 = vld [vmem:[%s2 + $0x18] sm:$0xff]
  %v416 = vld [vmem:[%s2 + $0x20] sm:$0xff]
  %v417 = vld [vmem:[%s2 + $0x28] sm:$0xff]
  %v418 = vld [vmem:[%s2 + $0x30] sm:$0xff]
  %v419 = vld [vmem:[%s2 + $0x38] sm:$0xff]
  %v420 = vld [vmem:[%s2 + $0x40] sm:$0xff]
  %v421 = vld [vmem:[%s2 + $0x48] sm:$0xff]
  %v422 = vld [vmem:[%s2 + $0x50] sm:$0xff]
  %v423 = vld [vmem:[%s2 + $0x58] sm:$0xff]
  %v424 = vld [vmem:[%s2 + $0x60] sm:$0xff]
  %v425 = vld [vmem:[%s2 + $0x68] sm:$0xff]
  %v426 = vld [vmem:[%s2 + $0x70] sm:$0xff]
  %v427 = vld [vmem:[%s2 + $0x78] sm:$0xff]
  %v428 = vld [vmem:[%s2 + $0x80] sm:$0xff]
  %v429 = vld [vmem:[%s2 + $0x88] sm:$0xff]
  %v430 = vld [vmem:[%s2 + $0x90] sm:$0xff]
  %v431 = vld [vmem:[%s2 + $0x98] sm:$0xff]
  %v432 = vld [vmem:[%s2 + $0xa0] sm:$0xff]
  %v433 = vld [vmem:[%s2 + $0xa8] sm:$0xff]
  %v434 = vld [vmem:[%s2 + $0xb0] sm:$0xff]
  %v435 = vld [vmem:[%s2 + $0xb8] sm:$0xff]
  %v436 = vld [vmem:[%s2 + $0xc0] sm:$0xff]
  %v437 = vld [vmem:[%s2 + $0xc8] sm:$0xff]
  %v438 = vld [vmem:[%s2 + $0xd0] sm:$0xff]
  %v439 = vld [vmem:[%s2 + $0xd8] sm:$0xff]
  %v440 = vld [vmem:[%s2 + $0xe0] sm:$0xff]
  %v441 = vld [vmem:[%s2 + $0xe8] sm:$0xff]
  %v442 = vld [vmem:[%s2 + $0xf0] sm:$0xff]
  %v443 = vld [vmem:[%s2 + $0xf8] sm:$0xff]
  %v444 = vld [vmem:[%s2 + $0x100] sm:$0xff]
  %v445 = vld [vmem:[%s2 + $0x108] sm:$0xff]
  %v446 = vld [vmem:[%s2 + $0x110] sm:$0xff]
  %v447 = vld [vmem:[%s2 + $0x118] sm:$0xff]
  %v448 = vld [vmem:[%s2 + $0x120] sm:$0xff]
  %v449 = vld [vmem:[%s2 + $0x128] sm:$0xff]
  %v450 = vld [vmem:[%s2 + $0x130] sm:$0xff]
  %v451 = vld [vmem:[%s2 + $0x138] sm:$0xff]
  %v452 = vld [vmem:[%s2 + $0x140] sm:$0xff]
  %v453 = vld [vmem:[%s2 + $0x148] sm:$0xff]
  %v454 = vld [vmem:[%s2 + $0x150] sm:$0xff]
  %v455 = vld [vmem:[%s2 + $0x158] sm:$0xff]
  %v456 = vld [vmem:[%s2 + $0x160] sm:$0xff]
  %v457 = vld [vmem:[%s2 + $0x168] sm:$0xff]
  %v458 = vld [vmem:[%s2 + $0x170] sm:$0xff]
  %v459 = vld [vmem:[%s2 + $0x178] sm:$0xff]
  %v460 = vld [vmem:[%s2 + $0x180] sm:$0xff]
  %v461 = vld [vmem:[%s2 + $0x188] sm:$0xff]
  %v462 = vld [vmem:[%s2 + $0x190] sm:$0xff]
  %v463 = vld [vmem:[%s2 + $0x198] sm:$0xff]
  %v464 = vld [vmem:[%s2 + $0x1a0] sm:$0xff]
  %v465 = vld [vmem:[%s2 + $0x1a8] sm:$0xff]
  %v466 = vld [vmem:[%s2 + $0x1b0] sm:$0xff]
  %v467 = vld [vmem:[%s2 + $0x1b8] sm:$0xff]
  %v468 = vld [vmem:[%s2 + $0x1c0] sm:$0xff]
  %v469 = vld [vmem:[%s2 + $0x1c8] sm:$0xff]
  %v470 = vld [vmem:[%s2 + $0x1d0] sm:$0xff]
  %v471 = vld [vmem:[%s2 + $0x1d8] sm:$0xff]
  %v472 = vld [vmem:[%s2 + $0x1e0] sm:$0xff]
  %v473 = vld [vmem:[%s2 + $0x1e8] sm:$0xff]
  %v474 = vld [vmem:[%s2 + $0x1f0] sm:$0xff]
  %v475 = vld [vmem:[%s2 + $0x1f8] sm:$0xff]
  %v540 = vunpack.c.l.b16 %v412
  %v541 = vunpack.c.h.b16 %v412
  %v542 = vunpack.c.l.b16 %v413
  %v543 = vunpack.c.h.b16 %v413
  %v544 = vunpack.c.l.b16 %v414
  %v545 = vunpack.c.h.b16 %v414
  %v546 = vunpack.c.l.b16 %v415
  %v547 = vunpack.c.h.b16 %v415
  %v548 = vunpack.c.l.b16 %v416
  %v549 = vunpack.c.h.b16 %v416
  %v550 = vunpack.c.l.b16 %v417
  %v551 = vunpack.c.h.b16 %v417
  %v552 = vunpack.c.l.b16 %v418
  %v553 = vunpack.c.h.b16 %v418
  %v554 = vunpack.c.l.b16 %v419
  %v555 = vunpack.c.h.b16 %v419
  %v556 = vunpack.c.l.b16 %v420
  %v557 = vunpack.c.h.b16 %v420
  %v558 = vunpack.c.l.b16 %v421
  %v559 = vunpack.c.h.b16 %v421
  %v560 = vunpack.c.l.b16 %v422
  %v561 = vunpack.c.h.b16 %v422
  %v562 = vunpack.c.l.b16 %v423
  %v563 = vunpack.c.h.b16 %v423
  %v564 = vunpack.c.l.b16 %v424
  %v565 = vunpack.c.h.b16 %v424
  %v566 = vunpack.c.l.b16 %v425
  %v567 = vunpack.c.h.b16 %v425
  %v568 = vunpack.c.l.b16 %v426
  %v569 = vunpack.c.h.b16 %v426
  %v570 = vunpack.c.l.b16 %v427
  %v571 = vunpack.c.h.b16 %v427
  %v572 = vunpack.c.l.b16 %v428
  %v573 = vunpack.c.h.b16 %v428
  %v574 = vunpack.c.l.b16 %v429
  %v575 = vunpack.c.h.b16 %v429
  %v576 = vunpack.c.l.b16 %v430
  %v577 = vunpack.c.h.b16 %v430
  %v578 = vunpack.c.l.b16 %v431
  %v579 = vunpack.c.h.b16 %v431
  %v580 = vunpack.c.l.b16 %v432
  %v581 = vunpack.c.h.b16 %v432
  %v582 = vunpack.c.l.b16 %v433
  %v583 = vunpack.c.h.b16 %v433
  %v584 = vunpack.c.l.b16 %v434
  %v585 = vunpack.c.h.b16 %v434
  %v586 = vunpack.c.l.b16 %v435
  %v587 = vunpack.c.h.b16 %v435
  %v588 = vunpack.c.l.b16 %v436
  %v589 = vunpack.c.h.b16 %v436
  %v590 = vunpack.c.l.b16 %v437
  %v591 = vunpack.c.h.b16 %v437
  %v592 = vunpack.c.l.b16 %v438
  %v593 = vunpack.c.h.b16 %v438
  %v594 = vunpack.c.l.b16 %v439
  %v595 = vunpack.c.h.b16 %v439
  %v596 = vunpack.c.l.b16 %v440
  %v597 = vunpack.c.h.b16 %v440
  %v598 = vunpack.c.l.b16 %v441
  %v599 = vunpack.c.h.b16 %v441
  %v600 = vunpack.c.l.b16 %v442
  %v601 = vunpack.c.h.b16 %v442
  %v602 = vunpack.c.l.b16 %v443
  %v603 = vunpack.c.h.b16 %v443
  %v604 = vunpack.c.l.b16 %v444
  %v605 = vunpack.c.h.b16 %v444
  %v606 = vunpack.c.l.b16 %v445
  %v607 = vunpack.c.h.b16 %v445
  %v608 = vunpack.c.l.b16 %v446
  %v609 = vunpack.c.h.b16 %v446
  %v610 = vunpack.c.l.b16 %v447
  %v611 = vunpack.c.h.b16 %v447
  %v612 = vunpack.c.l.b16 %v448
  %v613 = vunpack.c.h.b16 %v448
  %v614 = vunpack.c.l.b16 %v449
  %v615 = vunpack.c.h.b16 %v449
  %v616 = vunpack.c.l.b16 %v450
  %v617 = vunpack.c.h.b16 %v450
  %v618 = vunpack.c.l.b16 %v451
  %v619 = vunpack.c.h.b16 %v451
  %v620 = vunpack.c.l.b16 %v452
  %v621 = vunpack.c.h.b16 %v452
  %v622 = vunpack.c.l.b16 %v453
  %v623 = vunpack.c.h.b16 %v453
  %v624 = vunpack.c.l.b16 %v454
  %v625 = vunpack.c.h.b16 %v454
  %v626 = vunpack.c.l.b16 %v455
  %v627 = vunpack.c.h.b16 %v455
  %v628 = vunpack.c.l.b16 %v456
  %v629 = vunpack.c.h.b16 %v456
  %v630 = vunpack.c.l.b16 %v457
  %v631 = vunpack.c.h.b16 %v457
  %v632 = vunpack.c.l.b16 %v458
  %v633 = vunpack.c.h.b16 %v458
  %v634 = vunpack.c.l.b16 %v459
  %v635 = vunpack.c.h.b16 %v459
  %v636 = vunpack.c.l.b16 %v460
  %v637 = vunpack.c.h.b16 %v460
  %v638 = vunpack.c.l.b16 %v461
  %v639 = vunpack.c.h.b16 %v461
  %v640 = vunpack.c.l.b16 %v462
  %v641 = vunpack.c.h.b16 %v462
  %v642 = vunpack.c.l.b16 %v463
  %v643 = vunpack.c.h.b16 %v463
  %v644 = vunpack.c.l.b16 %v464
  %v645 = vunpack.c.h.b16 %v464
  %v646 = vunpack.c.l.b16 %v465
  %v647 = vunpack.c.h.b16 %v465
  %v648 = vunpack.c.l.b16 %v466
  %v649 = vunpack.c.h.b16 %v466
  %v650 = vunpack.c.l.b16 %v467
  %v651 = vunpack.c.h.b16 %v467
  %v652 = vunpack.c.l.b16 %v468
  %v653 = vunpack.c.h.b16 %v468
  %v654 = vunpack.c.l.b16 %v469
  %v655 = vunpack.c.h.b16 %v469
  %v656 = vunpack.c.l.b16 %v470
  %v657 = vunpack.c.h.b16 %v470
  %v658 = vunpack.c.l.b16 %v471
  %v659 = vunpack.c.h.b16 %v471
  %v660 = vunpack.c.l.b16 %v472
  %v661 = vunpack.c.h.b16 %v472
  %v662 = vunpack.c.l.b16 %v473
  %v663 = vunpack.c.h.b16 %v473
  %v664 = vunpack.c.l.b16 %v474
  %v665 = vunpack.c.h.b16 %v474
  %v666 = vunpack.c.l.b16 %v475
  %v667 = vunpack.c.h.b16 %v475
  %v668 = vpack.c.b16 %v544, %v540
  %v669 = vpack.c.b16 %v545, %v541
  %v670 = vpack.c.b16 %v546, %v542
  %v671 = vpack.c.b16 %v547, %v543
  %v672 = vpack.c.b16 %v552, %v548
  %v673 = vpack.c.b16 %v553, %v549
  %v674 = vpack.c.b16 %v554, %v550
  %v675 = vpack.c.b16 %v555, %v551
  %v676 = vpack.c.b16 %v560, %v556
  %v677 = vpack.c.b16 %v561, %v557
  %v678 = vpack.c.b16 %v562, %v558
  %v679 = vpack.c.b16 %v563, %v559
  %v680 = vpack.c.b16 %v568, %v564
  %v681 = vpack.c.b16 %v569, %v565
  %v682 = vpack.c.b16 %v570, %v566
  %v683 = vpack.c.b16 %v571, %v567
  %v684 = vpack.c.b16 %v576, %v572
  %v685 = vpack.c.b16 %v577, %v573
  %v686 = vpack.c.b16 %v578, %v574
  %v687 = vpack.c.b16 %v579, %v575
  %v688 = vpack.c.b16 %v584, %v580
  %v689 = vpack.c.b16 %v585, %v581
  %v690 = vpack.c.b16 %v586, %v582
  %v691 = vpack.c.b16 %v587, %v583
  %v692 = vpack.c.b16 %v592, %v588
  %v693 = vpack.c.b16 %v593, %v589
  %v694 = vpack.c.b16 %v594, %v590
  %v695 = vpack.c.b16 %v595, %v591
  %v696 = vpack.c.b16 %v600, %v596
  %v697 = vpack.c.b16 %v601, %v597
  %v698 = vpack.c.b16 %v602, %v598
  %v699 = vpack.c.b16 %v603, %v599
  %v700 = vpack.c.b16 %v608, %v604
  %v701 = vpack.c.b16 %v609, %v605
  %v702 = vpack.c.b16 %v610, %v606
  %v703 = vpack.c.b16 %v611, %v607
  %v704 = vpack.c.b16 %v616, %v612
  %v705 = vpack.c.b16 %v617, %v613
  %v706 = vpack.c.b16 %v618, %v614
  %v707 = vpack.c.b16 %v619, %v615
  %v708 = vpack.c.b16 %v624, %v620
  %v709 = vpack.c.b16 %v625, %v621
  %v710 = vpack.c.b16 %v626, %v622
  %v711 = vpack.c.b16 %v627, %v623
  %v712 = vpack.c.b16 %v632, %v628
  %v713 = vpack.c.b16 %v633, %v629
  %v714 = vpack.c.b16 %v634, %v630
  %v715 = vpack.c.b16 %v635, %v631
  %v716 = vpack.c.b16 %v640, %v636
  %v717 = vpack.c.b16 %v641, %v637
  %v718 = vpack.c.b16 %v642, %v638
  %v719 = vpack.c.b16 %v643, %v639
  %v720 = vpack.c.b16 %v648, %v644
  %v721 = vpack.c.b16 %v649, %v645
  %v722 = vpack.c.b16 %v650, %v646
  %v723 = vpack.c.b16 %v651, %v647
  %v724 = vpack.c.b16 %v656, %v652
  %v725 = vpack.c.b16 %v657, %v653
  %v726 = vpack.c.b16 %v658, %v654
  %v727 = vpack.c.b16 %v659, %v655
  %v728 = vpack.c.b16 %v664, %v660
  %v729 = vpack.c.b16 %v665, %v661
  %v730 = vpack.c.b16 %v666, %v662
  %v731 = vpack.c.b16 %v667, %v663
  %796 = vmatprep.subr.bf16.mxu0 %v669
  %797 = vmatpush1.bf16.msra.mxu0 %v668
  %798 = vmatprep.subr.bf16.mxu0 %v673
  %799 = vmatpush1.bf16.msra.mxu0 %v672
  %800 = vmatprep.subr.bf16.mxu0 %v677
  %801 = vmatpush1.bf16.msra.mxu0 %v676
  %802 = vmatprep.subr.bf16.mxu0 %v681
  %803 = vmatpush1.bf16.msra.mxu0 %v680
  %804 = vmatprep.subr.bf16.mxu0 %v685
  %805 = vmatpush1.bf16.msra.mxu0 %v684
  %806 = vmatprep.subr.bf16.mxu0 %v689
  %807 = vmatpush1.bf16.msra.mxu0 %v688
  %808 = vmatprep.subr.bf16.mxu0 %v693
  %809 = vmatpush1.bf16.msra.mxu0 %v692
  %810 = vmatprep.subr.bf16.mxu0 %v697
  %811 = vmatpush1.bf16.msra.mxu0 %v696
  %812 = vmatprep.subr.bf16.mxu0 %v701
  %813 = vmatpush1.bf16.msra.mxu0 %v700
  %814 = vmatprep.subr.bf16.mxu0 %v705
  %815 = vmatpush1.bf16.msra.mxu0 %v704
  %816 = vmatprep.subr.bf16.mxu0 %v709
  %817 = vmatpush1.bf16.msra.mxu0 %v708
  %818 = vmatprep.subr.bf16.mxu0 %v713
  %819 = vmatpush1.bf16.msra.mxu0 %v712
  %820 = vmatprep.subr.bf16.mxu0 %v717
  %821 = vmatpush1.bf16.msra.mxu0 %v716
  %822 = vmatprep.subr.bf16.mxu0 %v721
  %823 = vmatpush1.bf16.msra.mxu0 %v720
  %824 = vmatprep.subr.bf16.mxu0 %v725
  %825 = vmatpush1.bf16.msra.mxu0 %v724
  %826 = vmatprep.subr.bf16.mxu0 %v729
  %827 = vmatpush1.bf16.msra.mxu0 %v728
  %828 = vmatprep.mubr.bf16.mxu0 %v411
  %829 = vmatmul.mubr.bf16.gmra.mrb[0].mxu0 %v407
  %v830 = vpop.f32.mrb[0].mxu0
  %v831 = vadd.f32 %v35, %v830
  %v832 = vpop.f32.mrb[0].mxu0
  %v833 = vadd.f32 %v39, %v832
  %v834 = vpop.f32.mrb[0].mxu0
  %v835 = vadd.f32 %v35, %v834
  %v836 = vpop.f32.mrb[0].mxu0
  %v837 = vadd.f32 %v39, %v836
  %838 = vdwg.mxu0
  %839 = vmatprep.subr.bf16.mxu0 %v671
  %840 = vmatpush1.bf16.msra.mxu0 %v670
  %841 = vmatprep.subr.bf16.mxu0 %v675
  %842 = vmatpush1.bf16.msra.mxu0 %v674
  %843 = vmatprep.subr.bf16.mxu0 %v679
  %844 = vmatpush1.bf16.msra.mxu0 %v678
  %845 = vmatprep.subr.bf16.mxu0 %v683
  %846 = vmatpush1.bf16.msra.mxu0 %v682
  %847 = vmatprep.subr.bf16.mxu0 %v687
  %848 = vmatpush1.bf16.msra.mxu0 %v686
  %849 = vmatprep.subr.bf16.mxu0 %v691
  %850 = vmatpush1.bf16.msra.mxu0 %v690
  %851 = vmatprep.subr.bf16.mxu0 %v695
  %852 = vmatpush1.bf16.msra.mxu0 %v694
  %853 = vmatprep.subr.bf16.mxu0 %v699
  %854 = vmatpush1.bf16.msra.mxu0 %v698
  %855 = vmatprep.subr.bf16.mxu0 %v703
  %856 = vmatpush1.bf16.msra.mxu0 %v702
  %857 = vmatprep.subr.bf16.mxu0 %v707
  %858 = vmatpush1.bf16.msra.mxu0 %v706
  %859 = vmatprep.subr.bf16.mxu0 %v711
  %860 = vmatpush1.bf16.msra.mxu0 %v710
  %861 = vmatprep.subr.bf16.mxu0 %v715
  %862 = vmatpush1.bf16.msra.mxu0 %v714
  %863 = vmatprep.subr.bf16.mxu0 %v719
  %864 = vmatpush1.bf16.msra.mxu0 %v718
  %865 = vmatprep.subr.bf16.mxu0 %v723
  %866 = vmatpush1.bf16.msra.mxu0 %v722
  %867 = vmatprep.subr.bf16.mxu0 %v727
  %868 = vmatpush1.bf16.msra.mxu0 %v726
  %869 = vmatprep.subr.bf16.mxu0 %v731
  %870 = vmatpush1.bf16.msra.mxu0 %v730
  %871 = vmatprep.mubr.bf16.mxu0 %v411
  %872 = vmatmul.mubr.bf16.gmra.mrb[0].mxu0 %v407
  %v873 = vpop.f32.mrb[0].mxu0
  %v874 = vadd.f32 %v43, %v873
  %v875 = vpop.f32.mrb[0].mxu0
  %v876 = vadd.f32 %v47, %v875
  %v877 = vpop.f32.mrb[0].mxu0
  %v878 = vadd.f32 %v43, %v877
  %v879 = vpop.f32.mrb[0].mxu0
  %v880 = vadd.f32 %v47, %v879
  %881 = vdwg.mxu0
  %s882 = scalar_lea.vmem [#allocation3], 16
  %v883 = vld [vmem:[%s882] sm:$0xff]
  %v884 = vld [vmem:[%s882 + $0x8] sm:$0xff]
  %v885 = vxor.u32 %v831, 2147483648
  %v886 = vxor.u32 %v835, 2147483648
  %v887 = vmul.f32 %v885, 1.442695
  %v888 = vpow.pop %v887
  %v889 = vmul.f32 %v886, 1.442695
  %v890 = vpow.pop %v889
  %v891 = vadd.f32 %v888, 1.0
  %v892 = vadd.f32 %v890, 1.0
  %v893 = vrcp.pop %v891
  %v894 = vmul.f32 1.0, %v893
  %v895 = vrcp.pop %v892
  %v896 = vmul.f32 1.0, %v895
  %v897 = vxor.u32 %v833, 2147483648
  %v898 = vxor.u32 %v837, 2147483648
  %v899 = vmul.f32 %v897, 1.442695
  %v900 = vpow.pop %v899
  %v901 = vmul.f32 %v898, 1.442695
  %v902 = vpow.pop %v901
  %v903 = vadd.f32 %v900, 1.0
  %v904 = vadd.f32 %v902, 1.0
  %v905 = vrcp.pop %v903
  %v906 = vmul.f32 1.0, %v905
  %v907 = vrcp.pop %v904
  %v908 = vmul.f32 1.0, %v907
  %v909 = vtanh.pop %v874
  %v910 = vtanh.pop %v878
  %v911 = vxor.u32 %v876, 2147483648
  %v912 = vxor.u32 %v880, 2147483648
  %v913 = vmul.f32 %v911, 1.442695
  %v914 = vpow.pop %v913
  %v915 = vmul.f32 %v912, 1.442695
  %v916 = vpow.pop %v915
  %v917 = vadd.f32 %v914, 1.0
  %v918 = vadd.f32 %v916, 1.0
  %v919 = vrcp.pop %v917
  %v920 = vmul.f32 1.0, %v919
  %v921 = vrcp.pop %v918
  %v922 = vmul.f32 1.0, %v921
  %v923 = vmul.f32 %v906, %v883
  %v924 = vmul.f32 %v908, %v884
  %v925 = vmul.f32 %v894, %v909
  %v926 = vmul.f32 %v896, %v910
  %v927 = vadd.f32 %v923, %v925
  %v928 = vadd.f32 %v924, %v926
  %v929 = vtanh.pop %v927
  %v930 = vtanh.pop %v928
  %v931 = vmul.f32 %v920, %v929
  %v932 = vmul.f32 %v922, %v930
  %933 = vst [vmem:[%s408] sm:$0xff] %v931
  %934 = vst [vmem:[%s408 + $0x8] sm:$0xff] %v932
  %935 = vst [vmem:[%s882] sm:$0xff] %v927
  %936 = vst [vmem:[%s882 + $0x8] sm:$0xff] %v928
  %v937 = vpack.c.bf16 %v932, %v931
  %v939 = vunpack.c.l.b16 %v937
  %v940 = vunpack.c.h.b16 %v937
  %v941 = vpack.c.b16 %v939, %v939
  %v942 = vpack.c.b16 %v940, %v940
  %945 = vst [vmem:[%s4] sm:$0xf] %v941
  %946 = vst [vmem:[%s4 + $0x4] sm:$0xf] %v942
  %s947 = scalar_lea.vmem %s0, 32
  %v948 = vld [vmem:[%s947] sm:$0xff]
  %v949 = vld [vmem:[%s947 + $0x8] sm:$0xff]
  %v950 = vld [vmem:[%s947 + $0x10] sm:$0xff]
  %v951 = vld [vmem:[%s947 + $0x18] sm:$0xff]
  %v952 = vunpack.c.l.bf16 %v948
  %v953 = vunpack.c.h.bf16 %v948
  %v954 = vunpack.c.l.bf16 %v949
  %v955 = vunpack.c.h.bf16 %v949
  %v956 = vunpack.c.l.bf16 %v950
  %v957 = vunpack.c.h.bf16 %v950
  %v958 = vunpack.c.l.bf16 %v951
  %v959 = vunpack.c.h.bf16 %v951
  %v960 = vld [vmem:[#allocation2] sm:$0xff]
  %v961 = vld [vmem:[#allocation2 + $0x8] sm:$0xff]
  %v962 = vpack.c.bf16 %v961, %v960
  %v963 = vld [vmem:[%s1] sm:$0xff]
  %v964 = vld [vmem:[%s1 + $0x8] sm:$0xff]
  %v965 = vld [vmem:[%s1 + $0x10] sm:$0xff]
  %v966 = vld [vmem:[%s1 + $0x18] sm:$0xff]
  %v967 = vld [vmem:[%s1 + $0x20] sm:$0xff]
  %v968 = vld [vmem:[%s1 + $0x28] sm:$0xff]
  %v969 = vld [vmem:[%s1 + $0x30] sm:$0xff]
  %v970 = vld [vmem:[%s1 + $0x38] sm:$0xff]
  %v971 = vld [vmem:[%s1 + $0x40] sm:$0xff]
  %v972 = vld [vmem:[%s1 + $0x48] sm:$0xff]
  %v973 = vld [vmem:[%s1 + $0x50] sm:$0xff]
  %v974 = vld [vmem:[%s1 + $0x58] sm:$0xff]
  %v975 = vld [vmem:[%s1 + $0x60] sm:$0xff]
  %v976 = vld [vmem:[%s1 + $0x68] sm:$0xff]
  %v977 = vld [vmem:[%s1 + $0x70] sm:$0xff]
  %v978 = vld [vmem:[%s1 + $0x78] sm:$0xff]
  %v979 = vld [vmem:[%s1 + $0x80] sm:$0xff]
  %v980 = vld [vmem:[%s1 + $0x88] sm:$0xff]
  %v981 = vld [vmem:[%s1 + $0x90] sm:$0xff]
  %v982 = vld [vmem:[%s1 + $0x98] sm:$0xff]
  %v983 = vld [vmem:[%s1 + $0xa0] sm:$0xff]
  %v984 = vld [vmem:[%s1 + $0xa8] sm:$0xff]
  %v985 = vld [vmem:[%s1 + $0xb0] sm:$0xff]
  %v986 = vld [vmem:[%s1 + $0xb8] sm:$0xff]
  %v987 = vld [vmem:[%s1 + $0xc0] sm:$0xff]
  %v988 = vld [vmem:[%s1 + $0xc8] sm:$0xff]
  %v989 = vld [vmem:[%s1 + $0xd0] sm:$0xff]
  %v990 = vld [vmem:[%s1 + $0xd8] sm:$0xff]
  %v991 = vld [vmem:[%s1 + $0xe0] sm:$0xff]
  %v992 = vld [vmem:[%s1 + $0xe8] sm:$0xff]
  %v993 = vld [vmem:[%s1 + $0xf0] sm:$0xff]
  %v994 = vld [vmem:[%s1 + $0xf8] sm:$0xff]
  %v1027 = vunpack.c.l.b16 %v963
  %v1028 = vunpack.c.h.b16 %v963
  %v1029 = vunpack.c.l.b16 %v964
  %v1030 = vunpack.c.h.b16 %v964
  %v1031 = vunpack.c.l.b16 %v965
  %v1032 = vunpack.c.h.b16 %v965
  %v1033 = vunpack.c.l.b16 %v966
  %v1034 = vunpack.c.h.b16 %v966
  %v1035 = vunpack.c.l.b16 %v967
  %v1036 = vunpack.c.h.b16 %v967
  %v1037 = vunpack.c.l.b16 %v968
  %v1038 = vunpack.c.h.b16 %v968
  %v1039 = vunpack.c.l.b16 %v969
  %v1040 = vunpack.c.h.b16 %v969
  %v1041 = vunpack.c.l.b16 %v970
  %v1042 = vunpack.c.h.b16 %v970
  %v1043 = vunpack.c.l.b16 %v971
  %v1044 = vunpack.c.h.b16 %v971
  %v1045 = vunpack.c.l.b16 %v972
  %v1046 = vunpack.c.h.b16 %v972
  %v1047 = vunpack.c.l.b16 %v973
  %v1048 = vunpack.c.h.b16 %v973
  %v1049 = vunpack.c.l.b16 %v974
  %v1050 = vunpack.c.h.b16 %v974
  %v1051 = vunpack.c.l.b16 %v975
  %v1052 = vunpack.c.h.b16 %v975
  %v1053 = vunpack.c.l.b16 %v976
  %v1054 = vunpack.c.h.b16 %v976
  %v1055 = vunpack.c.l.b16 %v977
  %v1056 = vunpack.c.h.b16 %v977
  %v1057 = vunpack.c.l.b16 %v978
  %v1058 = vunpack.c.h.b16 %v978
  %v1059 = vunpack.c.l.b16 %v979
  %v1060 = vunpack.c.h.b16 %v979
  %v1061 = vunpack.c.l.b16 %v980
  %v1062 = vunpack.c.h.b16 %v980
  %v1063 = vunpack.c.l.b16 %v981
  %v1064 = vunpack.c.h.b16 %v981
  %v1065 = vunpack.c.l.b16 %v982
  %v1066 = vunpack.c.h.b16 %v982
  %v1067 = vunpack.c.l.b16 %v983
  %v1068 = vunpack.c.h.b16 %v983
  %v1069 = vunpack.c.l.b16 %v984
  %v1070 = vunpack.c.h.b16 %v984
  %v1071 = vunpack.c.l.b16 %v985
  %v1072 = vunpack.c.h.b16 %v985
  %v1073 = vunpack.c.l.b16 %v986
  %v1074 = vunpack.c.h.b16 %v986
  %v1075 = vunpack.c.l.b16 %v987
  %v1076 = vunpack.c.h.b16 %v987
  %v1077 = vunpack.c.l.b16 %v988
  %v1078 = vunpack.c.h.b16 %v988
  %v1079 = vunpack.c.l.b16 %v989
  %v1080 = vunpack.c.h.b16 %v989
  %v1081 = vunpack.c.l.b16 %v990
  %v1082 = vunpack.c.h.b16 %v990
  %v1083 = vunpack.c.l.b16 %v991
  %v1084 = vunpack.c.h.b16 %v991
  %v1085 = vunpack.c.l.b16 %v992
  %v1086 = vunpack.c.h.b16 %v992
  %v1087 = vunpack.c.l.b16 %v993
  %v1088 = vunpack.c.h.b16 %v993
  %v1089 = vunpack.c.l.b16 %v994
  %v1090 = vunpack.c.h.b16 %v994
  %v1091 = vpack.c.b16 %v1031, %v1027
  %v1092 = vpack.c.b16 %v1032, %v1028
  %v1093 = vpack.c.b16 %v1033, %v1029
  %v1094 = vpack.c.b16 %v1034, %v1030
  %v1095 = vpack.c.b16 %v1039, %v1035
  %v1096 = vpack.c.b16 %v1040, %v1036
  %v1097 = vpack.c.b16 %v1041, %v1037
  %v1098 = vpack.c.b16 %v1042, %v1038
  %v1099 = vpack.c.b16 %v1047, %v1043
  %v1100 = vpack.c.b16 %v1048, %v1044
  %v1101 = vpack.c.b16 %v1049, %v1045
  %v1102 = vpack.c.b16 %v1050, %v1046
  %v1103 = vpack.c.b16 %v1055, %v1051
  %v1104 = vpack.c.b16 %v1056, %v1052
  %v1105 = vpack.c.b16 %v1057, %v1053
  %v1106 = vpack.c.b16 %v1058, %v1054
  %v1107 = vpack.c.b16 %v1063, %v1059
  %v1108 = vpack.c.b16 %v1064, %v1060
  %v1109 = vpack.c.b16 %v1065, %v1061
  %v1110 = vpack.c.b16 %v1066, %v1062
  %v1111 = vpack.c.b16 %v1071, %v1067
  %v1112 = vpack.c.b16 %v1072, %v1068
  %v1113 = vpack.c.b16 %v1073, %v1069
  %v1114 = vpack.c.b16 %v1074, %v1070
  %v1115 = vpack.c.b16 %v1079, %v1075
  %v1116 = vpack.c.b16 %v1080, %v1076
  %v1117 = vpack.c.b16 %v1081, %v1077
  %v1118 = vpack.c.b16 %v1082, %v1078
  %v1119 = vpack.c.b16 %v1087, %v1083
  %v1120 = vpack.c.b16 %v1088, %v1084
  %v1121 = vpack.c.b16 %v1089, %v1085
  %v1122 = vpack.c.b16 %v1090, %v1086
  %1155 = vmatprep.subr.bf16.mxu0 %v1092
  %1156 = vmatpush1.bf16.msra.mxu0 %v1091
  %1157 = vmatprep.subr.bf16.mxu0 %v1096
  %1158 = vmatpush1.bf16.msra.mxu0 %v1095
  %1159 = vmatprep.subr.bf16.mxu0 %v1100
  %1160 = vmatpush1.bf16.msra.mxu0 %v1099
  %1161 = vmatprep.subr.bf16.mxu0 %v1104
  %1162 = vmatpush1.bf16.msra.mxu0 %v1103
  %1163 = vmatprep.subr.bf16.mxu0 %v1108
  %1164 = vmatpush1.bf16.msra.mxu0 %v1107
  %1165 = vmatprep.subr.bf16.mxu0 %v1112
  %1166 = vmatpush1.bf16.msra.mxu0 %v1111
  %1167 = vmatprep.subr.bf16.mxu0 %v1116
  %1168 = vmatpush1.bf16.msra.mxu0 %v1115
  %1169 = vmatprep.subr.bf16.mxu0 %v1120
  %1170 = vmatpush1.bf16.msra.mxu0 %v1119
  %1171 = vmatprep.subr.bf16.mxu0 0
  %1172 = vmatpush1.bf16.msra.mxu0 0
  %1173 = vmatprep.subr.bf16.mxu0 0
  %1174 = vmatpush1.bf16.msra.mxu0 0
  %1175 = vmatprep.subr.bf16.mxu0 0
  %1176 = vmatpush1.bf16.msra.mxu0 0
  %1177 = vmatprep.subr.bf16.mxu0 0
  %1178 = vmatpush1.bf16.msra.mxu0 0
  %1179 = vmatprep.subr.bf16.mxu0 0
  %1180 = vmatpush1.bf16.msra.mxu0 0
  %1181 = vmatprep.subr.bf16.mxu0 0
  %1182 = vmatpush1.bf16.msra.mxu0 0
  %1183 = vmatprep.subr.bf16.mxu0 0
  %1184 = vmatpush1.bf16.msra.mxu0 0
  %1185 = vmatprep.subr.bf16.mxu0 0
  %1186 = vmatpush1.bf16.msra.mxu0 0
  %1187 = vmatprep.mubr.bf16.mxu0 0
  %1188 = vmatmul.mubr.bf16.gmra.mrb[0].mxu0 %v962
  %v1189 = vpop.f32.mrb[0].mxu0
  %v1190 = vadd.f32 0.0, %v1189
  %v1191 = vpop.f32.mrb[0].mxu0
  %v1192 = vadd.f32 0.0, %v1191
  %v1193 = vpop.f32.mrb[0].mxu0
  %v1194 = vadd.f32 0.0, %v1193
  %v1195 = vpop.f32.mrb[0].mxu0
  %v1196 = vadd.f32 0.0, %v1195
  %1197 = vdwg.mxu0
  %1198 = vmatprep.subr.bf16.mxu0 %v1094
  %1199 = vmatpush1.bf16.msra.mxu0 %v1093
  %1200 = vmatprep.subr.bf16.mxu0 %v1098
  %1201 = vmatpush1.bf16.msra.mxu0 %v1097
  %1202 = vmatprep.subr.bf16.mxu0 %v1102
  %1203 = vmatpush1.bf16.msra.mxu0 %v1101
  %1204 = vmatprep.subr.bf16.mxu0 %v1106
  %1205 = vmatpush1.bf16.msra.mxu0 %v1105
  %1206 = vmatprep.subr.bf16.mxu0 %v1110
  %1207 = vmatpush1.bf16.msra.mxu0 %v1109
  %1208 = vmatprep.subr.bf16.mxu0 %v1114
  %1209 = vmatpush1.bf16.msra.mxu0 %v1113
  %1210 = vmatprep.subr.bf16.mxu0 %v1118
  %1211 = vmatpush1.bf16.msra.mxu0 %v1117
  %1212 = vmatprep.subr.bf16.mxu0 %v1122
  %1213 = vmatpush1.bf16.msra.mxu0 %v1121
  %1214 = vmatprep.subr.bf16.mxu0 0
  %1215 = vmatpush1.bf16.msra.mxu0 0
  %1216 = vmatprep.subr.bf16.mxu0 0
  %1217 = vmatpush1.bf16.msra.mxu0 0
  %1218 = vmatprep.subr.bf16.mxu0 0
  %1219 = vmatpush1.bf16.msra.mxu0 0
  %1220 = vmatprep.subr.bf16.mxu0 0
  %1221 = vmatpush1.bf16.msra.mxu0 0
  %1222 = vmatprep.subr.bf16.mxu0 0
  %1223 = vmatpush1.bf16.msra.mxu0 0
  %1224 = vmatprep.subr.bf16.mxu0 0
  %1225 = vmatpush1.bf16.msra.mxu0 0
  %1226 = vmatprep.subr.bf16.mxu0 0
  %1227 = vmatpush1.bf16.msra.mxu0 0
  %1228 = vmatprep.subr.bf16.mxu0 0
  %1229 = vmatpush1.bf16.msra.mxu0 0
  %1230 = vmatprep.mubr.bf16.mxu0 0
  %1231 = vmatmul.mubr.bf16.gmra.mrb[0].mxu0 %v962
  %v1232 = vpop.f32.mrb[0].mxu0
  %v1233 = vadd.f32 0.0, %v1232
  %v1234 = vpop.f32.mrb[0].mxu0
  %v1235 = vadd.f32 0.0, %v1234
  %v1236 = vpop.f32.mrb[0].mxu0
  %v1237 = vadd.f32 0.0, %v1236
  %v1238 = vpop.f32.mrb[0].mxu0
  %v1239 = vadd.f32 0.0, %v1238
  %1240 = vdwg.mxu0
  %v1241 = vadd.f32 %v952, %v1190
  %v1242 = vadd.f32 %v953, %v1192
  %v1243 = vadd.f32 %v954, %v1233
  %v1244 = vadd.f32 %v955, %v1235
  %v1245 = vadd.f32 %v956, %v1194
  %v1246 = vadd.f32 %v957, %v1196
  %v1247 = vadd.f32 %v958, %v1237
  %v1248 = vadd.f32 %v959, %v1239
  %v1249 = vld [vmem:[#allocation3] sm:$0xff]
  %v1250 = vld [vmem:[#allocation3 + $0x8] sm:$0xff]
  %v1251 = vxor.u32 %v1241, 2147483648
  %v1252 = vxor.u32 %v1245, 2147483648
  %v1253 = vmul.f32 %v1251, 1.442695
  %v1254 = vpow.pop %v1253
  %v1255 = vmul.f32 %v1252, 1.442695
  %v1256 = vpow.pop %v1255
  %v1257 = vadd.f32 %v1254, 1.0
  %v1258 = vadd.f32 %v1256, 1.0
  %v1259 = vrcp.pop %v1257
  %v1260 = vmul.f32 1.0, %v1259
  %v1261 = vrcp.pop %v1258
  %v1262 = vmul.f32 1.0, %v1261
  %v1263 = vxor.u32 %v1242, 2147483648
  %v1264 = vxor.u32 %v1246, 2147483648
  %v1265 = vmul.f32 %v1263, 1.442695
  %v1266 = vpow.pop %v1265
  %v1267 = vmul.f32 %v1264, 1.442695
  %v1268 = vpow.pop %v1267
  %v1269 = vadd.f32 %v1266, 1.0
  %v1270 = vadd.f32 %v1268, 1.0
  %v1271 = vrcp.pop %v1269
  %v1272 = vmul.f32 1.0, %v1271
  %v1273 = vrcp.pop %v1270
  %v1274 = vmul.f32 1.0, %v1273
  %v1275 = vtanh.pop %v1243
  %v1276 = vtanh.pop %v1247
  %v1277 = vxor.u32 %v1244, 2147483648
  %v1278 = vxor.u32 %v1248, 2147483648
  %v1279 = vmul.f32 %v1277, 1.442695
  %v1280 = vpow.pop %v1279
  %v1281 = vmul.f32 %v1278, 1.442695
  %v1282 = vpow.pop %v1281
  %v1283 = vadd.f32 %v1280, 1.0
  %v1284 = vadd.f32 %v1282, 1.0
  %v1285 = vrcp.pop %v1283
  %v1286 = vmul.f32 1.0, %v1285
  %v1287 = vrcp.pop %v1284
  %v1288 = vmul.f32 1.0, %v1287
  %v1289 = vmul.f32 %v1272, %v1249
  %v1290 = vmul.f32 %v1274, %v1250
  %v1291 = vmul.f32 %v1260, %v1275
  %v1292 = vmul.f32 %v1262, %v1276
  %v1293 = vadd.f32 %v1289, %v1291
  %v1294 = vadd.f32 %v1290, %v1292
  %v1295 = vtanh.pop %v1293
  %v1296 = vtanh.pop %v1294
  %v1297 = vmul.f32 %v1286, %v1295
  %v1298 = vmul.f32 %v1288, %v1296
  %1299 = vst [vmem:[#allocation2] sm:$0xff] %v1297
  %1300 = vst [vmem:[#allocation2 + $0x8] sm:$0xff] %v1298
  %1301 = vst [vmem:[#allocation3] sm:$0xff] %v1293
  %1302 = vst [vmem:[#allocation3 + $0x8] sm:$0xff] %v1294
  %v1303 = vpack.c.bf16 %v1298, %v1297
  %v1304 = vld [vmem:[%s408] sm:$0xff]
  %v1305 = vld [vmem:[%s408 + $0x8] sm:$0xff]
  %v1306 = vpack.c.bf16 %v1305, %v1304
  %v1307 = vld [vmem:[%s2] sm:$0xff]
  %v1308 = vld [vmem:[%s2 + $0x8] sm:$0xff]
  %v1309 = vld [vmem:[%s2 + $0x10] sm:$0xff]
  %v1310 = vld [vmem:[%s2 + $0x18] sm:$0xff]
  %v1311 = vld [vmem:[%s2 + $0x20] sm:$0xff]
  %v1312 = vld [vmem:[%s2 + $0x28] sm:$0xff]
  %v1313 = vld [vmem:[%s2 + $0x30] sm:$0xff]
  %v1314 = vld [vmem:[%s2 + $0x38] sm:$0xff]
  %v1315 = vld [vmem:[%s2 + $0x40] sm:$0xff]
  %v1316 = vld [vmem:[%s2 + $0x48] sm:$0xff]
  %v1317 = vld [vmem:[%s2 + $0x50] sm:$0xff]
  %v1318 = vld [vmem:[%s2 + $0x58] sm:$0xff]
  %v1319 = vld [vmem:[%s2 + $0x60] sm:$0xff]
  %v1320 = vld [vmem:[%s2 + $0x68] sm:$0xff]
  %v1321 = vld [vmem:[%s2 + $0x70] sm:$0xff]
  %v1322 = vld [vmem:[%s2 + $0x78] sm:$0xff]
  %v1323 = vld [vmem:[%s2 + $0x80] sm:$0xff]
  %v1324 = vld [vmem:[%s2 + $0x88] sm:$0xff]
  %v1325 = vld [vmem:[%s2 + $0x90] sm:$0xff]
  %v1326 = vld [vmem:[%s2 + $0x98] sm:$0xff]
  %v1327 = vld [vmem:[%s2 + $0xa0] sm:$0xff]
  %v1328 = vld [vmem:[%s2 + $0xa8] sm:$0xff]
  %v1329 = vld [vmem:[%s2 + $0xb0] sm:$0xff]
  %v1330 = vld [vmem:[%s2 + $0xb8] sm:$0xff]
  %v1331 = vld [vmem:[%s2 + $0xc0] sm:$0xff]
  %v1332 = vld [vmem:[%s2 + $0xc8] sm:$0xff]
  %v1333 = vld [vmem:[%s2 + $0xd0] sm:$0xff]
  %v1334 = vld [vmem:[%s2 + $0xd8] sm:$0xff]
  %v1335 = vld [vmem:[%s2 + $0xe0] sm:$0xff]
  %v1336 = vld [vmem:[%s2 + $0xe8] sm:$0xff]
  %v1337 = vld [vmem:[%s2 + $0xf0] sm:$0xff]
  %v1338 = vld [vmem:[%s2 + $0xf8] sm:$0xff]
  %v1339 = vld [vmem:[%s2 + $0x100] sm:$0xff]
  %v1340 = vld [vmem:[%s2 + $0x108] sm:$0xff]
  %v1341 = vld [vmem:[%s2 + $0x110] sm:$0xff]
  %v1342 = vld [vmem:[%s2 + $0x118] sm:$0xff]
  %v1343 = vld [vmem:[%s2 + $0x120] sm:$0xff]
  %v1344 = vld [vmem:[%s2 + $0x128] sm:$0xff]
  %v1345 = vld [vmem:[%s2 + $0x130] sm:$0xff]
  %v1346 = vld [vmem:[%s2 + $0x138] sm:$0xff]
  %v1347 = vld [vmem:[%s2 + $0x140] sm:$0xff]
  %v1348 = vld [vmem:[%s2 + $0x148] sm:$0xff]
  %v1349 = vld [vmem:[%s2 + $0x150] sm:$0xff]
  %v1350 = vld [vmem:[%s2 + $0x158] sm:$0xff]
  %v1351 = vld [vmem:[%s2 + $0x160] sm:$0xff]
  %v1352 = vld [vmem:[%s2 + $0x168] sm:$0xff]
  %v1353 = vld [vmem:[%s2 + $0x170] sm:$0xff]
  %v1354 = vld [vmem:[%s2 + $0x178] sm:$0xff]
  %v1355 = vld [vmem:[%s2 + $0x180] sm:$0xff]
  %v1356 = vld [vmem:[%s2 + $0x188] sm:$0xff]
  %v1357 = vld [vmem:[%s2 + $0x190] sm:$0xff]
  %v1358 = vld [vmem:[%s2 + $0x198] sm:$0xff]
  %v1359 = vld [vmem:[%s2 + $0x1a0] sm:$0xff]
  %v1360 = vld [vmem:[%s2 + $0x1a8] sm:$0xff]
  %v1361 = vld [vmem:[%s2 + $0x1b0] sm:$0xff]
  %v1362 = vld [vmem:[%s2 + $0x1b8] sm:$0xff]
  %v1363 = vld [vmem:[%s2 + $0x1c0] sm:$0xff]
  %v1364 = vld [vmem:[%s2 + $0x1c8] sm:$0xff]
  %v1365 = vld [vmem:[%s2 + $0x1d0] sm:$0xff]
  %v1366 = vld [vmem:[%s2 + $0x1d8] sm:$0xff]
  %v1367 = vld [vmem:[%s2 + $0x1e0] sm:$0xff]
  %v1368 = vld [vmem:[%s2 + $0x1e8] sm:$0xff]
  %v1369 = vld [vmem:[%s2 + $0x1f0] sm:$0xff]
  %v1370 = vld [vmem:[%s2 + $0x1f8] sm:$0xff]
  %v1435 = vunpack.c.l.b16 %v1307
  %v1436 = vunpack.c.h.b16 %v1307
  %v1437 = vunpack.c.l.b16 %v1308
  %v1438 = vunpack.c.h.b16 %v1308
  %v1439 = vunpack.c.l.b16 %v1309
  %v1440 = vunpack.c.h.b16 %v1309
  %v1441 = vunpack.c.l.b16 %v1310
  %v1442 = vunpack.c.h.b16 %v1310
  %v1443 = vunpack.c.l.b16 %v1311
  %v1444 = vunpack.c.h.b16 %v1311
  %v1445 = vunpack.c.l.b16 %v1312
  %v1446 = vunpack.c.h.b16 %v1312
  %v1447 = vunpack.c.l.b16 %v1313
  %v1448 = vunpack.c.h.b16 %v1313
  %v1449 = vunpack.c.l.b16 %v1314
  %v1450 = vunpack.c.h.b16 %v1314
  %v1451 = vunpack.c.l.b16 %v1315
  %v1452 = vunpack.c.h.b16 %v1315
  %v1453 = vunpack.c.l.b16 %v1316
  %v1454 = vunpack.c.h.b16 %v1316
  %v1455 = vunpack.c.l.b16 %v1317
  %v1456 = vunpack.c.h.b16 %v1317
  %v1457 = vunpack.c.l.b16 %v1318
  %v1458 = vunpack.c.h.b16 %v1318
  %v1459 = vunpack.c.l.b16 %v1319
  %v1460 = vunpack.c.h.b16 %v1319
  %v1461 = vunpack.c.l.b16 %v1320
  %v1462 = vunpack.c.h.b16 %v1320
  %v1463 = vunpack.c.l.b16 %v1321
  %v1464 = vunpack.c.h.b16 %v1321
  %v1465 = vunpack.c.l.b16 %v1322
  %v1466 = vunpack.c.h.b16 %v1322
  %v1467 = vunpack.c.l.b16 %v1323
  %v1468 = vunpack.c.h.b16 %v1323
  %v1469 = vunpack.c.l.b16 %v1324
  %v1470 = vunpack.c.h.b16 %v1324
  %v1471 = vunpack.c.l.b16 %v1325
  %v1472 = vunpack.c.h.b16 %v1325
  %v1473 = vunpack.c.l.b16 %v1326
  %v1474 = vunpack.c.h.b16 %v1326
  %v1475 = vunpack.c.l.b16 %v1327
  %v1476 = vunpack.c.h.b16 %v1327
  %v1477 = vunpack.c.l.b16 %v1328
  %v1478 = vunpack.c.h.b16 %v1328
  %v1479 = vunpack.c.l.b16 %v1329
  %v1480 = vunpack.c.h.b16 %v1329
  %v1481 = vunpack.c.l.b16 %v1330
  %v1482 = vunpack.c.h.b16 %v1330
  %v1483 = vunpack.c.l.b16 %v1331
  %v1484 = vunpack.c.h.b16 %v1331
  %v1485 = vunpack.c.l.b16 %v1332
  %v1486 = vunpack.c.h.b16 %v1332
  %v1487 = vunpack.c.l.b16 %v1333
  %v1488 = vunpack.c.h.b16 %v1333
  %v1489 = vunpack.c.l.b16 %v1334
  %v1490 = vunpack.c.h.b16 %v1334
  %v1491 = vunpack.c.l.b16 %v1335
  %v1492 = vunpack.c.h.b16 %v1335
  %v1493 = vunpack.c.l.b16 %v1336
  %v1494 = vunpack.c.h.b16 %v1336
  %v1495 = vunpack.c.l.b16 %v1337
  %v1496 = vunpack.c.h.b16 %v1337
  %v1497 = vunpack.c.l.b16 %v1338
  %v1498 = vunpack.c.h.b16 %v1338
  %v1499 = vunpack.c.l.b16 %v1339
  %v1500 = vunpack.c.h.b16 %v1339
  %v1501 = vunpack.c.l.b16 %v1340
  %v1502 = vunpack.c.h.b16 %v1340
  %v1503 = vunpack.c.l.b16 %v1341
  %v1504 = vunpack.c.h.b16 %v1341
  %v1505 = vunpack.c.l.b16 %v1342
  %v1506 = vunpack.c.h.b16 %v1342
  %v1507 = vunpack.c.l.b16 %v1343
  %v1508 = vunpack.c.h.b16 %v1343
  %v1509 = vunpack.c.l.b16 %v1344
  %v1510 = vunpack.c.h.b16 %v1344
  %v1511 = vunpack.c.l.b16 %v1345
  %v1512 = vunpack.c.h.b16 %v1345
  %v1513 = vunpack.c.l.b16 %v1346
  %v1514 = vunpack.c.h.b16 %v1346
  %v1515 = vunpack.c.l.b16 %v1347
  %v1516 = vunpack.c.h.b16 %v1347
  %v1517 = vunpack.c.l.b16 %v1348
  %v1518 = vunpack.c.h.b16 %v1348
  %v1519 = vunpack.c.l.b16 %v1349
  %v1520 = vunpack.c.h.b16 %v1349
  %v1521 = vunpack.c.l.b16 %v1350
  %v1522 = vunpack.c.h.b16 %v1350
  %v1523 = vunpack.c.l.b16 %v1351
  %v1524 = vunpack.c.h.b16 %v1351
  %v1525 = vunpack.c.l.b16 %v1352
  %v1526 = vunpack.c.h.b16 %v1352
  %v1527 = vunpack.c.l.b16 %v1353
  %v1528 = vunpack.c.h.b16 %v1353
  %v1529 = vunpack.c.l.b16 %v1354
  %v1530 = vunpack.c.h.b16 %v1354
  %v1531 = vunpack.c.l.b16 %v1355
  %v1532 = vunpack.c.h.b16 %v1355
  %v1533 = vunpack.c.l.b16 %v1356
  %v1534 = vunpack.c.h.b16 %v1356
  %v1535 = vunpack.c.l.b16 %v1357
  %v1536 = vunpack.c.h.b16 %v1357
  %v1537 = vunpack.c.l.b16 %v1358
  %v1538 = vunpack.c.h.b16 %v1358
  %v1539 = vunpack.c.l.b16 %v1359
  %v1540 = vunpack.c.h.b16 %v1359
  %v1541 = vunpack.c.l.b16 %v1360
  %v1542 = vunpack.c.h.b16 %v1360
  %v1543 = vunpack.c.l.b16 %v1361
  %v1544 = vunpack.c.h.b16 %v1361
  %v1545 = vunpack.c.l.b16 %v1362
  %v1546 = vunpack.c.h.b16 %v1362
  %v1547 = vunpack.c.l.b16 %v1363
  %v1548 = vunpack.c.h.b16 %v1363
  %v1549 = vunpack.c.l.b16 %v1364
  %v1550 = vunpack.c.h.b16 %v1364
  %v1551 = vunpack.c.l.b16 %v1365
  %v1552 = vunpack.c.h.b16 %v1365
  %v1553 = vunpack.c.l.b16 %v1366
  %v1554 = vunpack.c.h.b16 %v1366
  %v1555 = vunpack.c.l.b16 %v1367
  %v1556 = vunpack.c.h.b16 %v1367
  %v1557 = vunpack.c.l.b16 %v1368
  %v1558 = vunpack.c.h.b16 %v1368
  %v1559 = vunpack.c.l.b16 %v1369
  %v1560 = vunpack.c.h.b16 %v1369
  %v1561 = vunpack.c.l.b16 %v1370
  %v1562 = vunpack.c.h.b16 %v1370
  %v1563 = vpack.c.b16 %v1439, %v1435
  %v1564 = vpack.c.b16 %v1440, %v1436
  %v1565 = vpack.c.b16 %v1441, %v1437
  %v1566 = vpack.c.b16 %v1442, %v1438
  %v1567 = vpack.c.b16 %v1447, %v1443
  %v1568 = vpack.c.b16 %v1448, %v1444
  %v1569 = vpack.c.b16 %v1449, %v1445
  %v1570 = vpack.c.b16 %v1450, %v1446
  %v1571 = vpack.c.b16 %v1455, %v1451
  %v1572 = vpack.c.b16 %v1456, %v1452
  %v1573 = vpack.c.b16 %v1457, %v1453
  %v1574 = vpack.c.b16 %v1458, %v1454
  %v1575 = vpack.c.b16 %v1463, %v1459
  %v1576 = vpack.c.b16 %v1464, %v1460
  %v1577 = vpack.c.b16 %v1465, %v1461
  %v1578 = vpack.c.b16 %v1466, %v1462
  %v1579 = vpack.c.b16 %v1471, %v1467
  %v1580 = vpack.c.b16 %v1472, %v1468
  %v1581 = vpack.c.b16 %v1473, %v1469
  %v1582 = vpack.c.b16 %v1474, %v1470
  %v1583 = vpack.c.b16 %v1479, %v1475
  %v1584 = vpack.c.b16 %v1480, %v1476
  %v1585 = vpack.c.b16 %v1481, %v1477
  %v1586 = vpack.c.b16 %v1482, %v1478
  %v1587 = vpack.c.b16 %v1487, %v1483
  %v1588 = vpack.c.b16 %v1488, %v1484
  %v1589 = vpack.c.b16 %v1489, %v1485
  %v1590 = vpack.c.b16 %v1490, %v1486
  %v1591 = vpack.c.b16 %v1495, %v1491
  %v1592 = vpack.c.b16 %v1496, %v1492
  %v1593 = vpack.c.b16 %v1497, %v1493
  %v1594 = vpack.c.b16 %v1498, %v1494
  %v1595 = vpack.c.b16 %v1503, %v1499
  %v1596 = vpack.c.b16 %v1504, %v1500
  %v1597 = vpack.c.b16 %v1505, %v1501
  %v1598 = vpack.c.b16 %v1506, %v1502
  %v1599 = vpack.c.b16 %v1511, %v1507
  %v1600 = vpack.c.b16 %v1512, %v1508
  %v1601 = vpack.c.b16 %v1513, %v1509
  %v1602 = vpack.c.b16 %v1514, %v1510
  %v1603 = vpack.c.b16 %v1519, %v1515
  %v1604 = vpack.c.b16 %v1520, %v1516
  %v1605 = vpack.c.b16 %v1521, %v1517
  %v1606 = vpack.c.b16 %v1522, %v1518
  %v1607 = vpack.c.b16 %v1527, %v1523
  %v1608 = vpack.c.b16 %v1528, %v1524
  %v1609 = vpack.c.b16 %v1529, %v1525
  %v1610 = vpack.c.b16 %v1530, %v1526
  %v1611 = vpack.c.b16 %v1535, %v1531
  %v1612 = vpack.c.b16 %v1536, %v1532
  %v1613 = vpack.c.b16 %v1537, %v1533
  %v1614 = vpack.c.b16 %v1538, %v1534
  %v1615 = vpack.c.b16 %v1543, %v1539
  %v1616 = vpack.c.b16 %v1544, %v1540
  %v1617 = vpack.c.b16 %v1545, %v1541
  %v1618 = vpack.c.b16 %v1546, %v1542
  %v1619 = vpack.c.b16 %v1551, %v1547
  %v1620 = vpack.c.b16 %v1552, %v1548
  %v1621 = vpack.c.b16 %v1553, %v1549
  %v1622 = vpack.c.b16 %v1554, %v1550
  %v1623 = vpack.c.b16 %v1559, %v1555
  %v1624 = vpack.c.b16 %v1560, %v1556
  %v1625 = vpack.c.b16 %v1561, %v1557
  %v1626 = vpack.c.b16 %v1562, %v1558
  %1691 = vmatprep.subr.bf16.mxu0 %v1564
  %1692 = vmatpush1.bf16.msra.mxu0 %v1563
  %1693 = vmatprep.subr.bf16.mxu0 %v1568
  %1694 = vmatpush1.bf16.msra.mxu0 %v1567
  %1695 = vmatprep.subr.bf16.mxu0 %v1572
  %1696 = vmatpush1.bf16.msra.mxu0 %v1571
  %1697 = vmatprep.subr.bf16.mxu0 %v1576
  %1698 = vmatpush1.bf16.msra.mxu0 %v1575
  %1699 = vmatprep.subr.bf16.mxu0 %v1580
  %1700 = vmatpush1.bf16.msra.mxu0 %v1579
  %1701 = vmatprep.subr.bf16.mxu0 %v1584
  %1702 = vmatpush1.bf16.msra.mxu0 %v1583
  %1703 = vmatprep.subr.bf16.mxu0 %v1588
  %1704 = vmatpush1.bf16.msra.mxu0 %v1587
  %1705 = vmatprep.subr.bf16.mxu0 %v1592
  %1706 = vmatpush1.bf16.msra.mxu0 %v1591
  %1707 = vmatprep.subr.bf16.mxu0 %v1596
  %1708 = vmatpush1.bf16.msra.mxu0 %v1595
  %1709 = vmatprep.subr.bf16.mxu0 %v1600
  %1710 = vmatpush1.bf16.msra.mxu0 %v1599
  %1711 = vmatprep.subr.bf16.mxu0 %v1604
  %1712 = vmatpush1.bf16.msra.mxu0 %v1603
  %1713 = vmatprep.subr.bf16.mxu0 %v1608
  %1714 = vmatpush1.bf16.msra.mxu0 %v1607
  %1715 = vmatprep.subr.bf16.mxu0 %v1612
  %1716 = vmatpush1.bf16.msra.mxu0 %v1611
  %1717 = vmatprep.subr.bf16.mxu0 %v1616
  %1718 = vmatpush1.bf16.msra.mxu0 %v1615
  %1719 = vmatprep.subr.bf16.mxu0 %v1620
  %1720 = vmatpush1.bf16.msra.mxu0 %v1619
  %1721 = vmatprep.subr.bf16.mxu0 %v1624
  %1722 = vmatpush1.bf16.msra.mxu0 %v1623
  %1723 = vmatprep.mubr.bf16.mxu0 %v1306
  %1724 = vmatmul.mubr.bf16.gmra.mrb[0].mxu0 %v1303
  %v1725 = vpop.f32.mrb[0].mxu0
  %v1726 = vadd.f32 %v35, %v1725
  %v1727 = vpop.f32.mrb[0].mxu0
  %v1728 = vadd.f32 %v39, %v1727
  %v1729 = vpop.f32.mrb[0].mxu0
  %v1730 = vadd.f32 %v35, %v1729
  %v1731 = vpop.f32.mrb[0].mxu0
  %v1732 = vadd.f32 %v39, %v1731
  %1733 = vdwg.mxu0
  %1734 = vmatprep.subr.bf16.mxu0 %v1566
  %1735 = vmatpush1.bf16.msra.mxu0 %v1565
  %1736 = vmatprep.subr.bf16.mxu0 %v1570
  %1737 = vmatpush1.bf16.msra.mxu0 %v1569
  %1738 = vmatprep.subr.bf16.mxu0 %v1574
  %1739 = vmatpush1.bf16.msra.mxu0 %v1573
  %1740 = vmatprep.subr.bf16.mxu0 %v1578
  %1741 = vmatpush1.bf16.msra.mxu0 %v1577
  %1742 = vmatprep.subr.bf16.mxu0 %v1582
  %1743 = vmatpush1.bf16.msra.mxu0 %v1581
  %1744 = vmatprep.subr.bf16.mxu0 %v1586
  %1745 = vmatpush1.bf16.msra.mxu0 %v1585
  %1746 = vmatprep.subr.bf16.mxu0 %v1590
  %1747 = vmatpush1.bf16.msra.mxu0 %v1589
  %1748 = vmatprep.subr.bf16.mxu0 %v1594
  %1749 = vmatpush1.bf16.msra.mxu0 %v1593
  %1750 = vmatprep.subr.bf16.mxu0 %v1598
  %1751 = vmatpush1.bf16.msra.mxu0 %v1597
  %1752 = vmatprep.subr.bf16.mxu0 %v1602
  %1753 = vmatpush1.bf16.msra.mxu0 %v1601
  %1754 = vmatprep.subr.bf16.mxu0 %v1606
  %1755 = vmatpush1.bf16.msra.mxu0 %v1605
  %1756 = vmatprep.subr.bf16.mxu0 %v1610
  %1757 = vmatpush1.bf16.msra.mxu0 %v1609
  %1758 = vmatprep.subr.bf16.mxu0 %v1614
  %1759 = vmatpush1.bf16.msra.mxu0 %v1613
  %1760 = vmatprep.subr.bf16.mxu0 %v1618
  %1761 = vmatpush1.bf16.msra.mxu0 %v1617
  %1762 = vmatprep.subr.bf16.mxu0 %v1622
  %1763 = vmatpush1.bf16.msra.mxu0 %v1621
  %1764 = vmatprep.subr.bf16.mxu0 %v1626
  %1765 = vmatpush1.bf16.msra.mxu0 %v1625
  %1766 = vmatprep.mubr.bf16.mxu0 %v1306
  %1767 = vmatmul.mubr.bf16.gmra.mrb[0].mxu0 %v1303
  %v1768 = vpop.f32.mrb[0].mxu0
  %v1769 = vadd.f32 %v43, %v1768
  %v1770 = vpop.f32.mrb[0].mxu0
  %v1771 = vadd.f32 %v47, %v1770
  %v1772 = vpop.f32.mrb[0].mxu0
  %v1773 = vadd.f32 %v43, %v1772
  %v1774 = vpop.f32.mrb[0].mxu0
  %v1775 = vadd.f32 %v47, %v1774
  %1776 = vdwg.mxu0
  %v1777 = vld [vmem:[%s882] sm:$0xff]
  %v1778 = vld [vmem:[%s882 + $0x8] sm:$0xff]
  %v1779 = vxor.u32 %v1726, 2147483648
  %v1780 = vxor.u32 %v1730, 2147483648
  %v1781 = vmul.f32 %v1779, 1.442695
  %v1782 = vpow.pop %v1781
  %v1783 = vmul.f32 %v1780, 1.442695
  %v1784 = vpow.pop %v1783
  %v1785 = vadd.f32 %v1782, 1.0
  %v1786 = vadd.f32 %v1784, 1.0
  %v1787 = vrcp.pop %v1785
  %v1788 = vmul.f32 1.0, %v1787
  %v1789 = vrcp.pop %v1786
  %v1790 = vmul.f32 1.0, %v1789
  %v1791 = vxor.u32 %v1728, 2147483648
  %v1792 = vxor.u32 %v1732, 2147483648
  %v1793 = vmul.f32 %v1791, 1.442695
  %v1794 = vpow.pop %v1793
  %v1795 = vmul.f32 %v1792, 1.442695
  %v1796 = vpow.pop %v1795
  %v1797 = vadd.f32 %v1794, 1.0
  %v1798 = vadd.f32 %v1796, 1.0
  %v1799 = vrcp.pop %v1797
  %v1800 = vmul.f32 1.0, %v1799
  %v1801 = vrcp.pop %v1798
  %v1802 = vmul.f32 1.0, %v1801
  %v1803 = vtanh.pop %v1769
  %v1804 = vtanh.pop %v1773
  %v1805 = vxor.u32 %v1771, 2147483648
  %v1806 = vxor.u32 %v1775, 2147483648
  %v1807 = vmul.f32 %v1805, 1.442695
  %v1808 = vpow.pop %v1807
  %v1809 = vmul.f32 %v1806, 1.442695
  %v1810 = vpow.pop %v1809
  %v1811 = vadd.f32 %v1808, 1.0
  %v1812 = vadd.f32 %v1810, 1.0
  %v1813 = vrcp.pop %v1811
  %v1814 = vmul.f32 1.0, %v1813
  %v1815 = vrcp.pop %v1812
  %v1816 = vmul.f32 1.0, %v1815
  %v1817 = vmul.f32 %v1800, %v1777
  %v1818 = vmul.f32 %v1802, %v1778
  %v1819 = vmul.f32 %v1788, %v1803
  %v1820 = vmul.f32 %v1790, %v1804
  %v1821 = vadd.f32 %v1817, %v1819
  %v1822 = vadd.f32 %v1818, %v1820
  %v1823 = vtanh.pop %v1821
  %v1824 = vtanh.pop %v1822
  %v1825 = vmul.f32 %v1814, %v1823
  %v1826 = vmul.f32 %v1816, %v1824
  %1827 = vst [vmem:[%s408] sm:$0xff] %v1825
  %1828 = vst [vmem:[%s408 + $0x8] sm:$0xff] %v1826
  %1829 = vst [vmem:[%s882] sm:$0xff] %v1821
  %1830 = vst [vmem:[%s882 + $0x8] sm:$0xff] %v1822
  %v1831 = vpack.c.bf16 %v1826, %v1825
  %v1833 = vunpack.c.l.b16 %v1831
  %v1834 = vunpack.c.h.b16 %v1831
  %v1835 = vpack.c.b16 %v1833, %v1833
  %v1836 = vpack.c.b16 %v1834, %v1834
  %s1839 = scalar_lea.vmem %s4, 8
  %1840 = vst [vmem:[%s1839] sm:$0xf] %v1835
  %1841 = vst [vmem:[%s1839 + $0x4] sm:$0xf] %v1836
  %s1842 = scalar_lea.vmem %s0, 64
  %v1843 = vld [vmem:[%s1842] sm:$0xff]
  %v1844 = vld [vmem:[%s1842 + $0x8] sm:$0xff]
  %v1845 = vld [vmem:[%s1842 + $0x10] sm:$0xff]
  %v1846 = vld [vmem:[%s1842 + $0x18] sm:$0xff]
  %v1847 = vunpack.c.l.bf16 %v1843
  %v1848 = vunpack.c.h.bf16 %v1843
  %v1849 = vunpack.c.l.bf16 %v1844
  %v1850 = vunpack.c.h.bf16 %v1844
  %v1851 = vunpack.c.l.bf16 %v1845
  %v1852 = vunpack.c.h.bf16 %v1845
  %v1853 = vunpack.c.l.bf16 %v1846
  %v1854 = vunpack.c.h.bf16 %v1846
  %v1855 = vld [vmem:[#allocation2] sm:$0xff]
  %v1856 = vld [vmem:[#allocation2 + $0x8] sm:$0xff]
  %v1857 = vpack.c.bf16 %v1856, %v1855
  %v1858 = vld [vmem:[%s1] sm:$0xff]
  %v1859 = vld [vmem:[%s1 + $0x8] sm:$0xff]
  %v1860 = vld [vmem:[%s1 + $0x10] sm:$0xff]
  %v1861 = vld [vmem:[%s1 + $0x18] sm:$0xff]
  %v1862 = vld [vmem:[%s1 + $0x20] sm:$0xff]
  %v1863 = vld [vmem:[%s1 + $0x28] sm:$0xff]
  %v1864 = vld [vmem:[%s1 + $0x30] sm:$0xff]
  %v1865 = vld [vmem:[%s1 + $0x38] sm:$0xff]
  %v1866 = vld [vmem:[%s1 + $0x40] sm:$0xff]
  %v1867 = vld [vmem:[%s1 + $0x48] sm:$0xff]
  %v1868 = vld [vmem:[%s1 + $0x50] sm:$0xff]
  %v1869 = vld [vmem:[%s1 + $0x58] sm:$0xff]
  %v1870 = vld [vmem:[%s1 + $0x60] sm:$0xff]
  %v1871 = vld [vmem:[%s1 + $0x68] sm:$0xff]
  %v1872 = vld [vmem:[%s1 + $0x70] sm:$0xff]
  %v1873 = vld [vmem:[%s1 + $0x78] sm:$0xff]
  %v1874 = vld [vmem:[%s1 + $0x80] sm:$0xff]
  %v1875 = vld [vmem:[%s1 + $0x88] sm:$0xff]
  %v1876 = vld [vmem:[%s1 + $0x90] sm:$0xff]
  %v1877 = vld [vmem:[%s1 + $0x98] sm:$0xff]
  %v1878 = vld [vmem:[%s1 + $0xa0] sm:$0xff]
  %v1879 = vld [vmem:[%s1 + $0xa8] sm:$0xff]
  %v1880 = vld [vmem:[%s1 + $0xb0] sm:$0xff]
  %v1881 = vld [vmem:[%s1 + $0xb8] sm:$0xff]
  %v1882 = vld [vmem:[%s1 + $0xc0] sm:$0xff]
  %v1883 = vld [vmem:[%s1 + $0xc8] sm:$0xff]
  %v1884 = vld [vmem:[%s1 + $0xd0] sm:$0xff]
  %v1885 = vld [vmem:[%s1 + $0xd8] sm:$0xff]
  %v1886 = vld [vmem:[%s1 + $0xe0] sm:$0xff]
  %v1887 = vld [vmem:[%s1 + $0xe8] sm:$0xff]
  %v1888 = vld [vmem:[%s1 + $0xf0] sm:$0xff]
  %v1889 = vld [vmem:[%s1 + $0xf8] sm:$0xff]
  %v1922 = vunpack.c.l.b16 %v1858
  %v1923 = vunpack.c.h.b16 %v1858
  %v1924 = vunpack.c.l.b16 %v1859
  %v1925 = vunpack.c.h.b16 %v1859
  %v1926 = vunpack.c.l.b16 %v1860
  %v1927 = vunpack.c.h.b16 %v1860
  %v1928 = vunpack.c.l.b16 %v1861
  %v1929 = vunpack.c.h.b16 %v1861
  %v1930 = vunpack.c.l.b16 %v1862
  %v1931 = vunpack.c.h.b16 %v1862
  %v1932 = vunpack.c.l.b16 %v1863
  %v1933 = vunpack.c.h.b16 %v1863
  %v1934 = vunpack.c.l.b16 %v1864
  %v1935 = vunpack.c.h.b16 %v1864
  %v1936 = vunpack.c.l.b16 %v1865
  %v1937 = vunpack.c.h.b16 %v1865
  %v1938 = vunpack.c.l.b16 %v1866
  %v1939 = vunpack.c.h.b16 %v1866
  %v1940 = vunpack.c.l.b16 %v1867
  %v1941 = vunpack.c.h.b16 %v1867
  %v1942 = vunpack.c.l.b16 %v1868
  %v1943 = vunpack.c.h.b16 %v1868
  %v1944 = vunpack.c.l.b16 %v1869
  %v1945 = vunpack.c.h.b16 %v1869
  %v1946 = vunpack.c.l.b16 %v1870
  %v1947 = vunpack.c.h.b16 %v1870
  %v1948 = vunpack.c.l.b16 %v1871
  %v1949 = vunpack.c.h.b16 %v1871
  %v1950 = vunpack.c.l.b16 %v1872
  %v1951 = vunpack.c.h.b16 %v1872
  %v1952 = vunpack.c.l.b16 %v1873
  %v1953 = vunpack.c.h.b16 %v1873
  %v1954 = vunpack.c.l.b16 %v1874
  %v1955 = vunpack.c.h.b16 %v1874
  %v1956 = vunpack.c.l.b16 %v1875
  %v1957 = vunpack.c.h.b16 %v1875
  %v1958 = vunpack.c.l.b16 %v1876
  %v1959 = vunpack.c.h.b16 %v1876
  %v1960 = vunpack.c.l.b16 %v1877
  %v1961 = vunpack.c.h.b16 %v1877
  %v1962 = vunpack.c.l.b16 %v1878
  %v1963 = vunpack.c.h.b16 %v1878
  %v1964 = vunpack.c.l.b16 %v1879
  %v1965 = vunpack.c.h.b16 %v1879
  %v1966 = vunpack.c.l.b16 %v1880
  %v1967 = vunpack.c.h.b16 %v1880
  %v1968 = vunpack.c.l.b16 %v1881
  %v1969 = vunpack.c.h.b16 %v1881
  %v1970 = vunpack.c.l.b16 %v1882
  %v1971 = vunpack.c.h.b16 %v1882
  %v1972 = vunpack.c.l.b16 %v1883
  %v1973 = vunpack.c.h.b16 %v1883
  %v1974 = vunpack.c.l.b16 %v1884
  %v1975 = vunpack.c.h.b16 %v1884
  %v1976 = vunpack.c.l.b16 %v1885
  %v1977 = vunpack.c.h.b16 %v1885
  %v1978 = vunpack.c.l.b16 %v1886
  %v1979 = vunpack.c.h.b16 %v1886
  %v1980 = vunpack.c.l.b16 %v1887
  %v1981 = vunpack.c.h.b16 %v1887
  %v1982 = vunpack.c.l.b16 %v1888
  %v1983 = vunpack.c.h.b16 %v1888
  %v1984 = vunpack.c.l.b16 %v1889
  %v1985 = vunpack.c.h.b16 %v1889
  %v1986 = vpack.c.b16 %v1926, %v1922
  %v1987 = vpack.c.b16 %v1927, %v1923
  %v1988 = vpack.c.b16 %v1928, %v1924
  %v1989 = vpack.c.b16 %v1929, %v1925
  %v1990 = vpack.c.b16 %v1934, %v1930
  %v1991 = vpack.c.b16 %v1935, %v1931
  %v1992 = vpack.c.b16 %v1936, %v1932
  %v1993 = vpack.c.b16 %v1937, %v1933
  %v1994 = vpack.c.b16 %v1942, %v1938
  %v1995 = vpack.c.b16 %v1943, %v1939
  %v1996 = vpack.c.b16 %v1944, %v1940
  %v1997 = vpack.c.b16 %v1945, %v1941
  %v1998 = vpack.c.b16 %v1950, %v1946
  %v1999 = vpack.c.b16 %v1951, %v1947
  %v2000 = vpack.c.b16 %v1952, %v1948
  %v2001 = vpack.c.b16 %v1953, %v1949
  %v2002 = vpack.c.b16 %v1958, %v1954
  %v2003 = vpack.c.b16 %v1959, %v1955
  %v2004 = vpack.c.b16 %v1960, %v1956
  %v2005 = vpack.c.b16 %v1961, %v1957
  %v2006 = vpack.c.b16 %v1966, %v1962
  %v2007 = vpack.c.b16 %v1967, %v1963
  %v2008 = vpack.c.b16 %v1968, %v1964
  %v2009 = vpack.c.b16 %v1969, %v1965
  %v2010 = vpack.c.b16 %v1974, %v1970
  %v2011 = vpack.c.b16 %v1975, %v1971
  %v2012 = vpack.c.b16 %v1976, %v1972
  %v2013 = vpack.c.b16 %v1977, %v1973
  %v2014 = vpack.c.b16 %v1982, %v1978
  %v2015 = vpack.c.b16 %v1983, %v1979
  %v2016 = vpack.c.b16 %v1984, %v1980
  %v2017 = vpack.c.b16 %v1985, %v1981
  %2050 = vmatprep.subr.bf16.mxu0 %v1987
  %2051 = vmatpush1.bf16.msra.mxu0 %v1986
  %2052 = vmatprep.subr.bf16.mxu0 %v1991
  %2053 = vmatpush1.bf16.msra.mxu0 %v1990
  %2054 = vmatprep.subr.bf16.mxu0 %v1995
  %2055 = vmatpush1.bf16.msra.mxu0 %v1994
  %2056 = vmatprep.subr.bf16.mxu0 %v1999
  %2057 = vmatpush1.bf16.msra.mxu0 %v1998
  %2058 = vmatprep.subr.bf16.mxu0 %v2003
  %2059 = vmatpush1.bf16.msra.mxu0 %v2002
  %2060 = vmatprep.subr.bf16.mxu0 %v2007
  %2061 = vmatpush1.bf16.msra.mxu0 %v2006
  %2062 = vmatprep.subr.bf16.mxu0 %v2011
  %2063 = vmatpush1.bf16.msra.mxu0 %v2010
  %2064 = vmatprep.subr.bf16.mxu0 %v2015
  %2065 = vmatpush1.bf16.msra.mxu0 %v2014
  %2066 = vmatprep.subr.bf16.mxu0 0
  %2067 = vmatpush1.bf16.msra.mxu0 0
  %2068 = vmatprep.subr.bf16.mxu0 0
  %2069 = vmatpush1.bf16.msra.mxu0 0
  %2070 = vmatprep.subr.bf16.mxu0 0
  %2071 = vmatpush1.bf16.msra.mxu0 0
  %2072 = vmatprep.subr.bf16.mxu0 0
  %2073 = vmatpush1.bf16.msra.mxu0 0
  %2074 = vmatprep.subr.bf16.mxu0 0
  %2075 = vmatpush1.bf16.msra.mxu0 0
  %2076 = vmatprep.subr.bf16.mxu0 0
  %2077 = vmatpush1.bf16.msra.mxu0 0
  %2078 = vmatprep.subr.bf16.mxu0 0
  %2079 = vmatpush1.bf16.msra.mxu0 0
  %2080 = vmatprep.subr.bf16.mxu0 0
  %2081 = vmatpush1.bf16.msra.mxu0 0
  %2082 = vmatprep.mubr.bf16.mxu0 0
  %2083 = vmatmul.mubr.bf16.gmra.mrb[0].mxu0 %v1857
  %v2084 = vpop.f32.mrb[0].mxu0
  %v2085 = vadd.f32 0.0, %v2084
  %v2086 = vpop.f32.mrb[0].mxu0
  %v2087 = vadd.f32 0.0, %v2086
  %v2088 = vpop.f32.mrb[0].mxu0
  %v2089 = vadd.f32 0.0, %v2088
  %v2090 = vpop.f32.mrb[0].mxu0
  %v2091 = vadd.f32 0.0, %v2090
  %2092 = vdwg.mxu0
  %2093 = vmatprep.subr.bf16.mxu0 %v1989
  %2094 = vmatpush1.bf16.msra.mxu0 %v1988
  %2095 = vmatprep.subr.bf16.mxu0 %v1993
  %2096 = vmatpush1.bf16.msra.mxu0 %v1992
  %2097 = vmatprep.subr.bf16.mxu0 %v1997
  %2098 = vmatpush1.bf16.msra.mxu0 %v1996
  %2099 = vmatprep.subr.bf16.mxu0 %v2001
  %2100 = vmatpush1.bf16.msra.mxu0 %v2000
  %2101 = vmatprep.subr.bf16.mxu0 %v2005
  %2102 = vmatpush1.bf16.msra.mxu0 %v2004
  %2103 = vmatprep.subr.bf16.mxu0 %v2009
  %2104 = vmatpush1.bf16.msra.mxu0 %v2008
  %2105 = vmatprep.subr.bf16.mxu0 %v2013
  %2106 = vmatpush1.bf16.msra.mxu0 %v2012
  %2107 = vmatprep.subr.bf16.mxu0 %v2017
  %2108 = vmatpush1.bf16.msra.mxu0 %v2016
  %2109 = vmatprep.subr.bf16.mxu0 0
  %2110 = vmatpush1.bf16.msra.mxu0 0
  %2111 = vmatprep.subr.bf16.mxu0 0
  %2112 = vmatpush1.bf16.msra.mxu0 0
  %2113 = vmatprep.subr.bf16.mxu0 0
  %2114 = vmatpush1.bf16.msra.mxu0 0
  %2115 = vmatprep.subr.bf16.mxu0 0
  %2116 = vmatpush1.bf16.msra.mxu0 0
  %2117 = vmatprep.subr.bf16.mxu0 0
  %2118 = vmatpush1.bf16.msra.mxu0 0
  %2119 = vmatprep.subr.bf16.mxu0 0
  %2120 = vmatpush1.bf16.msra.mxu0 0
  %2121 = vmatprep.subr.bf16.mxu0 0
  %2122 = vmatpush1.bf16.msra.mxu0 0
  %2123 = vmatprep.subr.bf16.mxu0 0
  %2124 = vmatpush1.bf16.msra.mxu0 0
  %2125 = vmatprep.mubr.bf16.mxu0 0
  %2126 = vmatmul.mubr.bf16.gmra.mrb[0].mxu0 %v1857
  %v2127 = vpop.f32.mrb[0].mxu0
  %v2128 = vadd.f32 0.0, %v2127
  %v2129 = vpop.f32.mrb[0].mxu0
  %v2130 = vadd.f32 0.0, %v2129
  %v2131 = vpop.f32.mrb[0].mxu0
  %v2132 = vadd.f32 0.0, %v2131
  %v2133 = vpop.f32.mrb[0].mxu0
  %v2134 = vadd.f32 0.0, %v2133
  %2135 = vdwg.mxu0
  %v2136 = vadd.f32 %v1847, %v2085
  %v2137 = vadd.f32 %v1848, %v2087
  %v2138 = vadd.f32 %v1849, %v2128
  %v2139 = vadd.f32 %v1850, %v2130
  %v2140 = vadd.f32 %v1851, %v2089
  %v2141 = vadd.f32 %v1852, %v2091
  %v2142 = vadd.f32 %v1853, %v2132
  %v2143 = vadd.f32 %v1854, %v2134
  %v2144 = vld [vmem:[#allocation3] sm:$0xff]
  %v2145 = vld [vmem:[#allocation3 + $0x8] sm:$0xff]
  %v2146 = vxor.u32 %v2136, 2147483648
  %v2147 = vxor.u32 %v2140, 2147483648
  %v2148 = vmul.f32 %v2146, 1.442695
  %v2149 = vpow.pop %v2148
  %v2150 = vmul.f32 %v2147, 1.442695
  %v2151 = vpow.pop %v2150
  %v2152 = vadd.f32 %v2149, 1.0
  %v2153 = vadd.f32 %v2151, 1.0
  %v2154 = vrcp.pop %v2152
  %v2155 = vmul.f32 1.0, %v2154
  %v2156 = vrcp.pop %v2153
  %v2157 = vmul.f32 1.0, %v2156
  %v2158 = vxor.u32 %v2137, 2147483648
  %v2159 = vxor.u32 %v2141, 2147483648
  %v2160 = vmul.f32 %v2158, 1.442695
  %v2161 = vpow.pop %v2160
  %v2162 = vmul.f32 %v2159, 1.442695
  %v2163 = vpow.pop %v2162
  %v2164 = vadd.f32 %v2161, 1.0
  %v2165 = vadd.f32 %v2163, 1.0
  %v2166 = vrcp.pop %v2164
  %v2167 = vmul.f32 1.0, %v2166
  %v2168 = vrcp.pop %v2165
  %v2169 = vmul.f32 1.0, %v2168
  %v2170 = vtanh.pop %v2138
  %v2171 = vtanh.pop %v2142
  %v2172 = vxor.u32 %v2139, 2147483648
  %v2173 = vxor.u32 %v2143, 2147483648
  %v2174 = vmul.f32 %v2172, 1.442695
  %v2175 = vpow.pop %v2174
  %v2176 = vmul.f32 %v2173, 1.442695
  %v2177 = vpow.pop %v2176
  %v2178 = vadd.f32 %v2175, 1.0
  %v2179 = vadd.f32 %v2177, 1.0
  %v2180 = vrcp.pop %v2178
  %v2181 = vmul.f32 1.0, %v2180
  %v2182 = vrcp.pop %v2179
  %v2183 = vmul.f32 1.0, %v2182
  %v2184 = vmul.f32 %v2167, %v2144
  %v2185 = vmul.f32 %v2169, %v2145
  %v2186 = vmul.f32 %v2155, %v2170
  %v2187 = vmul.f32 %v2157, %v2171
  %v2188 = vadd.f32 %v2184, %v2186
  %v2189 = vadd.f32 %v2185, %v2187
  %v2190 = vtanh.pop %v2188
  %v2191 = vtanh.pop %v2189
  %v2192 = vmul.f32 %v2181, %v2190
  %v2193 = vmul.f32 %v2183, %v2191
  %2194 = vst [vmem:[#allocation2] sm:$0xff] %v2192
  %2195 = vst [vmem:[#allocation2 + $0x8] sm:$0xff] %v2193
  %2196 = vst [vmem:[#allocation3] sm:$0xff] %v2188
  %2197 = vst [vmem:[#allocation3 + $0x8] sm:$0xff] %v2189
  %v2198 = vpack.c.bf16 %v2193, %v2192
  %v2199 = vld [vmem:[%s408] sm:$0xff]
  %v2200 = vld [vmem:[%s408 + $0x8] sm:$0xff]
  %v2201 = vpack.c.bf16 %v2200, %v2199
  %v2202 = vld [vmem:[%s2] sm:$0xff]
  %v2203 = vld [vmem:[%s2 + $0x8] sm:$0xff]
  %v2204 = vld [vmem:[%s2 + $0x10] sm:$0xff]
  %v2205 = vld [vmem:[%s2 + $0x18] sm:$0xff]
  %v2206 = vld [vmem:[%s2 + $0x20] sm:$0xff]
  %v2207 = vld [vmem:[%s2 + $0x28] sm:$0xff]
  %v2208 = vld [vmem:[%s2 + $0x30] sm:$0xff]
  %v2209 = vld [vmem:[%s2 + $0x38] sm:$0xff]
  %v2210 = vld [vmem:[%s2 + $0x40] sm:$0xff]
  %v2211 = vld [vmem:[%s2 + $0x48] sm:$0xff]
  %v2212 = vld [vmem:[%s2 + $0x50] sm:$0xff]
  %v2213 = vld [vmem:[%s2 + $0x58] sm:$0xff]
  %v2214 = vld [vmem:[%s2 + $0x60] sm:$0xff]
  %v2215 = vld [vmem:[%s2 + $0x68] sm:$0xff]
  %v2216 = vld [vmem:[%s2 + $0x70] sm:$0xff]
  %v2217 = vld [vmem:[%s2 + $0x78] sm:$0xff]
  %v2218 = vld [vmem:[%s2 + $0x80] sm:$0xff]
  %v2219 = vld [vmem:[%s2 + $0x88] sm:$0xff]
  %v2220 = vld [vmem:[%s2 + $0x90] sm:$0xff]
  %v2221 = vld [vmem:[%s2 + $0x98] sm:$0xff]
  %v2222 = vld [vmem:[%s2 + $0xa0] sm:$0xff]
  %v2223 = vld [vmem:[%s2 + $0xa8] sm:$0xff]
  %v2224 = vld [vmem:[%s2 + $0xb0] sm:$0xff]
  %v2225 = vld [vmem:[%s2 + $0xb8] sm:$0xff]
  %v2226 = vld [vmem:[%s2 + $0xc0] sm:$0xff]
  %v2227 = vld [vmem:[%s2 + $0xc8] sm:$0xff]
  %v2228 = vld [vmem:[%s2 + $0xd0] sm:$0xff]
  %v2229 = vld [vmem:[%s2 + $0xd8] sm:$0xff]
  %v2230 = vld [vmem:[%s2 + $0xe0] sm:$0xff]
  %v2231 = vld [vmem:[%s2 + $0xe8] sm:$0xff]
  %v2232 = vld [vmem:[%s2 + $0xf0] sm:$0xff]
  %v2233 = vld [vmem:[%s2 + $0xf8] sm:$0xff]
  %v2234 = vld [vmem:[%s2 + $0x100] sm:$0xff]
  %v2235 = vld [vmem:[%s2 + $0x108] sm:$0xff]
  %v2236 = vld [vmem:[%s2 + $0x110] sm:$0xff]
  %v2237 = vld [vmem:[%s2 + $0x118] sm:$0xff]
  %v2238 = vld [vmem:[%s2 + $0x120] sm:$0xff]
  %v2239 = vld [vmem:[%s2 + $0x128] sm:$0xff]
  %v2240 = vld [vmem:[%s2 + $0x130] sm:$0xff]
  %v2241 = vld [vmem:[%s2 + $0x138] sm:$0xff]
  %v2242 = vld [vmem:[%s2 + $0x140] sm:$0xff]
  %v2243 = vld [vmem:[%s2 + $0x148] sm:$0xff]
  %v2244 = vld [vmem:[%s2 + $0x150] sm:$0xff]
  %v2245 = vld [vmem:[%s2 + $0x158] sm:$0xff]
  %v2246 = vld [vmem:[%s2 + $0x160] sm:$0xff]
  %v2247 = vld [vmem:[%s2 + $0x168] sm:$0xff]
  %v2248 = vld [vmem:[%s2 + $0x170] sm:$0xff]
  %v2249 = vld [vmem:[%s2 + $0x178] sm:$0xff]
  %v2250 = vld [vmem:[%s2 + $0x180] sm:$0xff]
  %v2251 = vld [vmem:[%s2 + $0x188] sm:$0xff]
  %v2252 = vld [vmem:[%s2 + $0x190] sm:$0xff]
  %v2253 = vld [vmem:[%s2 + $0x198] sm:$0xff]
  %v2254 = vld [vmem:[%s2 + $0x1a0] sm:$0xff]
  %v2255 = vld [vmem:[%s2 + $0x1a8] sm:$0xff]
  %v2256 = vld [vmem:[%s2 + $0x1b0] sm:$0xff]
  %v2257 = vld [vmem:[%s2 + $0x1b8] sm:$0xff]
  %v2258 = vld [vmem:[%s2 + $0x1c0] sm:$0xff]
  %v2259 = vld [vmem:[%s2 + $0x1c8] sm:$0xff]
  %v2260 = vld [vmem:[%s2 + $0x1d0] sm:$0xff]
  %v2261 = vld [vmem:[%s2 + $0x1d8] sm:$0xff]
  %v2262 = vld [vmem:[%s2 + $0x1e0] sm:$0xff]
  %v2263 = vld [vmem:[%s2 + $0x1e8] sm:$0xff]
  %v2264 = vld [vmem:[%s2 + $0x1f0] sm:$0xff]
  %v2265 = vld [vmem:[%s2 + $0x1f8] sm:$0xff]
  %v2330 = vunpack.c.l.b16 %v2202
  %v2331 = vunpack.c.h.b16 %v2202
  %v2332 = vunpack.c.l.b16 %v2203
  %v2333 = vunpack.c.h.b16 %v2203
  %v2334 = vunpack.c.l.b16 %v2204
  %v2335 = vunpack.c.h.b16 %v2204
  %v2336 = vunpack.c.l.b16 %v2205
  %v2337 = vunpack.c.h.b16 %v2205
  %v2338 = vunpack.c.l.b16 %v2206
  %v2339 = vunpack.c.h.b16 %v2206
  %v2340 = vunpack.c.l.b16 %v2207
  %v2341 = vunpack.c.h.b16 %v2207
  %v2342 = vunpack.c.l.b16 %v2208
  %v2343 = vunpack.c.h.b16 %v2208
  %v2344 = vunpack.c.l.b16 %v2209
  %v2345 = vunpack.c.h.b16 %v2209
  %v2346 = vunpack.c.l.b16 %v2210
  %v2347 = vunpack.c.h.b16 %v2210
  %v2348 = vunpack.c.l.b16 %v2211
  %v2349 = vunpack.c.h.b16 %v2211
  %v2350 = vunpack.c.l.b16 %v2212
  %v2351 = vunpack.c.h.b16 %v2212
  %v2352 = vunpack.c.l.b16 %v2213
  %v2353 = vunpack.c.h.b16 %v2213
  %v2354 = vunpack.c.l.b16 %v2214
  %v2355 = vunpack.c.h.b16 %v2214
  %v2356 = vunpack.c.l.b16 %v2215
  %v2357 = vunpack.c.h.b16 %v2215
  %v2358 = vunpack.c.l.b16 %v2216
  %v2359 = vunpack.c.h.b16 %v2216
  %v2360 = vunpack.c.l.b16 %v2217
  %v2361 = vunpack.c.h.b16 %v2217
  %v2362 = vunpack.c.l.b16 %v2218
  %v2363 = vunpack.c.h.b16 %v2218
  %v2364 = vunpack.c.l.b16 %v2219
  %v2365 = vunpack.c.h.b16 %v2219
  %v2366 = vunpack.c.l.b16 %v2220
  %v2367 = vunpack.c.h.b16 %v2220
  %v2368 = vunpack.c.l.b16 %v2221
  %v2369 = vunpack.c.h.b16 %v2221
  %v2370 = vunpack.c.l.b16 %v2222
  %v2371 = vunpack.c.h.b16 %v2222
  %v2372 = vunpack.c.l.b16 %v2223
  %v2373 = vunpack.c.h.b16 %v2223
  %v2374 = vunpack.c.l.b16 %v2224
  %v2375 = vunpack.c.h.b16 %v2224
  %v2376 = vunpack.c.l.b16 %v2225
  %v2377 = vunpack.c.h.b16 %v2225
  %v2378 = vunpack.c.l.b16 %v2226
  %v2379 = vunpack.c.h.b16 %v2226
  %v2380 = vunpack.c.l.b16 %v2227
  %v2381 = vunpack.c.h.b16 %v2227
  %v2382 = vunpack.c.l.b16 %v2228
  %v2383 = vunpack.c.h.b16 %v2228
  %v2384 = vunpack.c.l.b16 %v2229
  %v2385 = vunpack.c.h.b16 %v2229
  %v2386 = vunpack.c.l.b16 %v2230
  %v2387 = vunpack.c.h.b16 %v2230
  %v2388 = vunpack.c.l.b16 %v2231
  %v2389 = vunpack.c.h.b16 %v2231
  %v2390 = vunpack.c.l.b16 %v2232
  %v2391 = vunpack.c.h.b16 %v2232
  %v2392 = vunpack.c.l.b16 %v2233
  %v2393 = vunpack.c.h.b16 %v2233
  %v2394 = vunpack.c.l.b16 %v2234
  %v2395 = vunpack.c.h.b16 %v2234
  %v2396 = vunpack.c.l.b16 %v2235
  %v2397 = vunpack.c.h.b16 %v2235
  %v2398 = vunpack.c.l.b16 %v2236
  %v2399 = vunpack.c.h.b16 %v2236
  %v2400 = vunpack.c.l.b16 %v2237
  %v2401 = vunpack.c.h.b16 %v2237
  %v2402 = vunpack.c.l.b16 %v2238
  %v2403 = vunpack.c.h.b16 %v2238
  %v2404 = vunpack.c.l.b16 %v2239
  %v2405 = vunpack.c.h.b16 %v2239
  %v2406 = vunpack.c.l.b16 %v2240
  %v2407 = vunpack.c.h.b16 %v2240
  %v2408 = vunpack.c.l.b16 %v2241
  %v2409 = vunpack.c.h.b16 %v2241
  %v2410 = vunpack.c.l.b16 %v2242
  %v2411 = vunpack.c.h.b16 %v2242
  %v2412 = vunpack.c.l.b16 %v2243
  %v2413 = vunpack.c.h.b16 %v2243
  %v2414 = vunpack.c.l.b16 %v2244
  %v2415 = vunpack.c.h.b16 %v2244
  %v2416 = vunpack.c.l.b16 %v2245
  %v2417 = vunpack.c.h.b16 %v2245
  %v2418 = vunpack.c.l.b16 %v2246
  %v2419 = vunpack.c.h.b16 %v2246
  %v2420 = vunpack.c.l.b16 %v2247
  %v2421 = vunpack.c.h.b16 %v2247
  %v2422 = vunpack.c.l.b16 %v2248
  %v2423 = vunpack.c.h.b16 %v2248
  %v2424 = vunpack.c.l.b16 %v2249
  %v2425 = vunpack.c.h.b16 %v2249
  %v2426 = vunpack.c.l.b16 %v2250
  %v2427 = vunpack.c.h.b16 %v2250
  %v2428 = vunpack.c.l.b16 %v2251
  %v2429 = vunpack.c.h.b16 %v2251
  %v2430 = vunpack.c.l.b16 %v2252
  %v2431 = vunpack.c.h.b16 %v2252
  %v2432 = vunpack.c.l.b16 %v2253
  %v2433 = vunpack.c.h.b16 %v2253
  %v2434 = vunpack.c.l.b16 %v2254
  %v2435 = vunpack.c.h.b16 %v2254
  %v2436 = vunpack.c.l.b16 %v2255
  %v2437 = vunpack.c.h.b16 %v2255
  %v2438 = vunpack.c.l.b16 %v2256
  %v2439 = vunpack.c.h.b16 %v2256
  %v2440 = vunpack.c.l.b16 %v2257
  %v2441 = vunpack.c.h.b16 %v2257
  %v2442 = vunpack.c.l.b16 %v2258
  %v2443 = vunpack.c.h.b16 %v2258
  %v2444 = vunpack.c.l.b16 %v2259
  %v2445 = vunpack.c.h.b16 %v2259
  %v2446 = vunpack.c.l.b16 %v2260
  %v2447 = vunpack.c.h.b16 %v2260
  %v2448 = vunpack.c.l.b16 %v2261
  %v2449 = vunpack.c.h.b16 %v2261
  %v2450 = vunpack.c.l.b16 %v2262
  %v2451 = vunpack.c.h.b16 %v2262
  %v2452 = vunpack.c.l.b16 %v2263
  %v2453 = vunpack.c.h.b16 %v2263
  %v2454 = vunpack.c.l.b16 %v2264
  %v2455 = vunpack.c.h.b16 %v2264
  %v2456 = vunpack.c.l.b16 %v2265
  %v2457 = vunpack.c.h.b16 %v2265
  %v2458 = vpack.c.b16 %v2334, %v2330
  %v2459 = vpack.c.b16 %v2335, %v2331
  %v2460 = vpack.c.b16 %v2336, %v2332
  %v2461 = vpack.c.b16 %v2337, %v2333
  %v2462 = vpack.c.b16 %v2342, %v2338
  %v2463 = vpack.c.b16 %v2343, %v2339
  %v2464 = vpack.c.b16 %v2344, %v2340
  %v2465 = vpack.c.b16 %v2345, %v2341
  %v2466 = vpack.c.b16 %v2350, %v2346
  %v2467 = vpack.c.b16 %v2351, %v2347
  %v2468 = vpack.c.b16 %v2352, %v2348
  %v2469 = vpack.c.b16 %v2353, %v2349
  %v2470 = vpack.c.b16 %v2358, %v2354
  %v2471 = vpack.c.b16 %v2359, %v2355
  %v2472 = vpack.c.b16 %v2360, %v2356
  %v2473 = vpack.c.b16 %v2361, %v2357
  %v2474 = vpack.c.b16 %v2366, %v2362
  %v2475 = vpack.c.b16 %v2367, %v2363
  %v2476 = vpack.c.b16 %v2368, %v2364
  %v2477 = vpack.c.b16 %v2369, %v2365
  %v2478 = vpack.c.b16 %v2374, %v2370
  %v2479 = vpack.c.b16 %v2375, %v2371
  %v2480 = vpack.c.b16 %v2376, %v2372
  %v2481 = vpack.c.b16 %v2377, %v2373
  %v2482 = vpack.c.b16 %v2382, %v2378
  %v2483 = vpack.c.b16 %v2383, %v2379
  %v2484 = vpack.c.b16 %v2384, %v2380
  %v2485 = vpack.c.b16 %v2385, %v2381
  %v2486 = vpack.c.b16 %v2390, %v2386
  %v2487 = vpack.c.b16 %v2391, %v2387
  %v2488 = vpack.c.b16 %v2392, %v2388
  %v2489 = vpack.c.b16 %v2393, %v2389
  %v2490 = vpack.c.b16 %v2398, %v2394
  %v2491 = vpack.c.b16 %v2399, %v2395
  %v2492 = vpack.c.b16 %v2400, %v2396
  %v2493 = vpack.c.b16 %v2401, %v2397
  %v2494 = vpack.c.b16 %v2406, %v2402
  %v2495 = vpack.c.b16 %v2407, %v2403
  %v2496 = vpack.c.b16 %v2408, %v2404
  %v2497 = vpack.c.b16 %v2409, %v2405
  %v2498 = vpack.c.b16 %v2414, %v2410
  %v2499 = vpack.c.b16 %v2415, %v2411
  %v2500 = vpack.c.b16 %v2416, %v2412
  %v2501 = vpack.c.b16 %v2417, %v2413
  %v2502 = vpack.c.b16 %v2422, %v2418
  %v2503 = vpack.c.b16 %v2423, %v2419
  %v2504 = vpack.c.b16 %v2424, %v2420
  %v2505 = vpack.c.b16 %v2425, %v2421
  %v2506 = vpack.c.b16 %v2430, %v2426
  %v2507 = vpack.c.b16 %v2431, %v2427
  %v2508 = vpack.c.b16 %v2432, %v2428
  %v2509 = vpack.c.b16 %v2433, %v2429
  %v2510 = vpack.c.b16 %v2438, %v2434
  %v2511 = vpack.c.b16 %v2439, %v2435
  %v2512 = vpack.c.b16 %v2440, %v2436
  %v2513 = vpack.c.b16 %v2441, %v2437
  %v2514 = vpack.c.b16 %v2446, %v2442
  %v2515 = vpack.c.b16 %v2447, %v2443
  %v2516 = vpack.c.b16 %v2448, %v2444
  %v2517 = vpack.c.b16 %v2449, %v2445
  %v2518 = vpack.c.b16 %v2454, %v2450
  %v2519 = vpack.c.b16 %v2455, %v2451
  %v2520 = vpack.c.b16 %v2456, %v2452
  %v2521 = vpack.c.b16 %v2457, %v2453
  %2586 = vmatprep.subr.bf16.mxu0 %v2459
  %2587 = vmatpush1.bf16.msra.mxu0 %v2458
  %2588 = vmatprep.subr.bf16.mxu0 %v2463
  %2589 = vmatpush1.bf16.msra.mxu0 %v2462
  %2590 = vmatprep.subr.bf16.mxu0 %v2467
  %2591 = vmatpush1.bf16.msra.mxu0 %v2466
  %2592 = vmatprep.subr.bf16.mxu0 %v2471
  %2593 = vmatpush1.bf16.msra.mxu0 %v2470
  %2594 = vmatprep.subr.bf16.mxu0 %v2475
  %2595 = vmatpush1.bf16.msra.mxu0 %v2474
  %2596 = vmatprep.subr.bf16.mxu0 %v2479
  %2597 = vmatpush1.bf16.msra.mxu0 %v2478
  %2598 = vmatprep.subr.bf16.mxu0 %v2483
  %2599 = vmatpush1.bf16.msra.mxu0 %v2482
  %2600 = vmatprep.subr.bf16.mxu0 %v2487
  %2601 = vmatpush1.bf16.msra.mxu0 %v2486
  %2602 = vmatprep.subr.bf16.mxu0 %v2491
  %2603 = vmatpush1.bf16.msra.mxu0 %v2490
  %2604 = vmatprep.subr.bf16.mxu0 %v2495
  %2605 = vmatpush1.bf16.msra.mxu0 %v2494
  %2606 = vmatprep.subr.bf16.mxu0 %v2499
  %2607 = vmatpush1.bf16.msra.mxu0 %v2498
  %2608 = vmatprep.subr.bf16.mxu0 %v2503
  %2609 = vmatpush1.bf16.msra.mxu0 %v2502
  %2610 = vmatprep.subr.bf16.mxu0 %v2507
  %2611 = vmatpush1.bf16.msra.mxu0 %v2506
  %2612 = vmatprep.subr.bf16.mxu0 %v2511
  %2613 = vmatpush1.bf16.msra.mxu0 %v2510
  %2614 = vmatprep.subr.bf16.mxu0 %v2515
  %2615 = vmatpush1.bf16.msra.mxu0 %v2514
  %2616 = vmatprep.subr.bf16.mxu0 %v2519
  %2617 = vmatpush1.bf16.msra.mxu0 %v2518
  %2618 = vmatprep.mubr.bf16.mxu0 %v2201
  %2619 = vmatmul.mubr.bf16.gmra.mrb[0].mxu0 %v2198
  %v2620 = vpop.f32.mrb[0].mxu0
  %v2621 = vadd.f32 %v35, %v2620
  %v2622 = vpop.f32.mrb[0].mxu0
  %v2623 = vadd.f32 %v39, %v2622
  %v2624 = vpop.f32.mrb[0].mxu0
  %v2625 = vadd.f32 %v35, %v2624
  %v2626 = vpop.f32.mrb[0].mxu0
  %v2627 = vadd.f32 %v39, %v2626
  %2628 = vdwg.mxu0
  %2629 = vmatprep.subr.bf16.mxu0 %v2461
  %2630 = vmatpush1.bf16.msra.mxu0 %v2460
  %2631 = vmatprep.subr.bf16.mxu0 %v2465
  %2632 = vmatpush1.bf16.msra.mxu0 %v2464
  %2633 = vmatprep.subr.bf16.mxu0 %v2469
  %2634 = vmatpush1.bf16.msra.mxu0 %v2468
  %2635 = vmatprep.subr.bf16.mxu0 %v2473
  %2636 = vmatpush1.bf16.msra.mxu0 %v2472
  %2637 = vmatprep.subr.bf16.mxu0 %v2477
  %2638 = vmatpush1.bf16.msra.mxu0 %v2476
  %2639 = vmatprep.subr.bf16.mxu0 %v2481
  %2640 = vmatpush1.bf16.msra.mxu0 %v2480
  %2641 = vmatprep.subr.bf16.mxu0 %v2485
  %2642 = vmatpush1.bf16.msra.mxu0 %v2484
  %2643 = vmatprep.subr.bf16.mxu0 %v2489
  %2644 = vmatpush1.bf16.msra.mxu0 %v2488
  %2645 = vmatprep.subr.bf16.mxu0 %v2493
  %2646 = vmatpush1.bf16.msra.mxu0 %v2492
  %2647 = vmatprep.subr.bf16.mxu0 %v2497
  %2648 = vmatpush1.bf16.msra.mxu0 %v2496
  %2649 = vmatprep.subr.bf16.mxu0 %v2501
  %2650 = vmatpush1.bf16.msra.mxu0 %v2500
  %2651 = vmatprep.subr.bf16.mxu0 %v2505
  %2652 = vmatpush1.bf16.msra.mxu0 %v2504
  %2653 = vmatprep.subr.bf16.mxu0 %v2509
  %2654 = vmatpush1.bf16.msra.mxu0 %v2508
  %2655 = vmatprep.subr.bf16.mxu0 %v2513
  %2656 = vmatpush1.bf16.msra.mxu0 %v2512
  %2657 = vmatprep.subr.bf16.mxu0 %v2517
  %2658 = vmatpush1.bf16.msra.mxu0 %v2516
  %2659 = vmatprep.subr.bf16.mxu0 %v2521
  %2660 = vmatpush1.bf16.msra.mxu0 %v2520
  %2661 = vmatprep.mubr.bf16.mxu0 %v2201
  %2662 = vmatmul.mubr.bf16.gmra.mrb[0].mxu0 %v2198
  %v2663 = vpop.f32.mrb[0].mxu0
  %v2664 = vadd.f32 %v43, %v2663
  %v2665 = vpop.f32.mrb[0].mxu0
  %v2666 = vadd.f32 %v47, %v2665
  %v2667 = vpop.f32.mrb[0].mxu0
  %v2668 = vadd.f32 %v43, %v2667
  %v2669 = vpop.f32.mrb[0].mxu0
  %v2670 = vadd.f32 %v47, %v2669
  %2671 = vdwg.mxu0
  %v2672 = vld [vmem:[%s882] sm:$0xff]
  %v2673 = vld [vmem:[%s882 + $0x8] sm:$0xff]
  %v2674 = vxor.u32 %v2621, 2147483648
  %v2675 = vxor.u32 %v2625, 2147483648
  %v2676 = vmul.f32 %v2674, 1.442695
  %v2677 = vpow.pop %v2676
  %v2678 = vmul.f32 %v2675, 1.442695
  %v2679 = vpow.pop %v2678
  %v2680 = vadd.f32 %v2677, 1.0
  %v2681 = vadd.f32 %v2679, 1.0
  %v2682 = vrcp.pop %v2680
  %v2683 = vmul.f32 1.0, %v2682
  %v2684 = vrcp.pop %v2681
  %v2685 = vmul.f32 1.0, %v2684
  %v2686 = vxor.u32 %v2623, 2147483648
  %v2687 = vxor.u32 %v2627, 2147483648
  %v2688 = vmul.f32 %v2686, 1.442695
  %v2689 = vpow.pop %v2688
  %v2690 = vmul.f32 %v2687, 1.442695
  %v2691 = vpow.pop %v2690
  %v2692 = vadd.f32 %v2689, 1.0
  %v2693 = vadd.f32 %v2691, 1.0
  %v2694 = vrcp.pop %v2692
  %v2695 = vmul.f32 1.0, %v2694
  %v2696 = vrcp.pop %v2693
  %v2697 = vmul.f32 1.0, %v2696
  %v2698 = vtanh.pop %v2664
  %v2699 = vtanh.pop %v2668
  %v2700 = vxor.u32 %v2666, 2147483648
  %v2701 = vxor.u32 %v2670, 2147483648
  %v2702 = vmul.f32 %v2700, 1.442695
  %v2703 = vpow.pop %v2702
  %v2704 = vmul.f32 %v2701, 1.442695
  %v2705 = vpow.pop %v2704
  %v2706 = vadd.f32 %v2703, 1.0
  %v2707 = vadd.f32 %v2705, 1.0
  %v2708 = vrcp.pop %v2706
  %v2709 = vmul.f32 1.0, %v2708
  %v2710 = vrcp.pop %v2707
  %v2711 = vmul.f32 1.0, %v2710
  %v2712 = vmul.f32 %v2695, %v2672
  %v2713 = vmul.f32 %v2697, %v2673
  %v2714 = vmul.f32 %v2683, %v2698
  %v2715 = vmul.f32 %v2685, %v2699
  %v2716 = vadd.f32 %v2712, %v2714
  %v2717 = vadd.f32 %v2713, %v2715
  %v2718 = vtanh.pop %v2716
  %v2719 = vtanh.pop %v2717
  %v2720 = vmul.f32 %v2709, %v2718
  %v2721 = vmul.f32 %v2711, %v2719
  %2722 = vst [vmem:[%s408] sm:$0xff] %v2720
  %2723 = vst [vmem:[%s408 + $0x8] sm:$0xff] %v2721
  %2724 = vst [vmem:[%s882] sm:$0xff] %v2716
  %2725 = vst [vmem:[%s882 + $0x8] sm:$0xff] %v2717
  %v2726 = vpack.c.bf16 %v2721, %v2720
  %v2728 = vunpack.c.l.b16 %v2726
  %v2729 = vunpack.c.h.b16 %v2726
  %v2730 = vpack.c.b16 %v2728, %v2728
  %v2731 = vpack.c.b16 %v2729, %v2729
  %s2734 = scalar_lea.vmem %s4, 16
  %2735 = vst [vmem:[%s2734] sm:$0xf] %v2730
  %2736 = vst [vmem:[%s2734 + $0x4] sm:$0xf] %v2731
  %s2737 = scalar_lea.vmem %s0, 96
  %v2738 = vld [vmem:[%s2737] sm:$0xff]
  %v2739 = vld [vmem:[%s2737 + $0x8] sm:$0xff]
  %v2740 = vld [vmem:[%s2737 + $0x10] sm:$0xff]
  %v2741 = vld [vmem:[%s2737 + $0x18] sm:$0xff]
  %v2742 = vunpack.c.l.bf16 %v2738
  %v2743 = vunpack.c.h.bf16 %v2738
  %v2744 = vunpack.c.l.bf16 %v2739
  %v2745 = vunpack.c.h.bf16 %v2739
  %v2746 = vunpack.c.l.bf16 %v2740
  %v2747 = vunpack.c.h.bf16 %v2740
  %v2748 = vunpack.c.l.bf16 %v2741
  %v2749 = vunpack.c.h.bf16 %v2741
  %v2750 = vld [vmem:[#allocation2] sm:$0xff]
  %v2751 = vld [vmem:[#allocation2 + $0x8] sm:$0xff]
  %v2752 = vpack.c.bf16 %v2751, %v2750
  %v2753 = vld [vmem:[%s1] sm:$0xff]
  %v2754 = vld [vmem:[%s1 + $0x8] sm:$0xff]
  %v2755 = vld [vmem:[%s1 + $0x10] sm:$0xff]
  %v2756 = vld [vmem:[%s1 + $0x18] sm:$0xff]
  %v2757 = vld [vmem:[%s1 + $0x20] sm:$0xff]
  %v2758 = vld [vmem:[%s1 + $0x28] sm:$0xff]
  %v2759 = vld [vmem:[%s1 + $0x30] sm:$0xff]
  %v2760 = vld [vmem:[%s1 + $0x38] sm:$0xff]
  %v2761 = vld [vmem:[%s1 + $0x40] sm:$0xff]
  %v2762 = vld [vmem:[%s1 + $0x48] sm:$0xff]
  %v2763 = vld [vmem:[%s1 + $0x50] sm:$0xff]
  %v2764 = vld [vmem:[%s1 + $0x58] sm:$0xff]
  %v2765 = vld [vmem:[%s1 + $0x60] sm:$0xff]
  %v2766 = vld [vmem:[%s1 + $0x68] sm:$0xff]
  %v2767 = vld [vmem:[%s1 + $0x70] sm:$0xff]
  %v2768 = vld [vmem:[%s1 + $0x78] sm:$0xff]
  %v2769 = vld [vmem:[%s1 + $0x80] sm:$0xff]
  %v2770 = vld [vmem:[%s1 + $0x88] sm:$0xff]
  %v2771 = vld [vmem:[%s1 + $0x90] sm:$0xff]
  %v2772 = vld [vmem:[%s1 + $0x98] sm:$0xff]
  %v2773 = vld [vmem:[%s1 + $0xa0] sm:$0xff]
  %v2774 = vld [vmem:[%s1 + $0xa8] sm:$0xff]
  %v2775 = vld [vmem:[%s1 + $0xb0] sm:$0xff]
  %v2776 = vld [vmem:[%s1 + $0xb8] sm:$0xff]
  %v2777 = vld [vmem:[%s1 + $0xc0] sm:$0xff]
  %v2778 = vld [vmem:[%s1 + $0xc8] sm:$0xff]
  %v2779 = vld [vmem:[%s1 + $0xd0] sm:$0xff]
  %v2780 = vld [vmem:[%s1 + $0xd8] sm:$0xff]
  %v2781 = vld [vmem:[%s1 + $0xe0] sm:$0xff]
  %v2782 = vld [vmem:[%s1 + $0xe8] sm:$0xff]
  %v2783 = vld [vmem:[%s1 + $0xf0] sm:$0xff]
  %v2784 = vld [vmem:[%s1 + $0xf8] sm:$0xff]
  %v2817 = vunpack.c.l.b16 %v2753
  %v2818 = vunpack.c.h.b16 %v2753
  %v2819 = vunpack.c.l.b16 %v2754
  %v2820 = vunpack.c.h.b16 %v2754
  %v2821 = vunpack.c.l.b16 %v2755
  %v2822 = vunpack.c.h.b16 %v2755
  %v2823 = vunpack.c.l.b16 %v2756
  %v2824 = vunpack.c.h.b16 %v2756
  %v2825 = vunpack.c.l.b16 %v2757
  %v2826 = vunpack.c.h.b16 %v2757
  %v2827 = vunpack.c.l.b16 %v2758
  %v2828 = vunpack.c.h.b16 %v2758
  %v2829 = vunpack.c.l.b16 %v2759
  %v2830 = vunpack.c.h.b16 %v2759
  %v2831 = vunpack.c.l.b16 %v2760
  %v2832 = vunpack.c.h.b16 %v2760
  %v2833 = vunpack.c.l.b16 %v2761
  %v2834 = vunpack.c.h.b16 %v2761
  %v2835 = vunpack.c.l.b16 %v2762
  %v2836 = vunpack.c.h.b16 %v2762
  %v2837 = vunpack.c.l.b16 %v2763
  %v2838 = vunpack.c.h.b16 %v2763
  %v2839 = vunpack.c.l.b16 %v2764
  %v2840 = vunpack.c.h.b16 %v2764
  %v2841 = vunpack.c.l.b16 %v2765
  %v2842 = vunpack.c.h.b16 %v2765
  %v2843 = vunpack.c.l.b16 %v2766
  %v2844 = vunpack.c.h.b16 %v2766
  %v2845 = vunpack.c.l.b16 %v2767
  %v2846 = vunpack.c.h.b16 %v2767
  %v2847 = vunpack.c.l.b16 %v2768
  %v2848 = vunpack.c.h.b16 %v2768
  %v2849 = vunpack.c.l.b16 %v2769
  %v2850 = vunpack.c.h.b16 %v2769
  %v2851 = vunpack.c.l.b16 %v2770
  %v2852 = vunpack.c.h.b16 %v2770
  %v2853 = vunpack.c.l.b16 %v2771
  %v2854 = vunpack.c.h.b16 %v2771
  %v2855 = vunpack.c.l.b16 %v2772
  %v2856 = vunpack.c.h.b16 %v2772
  %v2857 = vunpack.c.l.b16 %v2773
  %v2858 = vunpack.c.h.b16 %v2773
  %v2859 = vunpack.c.l.b16 %v2774
  %v2860 = vunpack.c.h.b16 %v2774
  %v2861 = vunpack.c.l.b16 %v2775
  %v2862 = vunpack.c.h.b16 %v2775
  %v2863 = vunpack.c.l.b16 %v2776
  %v2864 = vunpack.c.h.b16 %v2776
  %v2865 = vunpack.c.l.b16 %v2777
  %v2866 = vunpack.c.h.b16 %v2777
  %v2867 = vunpack.c.l.b16 %v2778
  %v2868 = vunpack.c.h.b16 %v2778
  %v2869 = vunpack.c.l.b16 %v2779
  %v2870 = vunpack.c.h.b16 %v2779
  %v2871 = vunpack.c.l.b16 %v2780
  %v2872 = vunpack.c.h.b16 %v2780
  %v2873 = vunpack.c.l.b16 %v2781
  %v2874 = vunpack.c.h.b16 %v2781
  %v2875 = vunpack.c.l.b16 %v2782
  %v2876 = vunpack.c.h.b16 %v2782
  %v2877 = vunpack.c.l.b16 %v2783
  %v2878 = vunpack.c.h.b16 %v2783
  %v2879 = vunpack.c.l.b16 %v2784
  %v2880 = vunpack.c.h.b16 %v2784
  %v2881 = vpack.c.b16 %v2821, %v2817
  %v2882 = vpack.c.b16 %v2822, %v2818
  %v2883 = vpack.c.b16 %v2823, %v2819
  %v2884 = vpack.c.b16 %v2824, %v2820
  %v2885 = vpack.c.b16 %v2829, %v2825
  %v2886 = vpack.c.b16 %v2830, %v2826
  %v2887 = vpack.c.b16 %v2831, %v2827
  %v2888 = vpack.c.b16 %v2832, %v2828
  %v2889 = vpack.c.b16 %v2837, %v2833
  %v2890 = vpack.c.b16 %v2838, %v2834
  %v2891 = vpack.c.b16 %v2839, %v2835
  %v2892 = vpack.c.b16 %v2840, %v2836
  %v2893 = vpack.c.b16 %v2845, %v2841
  %v2894 = vpack.c.b16 %v2846, %v2842
  %v2895 = vpack.c.b16 %v2847, %v2843
  %v2896 = vpack.c.b16 %v2848, %v2844
  %v2897 = vpack.c.b16 %v2853, %v2849
  %v2898 = vpack.c.b16 %v2854, %v2850
  %v2899 = vpack.c.b16 %v2855, %v2851
  %v2900 = vpack.c.b16 %v2856, %v2852
  %v2901 = vpack.c.b16 %v2861, %v2857
  %v2902 = vpack.c.b16 %v2862, %v2858
  %v2903 = vpack.c.b16 %v2863, %v2859
  %v2904 = vpack.c.b16 %v2864, %v2860
  %v2905 = vpack.c.b16 %v2869, %v2865
  %v2906 = vpack.c.b16 %v2870, %v2866
  %v2907 = vpack.c.b16 %v2871, %v2867
  %v2908 = vpack.c.b16 %v2872, %v2868
  %v2909 = vpack.c.b16 %v2877, %v2873
  %v2910 = vpack.c.b16 %v2878, %v2874
  %v2911 = vpack.c.b16 %v2879, %v2875
  %v2912 = vpack.c.b16 %v2880, %v2876
  %2945 = vmatprep.subr.bf16.mxu0 %v2882
  %2946 = vmatpush1.bf16.msra.mxu0 %v2881
  %2947 = vmatprep.subr.bf16.mxu0 %v2886
  %2948 = vmatpush1.bf16.msra.mxu0 %v2885
  %2949 = vmatprep.subr.bf16.mxu0 %v2890
  %2950 = vmatpush1.bf16.msra.mxu0 %v2889
  %2951 = vmatprep.subr.bf16.mxu0 %v2894
  %2952 = vmatpush1.bf16.msra.mxu0 %v2893
  %2953 = vmatprep.subr.bf16.mxu0 %v2898
  %2954 = vmatpush1.bf16.msra.mxu0 %v2897
  %2955 = vmatprep.subr.bf16.mxu0 %v2902
  %2956 = vmatpush1.bf16.msra.mxu0 %v2901
  %2957 = vmatprep.subr.bf16.mxu0 %v2906
  %2958 = vmatpush1.bf16.msra.mxu0 %v2905
  %2959 = vmatprep.subr.bf16.mxu0 %v2910
  %2960 = vmatpush1.bf16.msra.mxu0 %v2909
  %2961 = vmatprep.subr.bf16.mxu0 0
  %2962 = vmatpush1.bf16.msra.mxu0 0
  %2963 = vmatprep.subr.bf16.mxu0 0
  %2964 = vmatpush1.bf16.msra.mxu0 0
  %2965 = vmatprep.subr.bf16.mxu0 0
  %2966 = vmatpush1.bf16.msra.mxu0 0
  %2967 = vmatprep.subr.bf16.mxu0 0
  %2968 = vmatpush1.bf16.msra.mxu0 0
  %2969 = vmatprep.subr.bf16.mxu0 0
  %2970 = vmatpush1.bf16.msra.mxu0 0
  %2971 = vmatprep.subr.bf16.mxu0 0
  %2972 = vmatpush1.bf16.msra.mxu0 0
  %2973 = vmatprep.subr.bf16.mxu0 0
  %2974 = vmatpush1.bf16.msra.mxu0 0
  %2975 = vmatprep.subr.bf16.mxu0 0
  %2976 = vmatpush1.bf16.msra.mxu0 0
  %2977 = vmatprep.mubr.bf16.mxu0 0
  %2978 = vmatmul.mubr.bf16.gmra.mrb[0].mxu0 %v2752
  %v2979 = vpop.f32.mrb[0].mxu0
  %v2980 = vadd.f32 0.0, %v2979
  %v2981 = vpop.f32.mrb[0].mxu0
  %v2982 = vadd.f32 0.0, %v2981
  %v2983 = vpop.f32.mrb[0].mxu0
  %v2984 = vadd.f32 0.0, %v2983
  %v2985 = vpop.f32.mrb[0].mxu0
  %v2986 = vadd.f32 0.0, %v2985
  %2987 = vdwg.mxu0
  %2988 = vmatprep.subr.bf16.mxu0 %v2884
  %2989 = vmatpush1.bf16.msra.mxu0 %v2883
  %2990 = vmatprep.subr.bf16.mxu0 %v2888
  %2991 = vmatpush1.bf16.msra.mxu0 %v2887
  %2992 = vmatprep.subr.bf16.mxu0 %v2892
  %2993 = vmatpush1.bf16.msra.mxu0 %v2891
  %2994 = vmatprep.subr.bf16.mxu0 %v2896
  %2995 = vmatpush1.bf16.msra.mxu0 %v2895
  %2996 = vmatprep.subr.bf16.mxu0 %v2900
  %2997 = vmatpush1.bf16.msra.mxu0 %v2899
  %2998 = vmatprep.subr.bf16.mxu0 %v2904
  %2999 = vmatpush1.bf16.msra.mxu0 %v2903
  %3000 = vmatprep.subr.bf16.mxu0 %v2908
  %3001 = vmatpush1.bf16.msra.mxu0 %v2907
  %3002 = vmatprep.subr.bf16.mxu0 %v2912
  %3003 = vmatpush1.bf16.msra.mxu0 %v2911
  %3004 = vmatprep.subr.bf16.mxu0 0
  %3005 = vmatpush1.bf16.msra.mxu0 0
  %3006 = vmatprep.subr.bf16.mxu0 0
  %3007 = vmatpush1.bf16.msra.mxu0 0
  %3008 = vmatprep.subr.bf16.mxu0 0
  %3009 = vmatpush1.bf16.msra.mxu0 0
  %3010 = vmatprep.subr.bf16.mxu0 0
  %3011 = vmatpush1.bf16.msra.mxu0 0
  %3012 = vmatprep.subr.bf16.mxu0 0
  %3013 = vmatpush1.bf16.msra.mxu0 0
  %3014 = vmatprep.subr.bf16.mxu0 0
  %3015 = vmatpush1.bf16.msra.mxu0 0
  %3016 = vmatprep.subr.bf16.mxu0 0
  %3017 = vmatpush1.bf16.msra.mxu0 0
  %3018 = vmatprep.subr.bf16.mxu0 0
  %3019 = vmatpush1.bf16.msra.mxu0 0
  %3020 = vmatprep.mubr.bf16.mxu0 0
  %3021 = vmatmul.mubr.bf16.gmra.mrb[0].mxu0 %v2752
  %v3022 = vpop.f32.mrb[0].mxu0
  %v3023 = vadd.f32 0.0, %v3022
  %v3024 = vpop.f32.mrb[0].mxu0
  %v3025 = vadd.f32 0.0, %v3024
  %v3026 = vpop.f32.mrb[0].mxu0
  %v3027 = vadd.f32 0.0, %v3026
  %v3028 = vpop.f32.mrb[0].mxu0
  %v3029 = vadd.f32 0.0, %v3028
  %3030 = vdwg.mxu0
  %v3031 = vadd.f32 %v2742, %v2980
  %v3032 = vadd.f32 %v2743, %v2982
  %v3033 = vadd.f32 %v2744, %v3023
  %v3034 = vadd.f32 %v2745, %v3025
  %v3035 = vadd.f32 %v2746, %v2984
  %v3036 = vadd.f32 %v2747, %v2986
  %v3037 = vadd.f32 %v2748, %v3027
  %v3038 = vadd.f32 %v2749, %v3029
  %v3039 = vld [vmem:[#allocation3] sm:$0xff]
  %v3040 = vld [vmem:[#allocation3 + $0x8] sm:$0xff]
  %v3041 = vxor.u32 %v3031, 2147483648
  %v3042 = vxor.u32 %v3035, 2147483648
  %v3043 = vmul.f32 %v3041, 1.442695
  %v3044 = vpow.pop %v3043
  %v3045 = vmul.f32 %v3042, 1.442695
  %v3046 = vpow.pop %v3045
  %v3047 = vadd.f32 %v3044, 1.0
  %v3048 = vadd.f32 %v3046, 1.0
  %v3049 = vrcp.pop %v3047
  %v3050 = vmul.f32 1.0, %v3049
  %v3051 = vrcp.pop %v3048
  %v3052 = vmul.f32 1.0, %v3051
  %v3053 = vxor.u32 %v3032, 2147483648
  %v3054 = vxor.u32 %v3036, 2147483648
  %v3055 = vmul.f32 %v3053, 1.442695
  %v3056 = vpow.pop %v3055
  %v3057 = vmul.f32 %v3054, 1.442695
  %v3058 = vpow.pop %v3057
  %v3059 = vadd.f32 %v3056, 1.0
  %v3060 = vadd.f32 %v3058, 1.0
  %v3061 = vrcp.pop %v3059
  %v3062 = vmul.f32 1.0, %v3061
  %v3063 = vrcp.pop %v3060
  %v3064 = vmul.f32 1.0, %v3063
  %v3065 = vtanh.pop %v3033
  %v3066 = vtanh.pop %v3037
  %v3067 = vxor.u32 %v3034, 2147483648
  %v3068 = vxor.u32 %v3038, 2147483648
  %v3069 = vmul.f32 %v3067, 1.442695
  %v3070 = vpow.pop %v3069
  %v3071 = vmul.f32 %v3068, 1.442695
  %v3072 = vpow.pop %v3071
  %v3073 = vadd.f32 %v3070, 1.0
  %v3074 = vadd.f32 %v3072, 1.0
  %v3075 = vrcp.pop %v3073
  %v3076 = vmul.f32 1.0, %v3075
  %v3077 = vrcp.pop %v3074
  %v3078 = vmul.f32 1.0, %v3077
  %v3079 = vmul.f32 %v3062, %v3039
  %v3080 = vmul.f32 %v3064, %v3040
  %v3081 = vmul.f32 %v3050, %v3065
  %v3082 = vmul.f32 %v3052, %v3066
  %v3083 = vadd.f32 %v3079, %v3081
  %v3084 = vadd.f32 %v3080, %v3082
  %v3085 = vtanh.pop %v3083
  %v3086 = vtanh.pop %v3084
  %v3087 = vmul.f32 %v3076, %v3085
  %v3088 = vmul.f32 %v3078, %v3086
  %3089 = vst [vmem:[#allocation2] sm:$0xff] %v3087
  %3090 = vst [vmem:[#allocation2 + $0x8] sm:$0xff] %v3088
  %3091 = vst [vmem:[#allocation3] sm:$0xff] %v3083
  %3092 = vst [vmem:[#allocation3 + $0x8] sm:$0xff] %v3084
  %v3093 = vpack.c.bf16 %v3088, %v3087
  %v3094 = vld [vmem:[%s408] sm:$0xff]
  %v3095 = vld [vmem:[%s408 + $0x8] sm:$0xff]
  %v3096 = vpack.c.bf16 %v3095, %v3094
  %v3097 = vld [vmem:[%s2] sm:$0xff]
  %v3098 = vld [vmem:[%s2 + $0x8] sm:$0xff]
  %v3099 = vld [vmem:[%s2 + $0x10] sm:$0xff]
  %v3100 = vld [vmem:[%s2 + $0x18] sm:$0xff]
  %v3101 = vld [vmem:[%s2 + $0x20] sm:$0xff]
  %v3102 = vld [vmem:[%s2 + $0x28] sm:$0xff]
  %v3103 = vld [vmem:[%s2 + $0x30] sm:$0xff]
  %v3104 = vld [vmem:[%s2 + $0x38] sm:$0xff]
  %v3105 = vld [vmem:[%s2 + $0x40] sm:$0xff]
  %v3106 = vld [vmem:[%s2 + $0x48] sm:$0xff]
  %v3107 = vld [vmem:[%s2 + $0x50] sm:$0xff]
  %v3108 = vld [vmem:[%s2 + $0x58] sm:$0xff]
  %v3109 = vld [vmem:[%s2 + $0x60] sm:$0xff]
  %v3110 = vld [vmem:[%s2 + $0x68] sm:$0xff]
  %v3111 = vld [vmem:[%s2 + $0x70] sm:$0xff]
  %v3112 = vld [vmem:[%s2 + $0x78] sm:$0xff]
  %v3113 = vld [vmem:[%s2 + $0x80] sm:$0xff]
  %v3114 = vld [vmem:[%s2 + $0x88] sm:$0xff]
  %v3115 = vld [vmem:[%s2 + $0x90] sm:$0xff]
  %v3116 = vld [vmem:[%s2 + $0x98] sm:$0xff]
  %v3117 = vld [vmem:[%s2 + $0xa0] sm:$0xff]
  %v3118 = vld [vmem:[%s2 + $0xa8] sm:$0xff]
  %v3119 = vld [vmem:[%s2 + $0xb0] sm:$0xff]
  %v3120 = vld [vmem:[%s2 + $0xb8] sm:$0xff]
  %v3121 = vld [vmem:[%s2 + $0xc0] sm:$0xff]
  %v3122 = vld [vmem:[%s2 + $0xc8] sm:$0xff]
  %v3123 = vld [vmem:[%s2 + $0xd0] sm:$0xff]
  %v3124 = vld [vmem:[%s2 + $0xd8] sm:$0xff]
  %v3125 = vld [vmem:[%s2 + $0xe0] sm:$0xff]
  %v3126 = vld [vmem:[%s2 + $0xe8] sm:$0xff]
  %v3127 = vld [vmem:[%s2 + $0xf0] sm:$0xff]
  %v3128 = vld [vmem:[%s2 + $0xf8] sm:$0xff]
  %v3129 = vld [vmem:[%s2 + $0x100] sm:$0xff]
  %v3130 = vld [vmem:[%s2 + $0x108] sm:$0xff]
  %v3131 = vld [vmem:[%s2 + $0x110] sm:$0xff]
  %v3132 = vld [vmem:[%s2 + $0x118] sm:$0xff]
  %v3133 = vld [vmem:[%s2 + $0x120] sm:$0xff]
  %v3134 = vld [vmem:[%s2 + $0x128] sm:$0xff]
  %v3135 = vld [vmem:[%s2 + $0x130] sm:$0xff]
  %v3136 = vld [vmem:[%s2 + $0x138] sm:$0xff]
  %v3137 = vld [vmem:[%s2 + $0x140] sm:$0xff]
  %v3138 = vld [vmem:[%s2 + $0x148] sm:$0xff]
  %v3139 = vld [vmem:[%s2 + $0x150] sm:$0xff]
  %v3140 = vld [vmem:[%s2 + $0x158] sm:$0xff]
  %v3141 = vld [vmem:[%s2 + $0x160] sm:$0xff]
  %v3142 = vld [vmem:[%s2 + $0x168] sm:$0xff]
  %v3143 = vld [vmem:[%s2 + $0x170] sm:$0xff]
  %v3144 = vld [vmem:[%s2 + $0x178] sm:$0xff]
  %v3145 = vld [vmem:[%s2 + $0x180] sm:$0xff]
  %v3146 = vld [vmem:[%s2 + $0x188] sm:$0xff]
  %v3147 = vld [vmem:[%s2 + $0x190] sm:$0xff]
  %v3148 = vld [vmem:[%s2 + $0x198] sm:$0xff]
  %v3149 = vld [vmem:[%s2 + $0x1a0] sm:$0xff]
  %v3150 = vld [vmem:[%s2 + $0x1a8] sm:$0xff]
  %v3151 = vld [vmem:[%s2 + $0x1b0] sm:$0xff]
  %v3152 = vld [vmem:[%s2 + $0x1b8] sm:$0xff]
  %v3153 = vld [vmem:[%s2 + $0x1c0] sm:$0xff]
  %v3154 = vld [vmem:[%s2 + $0x1c8] sm:$0xff]
  %v3155 = vld [vmem:[%s2 + $0x1d0] sm:$0xff]
  %v3156 = vld [vmem:[%s2 + $0x1d8] sm:$0xff]
  %v3157 = vld [vmem:[%s2 + $0x1e0] sm:$0xff]
  %v3158 = vld [vmem:[%s2 + $0x1e8] sm:$0xff]
  %v3159 = vld [vmem:[%s2 + $0x1f0] sm:$0xff]
  %v3160 = vld [vmem:[%s2 + $0x1f8] sm:$0xff]
  %v3225 = vunpack.c.l.b16 %v3097
  %v3226 = vunpack.c.h.b16 %v3097
  %v3227 = vunpack.c.l.b16 %v3098
  %v3228 = vunpack.c.h.b16 %v3098
  %v3229 = vunpack.c.l.b16 %v3099
  %v3230 = vunpack.c.h.b16 %v3099
  %v3231 = vunpack.c.l.b16 %v3100
  %v3232 = vunpack.c.h.b16 %v3100
  %v3233 = vunpack.c.l.b16 %v3101
  %v3234 = vunpack.c.h.b16 %v3101
  %v3235 = vunpack.c.l.b16 %v3102
  %v3236 = vunpack.c.h.b16 %v3102
  %v3237 = vunpack.c.l.b16 %v3103
  %v3238 = vunpack.c.h.b16 %v3103
  %v3239 = vunpack.c.l.b16 %v3104
  %v3240 = vunpack.c.h.b16 %v3104
  %v3241 = vunpack.c.l.b16 %v3105
  %v3242 = vunpack.c.h.b16 %v3105
  %v3243 = vunpack.c.l.b16 %v3106
  %v3244 = vunpack.c.h.b16 %v3106
  %v3245 = vunpack.c.l.b16 %v3107
  %v3246 = vunpack.c.h.b16 %v3107
  %v3247 = vunpack.c.l.b16 %v3108
  %v3248 = vunpack.c.h.b16 %v3108
  %v3249 = vunpack.c.l.b16 %v3109
  %v3250 = vunpack.c.h.b16 %v3109
  %v3251 = vunpack.c.l.b16 %v3110
  %v3252 = vunpack.c.h.b16 %v3110
  %v3253 = vunpack.c.l.b16 %v3111
  %v3254 = vunpack.c.h.b16 %v3111
  %v3255 = vunpack.c.l.b16 %v3112
  %v3256 = vunpack.c.h.b16 %v3112
  %v3257 = vunpack.c.l.b16 %v3113
  %v3258 = vunpack.c.h.b16 %v3113
  %v3259 = vunpack.c.l.b16 %v3114
  %v3260 = vunpack.c.h.b16 %v3114
  %v3261 = vunpack.c.l.b16 %v3115
  %v3262 = vunpack.c.h.b16 %v3115
  %v3263 = vunpack.c.l.b16 %v3116
  %v3264 = vunpack.c.h.b16 %v3116
  %v3265 = vunpack.c.l.b16 %v3117
  %v3266 = vunpack.c.h.b16 %v3117
  %v3267 = vunpack.c.l.b16 %v3118
  %v3268 = vunpack.c.h.b16 %v3118
  %v3269 = vunpack.c.l.b16 %v3119
  %v3270 = vunpack.c.h.b16 %v3119
  %v3271 = vunpack.c.l.b16 %v3120
  %v3272 = vunpack.c.h.b16 %v3120
  %v3273 = vunpack.c.l.b16 %v3121
  %v3274 = vunpack.c.h.b16 %v3121
  %v3275 = vunpack.c.l.b16 %v3122
  %v3276 = vunpack.c.h.b16 %v3122
  %v3277 = vunpack.c.l.b16 %v3123
  %v3278 = vunpack.c.h.b16 %v3123
  %v3279 = vunpack.c.l.b16 %v3124
  %v3280 = vunpack.c.h.b16 %v3124
  %v3281 = vunpack.c.l.b16 %v3125
  %v3282 = vunpack.c.h.b16 %v3125
  %v3283 = vunpack.c.l.b16 %v3126
  %v3284 = vunpack.c.h.b16 %v3126
  %v3285 = vunpack.c.l.b16 %v3127
  %v3286 = vunpack.c.h.b16 %v3127
  %v3287 = vunpack.c.l.b16 %v3128
  %v3288 = vunpack.c.h.b16 %v3128
  %v3289 = vunpack.c.l.b16 %v3129
  %v3290 = vunpack.c.h.b16 %v3129
  %v3291 = vunpack.c.l.b16 %v3130
  %v3292 = vunpack.c.h.b16 %v3130
  %v3293 = vunpack.c.l.b16 %v3131
  %v3294 = vunpack.c.h.b16 %v3131
  %v3295 = vunpack.c.l.b16 %v3132
  %v3296 = vunpack.c.h.b16 %v3132
  %v3297 = vunpack.c.l.b16 %v3133
  %v3298 = vunpack.c.h.b16 %v3133
  %v3299 = vunpack.c.l.b16 %v3134
  %v3300 = vunpack.c.h.b16 %v3134
  %v3301 = vunpack.c.l.b16 %v3135
  %v3302 = vunpack.c.h.b16 %v3135
  %v3303 = vunpack.c.l.b16 %v3136
  %v3304 = vunpack.c.h.b16 %v3136
  %v3305 = vunpack.c.l.b16 %v3137
  %v3306 = vunpack.c.h.b16 %v3137
  %v3307 = vunpack.c.l.b16 %v3138
  %v3308 = vunpack.c.h.b16 %v3138
  %v3309 = vunpack.c.l.b16 %v3139
  %v3310 = vunpack.c.h.b16 %v3139
  %v3311 = vunpack.c.l.b16 %v3140
  %v3312 = vunpack.c.h.b16 %v3140
  %v3313 = vunpack.c.l.b16 %v3141
  %v3314 = vunpack.c.h.b16 %v3141
  %v3315 = vunpack.c.l.b16 %v3142
  %v3316 = vunpack.c.h.b16 %v3142
  %v3317 = vunpack.c.l.b16 %v3143
  %v3318 = vunpack.c.h.b16 %v3143
  %v3319 = vunpack.c.l.b16 %v3144
  %v3320 = vunpack.c.h.b16 %v3144
  %v3321 = vunpack.c.l.b16 %v3145
  %v3322 = vunpack.c.h.b16 %v3145
  %v3323 = vunpack.c.l.b16 %v3146
  %v3324 = vunpack.c.h.b16 %v3146
  %v3325 = vunpack.c.l.b16 %v3147
  %v3326 = vunpack.c.h.b16 %v3147
  %v3327 = vunpack.c.l.b16 %v3148
  %v3328 = vunpack.c.h.b16 %v3148
  %v3329 = vunpack.c.l.b16 %v3149
  %v3330 = vunpack.c.h.b16 %v3149
  %v3331 = vunpack.c.l.b16 %v3150
  %v3332 = vunpack.c.h.b16 %v3150
  %v3333 = vunpack.c.l.b16 %v3151
  %v3334 = vunpack.c.h.b16 %v3151
  %v3335 = vunpack.c.l.b16 %v3152
  %v3336 = vunpack.c.h.b16 %v3152
  %v3337 = vunpack.c.l.b16 %v3153
  %v3338 = vunpack.c.h.b16 %v3153
  %v3339 = vunpack.c.l.b16 %v3154
  %v3340 = vunpack.c.h.b16 %v3154
  %v3341 = vunpack.c.l.b16 %v3155
  %v3342 = vunpack.c.h.b16 %v3155
  %v3343 = vunpack.c.l.b16 %v3156
  %v3344 = vunpack.c.h.b16 %v3156
  %v3345 = vunpack.c.l.b16 %v3157
  %v3346 = vunpack.c.h.b16 %v3157
  %v3347 = vunpack.c.l.b16 %v3158
  %v3348 = vunpack.c.h.b16 %v3158
  %v3349 = vunpack.c.l.b16 %v3159
  %v3350 = vunpack.c.h.b16 %v3159
  %v3351 = vunpack.c.l.b16 %v3160
  %v3352 = vunpack.c.h.b16 %v3160
  %v3353 = vpack.c.b16 %v3229, %v3225
  %v3354 = vpack.c.b16 %v3230, %v3226
  %v3355 = vpack.c.b16 %v3231, %v3227
  %v3356 = vpack.c.b16 %v3232, %v3228
  %v3357 = vpack.c.b16 %v3237, %v3233
  %v3358 = vpack.c.b16 %v3238, %v3234
  %v3359 = vpack.c.b16 %v3239, %v3235
  %v3360 = vpack.c.b16 %v3240, %v3236
  %v3361 = vpack.c.b16 %v3245, %v3241
  %v3362 = vpack.c.b16 %v3246, %v3242
  %v3363 = vpack.c.b16 %v3247, %v3243
  %v3364 = vpack.c.b16 %v3248, %v3244
  %v3365 = vpack.c.b16 %v3253, %v3249
  %v3366 = vpack.c.b16 %v3254, %v3250
  %v3367 = vpack.c.b16 %v3255, %v3251
  %v3368 = vpack.c.b16 %v3256, %v3252
  %v3369 = vpack.c.b16 %v3261, %v3257
  %v3370 = vpack.c.b16 %v3262, %v3258
  %v3371 = vpack.c.b16 %v3263, %v3259
  %v3372 = vpack.c.b16 %v3264, %v3260
  %v3373 = vpack.c.b16 %v3269, %v3265
  %v3374 = vpack.c.b16 %v3270, %v3266
  %v3375 = vpack.c.b16 %v3271, %v3267
  %v3376 = vpack.c.b16 %v3272, %v3268
  %v3377 = vpack.c.b16 %v3277, %v3273
  %v3378 = vpack.c.b16 %v3278, %v3274
  %v3379 = vpack.c.b16 %v3279, %v3275
  %v3380 = vpack.c.b16 %v3280, %v3276
  %v3381 = vpack.c.b16 %v3285, %v3281
  %v3382 = vpack.c.b16 %v3286, %v3282
  %v3383 = vpack.c.b16 %v3287, %v3283
  %v3384 = vpack.c.b16 %v3288, %v3284
  %v3385 = vpack.c.b16 %v3293, %v3289
  %v3386 = vpack.c.b16 %v3294, %v3290
  %v3387 = vpack.c.b16 %v3295, %v3291
  %v3388 = vpack.c.b16 %v3296, %v3292
  %v3389 = vpack.c.b16 %v3301, %v3297
  %v3390 = vpack.c.b16 %v3302, %v3298
  %v3391 = vpack.c.b16 %v3303, %v3299
  %v3392 = vpack.c.b16 %v3304, %v3300
  %v3393 = vpack.c.b16 %v3309, %v3305
  %v3394 = vpack.c.b16 %v3310, %v3306
  %v3395 = vpack.c.b16 %v3311, %v3307
  %v3396 = vpack.c.b16 %v3312, %v3308
  %v3397 = vpack.c.b16 %v3317, %v3313
  %v3398 = vpack.c.b16 %v3318, %v3314
  %v3399 = vpack.c.b16 %v3319, %v3315
  %v3400 = vpack.c.b16 %v3320, %v3316
  %v3401 = vpack.c.b16 %v3325, %v3321
  %v3402 = vpack.c.b16 %v3326, %v3322
  %v3403 = vpack.c.b16 %v3327, %v3323
  %v3404 = vpack.c.b16 %v3328, %v3324
  %v3405 = vpack.c.b16 %v3333, %v3329
  %v3406 = vpack.c.b16 %v3334, %v3330
  %v3407 = vpack.c.b16 %v3335, %v3331
  %v3408 = vpack.c.b16 %v3336, %v3332
  %v3409 = vpack.c.b16 %v3341, %v3337
  %v3410 = vpack.c.b16 %v3342, %v3338
  %v3411 = vpack.c.b16 %v3343, %v3339
  %v3412 = vpack.c.b16 %v3344, %v3340
  %v3413 = vpack.c.b16 %v3349, %v3345
  %v3414 = vpack.c.b16 %v3350, %v3346
  %v3415 = vpack.c.b16 %v3351, %v3347
  %v3416 = vpack.c.b16 %v3352, %v3348
  %3481 = vmatprep.subr.bf16.mxu0 %v3354
  %3482 = vmatpush1.bf16.msra.mxu0 %v3353
  %3483 = vmatprep.subr.bf16.mxu0 %v3358
  %3484 = vmatpush1.bf16.msra.mxu0 %v3357
  %3485 = vmatprep.subr.bf16.mxu0 %v3362
  %3486 = vmatpush1.bf16.msra.mxu0 %v3361
  %3487 = vmatprep.subr.bf16.mxu0 %v3366
  %3488 = vmatpush1.bf16.msra.mxu0 %v3365
  %3489 = vmatprep.subr.bf16.mxu0 %v3370
  %3490 = vmatpush1.bf16.msra.mxu0 %v3369
  %3491 = vmatprep.subr.bf16.mxu0 %v3374
  %3492 = vmatpush1.bf16.msra.mxu0 %v3373
  %3493 = vmatprep.subr.bf16.mxu0 %v3378
  %3494 = vmatpush1.bf16.msra.mxu0 %v3377
  %3495 = vmatprep.subr.bf16.mxu0 %v3382
  %3496 = vmatpush1.bf16.msra.mxu0 %v3381
  %3497 = vmatprep.subr.bf16.mxu0 %v3386
  %3498 = vmatpush1.bf16.msra.mxu0 %v3385
  %3499 = vmatprep.subr.bf16.mxu0 %v3390
  %3500 = vmatpush1.bf16.msra.mxu0 %v3389
  %3501 = vmatprep.subr.bf16.mxu0 %v3394
  %3502 = vmatpush1.bf16.msra.mxu0 %v3393
  %3503 = vmatprep.subr.bf16.mxu0 %v3398
  %3504 = vmatpush1.bf16.msra.mxu0 %v3397
  %3505 = vmatprep.subr.bf16.mxu0 %v3402
  %3506 = vmatpush1.bf16.msra.mxu0 %v3401
  %3507 = vmatprep.subr.bf16.mxu0 %v3406
  %3508 = vmatpush1.bf16.msra.mxu0 %v3405
  %3509 = vmatprep.subr.bf16.mxu0 %v3410
  %3510 = vmatpush1.bf16.msra.mxu0 %v3409
  %3511 = vmatprep.subr.bf16.mxu0 %v3414
  %3512 = vmatpush1.bf16.msra.mxu0 %v3413
  %3513 = vmatprep.mubr.bf16.mxu0 %v3096
  %3514 = vmatmul.mubr.bf16.gmra.mrb[0].mxu0 %v3093
  %v3515 = vpop.f32.mrb[0].mxu0
  %v3516 = vadd.f32 %v35, %v3515
  %v3517 = vpop.f32.mrb[0].mxu0
  %v3518 = vadd.f32 %v39, %v3517
  %v3519 = vpop.f32.mrb[0].mxu0
  %v3520 = vadd.f32 %v35, %v3519
  %v3521 = vpop.f32.mrb[0].mxu0
  %v3522 = vadd.f32 %v39, %v3521
  %3523 = vdwg.mxu0
  %3524 = vmatprep.subr.bf16.mxu0 %v3356
  %3525 = vmatpush1.bf16.msra.mxu0 %v3355
  %3526 = vmatprep.subr.bf16.mxu0 %v3360
  %3527 = vmatpush1.bf16.msra.mxu0 %v3359
  %3528 = vmatprep.subr.bf16.mxu0 %v3364
  %3529 = vmatpush1.bf16.msra.mxu0 %v3363
  %3530 = vmatprep.subr.bf16.mxu0 %v3368
  %3531 = vmatpush1.bf16.msra.mxu0 %v3367
  %3532 = vmatprep.subr.bf16.mxu0 %v3372
  %3533 = vmatpush1.bf16.msra.mxu0 %v3371
  %3534 = vmatprep.subr.bf16.mxu0 %v3376
  %3535 = vmatpush1.bf16.msra.mxu0 %v3375
  %3536 = vmatprep.subr.bf16.mxu0 %v3380
  %3537 = vmatpush1.bf16.msra.mxu0 %v3379
  %3538 = vmatprep.subr.bf16.mxu0 %v3384
  %3539 = vmatpush1.bf16.msra.mxu0 %v3383
  %3540 = vmatprep.subr.bf16.mxu0 %v3388
  %3541 = vmatpush1.bf16.msra.mxu0 %v3387
  %3542 = vmatprep.subr.bf16.mxu0 %v3392
  %3543 = vmatpush1.bf16.msra.mxu0 %v3391
  %3544 = vmatprep.subr.bf16.mxu0 %v3396
  %3545 = vmatpush1.bf16.msra.mxu0 %v3395
  %3546 = vmatprep.subr.bf16.mxu0 %v3400
  %3547 = vmatpush1.bf16.msra.mxu0 %v3399
  %3548 = vmatprep.subr.bf16.mxu0 %v3404
  %3549 = vmatpush1.bf16.msra.mxu0 %v3403
  %3550 = vmatprep.subr.bf16.mxu0 %v3408
  %3551 = vmatpush1.bf16.msra.mxu0 %v3407
  %3552 = vmatprep.subr.bf16.mxu0 %v3412
  %3553 = vmatpush1.bf16.msra.mxu0 %v3411
  %3554 = vmatprep.subr.bf16.mxu0 %v3416
  %3555 = vmatpush1.bf16.msra.mxu0 %v3415
  %3556 = vmatprep.mubr.bf16.mxu0 %v3096
  %3557 = vmatmul.mubr.bf16.gmra.mrb[0].mxu0 %v3093
  %v3558 = vpop.f32.mrb[0].mxu0
  %v3559 = vadd.f32 %v43, %v3558
  %v3560 = vpop.f32.mrb[0].mxu0
  %v3561 = vadd.f32 %v47, %v3560
  %v3562 = vpop.f32.mrb[0].mxu0
  %v3563 = vadd.f32 %v43, %v3562
  %v3564 = vpop.f32.mrb[0].mxu0
  %v3565 = vadd.f32 %v47, %v3564
  %3566 = vdwg.mxu0
  %v3567 = vld [vmem:[%s882] sm:$0xff]
  %v3568 = vld [vmem:[%s882 + $0x8] sm:$0xff]
  %v3569 = vxor.u32 %v3516, 2147483648
  %v3570 = vxor.u32 %v3520, 2147483648
  %v3571 = vmul.f32 %v3569, 1.442695
  %v3572 = vpow.pop %v3571
  %v3573 = vmul.f32 %v3570, 1.442695
  %v3574 = vpow.pop %v3573
  %v3575 = vadd.f32 %v3572, 1.0
  %v3576 = vadd.f32 %v3574, 1.0
  %v3577 = vrcp.pop %v3575
  %v3578 = vmul.f32 1.0, %v3577
  %v3579 = vrcp.pop %v3576
  %v3580 = vmul.f32 1.0, %v3579
  %v3581 = vxor.u32 %v3518, 2147483648
  %v3582 = vxor.u32 %v3522, 2147483648
  %v3583 = vmul.f32 %v3581, 1.442695
  %v3584 = vpow.pop %v3583
  %v3585 = vmul.f32 %v3582, 1.442695
  %v3586 = vpow.pop %v3585
  %v3587 = vadd.f32 %v3584, 1.0
  %v3588 = vadd.f32 %v3586, 1.0
  %v3589 = vrcp.pop %v3587
  %v3590 = vmul.f32 1.0, %v3589
  %v3591 = vrcp.pop %v3588
  %v3592 = vmul.f32 1.0, %v3591
  %v3593 = vtanh.pop %v3559
  %v3594 = vtanh.pop %v3563
  %v3595 = vxor.u32 %v3561, 2147483648
  %v3596 = vxor.u32 %v3565, 2147483648
  %v3597 = vmul.f32 %v3595, 1.442695
  %v3598 = vpow.pop %v3597
  %v3599 = vmul.f32 %v3596, 1.442695
  %v3600 = vpow.pop %v3599
  %v3601 = vadd.f32 %v3598, 1.0
  %v3602 = vadd.f32 %v3600, 1.0
  %v3603 = vrcp.pop %v3601
  %v3604 = vmul.f32 1.0, %v3603
  %v3605 = vrcp.pop %v3602
  %v3606 = vmul.f32 1.0, %v3605
  %v3607 = vmul.f32 %v3590, %v3567
  %v3608 = vmul.f32 %v3592, %v3568
  %v3609 = vmul.f32 %v3578, %v3593
  %v3610 = vmul.f32 %v3580, %v3594
  %v3611 = vadd.f32 %v3607, %v3609
  %v3612 = vadd.f32 %v3608, %v3610
  %v3613 = vtanh.pop %v3611
  %v3614 = vtanh.pop %v3612
  %v3615 = vmul.f32 %v3604, %v3613
  %v3616 = vmul.f32 %v3606, %v3614
  %3617 = vst [vmem:[%s408] sm:$0xff] %v3615
  %3618 = vst [vmem:[%s408 + $0x8] sm:$0xff] %v3616
  %3619 = vst [vmem:[%s882] sm:$0xff] %v3611
  %3620 = vst [vmem:[%s882 + $0x8] sm:$0xff] %v3612
  %v3621 = vpack.c.bf16 %v3616, %v3615
  %v3623 = vunpack.c.l.b16 %v3621
  %v3624 = vunpack.c.h.b16 %v3621
  %v3625 = vpack.c.b16 %v3623, %v3623
  %v3626 = vpack.c.b16 %v3624, %v3624
  %s3629 = scalar_lea.vmem %s4, 24
  %3630 = vst [vmem:[%s3629] sm:$0xf] %v3625
  %3631 = vst [vmem:[%s3629 + $0x4] sm:$0xf] %v3626
  %s3632 = scalar_lea.vmem %s0, 128
  %v3633 = vld [vmem:[%s3632] sm:$0xff]
  %v3634 = vld [vmem:[%s3632 + $0x8] sm:$0xff]
  %v3635 = vld [vmem:[%s3632 + $0x10] sm:$0xff]
  %v3636 = vld [vmem:[%s3632 + $0x18] sm:$0xff]
  %v3637 = vunpack.c.l.bf16 %v3633
  %v3638 = vunpack.c.h.bf16 %v3633
  %v3639 = vunpack.c.l.bf16 %v3634
  %v3640 = vunpack.c.h.bf16 %v3634
  %v3641 = vunpack.c.l.bf16 %v3635
  %v3642 = vunpack.c.h.bf16 %v3635
  %v3643 = vunpack.c.l.bf16 %v3636
  %v3644 = vunpack.c.h.bf16 %v3636
  %v3645 = vld [vmem:[#allocation2] sm:$0xff]
  %v3646 = vld [vmem:[#allocation2 + $0x8] sm:$0xff]
  %v3647 = vpack.c.bf16 %v3646, %v3645
  %v3648 = vld [vmem:[%s1] sm:$0xff]
  %v3649 = vld [vmem:[%s1 + $0x8] sm:$0xff]
  %v3650 = vld [vmem:[%s1 + $0x10] sm:$0xff]
  %v3651 = vld [vmem:[%s1 + $0x18] sm:$0xff]
  %v3652 = vld [vmem:[%s1 + $0x20] sm:$0xff]
  %v3653 = vld [vmem:[%s1 + $0x28] sm:$0xff]
  %v3654 = vld [vmem:[%s1 + $0x30] sm:$0xff]
  %v3655 = vld [vmem:[%s1 + $0x38] sm:$0xff]
  %v3656 = vld [vmem:[%s1 + $0x40] sm:$0xff]
  %v3657 = vld [vmem:[%s1 + $0x48] sm:$0xff]
  %v3658 = vld [vmem:[%s1 + $0x50] sm:$0xff]
  %v3659 = vld [vmem:[%s1 + $0x58] sm:$0xff]
  %v3660 = vld [vmem:[%s1 + $0x60] sm:$0xff]
  %v3661 = vld [vmem:[%s1 + $0x68] sm:$0xff]
  %v3662 = vld [vmem:[%s1 + $0x70] sm:$0xff]
  %v3663 = vld [vmem:[%s1 + $0x78] sm:$0xff]
  %v3664 = vld [vmem:[%s1 + $0x80] sm:$0xff]
  %v3665 = vld [vmem:[%s1 + $0x88] sm:$0xff]
  %v3666 = vld [vmem:[%s1 + $0x90] sm:$0xff]
  %v3667 = vld [vmem:[%s1 + $0x98] sm:$0xff]
  %v3668 = vld [vmem:[%s1 + $0xa0] sm:$0xff]
  %v3669 = vld [vmem:[%s1 + $0xa8] sm:$0xff]
  %v3670 = vld [vmem:[%s1 + $0xb0] sm:$0xff]
  %v3671 = vld [vmem:[%s1 + $0xb8] sm:$0xff]
  %v3672 = vld [vmem:[%s1 + $0xc0] sm:$0xff]
  %v3673 = vld [vmem:[%s1 + $0xc8] sm:$0xff]
  %v3674 = vld [vmem:[%s1 + $0xd0] sm:$0xff]
  %v3675 = vld [vmem:[%s1 + $0xd8] sm:$0xff]
  %v3676 = vld [vmem:[%s1 + $0xe0] sm:$0xff]
  %v3677 = vld [vmem:[%s1 + $0xe8] sm:$0xff]
  %v3678 = vld [vmem:[%s1 + $0xf0] sm:$0xff]
  %v3679 = vld [vmem:[%s1 + $0xf8] sm:$0xff]
  %v3712 = vunpack.c.l.b16 %v3648
  %v3713 = vunpack.c.h.b16 %v3648
  %v3714 = vunpack.c.l.b16 %v3649
  %v3715 = vunpack.c.h.b16 %v3649
  %v3716 = vunpack.c.l.b16 %v3650
  %v3717 = vunpack.c.h.b16 %v3650
  %v3718 = vunpack.c.l.b16 %v3651
  %v3719 = vunpack.c.h.b16 %v3651
  %v3720 = vunpack.c.l.b16 %v3652
  %v3721 = vunpack.c.h.b16 %v3652
  %v3722 = vunpack.c.l.b16 %v3653
  %v3723 = vunpack.c.h.b16 %v3653
  %v3724 = vunpack.c.l.b16 %v3654
  %v3725 = vunpack.c.h.b16 %v3654
  %v3726 = vunpack.c.l.b16 %v3655
  %v3727 = vunpack.c.h.b16 %v3655
  %v3728 = vunpack.c.l.b16 %v3656
  %v3729 = vunpack.c.h.b16 %v3656
  %v3730 = vunpack.c.l.b16 %v3657
  %v3731 = vunpack.c.h.b16 %v3657
  %v3732 = vunpack.c.l.b16 %v3658
  %v3733 = vunpack.c.h.b16 %v3658
  %v3734 = vunpack.c.l.b16 %v3659
  %v3735 = vunpack.c.h.b16 %v3659
  %v3736 = vunpack.c.l.b16 %v3660
  %v3737 = vunpack.c.h.b16 %v3660
  %v3738 = vunpack.c.l.b16 %v3661
  %v3739 = vunpack.c.h.b16 %v3661
  %v3740 = vunpack.c.l.b16 %v3662
  %v3741 = vunpack.c.h.b16 %v3662
  %v3742 = vunpack.c.l.b16 %v3663
  %v3743 = vunpack.c.h.b16 %v3663
  %v3744 = vunpack.c.l.b16 %v3664
  %v3745 = vunpack.c.h.b16 %v3664
  %v3746 = vunpack.c.l.b16 %v3665
  %v3747 = vunpack.c.h.b16 %v3665
  %v3748 = vunpack.c.l.b16 %v3666
  %v3749 = vunpack.c.h.b16 %v3666
  %v3750 = vunpack.c.l.b16 %v3667
  %v3751 = vunpack.c.h.b16 %v3667
  %v3752 = vunpack.c.l.b16 %v3668
  %v3753 = vunpack.c.h.b16 %v3668
  %v3754 = vunpack.c.l.b16 %v3669
  %v3755 = vunpack.c.h.b16 %v3669
  %v3756 = vunpack.c.l.b16 %v3670
  %v3757 = vunpack.c.h.b16 %v3670
  %v3758 = vunpack.c.l.b16 %v3671
  %v3759 = vunpack.c.h.b16 %v3671
  %v3760 = vunpack.c.l.b16 %v3672
  %v3761 = vunpack.c.h.b16 %v3672
  %v3762 = vunpack.c.l.b16 %v3673
  %v3763 = vunpack.c.h.b16 %v3673
  %v3764 = vunpack.c.l.b16 %v3674
  %v3765 = vunpack.c.h.b16 %v3674
  %v3766 = vunpack.c.l.b16 %v3675
  %v3767 = vunpack.c.h.b16 %v3675
  %v3768 = vunpack.c.l.b16 %v3676
  %v3769 = vunpack.c.h.b16 %v3676
  %v3770 = vunpack.c.l.b16 %v3677
  %v3771 = vunpack.c.h.b16 %v3677
  %v3772 = vunpack.c.l.b16 %v3678
  %v3773 = vunpack.c.h.b16 %v3678
  %v3774 = vunpack.c.l.b16 %v3679
  %v3775 = vunpack.c.h.b16 %v3679
  %v3776 = vpack.c.b16 %v3716, %v3712
  %v3777 = vpack.c.b16 %v3717, %v3713
  %v3778 = vpack.c.b16 %v3718, %v3714
  %v3779 = vpack.c.b16 %v3719, %v3715
  %v3780 = vpack.c.b16 %v3724, %v3720
  %v3781 = vpack.c.b16 %v3725, %v3721
  %v3782 = vpack.c.b16 %v3726, %v3722
  %v3783 = vpack.c.b16 %v3727, %v3723
  %v3784 = vpack.c.b16 %v3732, %v3728
  %v3785 = vpack.c.b16 %v3733, %v3729
  %v3786 = vpack.c.b16 %v3734, %v3730
  %v3787 = vpack.c.b16 %v3735, %v3731
  %v3788 = vpack.c.b16 %v3740, %v3736
  %v3789 = vpack.c.b16 %v3741, %v3737
  %v3790 = vpack.c.b16 %v3742, %v3738
  %v3791 = vpack.c.b16 %v3743, %v3739
  %v3792 = vpack.c.b16 %v3748, %v3744
  %v3793 = vpack.c.b16 %v3749, %v3745
  %v3794 = vpack.c.b16 %v3750, %v3746
  %v3795 = vpack.c.b16 %v3751, %v3747
  %v3796 = vpack.c.b16 %v3756, %v3752
  %v3797 = vpack.c.b16 %v3757, %v3753
  %v3798 = vpack.c.b16 %v3758, %v3754
  %v3799 = vpack.c.b16 %v3759, %v3755
  %v3800 = vpack.c.b16 %v3764, %v3760
  %v3801 = vpack.c.b16 %v3765, %v3761
  %v3802 = vpack.c.b16 %v3766, %v3762
  %v3803 = vpack.c.b16 %v3767, %v3763
  %v3804 = vpack.c.b16 %v3772, %v3768
  %v3805 = vpack.c.b16 %v3773, %v3769
  %v3806 = vpack.c.b16 %v3774, %v3770
  %v3807 = vpack.c.b16 %v3775, %v3771
  %3840 = vmatprep.subr.bf16.mxu0 %v3777
  %3841 = vmatpush1.bf16.msra.mxu0 %v3776
  %3842 = vmatprep.subr.bf16.mxu0 %v3781
  %3843 = vmatpush1.bf16.msra.mxu0 %v3780
  %3844 = vmatprep.subr.bf16.mxu0 %v3785
  %3845 = vmatpush1.bf16.msra.mxu0 %v3784
  %3846 = vmatprep.subr.bf16.mxu0 %v3789
  %3847 = vmatpush1.bf16.msra.mxu0 %v3788
  %3848 = vmatprep.subr.bf16.mxu0 %v3793
  %3849 = vmatpush1.bf16.msra.mxu0 %v3792
  %3850 = vmatprep.subr.bf16.mxu0 %v3797
  %3851 = vmatpush1.bf16.msra.mxu0 %v3796
  %3852 = vmatprep.subr.bf16.mxu0 %v3801
  %3853 = vmatpush1.bf16.msra.mxu0 %v3800
  %3854 = vmatprep.subr.bf16.mxu0 %v3805
  %3855 = vmatpush1.bf16.msra.mxu0 %v3804
  %3856 = vmatprep.subr.bf16.mxu0 0
  %3857 = vmatpush1.bf16.msra.mxu0 0
  %3858 = vmatprep.subr.bf16.mxu0 0
  %3859 = vmatpush1.bf16.msra.mxu0 0
  %3860 = vmatprep.subr.bf16.mxu0 0
  %3861 = vmatpush1.bf16.msra.mxu0 0
  %3862 = vmatprep.subr.bf16.mxu0 0
  %3863 = vmatpush1.bf16.msra.mxu0 0
  %3864 = vmatprep.subr.bf16.mxu0 0
  %3865 = vmatpush1.bf16.msra.mxu0 0
  %3866 = vmatprep.subr.bf16.mxu0 0
  %3867 = vmatpush1.bf16.msra.mxu0 0
  %3868 = vmatprep.subr.bf16.mxu0 0
  %3869 = vmatpush1.bf16.msra.mxu0 0
  %3870 = vmatprep.subr.bf16.mxu0 0
  %3871 = vmatpush1.bf16.msra.mxu0 0
  %3872 = vmatprep.mubr.bf16.mxu0 0
  %3873 = vmatmul.mubr.bf16.gmra.mrb[0].mxu0 %v3647
  %v3874 = vpop.f32.mrb[0].mxu0
  %v3875 = vadd.f32 0.0, %v3874
  %v3876 = vpop.f32.mrb[0].mxu0
  %v3877 = vadd.f32 0.0, %v3876
  %v3878 = vpop.f32.mrb[0].mxu0
  %v3879 = vadd.f32 0.0, %v3878
  %v3880 = vpop.f32.mrb[0].mxu0
  %v3881 = vadd.f32 0.0, %v3880
  %3882 = vdwg.mxu0
  %3883 = vmatprep.subr.bf16.mxu0 %v3779
  %3884 = vmatpush1.bf16.msra.mxu0 %v3778
  %3885 = vmatprep.subr.bf16.mxu0 %v3783
  %3886 = vmatpush1.bf16.msra.mxu0 %v3782
  %3887 = vmatprep.subr.bf16.mxu0 %v3787
  %3888 = vmatpush1.bf16.msra.mxu0 %v3786
  %3889 = vmatprep.subr.bf16.mxu0 %v3791
  %3890 = vmatpush1.bf16.msra.mxu0 %v3790
  %3891 = vmatprep.subr.bf16.mxu0 %v3795
  %3892 = vmatpush1.bf16.msra.mxu0 %v3794
  %3893 = vmatprep.subr.bf16.mxu0 %v3799
  %3894 = vmatpush1.bf16.msra.mxu0 %v3798
  %3895 = vmatprep.subr.bf16.mxu0 %v3803
  %3896 = vmatpush1.bf16.msra.mxu0 %v3802
  %3897 = vmatprep.subr.bf16.mxu0 %v3807
  %3898 = vmatpush1.bf16.msra.mxu0 %v3806
  %3899 = vmatprep.subr.bf16.mxu0 0
  %3900 = vmatpush1.bf16.msra.mxu0 0
  %3901 = vmatprep.subr.bf16.mxu0 0
  %3902 = vmatpush1.bf16.msra.mxu0 0
  %3903 = vmatprep.subr.bf16.mxu0 0
  %3904 = vmatpush1.bf16.msra.mxu0 0
  %3905 = vmatprep.subr.bf16.mxu0 0
  %3906 = vmatpush1.bf16.msra.mxu0 0
  %3907 = vmatprep.subr.bf16.mxu0 0
  %3908 = vmatpush1.bf16.msra.mxu0 0
  %3909 = vmatprep.subr.bf16.mxu0 0
  %3910 = vmatpush1.bf16.msra.mxu0 0
  %3911 = vmatprep.subr.bf16.mxu0 0
  %3912 = vmatpush1.bf16.msra.mxu0 0
  %3913 = vmatprep.subr.bf16.mxu0 0
  %3914 = vmatpush1.bf16.msra.mxu0 0
  %3915 = vmatprep.mubr.bf16.mxu0 0
  %3916 = vmatmul.mubr.bf16.gmra.mrb[0].mxu0 %v3647
  %v3917 = vpop.f32.mrb[0].mxu0
  %v3918 = vadd.f32 0.0, %v3917
  %v3919 = vpop.f32.mrb[0].mxu0
  %v3920 = vadd.f32 0.0, %v3919
  %v3921 = vpop.f32.mrb[0].mxu0
  %v3922 = vadd.f32 0.0, %v3921
  %v3923 = vpop.f32.mrb[0].mxu0
  %v3924 = vadd.f32 0.0, %v3923
  %3925 = vdwg.mxu0
  %v3926 = vadd.f32 %v3637, %v3875
  %v3927 = vadd.f32 %v3638, %v3877
  %v3928 = vadd.f32 %v3639, %v3918
  %v3929 = vadd.f32 %v3640, %v3920
  %v3930 = vadd.f32 %v3641, %v3879
  %v3931 = vadd.f32 %v3642, %v3881
  %v3932 = vadd.f32 %v3643, %v3922
  %v3933 = vadd.f32 %v3644, %v3924
  %v3934 = vld [vmem:[#allocation3] sm:$0xff]
  %v3935 = vld [vmem:[#allocation3 + $0x8] sm:$0xff]
  %v3936 = vxor.u32 %v3926, 2147483648
  %v3937 = vxor.u32 %v3930, 2147483648
  %v3938 = vmul.f32 %v3936, 1.442695
  %v3939 = vpow.pop %v3938
  %v3940 = vmul.f32 %v3937, 1.442695
  %v3941 = vpow.pop %v3940
  %v3942 = vadd.f32 %v3939, 1.0
  %v3943 = vadd.f32 %v3941, 1.0
  %v3944 = vrcp.pop %v3942
  %v3945 = vmul.f32 1.0, %v3944
  %v3946 = vrcp.pop %v3943
  %v3947 = vmul.f32 1.0, %v3946
  %v3948 = vxor.u32 %v3927, 2147483648
  %v3949 = vxor.u32 %v3931, 2147483648
  %v3950 = vmul.f32 %v3948, 1.442695
  %v3951 = vpow.pop %v3950
  %v3952 = vmul.f32 %v3949, 1.442695
  %v3953 = vpow.pop %v3952
  %v3954 = vadd.f32 %v3951, 1.0
  %v3955 = vadd.f32 %v3953, 1.0
  %v3956 = vrcp.pop %v3954
  %v3957 = vmul.f32 1.0, %v3956
  %v3958 = vrcp.pop %v3955
  %v3959 = vmul.f32 1.0, %v3958
  %v3960 = vtanh.pop %v3928
  %v3961 = vtanh.pop %v3932
  %v3962 = vxor.u32 %v3929, 2147483648
  %v3963 = vxor.u32 %v3933, 2147483648
  %v3964 = vmul.f32 %v3962, 1.442695
  %v3965 = vpow.pop %v3964
  %v3966 = vmul.f32 %v3963, 1.442695
  %v3967 = vpow.pop %v3966
  %v3968 = vadd.f32 %v3965, 1.0
  %v3969 = vadd.f32 %v3967, 1.0
  %v3970 = vrcp.pop %v3968
  %v3971 = vmul.f32 1.0, %v3970
  %v3972 = vrcp.pop %v3969
  %v3973 = vmul.f32 1.0, %v3972
  %v3974 = vmul.f32 %v3957, %v3934
  %v3975 = vmul.f32 %v3959, %v3935
  %v3976 = vmul.f32 %v3945, %v3960
  %v3977 = vmul.f32 %v3947, %v3961
  %v3978 = vadd.f32 %v3974, %v3976
  %v3979 = vadd.f32 %v3975, %v3977
  %v3980 = vtanh.pop %v3978
  %v3981 = vtanh.pop %v3979
  %v3982 = vmul.f32 %v3971, %v3980
  %v3983 = vmul.f32 %v3973, %v3981
  %3984 = vst [vmem:[#allocation2] sm:$0xff] %v3982
  %3985 = vst [vmem:[#allocation2 + $0x8] sm:$0xff] %v3983
  %3986 = vst [vmem:[#allocation3] sm:$0xff] %v3978
  %3987 = vst [vmem:[#allocation3 + $0x8] sm:$0xff] %v3979
  %v3988 = vpack.c.bf16 %v3983, %v3982
  %v3989 = vld [vmem:[%s408] sm:$0xff]
  %v3990 = vld [vmem:[%s408 + $0x8] sm:$0xff]
  %v3991 = vpack.c.bf16 %v3990, %v3989
  %v3992 = vld [vmem:[%s2] sm:$0xff]
  %v3993 = vld [vmem:[%s2 + $0x8] sm:$0xff]
  %v3994 = vld [vmem:[%s2 + $0x10] sm:$0xff]
  %v3995 = vld [vmem:[%s2 + $0x18] sm:$0xff]
  %v3996 = vld [vmem:[%s2 + $0x20] sm:$0xff]
  %v3997 = vld [vmem:[%s2 + $0x28] sm:$0xff]
  %v3998 = vld [vmem:[%s2 + $0x30] sm:$0xff]
  %v3999 = vld [vmem:[%s2 + $0x38] sm:$0xff]
  %v4000 = vld [vmem:[%s2 + $0x40] sm:$0xff]
  %v4001 = vld [vmem:[%s2 + $0x48] sm:$0xff]
  %v4002 = vld [vmem:[%s2 + $0x50] sm:$0xff]
  %v4003 = vld [vmem:[%s2 + $0x58] sm:$0xff]
  %v4004 = vld [vmem:[%s2 + $0x60] sm:$0xff]
  %v4005 = vld [vmem:[%s2 + $0x68] sm:$0xff]
  %v4006 = vld [vmem:[%s2 + $0x70] sm:$0xff]
  %v4007 = vld [vmem:[%s2 + $0x78] sm:$0xff]
  %v4008 = vld [vmem:[%s2 + $0x80] sm:$0xff]
  %v4009 = vld [vmem:[%s2 + $0x88] sm:$0xff]
  %v4010 = vld [vmem:[%s2 + $0x90] sm:$0xff]
  %v4011 = vld [vmem:[%s2 + $0x98] sm:$0xff]
  %v4012 = vld [vmem:[%s2 + $0xa0] sm:$0xff]
  %v4013 = vld [vmem:[%s2 + $0xa8] sm:$0xff]
  %v4014 = vld [vmem:[%s2 + $0xb0] sm:$0xff]
  %v4015 = vld [vmem:[%s2 + $0xb8] sm:$0xff]
  %v4016 = vld [vmem:[%s2 + $0xc0] sm:$0xff]
  %v4017 = vld [vmem:[%s2 + $0xc8] sm:$0xff]
  %v4018 = vld [vmem:[%s2 + $0xd0] sm:$0xff]
  %v4019 = vld [vmem:[%s2 + $0xd8] sm:$0xff]
  %v4020 = vld [vmem:[%s2 + $0xe0] sm:$0xff]
  %v4021 = vld [vmem:[%s2 + $0xe8] sm:$0xff]
  %v4022 = vld [vmem:[%s2 + $0xf0] sm:$0xff]
  %v4023 = vld [vmem:[%s2 + $0xf8] sm:$0xff]
  %v4024 = vld [vmem:[%s2 + $0x100] sm:$0xff]
  %v4025 = vld [vmem:[%s2 + $0x108] sm:$0xff]
  %v4026 = vld [vmem:[%s2 + $0x110] sm:$0xff]
  %v4027 = vld [vmem:[%s2 + $0x118] sm:$0xff]
  %v4028 = vld [vmem:[%s2 + $0x120] sm:$0xff]
  %v4029 = vld [vmem:[%s2 + $0x128] sm:$0xff]
  %v4030 = vld [vmem:[%s2 + $0x130] sm:$0xff]
  %v4031 = vld [vmem:[%s2 + $0x138] sm:$0xff]
  %v4032 = vld [vmem:[%s2 + $0x140] sm:$0xff]
  %v4033 = vld [vmem:[%s2 + $0x148] sm:$0xff]
  %v4034 = vld [vmem:[%s2 + $0x150] sm:$0xff]
  %v4035 = vld [vmem:[%s2 + $0x158] sm:$0xff]
  %v4036 = vld [vmem:[%s2 + $0x160] sm:$0xff]
  %v4037 = vld [vmem:[%s2 + $0x168] sm:$0xff]
  %v4038 = vld [vmem:[%s2 + $0x170] sm:$0xff]
  %v4039 = vld [vmem:[%s2 + $0x178] sm:$0xff]
  %v4040 = vld [vmem:[%s2 + $0x180] sm:$0xff]
  %v4041 = vld [vmem:[%s2 + $0x188] sm:$0xff]
  %v4042 = vld [vmem:[%s2 + $0x190] sm:$0xff]
  %v4043 = vld [vmem:[%s2 + $0x198] sm:$0xff]
  %v4044 = vld [vmem:[%s2 + $0x1a0] sm:$0xff]
  %v4045 = vld [vmem:[%s2 + $0x1a8] sm:$0xff]
  %v4046 = vld [vmem:[%s2 + $0x1b0] sm:$0xff]
  %v4047 = vld [vmem:[%s2 + $0x1b8] sm:$0xff]
  %v4048 = vld [vmem:[%s2 + $0x1c0] sm:$0xff]
  %v4049 = vld [vmem:[%s2 + $0x1c8] sm:$0xff]
  %v4050 = vld [vmem:[%s2 + $0x1d0] sm:$0xff]
  %v4051 = vld [vmem:[%s2 + $0x1d8] sm:$0xff]
  %v4052 = vld [vmem:[%s2 + $0x1e0] sm:$0xff]
  %v4053 = vld [vmem:[%s2 + $0x1e8] sm:$0xff]
  %v4054 = vld [vmem:[%s2 + $0x1f0] sm:$0xff]
  %v4055 = vld [vmem:[%s2 + $0x1f8] sm:$0xff]
  %v4120 = vunpack.c.l.b16 %v3992
  %v4121 = vunpack.c.h.b16 %v3992
  %v4122 = vunpack.c.l.b16 %v3993
  %v4123 = vunpack.c.h.b16 %v3993
  %v4124 = vunpack.c.l.b16 %v3994
  %v4125 = vunpack.c.h.b16 %v3994
  %v4126 = vunpack.c.l.b16 %v3995
  %v4127 = vunpack.c.h.b16 %v3995
  %v4128 = vunpack.c.l.b16 %v3996
  %v4129 = vunpack.c.h.b16 %v3996
  %v4130 = vunpack.c.l.b16 %v3997
  %v4131 = vunpack.c.h.b16 %v3997
  %v4132 = vunpack.c.l.b16 %v3998
  %v4133 = vunpack.c.h.b16 %v3998
  %v4134 = vunpack.c.l.b16 %v3999
  %v4135 = vunpack.c.h.b16 %v3999
  %v4136 = vunpack.c.l.b16 %v4000
  %v4137 = vunpack.c.h.b16 %v4000
  %v4138 = vunpack.c.l.b16 %v4001
  %v4139 = vunpack.c.h.b16 %v4001
  %v4140 = vunpack.c.l.b16 %v4002
  %v4141 = vunpack.c.h.b16 %v4002
  %v4142 = vunpack.c.l.b16 %v4003
  %v4143 = vunpack.c.h.b16 %v4003
  %v4144 = vunpack.c.l.b16 %v4004
  %v4145 = vunpack.c.h.b16 %v4004
  %v4146 = vunpack.c.l.b16 %v4005
  %v4147 = vunpack.c.h.b16 %v4005
  %v4148 = vunpack.c.l.b16 %v4006
  %v4149 = vunpack.c.h.b16 %v4006
  %v4150 = vunpack.c.l.b16 %v4007
  %v4151 = vunpack.c.h.b16 %v4007
  %v4152 = vunpack.c.l.b16 %v4008
  %v4153 = vunpack.c.h.b16 %v4008
  %v4154 = vunpack.c.l.b16 %v4009
  %v4155 = vunpack.c.h.b16 %v4009
  %v4156 = vunpack.c.l.b16 %v4010
  %v4157 = vunpack.c.h.b16 %v4010
  %v4158 = vunpack.c.l.b16 %v4011
  %v4159 = vunpack.c.h.b16 %v4011
  %v4160 = vunpack.c.l.b16 %v4012
  %v4161 = vunpack.c.h.b16 %v4012
  %v4162 = vunpack.c.l.b16 %v4013
  %v4163 = vunpack.c.h.b16 %v4013
  %v4164 = vunpack.c.l.b16 %v4014
  %v4165 = vunpack.c.h.b16 %v4014
  %v4166 = vunpack.c.l.b16 %v4015
  %v4167 = vunpack.c.h.b16 %v4015
  %v4168 = vunpack.c.l.b16 %v4016
  %v4169 = vunpack.c.h.b16 %v4016
  %v4170 = vunpack.c.l.b16 %v4017
  %v4171 = vunpack.c.h.b16 %v4017
  %v4172 = vunpack.c.l.b16 %v4018
  %v4173 = vunpack.c.h.b16 %v4018
  %v4174 = vunpack.c.l.b16 %v4019
  %v4175 = vunpack.c.h.b16 %v4019
  %v4176 = vunpack.c.l.b16 %v4020
  %v4177 = vunpack.c.h.b16 %v4020
  %v4178 = vunpack.c.l.b16 %v4021
  %v4179 = vunpack.c.h.b16 %v4021
  %v4180 = vunpack.c.l.b16 %v4022
  %v4181 = vunpack.c.h.b16 %v4022
  %v4182 = vunpack.c.l.b16 %v4023
  %v4183 = vunpack.c.h.b16 %v4023
  %v4184 = vunpack.c.l.b16 %v4024
  %v4185 = vunpack.c.h.b16 %v4024
  %v4186 = vunpack.c.l.b16 %v4025
  %v4187 = vunpack.c.h.b16 %v4025
  %v4188 = vunpack.c.l.b16 %v4026
  %v4189 = vunpack.c.h.b16 %v4026
  %v4190 = vunpack.c.l.b16 %v4027
  %v4191 = vunpack.c.h.b16 %v4027
  %v4192 = vunpack.c.l.b16 %v4028
  %v4193 = vunpack.c.h.b16 %v4028
  %v4194 = vunpack.c.l.b16 %v4029
  %v4195 = vunpack.c.h.b16 %v4029
  %v4196 = vunpack.c.l.b16 %v4030
  %v4197 = vunpack.c.h.b16 %v4030
  %v4198 = vunpack.c.l.b16 %v4031
  %v4199 = vunpack.c.h.b16 %v4031
  %v4200 = vunpack.c.l.b16 %v4032
  %v4201 = vunpack.c.h.b16 %v4032
  %v4202 = vunpack.c.l.b16 %v4033
  %v4203 = vunpack.c.h.b16 %v4033
  %v4204 = vunpack.c.l.b16 %v4034
  %v4205 = vunpack.c.h.b16 %v4034
  %v4206 = vunpack.c.l.b16 %v4035
  %v4207 = vunpack.c.h.b16 %v4035
  %v4208 = vunpack.c.l.b16 %v4036
  %v4209 = vunpack.c.h.b16 %v4036
  %v4210 = vunpack.c.l.b16 %v4037
  %v4211 = vunpack.c.h.b16 %v4037
  %v4212 = vunpack.c.l.b16 %v4038
  %v4213 = vunpack.c.h.b16 %v4038
  %v4214 = vunpack.c.l.b16 %v4039
  %v4215 = vunpack.c.h.b16 %v4039
  %v4216 = vunpack.c.l.b16 %v4040
  %v4217 = vunpack.c.h.b16 %v4040
  %v4218 = vunpack.c.l.b16 %v4041
  %v4219 = vunpack.c.h.b16 %v4041
  %v4220 = vunpack.c.l.b16 %v4042
  %v4221 = vunpack.c.h.b16 %v4042
  %v4222 = vunpack.c.l.b16 %v4043
  %v4223 = vunpack.c.h.b16 %v4043
  %v4224 = vunpack.c.l.b16 %v4044
  %v4225 = vunpack.c.h.b16 %v4044
  %v4226 = vunpack.c.l.b16 %v4045
  %v4227 = vunpack.c.h.b16 %v4045
  %v4228 = vunpack.c.l.b16 %v4046
  %v4229 = vunpack.c.h.b16 %v4046
  %v4230 = vunpack.c.l.b16 %v4047
  %v4231 = vunpack.c.h.b16 %v4047
  %v4232 = vunpack.c.l.b16 %v4048
  %v4233 = vunpack.c.h.b16 %v4048
  %v4234 = vunpack.c.l.b16 %v4049
  %v4235 = vunpack.c.h.b16 %v4049
  %v4236 = vunpack.c.l.b16 %v4050
  %v4237 = vunpack.c.h.b16 %v4050
  %v4238 = vunpack.c.l.b16 %v4051
  %v4239 = vunpack.c.h.b16 %v4051
  %v4240 = vunpack.c.l.b16 %v4052
  %v4241 = vunpack.c.h.b16 %v4052
  %v4242 = vunpack.c.l.b16 %v4053
  %v4243 = vunpack.c.h.b16 %v4053
  %v4244 = vunpack.c.l.b16 %v4054
  %v4245 = vunpack.c.h.b16 %v4054
  %v4246 = vunpack.c.l.b16 %v4055
  %v4247 = vunpack.c.h.b16 %v4055
  %v4248 = vpack.c.b16 %v4124, %v4120
  %v4249 = vpack.c.b16 %v4125, %v4121
  %v4250 = vpack.c.b16 %v4126, %v4122
  %v4251 = vpack.c.b16 %v4127, %v4123
  %v4252 = vpack.c.b16 %v4132, %v4128
  %v4253 = vpack.c.b16 %v4133, %v4129
  %v4254 = vpack.c.b16 %v4134, %v4130
  %v4255 = vpack.c.b16 %v4135, %v4131
  %v4256 = vpack.c.b16 %v4140, %v4136
  %v4257 = vpack.c.b16 %v4141, %v4137
  %v4258 = vpack.c.b16 %v4142, %v4138
  %v4259 = vpack.c.b16 %v4143, %v4139
  %v4260 = vpack.c.b16 %v4148, %v4144
  %v4261 = vpack.c.b16 %v4149, %v4145
  %v4262 = vpack.c.b16 %v4150, %v4146
  %v4263 = vpack.c.b16 %v4151, %v4147
  %v4264 = vpack.c.b16 %v4156, %v4152
  %v4265 = vpack.c.b16 %v4157, %v4153
  %v4266 = vpack.c.b16 %v4158, %v4154
  %v4267 = vpack.c.b16 %v4159, %v4155
  %v4268 = vpack.c.b16 %v4164, %v4160
  %v4269 = vpack.c.b16 %v4165, %v4161
  %v4270 = vpack.c.b16 %v4166, %v4162
  %v4271 = vpack.c.b16 %v4167, %v4163
  %v4272 = vpack.c.b16 %v4172, %v4168
  %v4273 = vpack.c.b16 %v4173, %v4169
  %v4274 = vpack.c.b16 %v4174, %v4170
  %v4275 = vpack.c.b16 %v4175, %v4171
  %v4276 = vpack.c.b16 %v4180, %v4176
  %v4277 = vpack.c.b16 %v4181, %v4177
  %v4278 = vpack.c.b16 %v4182, %v4178
  %v4279 = vpack.c.b16 %v4183, %v4179
  %v4280 = vpack.c.b16 %v4188, %v4184
  %v4281 = vpack.c.b16 %v4189, %v4185
  %v4282 = vpack.c.b16 %v4190, %v4186
  %v4283 = vpack.c.b16 %v4191, %v4187
  %v4284 = vpack.c.b16 %v4196, %v4192
  %v4285 = vpack.c.b16 %v4197, %v4193
  %v4286 = vpack.c.b16 %v4198, %v4194
  %v4287 = vpack.c.b16 %v4199, %v4195
  %v4288 = vpack.c.b16 %v4204, %v4200
  %v4289 = vpack.c.b16 %v4205, %v4201
  %v4290 = vpack.c.b16 %v4206, %v4202
  %v4291 = vpack.c.b16 %v4207, %v4203
  %v4292 = vpack.c.b16 %v4212, %v4208
  %v4293 = vpack.c.b16 %v4213, %v4209
  %v4294 = vpack.c.b16 %v4214, %v4210
  %v4295 = vpack.c.b16 %v4215, %v4211
  %v4296 = vpack.c.b16 %v4220, %v4216
  %v4297 = vpack.c.b16 %v4221, %v4217
  %v4298 = vpack.c.b16 %v4222, %v4218
  %v4299 = vpack.c.b16 %v4223, %v4219
  %v4300 = vpack.c.b16 %v4228, %v4224
  %v4301 = vpack.c.b16 %v4229, %v4225
  %v4302 = vpack.c.b16 %v4230, %v4226
  %v4303 = vpack.c.b16 %v4231, %v4227
  %v4304 = vpack.c.b16 %v4236, %v4232
  %v4305 = vpack.c.b16 %v4237, %v4233
  %v4306 = vpack.c.b16 %v4238, %v4234
  %v4307 = vpack.c.b16 %v4239, %v4235
  %v4308 = vpack.c.b16 %v4244, %v4240
  %v4309 = vpack.c.b16 %v4245, %v4241
  %v4310 = vpack.c.b16 %v4246, %v4242
  %v4311 = vpack.c.b16 %v4247, %v4243
  %4376 = vmatprep.subr.bf16.mxu0 %v4249
  %4377 = vmatpush1.bf16.msra.mxu0 %v4248
  %4378 = vmatprep.subr.bf16.mxu0 %v4253
  %4379 = vmatpush1.bf16.msra.mxu0 %v4252
  %4380 = vmatprep.subr.bf16.mxu0 %v4257
  %4381 = vmatpush1.bf16.msra.mxu0 %v4256
  %4382 = vmatprep.subr.bf16.mxu0 %v4261
  %4383 = vmatpush1.bf16.msra.mxu0 %v4260
  %4384 = vmatprep.subr.bf16.mxu0 %v4265
  %4385 = vmatpush1.bf16.msra.mxu0 %v4264
  %4386 = vmatprep.subr.bf16.mxu0 %v4269
  %4387 = vmatpush1.bf16.msra.mxu0 %v4268
  %4388 = vmatprep.subr.bf16.mxu0 %v4273
  %4389 = vmatpush1.bf16.msra.mxu0 %v4272
  %4390 = vmatprep.subr.bf16.mxu0 %v4277
  %4391 = vmatpush1.bf16.msra.mxu0 %v4276
  %4392 = vmatprep.subr.bf16.mxu0 %v4281
  %4393 = vmatpush1.bf16.msra.mxu0 %v4280
  %4394 = vmatprep.subr.bf16.mxu0 %v4285
  %4395 = vmatpush1.bf16.msra.mxu0 %v4284
  %4396 = vmatprep.subr.bf16.mxu0 %v4289
  %4397 = vmatpush1.bf16.msra.mxu0 %v4288
  %4398 = vmatprep.subr.bf16.mxu0 %v4293
  %4399 = vmatpush1.bf16.msra.mxu0 %v4292
  %4400 = vmatprep.subr.bf16.mxu0 %v4297
  %4401 = vmatpush1.bf16.msra.mxu0 %v4296
  %4402 = vmatprep.subr.bf16.mxu0 %v4301
  %4403 = vmatpush1.bf16.msra.mxu0 %v4300
  %4404 = vmatprep.subr.bf16.mxu0 %v4305
  %4405 = vmatpush1.bf16.msra.mxu0 %v4304
  %4406 = vmatprep.subr.bf16.mxu0 %v4309
  %4407 = vmatpush1.bf16.msra.mxu0 %v4308
  %4408 = vmatprep.mubr.bf16.mxu0 %v3991
  %4409 = vmatmul.mubr.bf16.gmra.mrb[0].mxu0 %v3988
  %v4410 = vpop.f32.mrb[0].mxu0
  %v4411 = vadd.f32 %v35, %v4410
  %v4412 = vpop.f32.mrb[0].mxu0
  %v4413 = vadd.f32 %v39, %v4412
  %v4414 = vpop.f32.mrb[0].mxu0
  %v4415 = vadd.f32 %v35, %v4414
  %v4416 = vpop.f32.mrb[0].mxu0
  %v4417 = vadd.f32 %v39, %v4416
  %4418 = vdwg.mxu0
  %4419 = vmatprep.subr.bf16.mxu0 %v4251
  %4420 = vmatpush1.bf16.msra.mxu0 %v4250
  %4421 = vmatprep.subr.bf16.mxu0 %v4255
  %4422 = vmatpush1.bf16.msra.mxu0 %v4254
  %4423 = vmatprep.subr.bf16.mxu0 %v4259
  %4424 = vmatpush1.bf16.msra.mxu0 %v4258
  %4425 = vmatprep.subr.bf16.mxu0 %v4263
  %4426 = vmatpush1.bf16.msra.mxu0 %v4262
  %4427 = vmatprep.subr.bf16.mxu0 %v4267
  %4428 = vmatpush1.bf16.msra.mxu0 %v4266
  %4429 = vmatprep.subr.bf16.mxu0 %v4271
  %4430 = vmatpush1.bf16.msra.mxu0 %v4270
  %4431 = vmatprep.subr.bf16.mxu0 %v4275
  %4432 = vmatpush1.bf16.msra.mxu0 %v4274
  %4433 = vmatprep.subr.bf16.mxu0 %v4279
  %4434 = vmatpush1.bf16.msra.mxu0 %v4278
  %4435 = vmatprep.subr.bf16.mxu0 %v4283
  %4436 = vmatpush1.bf16.msra.mxu0 %v4282
  %4437 = vmatprep.subr.bf16.mxu0 %v4287
  %4438 = vmatpush1.bf16.msra.mxu0 %v4286
  %4439 = vmatprep.subr.bf16.mxu0 %v4291
  %4440 = vmatpush1.bf16.msra.mxu0 %v4290
  %4441 = vmatprep.subr.bf16.mxu0 %v4295
  %4442 = vmatpush1.bf16.msra.mxu0 %v4294
  %4443 = vmatprep.subr.bf16.mxu0 %v4299
  %4444 = vmatpush1.bf16.msra.mxu0 %v4298
  %4445 = vmatprep.subr.bf16.mxu0 %v4303
  %4446 = vmatpush1.bf16.msra.mxu0 %v4302
  %4447 = vmatprep.subr.bf16.mxu0 %v4307
  %4448 = vmatpush1.bf16.msra.mxu0 %v4306
  %4449 = vmatprep.subr.bf16.mxu0 %v4311
  %4450 = vmatpush1.bf16.msra.mxu0 %v4310
  %4451 = vmatprep.mubr.bf16.mxu0 %v3991
  %4452 = vmatmul.mubr.bf16.gmra.mrb[0].mxu0 %v3988
  %v4453 = vpop.f32.mrb[0].mxu0
  %v4454 = vadd.f32 %v43, %v4453
  %v4455 = vpop.f32.mrb[0].mxu0
  %v4456 = vadd.f32 %v47, %v4455
  %v4457 = vpop.f32.mrb[0].mxu0
  %v4458 = vadd.f32 %v43, %v4457
  %v4459 = vpop.f32.mrb[0].mxu0
  %v4460 = vadd.f32 %v47, %v4459
  %4461 = vdwg.mxu0
  %v4462 = vld [vmem:[%s882] sm:$0xff]
  %v4463 = vld [vmem:[%s882 + $0x8] sm:$0xff]
  %v4464 = vxor.u32 %v4411, 2147483648
  %v4465 = vxor.u32 %v4415, 2147483648
  %v4466 = vmul.f32 %v4464, 1.442695
  %v4467 = vpow.pop %v4466
  %v4468 = vmul.f32 %v4465, 1.442695
  %v4469 = vpow.pop %v4468
  %v4470 = vadd.f32 %v4467, 1.0
  %v4471 = vadd.f32 %v4469, 1.0
  %v4472 = vrcp.pop %v4470
  %v4473 = vmul.f32 1.0, %v4472
  %v4474 = vrcp.pop %v4471
  %v4475 = vmul.f32 1.0, %v4474
  %v4476 = vxor.u32 %v4413, 2147483648
  %v4477 = vxor.u32 %v4417, 2147483648
  %v4478 = vmul.f32 %v4476, 1.442695
  %v4479 = vpow.pop %v4478
  %v4480 = vmul.f32 %v4477, 1.442695
  %v4481 = vpow.pop %v4480
  %v4482 = vadd.f32 %v4479, 1.0
  %v4483 = vadd.f32 %v4481, 1.0
  %v4484 = vrcp.pop %v4482
  %v4485 = vmul.f32 1.0, %v4484
  %v4486 = vrcp.pop %v4483
  %v4487 = vmul.f32 1.0, %v4486
  %v4488 = vtanh.pop %v4454
  %v4489 = vtanh.pop %v4458
  %v4490 = vxor.u32 %v4456, 2147483648
  %v4491 = vxor.u32 %v4460, 2147483648
  %v4492 = vmul.f32 %v4490, 1.442695
  %v4493 = vpow.pop %v4492
  %v4494 = vmul.f32 %v4491, 1.442695
  %v4495 = vpow.pop %v4494
  %v4496 = vadd.f32 %v4493, 1.0
  %v4497 = vadd.f32 %v4495, 1.0
  %v4498 = vrcp.pop %v4496
  %v4499 = vmul.f32 1.0, %v4498
  %v4500 = vrcp.pop %v4497
  %v4501 = vmul.f32 1.0, %v4500
  %v4502 = vmul.f32 %v4485, %v4462
  %v4503 = vmul.f32 %v4487, %v4463
  %v4504 = vmul.f32 %v4473, %v4488
  %v4505 = vmul.f32 %v4475, %v4489
  %v4506 = vadd.f32 %v4502, %v4504
  %v4507 = vadd.f32 %v4503, %v4505
  %v4508 = vtanh.pop %v4506
  %v4509 = vtanh.pop %v4507
  %v4510 = vmul.f32 %v4499, %v4508
  %v4511 = vmul.f32 %v4501, %v4509
  %4512 = vst [vmem:[%s408] sm:$0xff] %v4510
  %4513 = vst [vmem:[%s408 + $0x8] sm:$0xff] %v4511
  %4514 = vst [vmem:[%s882] sm:$0xff] %v4506
  %4515 = vst [vmem:[%s882 + $0x8] sm:$0xff] %v4507
  %v4516 = vpack.c.bf16 %v4511, %v4510
  %v4518 = vunpack.c.l.b16 %v4516
  %v4519 = vunpack.c.h.b16 %v4516
  %v4520 = vpack.c.b16 %v4518, %v4518
  %v4521 = vpack.c.b16 %v4519, %v4519
  %s4524 = scalar_lea.vmem %s4, 32
  %4525 = vst [vmem:[%s4524] sm:$0xf] %v4520
  %4526 = vst [vmem:[%s4524 + $0x4] sm:$0xf] %v4521
  %s4527 = scalar_lea.vmem %s0, 160
  %v4528 = vld [vmem:[%s4527] sm:$0xff]
  %v4529 = vld [vmem:[%s4527 + $0x8] sm:$0xff]
  %v4530 = vld [vmem:[%s4527 + $0x10] sm:$0xff]
  %v4531 = vld [vmem:[%s4527 + $0x18] sm:$0xff]
  %v4532 = vunpack.c.l.bf16 %v4528
  %v4533 = vunpack.c.h.bf16 %v4528
  %v4534 = vunpack.c.l.bf16 %v4529
  %v4535 = vunpack.c.h.bf16 %v4529
  %v4536 = vunpack.c.l.bf16 %v4530
  %v4537 = vunpack.c.h.bf16 %v4530
  %v4538 = vunpack.c.l.bf16 %v4531
  %v4539 = vunpack.c.h.bf16 %v4531
  %v4540 = vld [vmem:[#allocation2] sm:$0xff]
  %v4541 = vld [vmem:[#allocation2 + $0x8] sm:$0xff]
  %v4542 = vpack.c.bf16 %v4541, %v4540
  %v4543 = vld [vmem:[%s1] sm:$0xff]
  %v4544 = vld [vmem:[%s1 + $0x8] sm:$0xff]
  %v4545 = vld [vmem:[%s1 + $0x10] sm:$0xff]
  %v4546 = vld [vmem:[%s1 + $0x18] sm:$0xff]
  %v4547 = vld [vmem:[%s1 + $0x20] sm:$0xff]
  %v4548 = vld [vmem:[%s1 + $0x28] sm:$0xff]
  %v4549 = vld [vmem:[%s1 + $0x30] sm:$0xff]
  %v4550 = vld [vmem:[%s1 + $0x38] sm:$0xff]
  %v4551 = vld [vmem:[%s1 + $0x40] sm:$0xff]
  %v4552 = vld [vmem:[%s1 + $0x48] sm:$0xff]
  %v4553 = vld [vmem:[%s1 + $0x50] sm:$0xff]
  %v4554 = vld [vmem:[%s1 + $0x58] sm:$0xff]
  %v4555 = vld [vmem:[%s1 + $0x60] sm:$0xff]
  %v4556 = vld [vmem:[%s1 + $0x68] sm:$0xff]
  %v4557 = vld [vmem:[%s1 + $0x70] sm:$0xff]
  %v4558 = vld [vmem:[%s1 + $0x78] sm:$0xff]
  %v4559 = vld [vmem:[%s1 + $0x80] sm:$0xff]
  %v4560 = vld [vmem:[%s1 + $0x88] sm:$0xff]
  %v4561 = vld [vmem:[%s1 + $0x90] sm:$0xff]
  %v4562 = vld [vmem:[%s1 + $0x98] sm:$0xff]
  %v4563 = vld [vmem:[%s1 + $0xa0] sm:$0xff]
  %v4564 = vld [vmem:[%s1 + $0xa8] sm:$0xff]
  %v4565 = vld [vmem:[%s1 + $0xb0] sm:$0xff]
  %v4566 = vld [vmem:[%s1 + $0xb8] sm:$0xff]
  %v4567 = vld [vmem:[%s1 + $0xc0] sm:$0xff]
  %v4568 = vld [vmem:[%s1 + $0xc8] sm:$0xff]
  %v4569 = vld [vmem:[%s1 + $0xd0] sm:$0xff]
  %v4570 = vld [vmem:[%s1 + $0xd8] sm:$0xff]
  %v4571 = vld [vmem:[%s1 + $0xe0] sm:$0xff]
  %v4572 = vld [vmem:[%s1 + $0xe8] sm:$0xff]
  %v4573 = vld [vmem:[%s1 + $0xf0] sm:$0xff]
  %v4574 = vld [vmem:[%s1 + $0xf8] sm:$0xff]
  %v4607 = vunpack.c.l.b16 %v4543
  %v4608 = vunpack.c.h.b16 %v4543
  %v4609 = vunpack.c.l.b16 %v4544
  %v4610 = vunpack.c.h.b16 %v4544
  %v4611 = vunpack.c.l.b16 %v4545
  %v4612 = vunpack.c.h.b16 %v4545
  %v4613 = vunpack.c.l.b16 %v4546
  %v4614 = vunpack.c.h.b16 %v4546
  %v4615 = vunpack.c.l.b16 %v4547
  %v4616 = vunpack.c.h.b16 %v4547
  %v4617 = vunpack.c.l.b16 %v4548
  %v4618 = vunpack.c.h.b16 %v4548
  %v4619 = vunpack.c.l.b16 %v4549
  %v4620 = vunpack.c.h.b16 %v4549
  %v4621 = vunpack.c.l.b16 %v4550
  %v4622 = vunpack.c.h.b16 %v4550
  %v4623 = vunpack.c.l.b16 %v4551
  %v4624 = vunpack.c.h.b16 %v4551
  %v4625 = vunpack.c.l.b16 %v4552
  %v4626 = vunpack.c.h.b16 %v4552
  %v4627 = vunpack.c.l.b16 %v4553
  %v4628 = vunpack.c.h.b16 %v4553
  %v4629 = vunpack.c.l.b16 %v4554
  %v4630 = vunpack.c.h.b16 %v4554
  %v4631 = vunpack.c.l.b16 %v4555
  %v4632 = vunpack.c.h.b16 %v4555
  %v4633 = vunpack.c.l.b16 %v4556
  %v4634 = vunpack.c.h.b16 %v4556
  %v4635 = vunpack.c.l.b16 %v4557
  %v4636 = vunpack.c.h.b16 %v4557
  %v4637 = vunpack.c.l.b16 %v4558
  %v4638 = vunpack.c.h.b16 %v4558
  %v4639 = vunpack.c.l.b16 %v4559
  %v4640 = vunpack.c.h.b16 %v4559
  %v4641 = vunpack.c.l.b16 %v4560
  %v4642 = vunpack.c.h.b16 %v4560
  %v4643 = vunpack.c.l.b16 %v4561
  %v4644 = vunpack.c.h.b16 %v4561
  %v4645 = vunpack.c.l.b16 %v4562
  %v4646 = vunpack.c.h.b16 %v4562
  %v4647 = vunpack.c.l.b16 %v4563
  %v4648 = vunpack.c.h.b16 %v4563
  %v4649 = vunpack.c.l.b16 %v4564
  %v4650 = vunpack.c.h.b16 %v4564
  %v4651 = vunpack.c.l.b16 %v4565
  %v4652 = vunpack.c.h.b16 %v4565
  %v4653 = vunpack.c.l.b16 %v4566
  %v4654 = vunpack.c.h.b16 %v4566
  %v4655 = vunpack.c.l.b16 %v4567
  %v4656 = vunpack.c.h.b16 %v4567
  %v4657 = vunpack.c.l.b16 %v4568
  %v4658 = vunpack.c.h.b16 %v4568
  %v4659 = vunpack.c.l.b16 %v4569
  %v4660 = vunpack.c.h.b16 %v4569
  %v4661 = vunpack.c.l.b16 %v4570
  %v4662 = vunpack.c.h.b16 %v4570
  %v4663 = vunpack.c.l.b16 %v4571
  %v4664 = vunpack.c.h.b16 %v4571
  %v4665 = vunpack.c.l.b16 %v4572
  %v4666 = vunpack.c.h.b16 %v4572
  %v4667 = vunpack.c.l.b16 %v4573
  %v4668 = vunpack.c.h.b16 %v4573
  %v4669 = vunpack.c.l.b16 %v4574
  %v4670 = vunpack.c.h.b16 %v4574
  %v4671 = vpack.c.b16 %v4611, %v4607
  %v4672 = vpack.c.b16 %v4612, %v4608
  %v4673 = vpack.c.b16 %v4613, %v4609
  %v4674 = vpack.c.b16 %v4614, %v4610
  %v4675 = vpack.c.b16 %v4619, %v4615
  %v4676 = vpack.c.b16 %v4620, %v4616
  %v4677 = vpack.c.b16 %v4621, %v4617
  %v4678 = vpack.c.b16 %v4622, %v4618
  %v4679 = vpack.c.b16 %v4627, %v4623
  %v4680 = vpack.c.b16 %v4628, %v4624
  %v4681 = vpack.c.b16 %v4629, %v4625
  %v4682 = vpack.c.b16 %v4630, %v4626
  %v4683 = vpack.c.b16 %v4635, %v4631
  %v4684 = vpack.c.b16 %v4636, %v4632
  %v4685 = vpack.c.b16 %v4637, %v4633
  %v4686 = vpack.c.b16 %v4638, %v4634
  %v4687 = vpack.c.b16 %v4643, %v4639
  %v4688 = vpack.c.b16 %v4644, %v4640
  %v4689 = vpack.c.b16 %v4645, %v4641
  %v4690 = vpack.c.b16 %v4646, %v4642
  %v4691 = vpack.c.b16 %v4651, %v4647
  %v4692 = vpack.c.b16 %v4652, %v4648
  %v4693 = vpack.c.b16 %v4653, %v4649
  %v4694 = vpack.c.b16 %v4654, %v4650
  %v4695 = vpack.c.b16 %v4659, %v4655
  %v4696 = vpack.c.b16 %v4660, %v4656
  %v4697 = vpack.c.b16 %v4661, %v4657
  %v4698 = vpack.c.b16 %v4662, %v4658
  %v4699 = vpack.c.b16 %v4667, %v4663
  %v4700 = vpack.c.b16 %v4668, %v4664
  %v4701 = vpack.c.b16 %v4669, %v4665
  %v4702 = vpack.c.b16 %v4670, %v4666
  %4735 = vmatprep.subr.bf16.mxu0 %v4672
  %4736 = vmatpush1.bf16.msra.mxu0 %v4671
  %4737 = vmatprep.subr.bf16.mxu0 %v4676
  %4738 = vmatpush1.bf16.msra.mxu0 %v4675
  %4739 = vmatprep.subr.bf16.mxu0 %v4680
  %4740 = vmatpush1.bf16.msra.mxu0 %v4679
  %4741 = vmatprep.subr.bf16.mxu0 %v4684
  %4742 = vmatpush1.bf16.msra.mxu0 %v4683
  %4743 = vmatprep.subr.bf16.mxu0 %v4688
  %4744 = vmatpush1.bf16.msra.mxu0 %v4687
  %4745 = vmatprep.subr.bf16.mxu0 %v4692
  %4746 = vmatpush1.bf16.msra.mxu0 %v4691
  %4747 = vmatprep.subr.bf16.mxu0 %v4696
  %4748 = vmatpush1.bf16.msra.mxu0 %v4695
  %4749 = vmatprep.subr.bf16.mxu0 %v4700
  %4750 = vmatpush1.bf16.msra.mxu0 %v4699
  %4751 = vmatprep.subr.bf16.mxu0 0
  %4752 = vmatpush1.bf16.msra.mxu0 0
  %4753 = vmatprep.subr.bf16.mxu0 0
  %4754 = vmatpush1.bf16.msra.mxu0 0
  %4755 = vmatprep.subr.bf16.mxu0 0
  %4756 = vmatpush1.bf16.msra.mxu0 0
  %4757 = vmatprep.subr.bf16.mxu0 0
  %4758 = vmatpush1.bf16.msra.mxu0 0
  %4759 = vmatprep.subr.bf16.mxu0 0
  %4760 = vmatpush1.bf16.msra.mxu0 0
  %4761 = vmatprep.subr.bf16.mxu0 0
  %4762 = vmatpush1.bf16.msra.mxu0 0
  %4763 = vmatprep.subr.bf16.mxu0 0
  %4764 = vmatpush1.bf16.msra.mxu0 0
  %4765 = vmatprep.subr.bf16.mxu0 0
  %4766 = vmatpush1.bf16.msra.mxu0 0
  %4767 = vmatprep.mubr.bf16.mxu0 0
  %4768 = vmatmul.mubr.bf16.gmra.mrb[0].mxu0 %v4542
  %v4769 = vpop.f32.mrb[0].mxu0
  %v4770 = vadd.f32 0.0, %v4769
  %v4771 = vpop.f32.mrb[0].mxu0
  %v4772 = vadd.f32 0.0, %v4771
  %v4773 = vpop.f32.mrb[0].mxu0
  %v4774 = vadd.f32 0.0, %v4773
  %v4775 = vpop.f32.mrb[0].mxu0
  %v4776 = vadd.f32 0.0, %v4775
  %4777 = vdwg.mxu0
  %4778 = vmatprep.subr.bf16.mxu0 %v4674
  %4779 = vmatpush1.bf16.msra.mxu0 %v4673
  %4780 = vmatprep.subr.bf16.mxu0 %v4678
  %4781 = vmatpush1.bf16.msra.mxu0 %v4677
  %4782 = vmatprep.subr.bf16.mxu0 %v4682
  %4783 = vmatpush1.bf16.msra.mxu0 %v4681
  %4784 = vmatprep.subr.bf16.mxu0 %v4686
  %4785 = vmatpush1.bf16.msra.mxu0 %v4685
  %4786 = vmatprep.subr.bf16.mxu0 %v4690
  %4787 = vmatpush1.bf16.msra.mxu0 %v4689
  %4788 = vmatprep.subr.bf16.mxu0 %v4694
  %4789 = vmatpush1.bf16.msra.mxu0 %v4693
  %4790 = vmatprep.subr.bf16.mxu0 %v4698
  %4791 = vmatpush1.bf16.msra.mxu0 %v4697
  %4792 = vmatprep.subr.bf16.mxu0 %v4702
  %4793 = vmatpush1.bf16.msra.mxu0 %v4701
  %4794 = vmatprep.subr.bf16.mxu0 0
  %4795 = vmatpush1.bf16.msra.mxu0 0
  %4796 = vmatprep.subr.bf16.mxu0 0
  %4797 = vmatpush1.bf16.msra.mxu0 0
  %4798 = vmatprep.subr.bf16.mxu0 0
  %4799 = vmatpush1.bf16.msra.mxu0 0
  %4800 = vmatprep.subr.bf16.mxu0 0
  %4801 = vmatpush1.bf16.msra.mxu0 0
  %4802 = vmatprep.subr.bf16.mxu0 0
  %4803 = vmatpush1.bf16.msra.mxu0 0
  %4804 = vmatprep.subr.bf16.mxu0 0
  %4805 = vmatpush1.bf16.msra.mxu0 0
  %4806 = vmatprep.subr.bf16.mxu0 0
  %4807 = vmatpush1.bf16.msra.mxu0 0
  %4808 = vmatprep.subr.bf16.mxu0 0
  %4809 = vmatpush1.bf16.msra.mxu0 0
  %4810 = vmatprep.mubr.bf16.mxu0 0
  %4811 = vmatmul.mubr.bf16.gmra.mrb[0].mxu0 %v4542
  %v4812 = vpop.f32.mrb[0].mxu0
  %v4813 = vadd.f32 0.0, %v4812
  %v4814 = vpop.f32.mrb[0].mxu0
  %v4815 = vadd.f32 0.0, %v4814
  %v4816 = vpop.f32.mrb[0].mxu0
  %v4817 = vadd.f32 0.0, %v4816
  %v4818 = vpop.f32.mrb[0].mxu0
  %v4819 = vadd.f32 0.0, %v4818
  %4820 = vdwg.mxu0
  %v4821 = vadd.f32 %v4532, %v4770
  %v4822 = vadd.f32 %v4533, %v4772
  %v4823 = vadd.f32 %v4534, %v4813
  %v4824 = vadd.f32 %v4535, %v4815
  %v4825 = vadd.f32 %v4536, %v4774
  %v4826 = vadd.f32 %v4537, %v4776
  %v4827 = vadd.f32 %v4538, %v4817
  %v4828 = vadd.f32 %v4539, %v4819
  %v4829 = vld [vmem:[#allocation3] sm:$0xff]
  %v4830 = vld [vmem:[#allocation3 + $0x8] sm:$0xff]
  %v4831 = vxor.u32 %v4821, 2147483648
  %v4832 = vxor.u32 %v4825, 2147483648
  %v4833 = vmul.f32 %v4831, 1.442695
  %v4834 = vpow.pop %v4833
  %v4835 = vmul.f32 %v4832, 1.442695
  %v4836 = vpow.pop %v4835
  %v4837 = vadd.f32 %v4834, 1.0
  %v4838 = vadd.f32 %v4836, 1.0
  %v4839 = vrcp.pop %v4837
  %v4840 = vmul.f32 1.0, %v4839
  %v4841 = vrcp.pop %v4838
  %v4842 = vmul.f32 1.0, %v4841
  %v4843 = vxor.u32 %v4822, 2147483648
  %v4844 = vxor.u32 %v4826, 2147483648
  %v4845 = vmul.f32 %v4843, 1.442695
  %v4846 = vpow.pop %v4845
  %v4847 = vmul.f32 %v4844, 1.442695
  %v4848 = vpow.pop %v4847
  %v4849 = vadd.f32 %v4846, 1.0
  %v4850 = vadd.f32 %v4848, 1.0
  %v4851 = vrcp.pop %v4849
  %v4852 = vmul.f32 1.0, %v4851
  %v4853 = vrcp.pop %v4850
  %v4854 = vmul.f32 1.0, %v4853
  %v4855 = vtanh.pop %v4823
  %v4856 = vtanh.pop %v4827
  %v4857 = vxor.u32 %v4824, 2147483648
  %v4858 = vxor.u32 %v4828, 2147483648
  %v4859 = vmul.f32 %v4857, 1.442695
  %v4860 = vpow.pop %v4859
  %v4861 = vmul.f32 %v4858, 1.442695
  %v4862 = vpow.pop %v4861
  %v4863 = vadd.f32 %v4860, 1.0
  %v4864 = vadd.f32 %v4862, 1.0
  %v4865 = vrcp.pop %v4863
  %v4866 = vmul.f32 1.0, %v4865
  %v4867 = vrcp.pop %v4864
  %v4868 = vmul.f32 1.0, %v4867
  %v4869 = vmul.f32 %v4852, %v4829
  %v4870 = vmul.f32 %v4854, %v4830
  %v4871 = vmul.f32 %v4840, %v4855
  %v4872 = vmul.f32 %v4842, %v4856
  %v4873 = vadd.f32 %v4869, %v4871
  %v4874 = vadd.f32 %v4870, %v4872
  %v4875 = vtanh.pop %v4873
  %v4876 = vtanh.pop %v4874
  %v4877 = vmul.f32 %v4866, %v4875
  %v4878 = vmul.f32 %v4868, %v4876
  %4879 = vst [vmem:[#allocation2] sm:$0xff] %v4877
  %4880 = vst [vmem:[#allocation2 + $0x8] sm:$0xff] %v4878
  %4881 = vst [vmem:[#allocation3] sm:$0xff] %v4873
  %4882 = vst [vmem:[#allocation3 + $0x8] sm:$0xff] %v4874
  %v4883 = vpack.c.bf16 %v4878, %v4877
  %v4884 = vld [vmem:[%s408] sm:$0xff]
  %v4885 = vld [vmem:[%s408 + $0x8] sm:$0xff]
  %v4886 = vpack.c.bf16 %v4885, %v4884
  %v4887 = vld [vmem:[%s2] sm:$0xff]
  %v4888 = vld [vmem:[%s2 + $0x8] sm:$0xff]
  %v4889 = vld [vmem:[%s2 + $0x10] sm:$0xff]
  %v4890 = vld [vmem:[%s2 + $0x18] sm:$0xff]
  %v4891 = vld [vmem:[%s2 + $0x20] sm:$0xff]
  %v4892 = vld [vmem:[%s2 + $0x28] sm:$0xff]
  %v4893 = vld [vmem:[%s2 + $0x30] sm:$0xff]
  %v4894 = vld [vmem:[%s2 + $0x38] sm:$0xff]
  %v4895 = vld [vmem:[%s2 + $0x40] sm:$0xff]
  %v4896 = vld [vmem:[%s2 + $0x48] sm:$0xff]
  %v4897 = vld [vmem:[%s2 + $0x50] sm:$0xff]
  %v4898 = vld [vmem:[%s2 + $0x58] sm:$0xff]
  %v4899 = vld [vmem:[%s2 + $0x60] sm:$0xff]
  %v4900 = vld [vmem:[%s2 + $0x68] sm:$0xff]
  %v4901 = vld [vmem:[%s2 + $0x70] sm:$0xff]
  %v4902 = vld [vmem:[%s2 + $0x78] sm:$0xff]
  %v4903 = vld [vmem:[%s2 + $0x80] sm:$0xff]
  %v4904 = vld [vmem:[%s2 + $0x88] sm:$0xff]
  %v4905 = vld [vmem:[%s2 + $0x90] sm:$0xff]
  %v4906 = vld [vmem:[%s2 + $0x98] sm:$0xff]
  %v4907 = vld [vmem:[%s2 + $0xa0] sm:$0xff]
  %v4908 = vld [vmem:[%s2 + $0xa8] sm:$0xff]
  %v4909 = vld [vmem:[%s2 + $0xb0] sm:$0xff]
  %v4910 = vld [vmem:[%s2 + $0xb8] sm:$0xff]
  %v4911 = vld [vmem:[%s2 + $0xc0] sm:$0xff]
  %v4912 = vld [vmem:[%s2 + $0xc8] sm:$0xff]
  %v4913 = vld [vmem:[%s2 + $0xd0] sm:$0xff]
  %v4914 = vld [vmem:[%s2 + $0xd8] sm:$0xff]
  %v4915 = vld [vmem:[%s2 + $0xe0] sm:$0xff]
  %v4916 = vld [vmem:[%s2 + $0xe8] sm:$0xff]
  %v4917 = vld [vmem:[%s2 + $0xf0] sm:$0xff]
  %v4918 = vld [vmem:[%s2 + $0xf8] sm:$0xff]
  %v4919 = vld [vmem:[%s2 + $0x100] sm:$0xff]
  %v4920 = vld [vmem:[%s2 + $0x108] sm:$0xff]
  %v4921 = vld [vmem:[%s2 + $0x110] sm:$0xff]
  %v4922 = vld [vmem:[%s2 + $0x118] sm:$0xff]
  %v4923 = vld [vmem:[%s2 + $0x120] sm:$0xff]
  %v4924 = vld [vmem:[%s2 + $0x128] sm:$0xff]
  %v4925 = vld [vmem:[%s2 + $0x130] sm:$0xff]
  %v4926 = vld [vmem:[%s2 + $0x138] sm:$0xff]
  %v4927 = vld [vmem:[%s2 + $0x140] sm:$0xff]
  %v4928 = vld [vmem:[%s2 + $0x148] sm:$0xff]
  %v4929 = vld [vmem:[%s2 + $0x150] sm:$0xff]
  %v4930 = vld [vmem:[%s2 + $0x158] sm:$0xff]
  %v4931 = vld [vmem:[%s2 + $0x160] sm:$0xff]
  %v4932 = vld [vmem:[%s2 + $0x168] sm:$0xff]
  %v4933 = vld [vmem:[%s2 + $0x170] sm:$0xff]
  %v4934 = vld [vmem:[%s2 + $0x178] sm:$0xff]
  %v4935 = vld [vmem:[%s2 + $0x180] sm:$0xff]
  %v4936 = vld [vmem:[%s2 + $0x188] sm:$0xff]
  %v4937 = vld [vmem:[%s2 + $0x190] sm:$0xff]
  %v4938 = vld [vmem:[%s2 + $0x198] sm:$0xff]
  %v4939 = vld [vmem:[%s2 + $0x1a0] sm:$0xff]
  %v4940 = vld [vmem:[%s2 + $0x1a8] sm:$0xff]
  %v4941 = vld [vmem:[%s2 + $0x1b0] sm:$0xff]
  %v4942 = vld [vmem:[%s2 + $0x1b8] sm:$0xff]
  %v4943 = vld [vmem:[%s2 + $0x1c0] sm:$0xff]
  %v4944 = vld [vmem:[%s2 + $0x1c8] sm:$0xff]
  %v4945 = vld [vmem:[%s2 + $0x1d0] sm:$0xff]
  %v4946 = vld [vmem:[%s2 + $0x1d8] sm:$0xff]
  %v4947 = vld [vmem:[%s2 + $0x1e0] sm:$0xff]
  %v4948 = vld [vmem:[%s2 + $0x1e8] sm:$0xff]
  %v4949 = vld [vmem:[%s2 + $0x1f0] sm:$0xff]
  %v4950 = vld [vmem:[%s2 + $0x1f8] sm:$0xff]
  %v5015 = vunpack.c.l.b16 %v4887
  %v5016 = vunpack.c.h.b16 %v4887
  %v5017 = vunpack.c.l.b16 %v4888
  %v5018 = vunpack.c.h.b16 %v4888
  %v5019 = vunpack.c.l.b16 %v4889
  %v5020 = vunpack.c.h.b16 %v4889
  %v5021 = vunpack.c.l.b16 %v4890
  %v5022 = vunpack.c.h.b16 %v4890
  %v5023 = vunpack.c.l.b16 %v4891
  %v5024 = vunpack.c.h.b16 %v4891
  %v5025 = vunpack.c.l.b16 %v4892
  %v5026 = vunpack.c.h.b16 %v4892
  %v5027 = vunpack.c.l.b16 %v4893
  %v5028 = vunpack.c.h.b16 %v4893
  %v5029 = vunpack.c.l.b16 %v4894
  %v5030 = vunpack.c.h.b16 %v4894
  %v5031 = vunpack.c.l.b16 %v4895
  %v5032 = vunpack.c.h.b16 %v4895
  %v5033 = vunpack.c.l.b16 %v4896
  %v5034 = vunpack.c.h.b16 %v4896
  %v5035 = vunpack.c.l.b16 %v4897
  %v5036 = vunpack.c.h.b16 %v4897
  %v5037 = vunpack.c.l.b16 %v4898
  %v5038 = vunpack.c.h.b16 %v4898
  %v5039 = vunpack.c.l.b16 %v4899
  %v5040 = vunpack.c.h.b16 %v4899
  %v5041 = vunpack.c.l.b16 %v4900
  %v5042 = vunpack.c.h.b16 %v4900
  %v5043 = vunpack.c.l.b16 %v4901
  %v5044 = vunpack.c.h.b16 %v4901
  %v5045 = vunpack.c.l.b16 %v4902
  %v5046 = vunpack.c.h.b16 %v4902
  %v5047 = vunpack.c.l.b16 %v4903
  %v5048 = vunpack.c.h.b16 %v4903
  %v5049 = vunpack.c.l.b16 %v4904
  %v5050 = vunpack.c.h.b16 %v4904
  %v5051 = vunpack.c.l.b16 %v4905
  %v5052 = vunpack.c.h.b16 %v4905
  %v5053 = vunpack.c.l.b16 %v4906
  %v5054 = vunpack.c.h.b16 %v4906
  %v5055 = vunpack.c.l.b16 %v4907
  %v5056 = vunpack.c.h.b16 %v4907
  %v5057 = vunpack.c.l.b16 %v4908
  %v5058 = vunpack.c.h.b16 %v4908
  %v5059 = vunpack.c.l.b16 %v4909
  %v5060 = vunpack.c.h.b16 %v4909
  %v5061 = vunpack.c.l.b16 %v4910
  %v5062 = vunpack.c.h.b16 %v4910
  %v5063 = vunpack.c.l.b16 %v4911
  %v5064 = vunpack.c.h.b16 %v4911
  %v5065 = vunpack.c.l.b16 %v4912
  %v5066 = vunpack.c.h.b16 %v4912
  %v5067 = vunpack.c.l.b16 %v4913
  %v5068 = vunpack.c.h.b16 %v4913
  %v5069 = vunpack.c.l.b16 %v4914
  %v5070 = vunpack.c.h.b16 %v4914
  %v5071 = vunpack.c.l.b16 %v4915
  %v5072 = vunpack.c.h.b16 %v4915
  %v5073 = vunpack.c.l.b16 %v4916
  %v5074 = vunpack.c.h.b16 %v4916
  %v5075 = vunpack.c.l.b16 %v4917
  %v5076 = vunpack.c.h.b16 %v4917
  %v5077 = vunpack.c.l.b16 %v4918
  %v5078 = vunpack.c.h.b16 %v4918
  %v5079 = vunpack.c.l.b16 %v4919
  %v5080 = vunpack.c.h.b16 %v4919
  %v5081 = vunpack.c.l.b16 %v4920
  %v5082 = vunpack.c.h.b16 %v4920
  %v5083 = vunpack.c.l.b16 %v4921
  %v5084 = vunpack.c.h.b16 %v4921
  %v5085 = vunpack.c.l.b16 %v4922
  %v5086 = vunpack.c.h.b16 %v4922
  %v5087 = vunpack.c.l.b16 %v4923
  %v5088 = vunpack.c.h.b16 %v4923
  %v5089 = vunpack.c.l.b16 %v4924
  %v5090 = vunpack.c.h.b16 %v4924
  %v5091 = vunpack.c.l.b16 %v4925
  %v5092 = vunpack.c.h.b16 %v4925
  %v5093 = vunpack.c.l.b16 %v4926
  %v5094 = vunpack.c.h.b16 %v4926
  %v5095 = vunpack.c.l.b16 %v4927
  %v5096 = vunpack.c.h.b16 %v4927
  %v5097 = vunpack.c.l.b16 %v4928
  %v5098 = vunpack.c.h.b16 %v4928
  %v5099 = vunpack.c.l.b16 %v4929
  %v5100 = vunpack.c.h.b16 %v4929
  %v5101 = vunpack.c.l.b16 %v4930
  %v5102 = vunpack.c.h.b16 %v4930
  %v5103 = vunpack.c.l.b16 %v4931
  %v5104 = vunpack.c.h.b16 %v4931
  %v5105 = vunpack.c.l.b16 %v4932
  %v5106 = vunpack.c.h.b16 %v4932
  %v5107 = vunpack.c.l.b16 %v4933
  %v5108 = vunpack.c.h.b16 %v4933
  %v5109 = vunpack.c.l.b16 %v4934
  %v5110 = vunpack.c.h.b16 %v4934
  %v5111 = vunpack.c.l.b16 %v4935
  %v5112 = vunpack.c.h.b16 %v4935
  %v5113 = vunpack.c.l.b16 %v4936
  %v5114 = vunpack.c.h.b16 %v4936
  %v5115 = vunpack.c.l.b16 %v4937
  %v5116 = vunpack.c.h.b16 %v4937
  %v5117 = vunpack.c.l.b16 %v4938
  %v5118 = vunpack.c.h.b16 %v4938
  %v5119 = vunpack.c.l.b16 %v4939
  %v5120 = vunpack.c.h.b16 %v4939
  %v5121 = vunpack.c.l.b16 %v4940
  %v5122 = vunpack.c.h.b16 %v4940
  %v5123 = vunpack.c.l.b16 %v4941
  %v5124 = vunpack.c.h.b16 %v4941
  %v5125 = vunpack.c.l.b16 %v4942
  %v5126 = vunpack.c.h.b16 %v4942
  %v5127 = vunpack.c.l.b16 %v4943
  %v5128 = vunpack.c.h.b16 %v4943
  %v5129 = vunpack.c.l.b16 %v4944
  %v5130 = vunpack.c.h.b16 %v4944
  %v5131 = vunpack.c.l.b16 %v4945
  %v5132 = vunpack.c.h.b16 %v4945
  %v5133 = vunpack.c.l.b16 %v4946
  %v5134 = vunpack.c.h.b16 %v4946
  %v5135 = vunpack.c.l.b16 %v4947
  %v5136 = vunpack.c.h.b16 %v4947
  %v5137 = vunpack.c.l.b16 %v4948
  %v5138 = vunpack.c.h.b16 %v4948
  %v5139 = vunpack.c.l.b16 %v4949
  %v5140 = vunpack.c.h.b16 %v4949
  %v5141 = vunpack.c.l.b16 %v4950
  %v5142 = vunpack.c.h.b16 %v4950
  %v5143 = vpack.c.b16 %v5019, %v5015
  %v5144 = vpack.c.b16 %v5020, %v5016
  %v5145 = vpack.c.b16 %v5021, %v5017
  %v5146 = vpack.c.b16 %v5022, %v5018
  %v5147 = vpack.c.b16 %v5027, %v5023
  %v5148 = vpack.c.b16 %v5028, %v5024
  %v5149 = vpack.c.b16 %v5029, %v5025
  %v5150 = vpack.c.b16 %v5030, %v5026
  %v5151 = vpack.c.b16 %v5035, %v5031
  %v5152 = vpack.c.b16 %v5036, %v5032
  %v5153 = vpack.c.b16 %v5037, %v5033
  %v5154 = vpack.c.b16 %v5038, %v5034
  %v5155 = vpack.c.b16 %v5043, %v5039
  %v5156 = vpack.c.b16 %v5044, %v5040
  %v5157 = vpack.c.b16 %v5045, %v5041
  %v5158 = vpack.c.b16 %v5046, %v5042
  %v5159 = vpack.c.b16 %v5051, %v5047
  %v5160 = vpack.c.b16 %v5052, %v5048
  %v5161 = vpack.c.b16 %v5053, %v5049
  %v5162 = vpack.c.b16 %v5054, %v5050
  %v5163 = vpack.c.b16 %v5059, %v5055
  %v5164 = vpack.c.b16 %v5060, %v5056
  %v5165 = vpack.c.b16 %v5061, %v5057
  %v5166 = vpack.c.b16 %v5062, %v5058
  %v5167 = vpack.c.b16 %v5067, %v5063
  %v5168 = vpack.c.b16 %v5068, %v5064
  %v5169 = vpack.c.b16 %v5069, %v5065
  %v5170 = vpack.c.b16 %v5070, %v5066
  %v5171 = vpack.c.b16 %v5075, %v5071
  %v5172 = vpack.c.b16 %v5076, %v5072
  %v5173 = vpack.c.b16 %v5077, %v5073
  %v5174 = vpack.c.b16 %v5078, %v5074
  %v5175 = vpack.c.b16 %v5083, %v5079
  %v5176 = vpack.c.b16 %v5084, %v5080
  %v5177 = vpack.c.b16 %v5085, %v5081
  %v5178 = vpack.c.b16 %v5086, %v5082
  %v5179 = vpack.c.b16 %v5091, %v5087
  %v5180 = vpack.c.b16 %v5092, %v5088
  %v5181 = vpack.c.b16 %v5093, %v5089
  %v5182 = vpack.c.b16 %v5094, %v5090
  %v5183 = vpack.c.b16 %v5099, %v5095
  %v5184 = vpack.c.b16 %v5100, %v5096
  %v5185 = vpack.c.b16 %v5101, %v5097
  %v5186 = vpack.c.b16 %v5102, %v5098
  %v5187 = vpack.c.b16 %v5107, %v5103
  %v5188 = vpack.c.b16 %v5108, %v5104
  %v5189 = vpack.c.b16 %v5109, %v5105
  %v5190 = vpack.c.b16 %v5110, %v5106
  %v5191 = vpack.c.b16 %v5115, %v5111
  %v5192 = vpack.c.b16 %v5116, %v5112
  %v5193 = vpack.c.b16 %v5117, %v5113
  %v5194 = vpack.c.b16 %v5118, %v5114
  %v5195 = vpack.c.b16 %v5123, %v5119
  %v5196 = vpack.c.b16 %v5124, %v5120
  %v5197 = vpack.c.b16 %v5125, %v5121
  %v5198 = vpack.c.b16 %v5126, %v5122
  %v5199 = vpack.c.b16 %v5131, %v5127
  %v5200 = vpack.c.b16 %v5132, %v5128
  %v5201 = vpack.c.b16 %v5133, %v5129
  %v5202 = vpack.c.b16 %v5134, %v5130
  %v5203 = vpack.c.b16 %v5139, %v5135
  %v5204 = vpack.c.b16 %v5140, %v5136
  %v5205 = vpack.c.b16 %v5141, %v5137
  %v5206 = vpack.c.b16 %v5142, %v5138
  %5271 = vmatprep.subr.bf16.mxu0 %v5144
  %5272 = vmatpush1.bf16.msra.mxu0 %v5143
  %5273 = vmatprep.subr.bf16.mxu0 %v5148
  %5274 = vmatpush1.bf16.msra.mxu0 %v5147
  %5275 = vmatprep.subr.bf16.mxu0 %v5152
  %5276 = vmatpush1.bf16.msra.mxu0 %v5151
  %5277 = vmatprep.subr.bf16.mxu0 %v5156
  %5278 = vmatpush1.bf16.msra.mxu0 %v5155
  %5279 = vmatprep.subr.bf16.mxu0 %v5160
  %5280 = vmatpush1.bf16.msra.mxu0 %v5159
  %5281 = vmatprep.subr.bf16.mxu0 %v5164
  %5282 = vmatpush1.bf16.msra.mxu0 %v5163
  %5283 = vmatprep.subr.bf16.mxu0 %v5168
  %5284 = vmatpush1.bf16.msra.mxu0 %v5167
  %5285 = vmatprep.subr.bf16.mxu0 %v5172
  %5286 = vmatpush1.bf16.msra.mxu0 %v5171
  %5287 = vmatprep.subr.bf16.mxu0 %v5176
  %5288 = vmatpush1.bf16.msra.mxu0 %v5175
  %5289 = vmatprep.subr.bf16.mxu0 %v5180
  %5290 = vmatpush1.bf16.msra.mxu0 %v5179
  %5291 = vmatprep.subr.bf16.mxu0 %v5184
  %5292 = vmatpush1.bf16.msra.mxu0 %v5183
  %5293 = vmatprep.subr.bf16.mxu0 %v5188
  %5294 = vmatpush1.bf16.msra.mxu0 %v5187
  %5295 = vmatprep.subr.bf16.mxu0 %v5192
  %5296 = vmatpush1.bf16.msra.mxu0 %v5191
  %5297 = vmatprep.subr.bf16.mxu0 %v5196
  %5298 = vmatpush1.bf16.msra.mxu0 %v5195
  %5299 = vmatprep.subr.bf16.mxu0 %v5200
  %5300 = vmatpush1.bf16.msra.mxu0 %v5199
  %5301 = vmatprep.subr.bf16.mxu0 %v5204
  %5302 = vmatpush1.bf16.msra.mxu0 %v5203
  %5303 = vmatprep.mubr.bf16.mxu0 %v4886
  %5304 = vmatmul.mubr.bf16.gmra.mrb[0].mxu0 %v4883
  %v5305 = vpop.f32.mrb[0].mxu0
  %v5306 = vadd.f32 %v35, %v5305
  %v5307 = vpop.f32.mrb[0].mxu0
  %v5308 = vadd.f32 %v39, %v5307
  %v5309 = vpop.f32.mrb[0].mxu0
  %v5310 = vadd.f32 %v35, %v5309
  %v5311 = vpop.f32.mrb[0].mxu0
  %v5312 = vadd.f32 %v39, %v5311
  %5313 = vdwg.mxu0
  %5314 = vmatprep.subr.bf16.mxu0 %v5146
  %5315 = vmatpush1.bf16.msra.mxu0 %v5145
  %5316 = vmatprep.subr.bf16.mxu0 %v5150
  %5317 = vmatpush1.bf16.msra.mxu0 %v5149
  %5318 = vmatprep.subr.bf16.mxu0 %v5154
  %5319 = vmatpush1.bf16.msra.mxu0 %v5153
  %5320 = vmatprep.subr.bf16.mxu0 %v5158
  %5321 = vmatpush1.bf16.msra.mxu0 %v5157
  %5322 = vmatprep.subr.bf16.mxu0 %v5162
  %5323 = vmatpush1.bf16.msra.mxu0 %v5161
  %5324 = vmatprep.subr.bf16.mxu0 %v5166
  %5325 = vmatpush1.bf16.msra.mxu0 %v5165
  %5326 = vmatprep.subr.bf16.mxu0 %v5170
  %5327 = vmatpush1.bf16.msra.mxu0 %v5169
  %5328 = vmatprep.subr.bf16.mxu0 %v5174
  %5329 = vmatpush1.bf16.msra.mxu0 %v5173
  %5330 = vmatprep.subr.bf16.mxu0 %v5178
  %5331 = vmatpush1.bf16.msra.mxu0 %v5177
  %5332 = vmatprep.subr.bf16.mxu0 %v5182
  %5333 = vmatpush1.bf16.msra.mxu0 %v5181
  %5334 = vmatprep.subr.bf16.mxu0 %v5186
  %5335 = vmatpush1.bf16.msra.mxu0 %v5185
  %5336 = vmatprep.subr.bf16.mxu0 %v5190
  %5337 = vmatpush1.bf16.msra.mxu0 %v5189
  %5338 = vmatprep.subr.bf16.mxu0 %v5194
  %5339 = vmatpush1.bf16.msra.mxu0 %v5193
  %5340 = vmatprep.subr.bf16.mxu0 %v5198
  %5341 = vmatpush1.bf16.msra.mxu0 %v5197
  %5342 = vmatprep.subr.bf16.mxu0 %v5202
  %5343 = vmatpush1.bf16.msra.mxu0 %v5201
  %5344 = vmatprep.subr.bf16.mxu0 %v5206
  %5345 = vmatpush1.bf16.msra.mxu0 %v5205
  %5346 = vmatprep.mubr.bf16.mxu0 %v4886
  %5347 = vmatmul.mubr.bf16.gmra.mrb[0].mxu0 %v4883
  %v5348 = vpop.f32.mrb[0].mxu0
  %v5349 = vadd.f32 %v43, %v5348
  %v5350 = vpop.f32.mrb[0].mxu0
  %v5351 = vadd.f32 %v47, %v5350
  %v5352 = vpop.f32.mrb[0].mxu0
  %v5353 = vadd.f32 %v43, %v5352
  %v5354 = vpop.f32.mrb[0].mxu0
  %v5355 = vadd.f32 %v47, %v5354
  %5356 = vdwg.mxu0
  %v5357 = vld [vmem:[%s882] sm:$0xff]
  %v5358 = vld [vmem:[%s882 + $0x8] sm:$0xff]
  %v5359 = vxor.u32 %v5306, 2147483648
  %v5360 = vxor.u32 %v5310, 2147483648
  %v5361 = vmul.f32 %v5359, 1.442695
  %v5362 = vpow.pop %v5361
  %v5363 = vmul.f32 %v5360, 1.442695
  %v5364 = vpow.pop %v5363
  %v5365 = vadd.f32 %v5362, 1.0
  %v5366 = vadd.f32 %v5364, 1.0
  %v5367 = vrcp.pop %v5365
  %v5368 = vmul.f32 1.0, %v5367
  %v5369 = vrcp.pop %v5366
  %v5370 = vmul.f32 1.0, %v5369
  %v5371 = vxor.u32 %v5308, 2147483648
  %v5372 = vxor.u32 %v5312, 2147483648
  %v5373 = vmul.f32 %v5371, 1.442695
  %v5374 = vpow.pop %v5373
  %v5375 = vmul.f32 %v5372, 1.442695
  %v5376 = vpow.pop %v5375
  %v5377 = vadd.f32 %v5374, 1.0
  %v5378 = vadd.f32 %v5376, 1.0
  %v5379 = vrcp.pop %v5377
  %v5380 = vmul.f32 1.0, %v5379
  %v5381 = vrcp.pop %v5378
  %v5382 = vmul.f32 1.0, %v5381
  %v5383 = vtanh.pop %v5349
  %v5384 = vtanh.pop %v5353
  %v5385 = vxor.u32 %v5351, 2147483648
  %v5386 = vxor.u32 %v5355, 2147483648
  %v5387 = vmul.f32 %v5385, 1.442695
  %v5388 = vpow.pop %v5387
  %v5389 = vmul.f32 %v5386, 1.442695
  %v5390 = vpow.pop %v5389
  %v5391 = vadd.f32 %v5388, 1.0
  %v5392 = vadd.f32 %v5390, 1.0
  %v5393 = vrcp.pop %v5391
  %v5394 = vmul.f32 1.0, %v5393
  %v5395 = vrcp.pop %v5392
  %v5396 = vmul.f32 1.0, %v5395
  %v5397 = vmul.f32 %v5380, %v5357
  %v5398 = vmul.f32 %v5382, %v5358
  %v5399 = vmul.f32 %v5368, %v5383
  %v5400 = vmul.f32 %v5370, %v5384
  %v5401 = vadd.f32 %v5397, %v5399
  %v5402 = vadd.f32 %v5398, %v5400
  %v5403 = vtanh.pop %v5401
  %v5404 = vtanh.pop %v5402
  %v5405 = vmul.f32 %v5394, %v5403
  %v5406 = vmul.f32 %v5396, %v5404
  %5407 = vst [vmem:[%s408] sm:$0xff] %v5405
  %5408 = vst [vmem:[%s408 + $0x8] sm:$0xff] %v5406
  %5409 = vst [vmem:[%s882] sm:$0xff] %v5401
  %5410 = vst [vmem:[%s882 + $0x8] sm:$0xff] %v5402
  %v5411 = vpack.c.bf16 %v5406, %v5405
  %v5413 = vunpack.c.l.b16 %v5411
  %v5414 = vunpack.c.h.b16 %v5411
  %v5415 = vpack.c.b16 %v5413, %v5413
  %v5416 = vpack.c.b16 %v5414, %v5414
  %s5419 = scalar_lea.vmem %s4, 40
  %5420 = vst [vmem:[%s5419] sm:$0xf] %v5415
  %5421 = vst [vmem:[%s5419 + $0x4] sm:$0xf] %v5416
  %s5422 = scalar_lea.vmem %s0, 192
  %v5423 = vld [vmem:[%s5422] sm:$0xff]
  %v5424 = vld [vmem:[%s5422 + $0x8] sm:$0xff]
  %v5425 = vld [vmem:[%s5422 + $0x10] sm:$0xff]
  %v5426 = vld [vmem:[%s5422 + $0x18] sm:$0xff]
  %v5427 = vunpack.c.l.bf16 %v5423
  %v5428 = vunpack.c.h.bf16 %v5423
  %v5429 = vunpack.c.l.bf16 %v5424
  %v5430 = vunpack.c.h.bf16 %v5424
  %v5431 = vunpack.c.l.bf16 %v5425
  %v5432 = vunpack.c.h.bf16 %v5425
  %v5433 = vunpack.c.l.bf16 %v5426
  %v5434 = vunpack.c.h.bf16 %v5426
  %v5435 = vld [vmem:[#allocation2] sm:$0xff]
  %v5436 = vld [vmem:[#allocation2 + $0x8] sm:$0xff]
  %v5437 = vpack.c.bf16 %v5436, %v5435
  %v5438 = vld [vmem:[%s1] sm:$0xff]
  %v5439 = vld [vmem:[%s1 + $0x8] sm:$0xff]
  %v5440 = vld [vmem:[%s1 + $0x10] sm:$0xff]
  %v5441 = vld [vmem:[%s1 + $0x18] sm:$0xff]
  %v5442 = vld [vmem:[%s1 + $0x20] sm:$0xff]
  %v5443 = vld [vmem:[%s1 + $0x28] sm:$0xff]
  %v5444 = vld [vmem:[%s1 + $0x30] sm:$0xff]
  %v5445 = vld [vmem:[%s1 + $0x38] sm:$0xff]
  %v5446 = vld [vmem:[%s1 + $0x40] sm:$0xff]
  %v5447 = vld [vmem:[%s1 + $0x48] sm:$0xff]
  %v5448 = vld [vmem:[%s1 + $0x50] sm:$0xff]
  %v5449 = vld [vmem:[%s1 + $0x58] sm:$0xff]
  %v5450 = vld [vmem:[%s1 + $0x60] sm:$0xff]
  %v5451 = vld [vmem:[%s1 + $0x68] sm:$0xff]
  %v5452 = vld [vmem:[%s1 + $0x70] sm:$0xff]
  %v5453 = vld [vmem:[%s1 + $0x78] sm:$0xff]
  %v5454 = vld [vmem:[%s1 + $0x80] sm:$0xff]
  %v5455 = vld [vmem:[%s1 + $0x88] sm:$0xff]
  %v5456 = vld [vmem:[%s1 + $0x90] sm:$0xff]
  %v5457 = vld [vmem:[%s1 + $0x98] sm:$0xff]
  %v5458 = vld [vmem:[%s1 + $0xa0] sm:$0xff]
  %v5459 = vld [vmem:[%s1 + $0xa8] sm:$0xff]
  %v5460 = vld [vmem:[%s1 + $0xb0] sm:$0xff]
  %v5461 = vld [vmem:[%s1 + $0xb8] sm:$0xff]
  %v5462 = vld [vmem:[%s1 + $0xc0] sm:$0xff]
  %v5463 = vld [vmem:[%s1 + $0xc8] sm:$0xff]
  %v5464 = vld [vmem:[%s1 + $0xd0] sm:$0xff]
  %v5465 = vld [vmem:[%s1 + $0xd8] sm:$0xff]
  %v5466 = vld [vmem:[%s1 + $0xe0] sm:$0xff]
  %v5467 = vld [vmem:[%s1 + $0xe8] sm:$0xff]
  %v5468 = vld [vmem:[%s1 + $0xf0] sm:$0xff]
  %v5469 = vld [vmem:[%s1 + $0xf8] sm:$0xff]
  %v5502 = vunpack.c.l.b16 %v5438
  %v5503 = vunpack.c.h.b16 %v5438
  %v5504 = vunpack.c.l.b16 %v5439
  %v5505 = vunpack.c.h.b16 %v5439
  %v5506 = vunpack.c.l.b16 %v5440
  %v5507 = vunpack.c.h.b16 %v5440
  %v5508 = vunpack.c.l.b16 %v5441
  %v5509 = vunpack.c.h.b16 %v5441
  %v5510 = vunpack.c.l.b16 %v5442
  %v5511 = vunpack.c.h.b16 %v5442
  %v5512 = vunpack.c.l.b16 %v5443
  %v5513 = vunpack.c.h.b16 %v5443
  %v5514 = vunpack.c.l.b16 %v5444
  %v5515 = vunpack.c.h.b16 %v5444
  %v5516 = vunpack.c.l.b16 %v5445
  %v5517 = vunpack.c.h.b16 %v5445
  %v5518 = vunpack.c.l.b16 %v5446
  %v5519 = vunpack.c.h.b16 %v5446
  %v5520 = vunpack.c.l.b16 %v5447
  %v5521 = vunpack.c.h.b16 %v5447
  %v5522 = vunpack.c.l.b16 %v5448
  %v5523 = vunpack.c.h.b16 %v5448
  %v5524 = vunpack.c.l.b16 %v5449
  %v5525 = vunpack.c.h.b16 %v5449
  %v5526 = vunpack.c.l.b16 %v5450
  %v5527 = vunpack.c.h.b16 %v5450
  %v5528 = vunpack.c.l.b16 %v5451
  %v5529 = vunpack.c.h.b16 %v5451
  %v5530 = vunpack.c.l.b16 %v5452
  %v5531 = vunpack.c.h.b16 %v5452
  %v5532 = vunpack.c.l.b16 %v5453
  %v5533 = vunpack.c.h.b16 %v5453
  %v5534 = vunpack.c.l.b16 %v5454
  %v5535 = vunpack.c.h.b16 %v5454
  %v5536 = vunpack.c.l.b16 %v5455
  %v5537 = vunpack.c.h.b16 %v5455
  %v5538 = vunpack.c.l.b16 %v5456
  %v5539 = vunpack.c.h.b16 %v5456
  %v5540 = vunpack.c.l.b16 %v5457
  %v5541 = vunpack.c.h.b16 %v5457
  %v5542 = vunpack.c.l.b16 %v5458
  %v5543 = vunpack.c.h.b16 %v5458
  %v5544 = vunpack.c.l.b16 %v5459
  %v5545 = vunpack.c.h.b16 %v5459
  %v5546 = vunpack.c.l.b16 %v5460
  %v5547 = vunpack.c.h.b16 %v5460
  %v5548 = vunpack.c.l.b16 %v5461
  %v5549 = vunpack.c.h.b16 %v5461
  %v5550 = vunpack.c.l.b16 %v5462
  %v5551 = vunpack.c.h.b16 %v5462
  %v5552 = vunpack.c.l.b16 %v5463
  %v5553 = vunpack.c.h.b16 %v5463
  %v5554 = vunpack.c.l.b16 %v5464
  %v5555 = vunpack.c.h.b16 %v5464
  %v5556 = vunpack.c.l.b16 %v5465
  %v5557 = vunpack.c.h.b16 %v5465
  %v5558 = vunpack.c.l.b16 %v5466
  %v5559 = vunpack.c.h.b16 %v5466
  %v5560 = vunpack.c.l.b16 %v5467
  %v5561 = vunpack.c.h.b16 %v5467
  %v5562 = vunpack.c.l.b16 %v5468
  %v5563 = vunpack.c.h.b16 %v5468
  %v5564 = vunpack.c.l.b16 %v5469
  %v5565 = vunpack.c.h.b16 %v5469
  %v5566 = vpack.c.b16 %v5506, %v5502
  %v5567 = vpack.c.b16 %v5507, %v5503
  %v5568 = vpack.c.b16 %v5508, %v5504
  %v5569 = vpack.c.b16 %v5509, %v5505
  %v5570 = vpack.c.b16 %v5514, %v5510
  %v5571 = vpack.c.b16 %v5515, %v5511
  %v5572 = vpack.c.b16 %v5516, %v5512
  %v5573 = vpack.c.b16 %v5517, %v5513
  %v5574 = vpack.c.b16 %v5522, %v5518
  %v5575 = vpack.c.b16 %v5523, %v5519
  %v5576 = vpack.c.b16 %v5524, %v5520
  %v5577 = vpack.c.b16 %v5525, %v5521
  %v5578 = vpack.c.b16 %v5530, %v5526
  %v5579 = vpack.c.b16 %v5531, %v5527
  %v5580 = vpack.c.b16 %v5532, %v5528
  %v5581 = vpack.c.b16 %v5533, %v5529
  %v5582 = vpack.c.b16 %v5538, %v5534
  %v5583 = vpack.c.b16 %v5539, %v5535
  %v5584 = vpack.c.b16 %v5540, %v5536
  %v5585 = vpack.c.b16 %v5541, %v5537
  %v5586 = vpack.c.b16 %v5546, %v5542
  %v5587 = vpack.c.b16 %v5547, %v5543
  %v5588 = vpack.c.b16 %v5548, %v5544
  %v5589 = vpack.c.b16 %v5549, %v5545
  %v5590 = vpack.c.b16 %v5554, %v5550
  %v5591 = vpack.c.b16 %v5555, %v5551
  %v5592 = vpack.c.b16 %v5556, %v5552
  %v5593 = vpack.c.b16 %v5557, %v5553
  %v5594 = vpack.c.b16 %v5562, %v5558
  %v5595 = vpack.c.b16 %v5563, %v5559
  %v5596 = vpack.c.b16 %v5564, %v5560
  %v5597 = vpack.c.b16 %v5565, %v5561
  %5630 = vmatprep.subr.bf16.mxu0 %v5567
  %5631 = vmatpush1.bf16.msra.mxu0 %v5566
  %5632 = vmatprep.subr.bf16.mxu0 %v5571
  %5633 = vmatpush1.bf16.msra.mxu0 %v5570
  %5634 = vmatprep.subr.bf16.mxu0 %v5575
  %5635 = vmatpush1.bf16.msra.mxu0 %v5574
  %5636 = vmatprep.subr.bf16.mxu0 %v5579
  %5637 = vmatpush1.bf16.msra.mxu0 %v5578
  %5638 = vmatprep.subr.bf16.mxu0 %v5583
  %5639 = vmatpush1.bf16.msra.mxu0 %v5582
  %5640 = vmatprep.subr.bf16.mxu0 %v5587
  %5641 = vmatpush1.bf16.msra.mxu0 %v5586
  %5642 = vmatprep.subr.bf16.mxu0 %v5591
  %5643 = vmatpush1.bf16.msra.mxu0 %v5590
  %5644 = vmatprep.subr.bf16.mxu0 %v5595
  %5645 = vmatpush1.bf16.msra.mxu0 %v5594
  %5646 = vmatprep.subr.bf16.mxu0 0
  %5647 = vmatpush1.bf16.msra.mxu0 0
  %5648 = vmatprep.subr.bf16.mxu0 0
  %5649 = vmatpush1.bf16.msra.mxu0 0
  %5650 = vmatprep.subr.bf16.mxu0 0
  %5651 = vmatpush1.bf16.msra.mxu0 0
  %5652 = vmatprep.subr.bf16.mxu0 0
  %5653 = vmatpush1.bf16.msra.mxu0 0
  %5654 = vmatprep.subr.bf16.mxu0 0
  %5655 = vmatpush1.bf16.msra.mxu0 0
  %5656 = vmatprep.subr.bf16.mxu0 0
  %5657 = vmatpush1.bf16.msra.mxu0 0
  %5658 = vmatprep.subr.bf16.mxu0 0
  %5659 = vmatpush1.bf16.msra.mxu0 0
  %5660 = vmatprep.subr.bf16.mxu0 0
  %5661 = vmatpush1.bf16.msra.mxu0 0
  %5662 = vmatprep.mubr.bf16.mxu0 0
  %5663 = vmatmul.mubr.bf16.gmra.mrb[0].mxu0 %v5437
  %v5664 = vpop.f32.mrb[0].mxu0
  %v5665 = vadd.f32 0.0, %v5664
  %v5666 = vpop.f32.mrb[0].mxu0
  %v5667 = vadd.f32 0.0, %v5666
  %v5668 = vpop.f32.mrb[0].mxu0
  %v5669 = vadd.f32 0.0, %v5668
  %v5670 = vpop.f32.mrb[0].mxu0
  %v5671 = vadd.f32 0.0, %v5670
  %5672 = vdwg.mxu0
  %5673 = vmatprep.subr.bf16.mxu0 %v5569
  %5674 = vmatpush1.bf16.msra.mxu0 %v5568
  %5675 = vmatprep.subr.bf16.mxu0 %v5573
  %5676 = vmatpush1.bf16.msra.mxu0 %v5572
  %5677 = vmatprep.subr.bf16.mxu0 %v5577
  %5678 = vmatpush1.bf16.msra.mxu0 %v5576
  %5679 = vmatprep.subr.bf16.mxu0 %v5581
  %5680 = vmatpush1.bf16.msra.mxu0 %v5580
  %5681 = vmatprep.subr.bf16.mxu0 %v5585
  %5682 = vmatpush1.bf16.msra.mxu0 %v5584
  %5683 = vmatprep.subr.bf16.mxu0 %v5589
  %5684 = vmatpush1.bf16.msra.mxu0 %v5588
  %5685 = vmatprep.subr.bf16.mxu0 %v5593
  %5686 = vmatpush1.bf16.msra.mxu0 %v5592
  %5687 = vmatprep.subr.bf16.mxu0 %v5597
  %5688 = vmatpush1.bf16.msra.mxu0 %v5596
  %5689 = vmatprep.subr.bf16.mxu0 0
  %5690 = vmatpush1.bf16.msra.mxu0 0
  %5691 = vmatprep.subr.bf16.mxu0 0
  %5692 = vmatpush1.bf16.msra.mxu0 0
  %5693 = vmatprep.subr.bf16.mxu0 0
  %5694 = vmatpush1.bf16.msra.mxu0 0
  %5695 = vmatprep.subr.bf16.mxu0 0
  %5696 = vmatpush1.bf16.msra.mxu0 0
  %5697 = vmatprep.subr.bf16.mxu0 0
  %5698 = vmatpush1.bf16.msra.mxu0 0
  %5699 = vmatprep.subr.bf16.mxu0 0
  %5700 = vmatpush1.bf16.msra.mxu0 0
  %5701 = vmatprep.subr.bf16.mxu0 0
  %5702 = vmatpush1.bf16.msra.mxu0 0
  %5703 = vmatprep.subr.bf16.mxu0 0
  %5704 = vmatpush1.bf16.msra.mxu0 0
  %5705 = vmatprep.mubr.bf16.mxu0 0
  %5706 = vmatmul.mubr.bf16.gmra.mrb[0].mxu0 %v5437
  %v5707 = vpop.f32.mrb[0].mxu0
  %v5708 = vadd.f32 0.0, %v5707
  %v5709 = vpop.f32.mrb[0].mxu0
  %v5710 = vadd.f32 0.0, %v5709
  %v5711 = vpop.f32.mrb[0].mxu0
  %v5712 = vadd.f32 0.0, %v5711
  %v5713 = vpop.f32.mrb[0].mxu0
  %v5714 = vadd.f32 0.0, %v5713
  %5715 = vdwg.mxu0
  %v5716 = vadd.f32 %v5427, %v5665
  %v5717 = vadd.f32 %v5428, %v5667
  %v5718 = vadd.f32 %v5429, %v5708
  %v5719 = vadd.f32 %v5430, %v5710
  %v5720 = vadd.f32 %v5431, %v5669
  %v5721 = vadd.f32 %v5432, %v5671
  %v5722 = vadd.f32 %v5433, %v5712
  %v5723 = vadd.f32 %v5434, %v5714
  %v5724 = vld [vmem:[#allocation3] sm:$0xff]
  %v5725 = vld [vmem:[#allocation3 + $0x8] sm:$0xff]
  %v5726 = vxor.u32 %v5716, 2147483648
  %v5727 = vxor.u32 %v5720, 2147483648
  %v5728 = vmul.f32 %v5726, 1.442695
  %v5729 = vpow.pop %v5728
  %v5730 = vmul.f32 %v5727, 1.442695
  %v5731 = vpow.pop %v5730
  %v5732 = vadd.f32 %v5729, 1.0
  %v5733 = vadd.f32 %v5731, 1.0
  %v5734 = vrcp.pop %v5732
  %v5735 = vmul.f32 1.0, %v5734
  %v5736 = vrcp.pop %v5733
  %v5737 = vmul.f32 1.0, %v5736
  %v5738 = vxor.u32 %v5717, 2147483648
  %v5739 = vxor.u32 %v5721, 2147483648
  %v5740 = vmul.f32 %v5738, 1.442695
  %v5741 = vpow.pop %v5740
  %v5742 = vmul.f32 %v5739, 1.442695
  %v5743 = vpow.pop %v5742
  %v5744 = vadd.f32 %v5741, 1.0
  %v5745 = vadd.f32 %v5743, 1.0
  %v5746 = vrcp.pop %v5744
  %v5747 = vmul.f32 1.0, %v5746
  %v5748 = vrcp.pop %v5745
  %v5749 = vmul.f32 1.0, %v5748
  %v5750 = vtanh.pop %v5718
  %v5751 = vtanh.pop %v5722
  %v5752 = vxor.u32 %v5719, 2147483648
  %v5753 = vxor.u32 %v5723, 2147483648
  %v5754 = vmul.f32 %v5752, 1.442695
  %v5755 = vpow.pop %v5754
  %v5756 = vmul.f32 %v5753, 1.442695
  %v5757 = vpow.pop %v5756
  %v5758 = vadd.f32 %v5755, 1.0
  %v5759 = vadd.f32 %v5757, 1.0
  %v5760 = vrcp.pop %v5758
  %v5761 = vmul.f32 1.0, %v5760
  %v5762 = vrcp.pop %v5759
  %v5763 = vmul.f32 1.0, %v5762
  %v5764 = vmul.f32 %v5747, %v5724
  %v5765 = vmul.f32 %v5749, %v5725
  %v5766 = vmul.f32 %v5735, %v5750
  %v5767 = vmul.f32 %v5737, %v5751
  %v5768 = vadd.f32 %v5764, %v5766
  %v5769 = vadd.f32 %v5765, %v5767
  %v5770 = vtanh.pop %v5768
  %v5771 = vtanh.pop %v5769
  %v5772 = vmul.f32 %v5761, %v5770
  %v5773 = vmul.f32 %v5763, %v5771
  %5774 = vst [vmem:[#allocation2] sm:$0xff] %v5772
  %5775 = vst [vmem:[#allocation2 + $0x8] sm:$0xff] %v5773
  %5776 = vst [vmem:[#allocation3] sm:$0xff] %v5768
  %5777 = vst [vmem:[#allocation3 + $0x8] sm:$0xff] %v5769
  %v5778 = vpack.c.bf16 %v5773, %v5772
  %v5779 = vld [vmem:[%s408] sm:$0xff]
  %v5780 = vld [vmem:[%s408 + $0x8] sm:$0xff]
  %v5781 = vpack.c.bf16 %v5780, %v5779
  %v5782 = vld [vmem:[%s2] sm:$0xff]
  %v5783 = vld [vmem:[%s2 + $0x8] sm:$0xff]
  %v5784 = vld [vmem:[%s2 + $0x10] sm:$0xff]
  %v5785 = vld [vmem:[%s2 + $0x18] sm:$0xff]
  %v5786 = vld [vmem:[%s2 + $0x20] sm:$0xff]
  %v5787 = vld [vmem:[%s2 + $0x28] sm:$0xff]
  %v5788 = vld [vmem:[%s2 + $0x30] sm:$0xff]
  %v5789 = vld [vmem:[%s2 + $0x38] sm:$0xff]
  %v5790 = vld [vmem:[%s2 + $0x40] sm:$0xff]
  %v5791 = vld [vmem:[%s2 + $0x48] sm:$0xff]
  %v5792 = vld [vmem:[%s2 + $0x50] sm:$0xff]
  %v5793 = vld [vmem:[%s2 + $0x58] sm:$0xff]
  %v5794 = vld [vmem:[%s2 + $0x60] sm:$0xff]
  %v5795 = vld [vmem:[%s2 + $0x68] sm:$0xff]
  %v5796 = vld [vmem:[%s2 + $0x70] sm:$0xff]
  %v5797 = vld [vmem:[%s2 + $0x78] sm:$0xff]
  %v5798 = vld [vmem:[%s2 + $0x80] sm:$0xff]
  %v5799 = vld [vmem:[%s2 + $0x88] sm:$0xff]
  %v5800 = vld [vmem:[%s2 + $0x90] sm:$0xff]
  %v5801 = vld [vmem:[%s2 + $0x98] sm:$0xff]
  %v5802 = vld [vmem:[%s2 + $0xa0] sm:$0xff]
  %v5803 = vld [vmem:[%s2 + $0xa8] sm:$0xff]
  %v5804 = vld [vmem:[%s2 + $0xb0] sm:$0xff]
  %v5805 = vld [vmem:[%s2 + $0xb8] sm:$0xff]
  %v5806 = vld [vmem:[%s2 + $0xc0] sm:$0xff]
  %v5807 = vld [vmem:[%s2 + $0xc8] sm:$0xff]
  %v5808 = vld [vmem:[%s2 + $0xd0] sm:$0xff]
  %v5809 = vld [vmem:[%s2 + $0xd8] sm:$0xff]
  %v5810 = vld [vmem:[%s2 + $0xe0] sm:$0xff]
  %v5811 = vld [vmem:[%s2 + $0xe8] sm:$0xff]
  %v5812 = vld [vmem:[%s2 + $0xf0] sm:$0xff]
  %v5813 = vld [vmem:[%s2 + $0xf8] sm:$0xff]
  %v5814 = vld [vmem:[%s2 + $0x100] sm:$0xff]
  %v5815 = vld [vmem:[%s2 + $0x108] sm:$0xff]
  %v5816 = vld [vmem:[%s2 + $0x110] sm:$0xff]
  %v5817 = vld [vmem:[%s2 + $0x118] sm:$0xff]
  %v5818 = vld [vmem:[%s2 + $0x120] sm:$0xff]
  %v5819 = vld [vmem:[%s2 + $0x128] sm:$0xff]
  %v5820 = vld [vmem:[%s2 + $0x130] sm:$0xff]
  %v5821 = vld [vmem:[%s2 + $0x138] sm:$0xff]
  %v5822 = vld [vmem:[%s2 + $0x140] sm:$0xff]
  %v5823 = vld [vmem:[%s2 + $0x148] sm:$0xff]
  %v5824 = vld [vmem:[%s2 + $0x150] sm:$0xff]
  %v5825 = vld [vmem:[%s2 + $0x158] sm:$0xff]
  %v5826 = vld [vmem:[%s2 + $0x160] sm:$0xff]
  %v5827 = vld [vmem:[%s2 + $0x168] sm:$0xff]
  %v5828 = vld [vmem:[%s2 + $0x170] sm:$0xff]
  %v5829 = vld [vmem:[%s2 + $0x178] sm:$0xff]
  %v5830 = vld [vmem:[%s2 + $0x180] sm:$0xff]
  %v5831 = vld [vmem:[%s2 + $0x188] sm:$0xff]
  %v5832 = vld [vmem:[%s2 + $0x190] sm:$0xff]
  %v5833 = vld [vmem:[%s2 + $0x198] sm:$0xff]
  %v5834 = vld [vmem:[%s2 + $0x1a0] sm:$0xff]
  %v5835 = vld [vmem:[%s2 + $0x1a8] sm:$0xff]
  %v5836 = vld [vmem:[%s2 + $0x1b0] sm:$0xff]
  %v5837 = vld [vmem:[%s2 + $0x1b8] sm:$0xff]
  %v5838 = vld [vmem:[%s2 + $0x1c0] sm:$0xff]
  %v5839 = vld [vmem:[%s2 + $0x1c8] sm:$0xff]
  %v5840 = vld [vmem:[%s2 + $0x1d0] sm:$0xff]
  %v5841 = vld [vmem:[%s2 + $0x1d8] sm:$0xff]
  %v5842 = vld [vmem:[%s2 + $0x1e0] sm:$0xff]
  %v5843 = vld [vmem:[%s2 + $0x1e8] sm:$0xff]
  %v5844 = vld [vmem:[%s2 + $0x1f0] sm:$0xff]
  %v5845 = vld [vmem:[%s2 + $0x1f8] sm:$0xff]
  %v5910 = vunpack.c.l.b16 %v5782
  %v5911 = vunpack.c.h.b16 %v5782
  %v5912 = vunpack.c.l.b16 %v5783
  %v5913 = vunpack.c.h.b16 %v5783
  %v5914 = vunpack.c.l.b16 %v5784
  %v5915 = vunpack.c.h.b16 %v5784
  %v5916 = vunpack.c.l.b16 %v5785
  %v5917 = vunpack.c.h.b16 %v5785
  %v5918 = vunpack.c.l.b16 %v5786
  %v5919 = vunpack.c.h.b16 %v5786
  %v5920 = vunpack.c.l.b16 %v5787
  %v5921 = vunpack.c.h.b16 %v5787
  %v5922 = vunpack.c.l.b16 %v5788
  %v5923 = vunpack.c.h.b16 %v5788
  %v5924 = vunpack.c.l.b16 %v5789
  %v5925 = vunpack.c.h.b16 %v5789
  %v5926 = vunpack.c.l.b16 %v5790
  %v5927 = vunpack.c.h.b16 %v5790
  %v5928 = vunpack.c.l.b16 %v5791
  %v5929 = vunpack.c.h.b16 %v5791
  %v5930 = vunpack.c.l.b16 %v5792
  %v5931 = vunpack.c.h.b16 %v5792
  %v5932 = vunpack.c.l.b16 %v5793
  %v5933 = vunpack.c.h.b16 %v5793
  %v5934 = vunpack.c.l.b16 %v5794
  %v5935 = vunpack.c.h.b16 %v5794
  %v5936 = vunpack.c.l.b16 %v5795
  %v5937 = vunpack.c.h.b16 %v5795
  %v5938 = vunpack.c.l.b16 %v5796
  %v5939 = vunpack.c.h.b16 %v5796
  %v5940 = vunpack.c.l.b16 %v5797
  %v5941 = vunpack.c.h.b16 %v5797
  %v5942 = vunpack.c.l.b16 %v5798
  %v5943 = vunpack.c.h.b16 %v5798
  %v5944 = vunpack.c.l.b16 %v5799
  %v5945 = vunpack.c.h.b16 %v5799
  %v5946 = vunpack.c.l.b16 %v5800
  %v5947 = vunpack.c.h.b16 %v5800
  %v5948 = vunpack.c.l.b16 %v5801
  %v5949 = vunpack.c.h.b16 %v5801
  %v5950 = vunpack.c.l.b16 %v5802
  %v5951 = vunpack.c.h.b16 %v5802
  %v5952 = vunpack.c.l.b16 %v5803
  %v5953 = vunpack.c.h.b16 %v5803
  %v5954 = vunpack.c.l.b16 %v5804
  %v5955 = vunpack.c.h.b16 %v5804
  %v5956 = vunpack.c.l.b16 %v5805
  %v5957 = vunpack.c.h.b16 %v5805
  %v5958 = vunpack.c.l.b16 %v5806
  %v5959 = vunpack.c.h.b16 %v5806
  %v5960 = vunpack.c.l.b16 %v5807
  %v5961 = vunpack.c.h.b16 %v5807
  %v5962 = vunpack.c.l.b16 %v5808
  %v5963 = vunpack.c.h.b16 %v5808
  %v5964 = vunpack.c.l.b16 %v5809
  %v5965 = vunpack.c.h.b16 %v5809
  %v5966 = vunpack.c.l.b16 %v5810
  %v5967 = vunpack.c.h.b16 %v5810
  %v5968 = vunpack.c.l.b16 %v5811
  %v5969 = vunpack.c.h.b16 %v5811
  %v5970 = vunpack.c.l.b16 %v5812
  %v5971 = vunpack.c.h.b16 %v5812
  %v5972 = vunpack.c.l.b16 %v5813
  %v5973 = vunpack.c.h.b16 %v5813
  %v5974 = vunpack.c.l.b16 %v5814
  %v5975 = vunpack.c.h.b16 %v5814
  %v5976 = vunpack.c.l.b16 %v5815
  %v5977 = vunpack.c.h.b16 %v5815
  %v5978 = vunpack.c.l.b16 %v5816
  %v5979 = vunpack.c.h.b16 %v5816
  %v5980 = vunpack.c.l.b16 %v5817
  %v5981 = vunpack.c.h.b16 %v5817
  %v5982 = vunpack.c.l.b16 %v5818
  %v5983 = vunpack.c.h.b16 %v5818
  %v5984 = vunpack.c.l.b16 %v5819
  %v5985 = vunpack.c.h.b16 %v5819
  %v5986 = vunpack.c.l.b16 %v5820
  %v5987 = vunpack.c.h.b16 %v5820
  %v5988 = vunpack.c.l.b16 %v5821
  %v5989 = vunpack.c.h.b16 %v5821
  %v5990 = vunpack.c.l.b16 %v5822
  %v5991 = vunpack.c.h.b16 %v5822
  %v5992 = vunpack.c.l.b16 %v5823
  %v5993 = vunpack.c.h.b16 %v5823
  %v5994 = vunpack.c.l.b16 %v5824
  %v5995 = vunpack.c.h.b16 %v5824
  %v5996 = vunpack.c.l.b16 %v5825
  %v5997 = vunpack.c.h.b16 %v5825
  %v5998 = vunpack.c.l.b16 %v5826
  %v5999 = vunpack.c.h.b16 %v5826
  %v6000 = vunpack.c.l.b16 %v5827
  %v6001 = vunpack.c.h.b16 %v5827
  %v6002 = vunpack.c.l.b16 %v5828
  %v6003 = vunpack.c.h.b16 %v5828
  %v6004 = vunpack.c.l.b16 %v5829
  %v6005 = vunpack.c.h.b16 %v5829
  %v6006 = vunpack.c.l.b16 %v5830
  %v6007 = vunpack.c.h.b16 %v5830
  %v6008 = vunpack.c.l.b16 %v5831
  %v6009 = vunpack.c.h.b16 %v5831
  %v6010 = vunpack.c.l.b16 %v5832
  %v6011 = vunpack.c.h.b16 %v5832
  %v6012 = vunpack.c.l.b16 %v5833
  %v6013 = vunpack.c.h.b16 %v5833
  %v6014 = vunpack.c.l.b16 %v5834
  %v6015 = vunpack.c.h.b16 %v5834
  %v6016 = vunpack.c.l.b16 %v5835
  %v6017 = vunpack.c.h.b16 %v5835
  %v6018 = vunpack.c.l.b16 %v5836
  %v6019 = vunpack.c.h.b16 %v5836
  %v6020 = vunpack.c.l.b16 %v5837
  %v6021 = vunpack.c.h.b16 %v5837
  %v6022 = vunpack.c.l.b16 %v5838
  %v6023 = vunpack.c.h.b16 %v5838
  %v6024 = vunpack.c.l.b16 %v5839
  %v6025 = vunpack.c.h.b16 %v5839
  %v6026 = vunpack.c.l.b16 %v5840
  %v6027 = vunpack.c.h.b16 %v5840
  %v6028 = vunpack.c.l.b16 %v5841
  %v6029 = vunpack.c.h.b16 %v5841
  %v6030 = vunpack.c.l.b16 %v5842
  %v6031 = vunpack.c.h.b16 %v5842
  %v6032 = vunpack.c.l.b16 %v5843
  %v6033 = vunpack.c.h.b16 %v5843
  %v6034 = vunpack.c.l.b16 %v5844
  %v6035 = vunpack.c.h.b16 %v5844
  %v6036 = vunpack.c.l.b16 %v5845
  %v6037 = vunpack.c.h.b16 %v5845
  %v6038 = vpack.c.b16 %v5914, %v5910
  %v6039 = vpack.c.b16 %v5915, %v5911
  %v6040 = vpack.c.b16 %v5916, %v5912
  %v6041 = vpack.c.b16 %v5917, %v5913
  %v6042 = vpack.c.b16 %v5922, %v5918
  %v6043 = vpack.c.b16 %v5923, %v5919
  %v6044 = vpack.c.b16 %v5924, %v5920
  %v6045 = vpack.c.b16 %v5925, %v5921
  %v6046 = vpack.c.b16 %v5930, %v5926
  %v6047 = vpack.c.b16 %v5931, %v5927
  %v6048 = vpack.c.b16 %v5932, %v5928
  %v6049 = vpack.c.b16 %v5933, %v5929
  %v6050 = vpack.c.b16 %v5938, %v5934
  %v6051 = vpack.c.b16 %v5939, %v5935
  %v6052 = vpack.c.b16 %v5940, %v5936
  %v6053 = vpack.c.b16 %v5941, %v5937
  %v6054 = vpack.c.b16 %v5946, %v5942
  %v6055 = vpack.c.b16 %v5947, %v5943
  %v6056 = vpack.c.b16 %v5948, %v5944
  %v6057 = vpack.c.b16 %v5949, %v5945
  %v6058 = vpack.c.b16 %v5954, %v5950
  %v6059 = vpack.c.b16 %v5955, %v5951
  %v6060 = vpack.c.b16 %v5956, %v5952
  %v6061 = vpack.c.b16 %v5957, %v5953
  %v6062 = vpack.c.b16 %v5962, %v5958
  %v6063 = vpack.c.b16 %v5963, %v5959
  %v6064 = vpack.c.b16 %v5964, %v5960
  %v6065 = vpack.c.b16 %v5965, %v5961
  %v6066 = vpack.c.b16 %v5970, %v5966
  %v6067 = vpack.c.b16 %v5971, %v5967
  %v6068 = vpack.c.b16 %v5972, %v5968
  %v6069 = vpack.c.b16 %v5973, %v5969
  %v6070 = vpack.c.b16 %v5978, %v5974
  %v6071 = vpack.c.b16 %v5979, %v5975
  %v6072 = vpack.c.b16 %v5980, %v5976
  %v6073 = vpack.c.b16 %v5981, %v5977
  %v6074 = vpack.c.b16 %v5986, %v5982
  %v6075 = vpack.c.b16 %v5987, %v5983
  %v6076 = vpack.c.b16 %v5988, %v5984
  %v6077 = vpack.c.b16 %v5989, %v5985
  %v6078 = vpack.c.b16 %v5994, %v5990
  %v6079 = vpack.c.b16 %v5995, %v5991
  %v6080 = vpack.c.b16 %v5996, %v5992
  %v6081 = vpack.c.b16 %v5997, %v5993
  %v6082 = vpack.c.b16 %v6002, %v5998
  %v6083 = vpack.c.b16 %v6003, %v5999
  %v6084 = vpack.c.b16 %v6004, %v6000
  %v6085 = vpack.c.b16 %v6005, %v6001
  %v6086 = vpack.c.b16 %v6010, %v6006
  %v6087 = vpack.c.b16 %v6011, %v6007
  %v6088 = vpack.c.b16 %v6012, %v6008
  %v6089 = vpack.c.b16 %v6013, %v6009
  %v6090 = vpack.c.b16 %v6018, %v6014
  %v6091 = vpack.c.b16 %v6019, %v6015
  %v6092 = vpack.c.b16 %v6020, %v6016
  %v6093 = vpack.c.b16 %v6021, %v6017
  %v6094 = vpack.c.b16 %v6026, %v6022
  %v6095 = vpack.c.b16 %v6027, %v6023
  %v6096 = vpack.c.b16 %v6028, %v6024
  %v6097 = vpack.c.b16 %v6029, %v6025
  %v6098 = vpack.c.b16 %v6034, %v6030
  %v6099 = vpack.c.b16 %v6035, %v6031
  %v6100 = vpack.c.b16 %v6036, %v6032
  %v6101 = vpack.c.b16 %v6037, %v6033
  %6166 = vmatprep.subr.bf16.mxu0 %v6039
  %6167 = vmatpush1.bf16.msra.mxu0 %v6038
  %6168 = vmatprep.subr.bf16.mxu0 %v6043
  %6169 = vmatpush1.bf16.msra.mxu0 %v6042
  %6170 = vmatprep.subr.bf16.mxu0 %v6047
  %6171 = vmatpush1.bf16.msra.mxu0 %v6046
  %6172 = vmatprep.subr.bf16.mxu0 %v6051
  %6173 = vmatpush1.bf16.msra.mxu0 %v6050
  %6174 = vmatprep.subr.bf16.mxu0 %v6055
  %6175 = vmatpush1.bf16.msra.mxu0 %v6054
  %6176 = vmatprep.subr.bf16.mxu0 %v6059
  %6177 = vmatpush1.bf16.msra.mxu0 %v6058
  %6178 = vmatprep.subr.bf16.mxu0 %v6063
  %6179 = vmatpush1.bf16.msra.mxu0 %v6062
  %6180 = vmatprep.subr.bf16.mxu0 %v6067
  %6181 = vmatpush1.bf16.msra.mxu0 %v6066
  %6182 = vmatprep.subr.bf16.mxu0 %v6071
  %6183 = vmatpush1.bf16.msra.mxu0 %v6070
  %6184 = vmatprep.subr.bf16.mxu0 %v6075
  %6185 = vmatpush1.bf16.msra.mxu0 %v6074
  %6186 = vmatprep.subr.bf16.mxu0 %v6079
  %6187 = vmatpush1.bf16.msra.mxu0 %v6078
  %6188 = vmatprep.subr.bf16.mxu0 %v6083
  %6189 = vmatpush1.bf16.msra.mxu0 %v6082
  %6190 = vmatprep.subr.bf16.mxu0 %v6087
  %6191 = vmatpush1.bf16.msra.mxu0 %v6086
  %6192 = vmatprep.subr.bf16.mxu0 %v6091
  %6193 = vmatpush1.bf16.msra.mxu0 %v6090
  %6194 = vmatprep.subr.bf16.mxu0 %v6095
  %6195 = vmatpush1.bf16.msra.mxu0 %v6094
  %6196 = vmatprep.subr.bf16.mxu0 %v6099
  %6197 = vmatpush1.bf16.msra.mxu0 %v6098
  %6198 = vmatprep.mubr.bf16.mxu0 %v5781
  %6199 = vmatmul.mubr.bf16.gmra.mrb[0].mxu0 %v5778
  %v6200 = vpop.f32.mrb[0].mxu0
  %v6201 = vadd.f32 %v35, %v6200
  %v6202 = vpop.f32.mrb[0].mxu0
  %v6203 = vadd.f32 %v39, %v6202
  %v6204 = vpop.f32.mrb[0].mxu0
  %v6205 = vadd.f32 %v35, %v6204
  %v6206 = vpop.f32.mrb[0].mxu0
  %v6207 = vadd.f32 %v39, %v6206
  %6208 = vdwg.mxu0
  %6209 = vmatprep.subr.bf16.mxu0 %v6041
  %6210 = vmatpush1.bf16.msra.mxu0 %v6040
  %6211 = vmatprep.subr.bf16.mxu0 %v6045
  %6212 = vmatpush1.bf16.msra.mxu0 %v6044
  %6213 = vmatprep.subr.bf16.mxu0 %v6049
  %6214 = vmatpush1.bf16.msra.mxu0 %v6048
  %6215 = vmatprep.subr.bf16.mxu0 %v6053
  %6216 = vmatpush1.bf16.msra.mxu0 %v6052
  %6217 = vmatprep.subr.bf16.mxu0 %v6057
  %6218 = vmatpush1.bf16.msra.mxu0 %v6056
  %6219 = vmatprep.subr.bf16.mxu0 %v6061
  %6220 = vmatpush1.bf16.msra.mxu0 %v6060
  %6221 = vmatprep.subr.bf16.mxu0 %v6065
  %6222 = vmatpush1.bf16.msra.mxu0 %v6064
  %6223 = vmatprep.subr.bf16.mxu0 %v6069
  %6224 = vmatpush1.bf16.msra.mxu0 %v6068
  %6225 = vmatprep.subr.bf16.mxu0 %v6073
  %6226 = vmatpush1.bf16.msra.mxu0 %v6072
  %6227 = vmatprep.subr.bf16.mxu0 %v6077
  %6228 = vmatpush1.bf16.msra.mxu0 %v6076
  %6229 = vmatprep.subr.bf16.mxu0 %v6081
  %6230 = vmatpush1.bf16.msra.mxu0 %v6080
  %6231 = vmatprep.subr.bf16.mxu0 %v6085
  %6232 = vmatpush1.bf16.msra.mxu0 %v6084
  %6233 = vmatprep.subr.bf16.mxu0 %v6089
  %6234 = vmatpush1.bf16.msra.mxu0 %v6088
  %6235 = vmatprep.subr.bf16.mxu0 %v6093
  %6236 = vmatpush1.bf16.msra.mxu0 %v6092
  %6237 = vmatprep.subr.bf16.mxu0 %v6097
  %6238 = vmatpush1.bf16.msra.mxu0 %v6096
  %6239 = vmatprep.subr.bf16.mxu0 %v6101
  %6240 = vmatpush1.bf16.msra.mxu0 %v6100
  %6241 = vmatprep.mubr.bf16.mxu0 %v5781
  %6242 = vmatmul.mubr.bf16.gmra.mrb[0].mxu0 %v5778
  %v6243 = vpop.f32.mrb[0].mxu0
  %v6244 = vadd.f32 %v43, %v6243
  %v6245 = vpop.f32.mrb[0].mxu0
  %v6246 = vadd.f32 %v47, %v6245
  %v6247 = vpop.f32.mrb[0].mxu0
  %v6248 = vadd.f32 %v43, %v6247
  %v6249 = vpop.f32.mrb[0].mxu0
  %v6250 = vadd.f32 %v47, %v6249
  %6251 = vdwg.mxu0
  %v6252 = vld [vmem:[%s882] sm:$0xff]
  %v6253 = vld [vmem:[%s882 + $0x8] sm:$0xff]
  %v6254 = vxor.u32 %v6201, 2147483648
  %v6255 = vxor.u32 %v6205, 2147483648
  %v6256 = vmul.f32 %v6254, 1.442695
  %v6257 = vpow.pop %v6256
  %v6258 = vmul.f32 %v6255, 1.442695
  %v6259 = vpow.pop %v6258
  %v6260 = vadd.f32 %v6257, 1.0
  %v6261 = vadd.f32 %v6259, 1.0
  %v6262 = vrcp.pop %v6260
  %v6263 = vmul.f32 1.0, %v6262
  %v6264 = vrcp.pop %v6261
  %v6265 = vmul.f32 1.0, %v6264
  %v6266 = vxor.u32 %v6203, 2147483648
  %v6267 = vxor.u32 %v6207, 2147483648
  %v6268 = vmul.f32 %v6266, 1.442695
  %v6269 = vpow.pop %v6268
  %v6270 = vmul.f32 %v6267, 1.442695
  %v6271 = vpow.pop %v6270
  %v6272 = vadd.f32 %v6269, 1.0
  %v6273 = vadd.f32 %v6271, 1.0
  %v6274 = vrcp.pop %v6272
  %v6275 = vmul.f32 1.0, %v6274
  %v6276 = vrcp.pop %v6273
  %v6277 = vmul.f32 1.0, %v6276
  %v6278 = vtanh.pop %v6244
  %v6279 = vtanh.pop %v6248
  %v6280 = vxor.u32 %v6246, 2147483648
  %v6281 = vxor.u32 %v6250, 2147483648
  %v6282 = vmul.f32 %v6280, 1.442695
  %v6283 = vpow.pop %v6282
  %v6284 = vmul.f32 %v6281, 1.442695
  %v6285 = vpow.pop %v6284
  %v6286 = vadd.f32 %v6283, 1.0
  %v6287 = vadd.f32 %v6285, 1.0
  %v6288 = vrcp.pop %v6286
  %v6289 = vmul.f32 1.0, %v6288
  %v6290 = vrcp.pop %v6287
  %v6291 = vmul.f32 1.0, %v6290
  %v6292 = vmul.f32 %v6275, %v6252
  %v6293 = vmul.f32 %v6277, %v6253
  %v6294 = vmul.f32 %v6263, %v6278
  %v6295 = vmul.f32 %v6265, %v6279
  %v6296 = vadd.f32 %v6292, %v6294
  %v6297 = vadd.f32 %v6293, %v6295
  %v6298 = vtanh.pop %v6296
  %v6299 = vtanh.pop %v6297
  %v6300 = vmul.f32 %v6289, %v6298
  %v6301 = vmul.f32 %v6291, %v6299
  %6302 = vst [vmem:[%s408] sm:$0xff] %v6300
  %6303 = vst [vmem:[%s408 + $0x8] sm:$0xff] %v6301
  %6304 = vst [vmem:[%s882] sm:$0xff] %v6296
  %6305 = vst [vmem:[%s882 + $0x8] sm:$0xff] %v6297
  %v6306 = vpack.c.bf16 %v6301, %v6300
  %v6308 = vunpack.c.l.b16 %v6306
  %v6309 = vunpack.c.h.b16 %v6306
  %v6310 = vpack.c.b16 %v6308, %v6308
  %v6311 = vpack.c.b16 %v6309, %v6309
  %s6314 = scalar_lea.vmem %s4, 48
  %6315 = vst [vmem:[%s6314] sm:$0xf] %v6310
  %6316 = vst [vmem:[%s6314 + $0x4] sm:$0xf] %v6311
  %s6317 = scalar_lea.vmem %s0, 224
  %v6318 = vld [vmem:[%s6317] sm:$0xff]
  %v6319 = vld [vmem:[%s6317 + $0x8] sm:$0xff]
  %v6320 = vld [vmem:[%s6317 + $0x10] sm:$0xff]
  %v6321 = vld [vmem:[%s6317 + $0x18] sm:$0xff]
  %v6322 = vunpack.c.l.bf16 %v6318
  %v6323 = vunpack.c.h.bf16 %v6318
  %v6324 = vunpack.c.l.bf16 %v6319
  %v6325 = vunpack.c.h.bf16 %v6319
  %v6326 = vunpack.c.l.bf16 %v6320
  %v6327 = vunpack.c.h.bf16 %v6320
  %v6328 = vunpack.c.l.bf16 %v6321
  %v6329 = vunpack.c.h.bf16 %v6321
  %v6330 = vld [vmem:[#allocation2] sm:$0xff]
  %v6331 = vld [vmem:[#allocation2 + $0x8] sm:$0xff]
  %v6332 = vpack.c.bf16 %v6331, %v6330
  %v6333 = vld [vmem:[%s1] sm:$0xff]
  %v6334 = vld [vmem:[%s1 + $0x8] sm:$0xff]
  %v6335 = vld [vmem:[%s1 + $0x10] sm:$0xff]
  %v6336 = vld [vmem:[%s1 + $0x18] sm:$0xff]
  %v6337 = vld [vmem:[%s1 + $0x20] sm:$0xff]
  %v6338 = vld [vmem:[%s1 + $0x28] sm:$0xff]
  %v6339 = vld [vmem:[%s1 + $0x30] sm:$0xff]
  %v6340 = vld [vmem:[%s1 + $0x38] sm:$0xff]
  %v6341 = vld [vmem:[%s1 + $0x40] sm:$0xff]
  %v6342 = vld [vmem:[%s1 + $0x48] sm:$0xff]
  %v6343 = vld [vmem:[%s1 + $0x50] sm:$0xff]
  %v6344 = vld [vmem:[%s1 + $0x58] sm:$0xff]
  %v6345 = vld [vmem:[%s1 + $0x60] sm:$0xff]
  %v6346 = vld [vmem:[%s1 + $0x68] sm:$0xff]
  %v6347 = vld [vmem:[%s1 + $0x70] sm:$0xff]
  %v6348 = vld [vmem:[%s1 + $0x78] sm:$0xff]
  %v6349 = vld [vmem:[%s1 + $0x80] sm:$0xff]
  %v6350 = vld [vmem:[%s1 + $0x88] sm:$0xff]
  %v6351 = vld [vmem:[%s1 + $0x90] sm:$0xff]
  %v6352 = vld [vmem:[%s1 + $0x98] sm:$0xff]
  %v6353 = vld [vmem:[%s1 + $0xa0] sm:$0xff]
  %v6354 = vld [vmem:[%s1 + $0xa8] sm:$0xff]
  %v6355 = vld [vmem:[%s1 + $0xb0] sm:$0xff]
  %v6356 = vld [vmem:[%s1 + $0xb8] sm:$0xff]
  %v6357 = vld [vmem:[%s1 + $0xc0] sm:$0xff]
  %v6358 = vld [vmem:[%s1 + $0xc8] sm:$0xff]
  %v6359 = vld [vmem:[%s1 + $0xd0] sm:$0xff]
  %v6360 = vld [vmem:[%s1 + $0xd8] sm:$0xff]
  %v6361 = vld [vmem:[%s1 + $0xe0] sm:$0xff]
  %v6362 = vld [vmem:[%s1 + $0xe8] sm:$0xff]
  %v6363 = vld [vmem:[%s1 + $0xf0] sm:$0xff]
  %v6364 = vld [vmem:[%s1 + $0xf8] sm:$0xff]
  %v6397 = vunpack.c.l.b16 %v6333
  %v6398 = vunpack.c.h.b16 %v6333
  %v6399 = vunpack.c.l.b16 %v6334
  %v6400 = vunpack.c.h.b16 %v6334
  %v6401 = vunpack.c.l.b16 %v6335
  %v6402 = vunpack.c.h.b16 %v6335
  %v6403 = vunpack.c.l.b16 %v6336
  %v6404 = vunpack.c.h.b16 %v6336
  %v6405 = vunpack.c.l.b16 %v6337
  %v6406 = vunpack.c.h.b16 %v6337
  %v6407 = vunpack.c.l.b16 %v6338
  %v6408 = vunpack.c.h.b16 %v6338
  %v6409 = vunpack.c.l.b16 %v6339
  %v6410 = vunpack.c.h.b16 %v6339
  %v6411 = vunpack.c.l.b16 %v6340
  %v6412 = vunpack.c.h.b16 %v6340
  %v6413 = vunpack.c.l.b16 %v6341
  %v6414 = vunpack.c.h.b16 %v6341
  %v6415 = vunpack.c.l.b16 %v6342
  %v6416 = vunpack.c.h.b16 %v6342
  %v6417 = vunpack.c.l.b16 %v6343
  %v6418 = vunpack.c.h.b16 %v6343
  %v6419 = vunpack.c.l.b16 %v6344
  %v6420 = vunpack.c.h.b16 %v6344
  %v6421 = vunpack.c.l.b16 %v6345
  %v6422 = vunpack.c.h.b16 %v6345
  %v6423 = vunpack.c.l.b16 %v6346
  %v6424 = vunpack.c.h.b16 %v6346
  %v6425 = vunpack.c.l.b16 %v6347
  %v6426 = vunpack.c.h.b16 %v6347
  %v6427 = vunpack.c.l.b16 %v6348
  %v6428 = vunpack.c.h.b16 %v6348
  %v6429 = vunpack.c.l.b16 %v6349
  %v6430 = vunpack.c.h.b16 %v6349
  %v6431 = vunpack.c.l.b16 %v6350
  %v6432 = vunpack.c.h.b16 %v6350
  %v6433 = vunpack.c.l.b16 %v6351
  %v6434 = vunpack.c.h.b16 %v6351
  %v6435 = vunpack.c.l.b16 %v6352
  %v6436 = vunpack.c.h.b16 %v6352
  %v6437 = vunpack.c.l.b16 %v6353
  %v6438 = vunpack.c.h.b16 %v6353
  %v6439 = vunpack.c.l.b16 %v6354
  %v6440 = vunpack.c.h.b16 %v6354
  %v6441 = vunpack.c.l.b16 %v6355
  %v6442 = vunpack.c.h.b16 %v6355
  %v6443 = vunpack.c.l.b16 %v6356
  %v6444 = vunpack.c.h.b16 %v6356
  %v6445 = vunpack.c.l.b16 %v6357
  %v6446 = vunpack.c.h.b16 %v6357
  %v6447 = vunpack.c.l.b16 %v6358
  %v6448 = vunpack.c.h.b16 %v6358
  %v6449 = vunpack.c.l.b16 %v6359
  %v6450 = vunpack.c.h.b16 %v6359
  %v6451 = vunpack.c.l.b16 %v6360
  %v6452 = vunpack.c.h.b16 %v6360
  %v6453 = vunpack.c.l.b16 %v6361
  %v6454 = vunpack.c.h.b16 %v6361
  %v6455 = vunpack.c.l.b16 %v6362
  %v6456 = vunpack.c.h.b16 %v6362
  %v6457 = vunpack.c.l.b16 %v6363
  %v6458 = vunpack.c.h.b16 %v6363
  %v6459 = vunpack.c.l.b16 %v6364
  %v6460 = vunpack.c.h.b16 %v6364
  %v6461 = vpack.c.b16 %v6401, %v6397
  %v6462 = vpack.c.b16 %v6402, %v6398
  %v6463 = vpack.c.b16 %v6403, %v6399
  %v6464 = vpack.c.b16 %v6404, %v6400
  %v6465 = vpack.c.b16 %v6409, %v6405
  %v6466 = vpack.c.b16 %v6410, %v6406
  %v6467 = vpack.c.b16 %v6411, %v6407
  %v6468 = vpack.c.b16 %v6412, %v6408
  %v6469 = vpack.c.b16 %v6417, %v6413
  %v6470 = vpack.c.b16 %v6418, %v6414
  %v6471 = vpack.c.b16 %v6419, %v6415
  %v6472 = vpack.c.b16 %v6420, %v6416
  %v6473 = vpack.c.b16 %v6425, %v6421
  %v6474 = vpack.c.b16 %v6426, %v6422
  %v6475 = vpack.c.b16 %v6427, %v6423
  %v6476 = vpack.c.b16 %v6428, %v6424
  %v6477 = vpack.c.b16 %v6433, %v6429
  %v6478 = vpack.c.b16 %v6434, %v6430
  %v6479 = vpack.c.b16 %v6435, %v6431
  %v6480 = vpack.c.b16 %v6436, %v6432
  %v6481 = vpack.c.b16 %v6441, %v6437
  %v6482 = vpack.c.b16 %v6442, %v6438
  %v6483 = vpack.c.b16 %v6443, %v6439
  %v6484 = vpack.c.b16 %v6444, %v6440
  %v6485 = vpack.c.b16 %v6449, %v6445
  %v6486 = vpack.c.b16 %v6450, %v6446
  %v6487 = vpack.c.b16 %v6451, %v6447
  %v6488 = vpack.c.b16 %v6452, %v6448
  %v6489 = vpack.c.b16 %v6457, %v6453
  %v6490 = vpack.c.b16 %v6458, %v6454
  %v6491 = vpack.c.b16 %v6459, %v6455
  %v6492 = vpack.c.b16 %v6460, %v6456
  %6525 = vmatprep.subr.bf16.mxu0 %v6462
  %6526 = vmatpush1.bf16.msra.mxu0 %v6461
  %6527 = vmatprep.subr.bf16.mxu0 %v6466
  %6528 = vmatpush1.bf16.msra.mxu0 %v6465
  %6529 = vmatprep.subr.bf16.mxu0 %v6470
  %6530 = vmatpush1.bf16.msra.mxu0 %v6469
  %6531 = vmatprep.subr.bf16.mxu0 %v6474
  %6532 = vmatpush1.bf16.msra.mxu0 %v6473
  %6533 = vmatprep.subr.bf16.mxu0 %v6478
  %6534 = vmatpush1.bf16.msra.mxu0 %v6477
  %6535 = vmatprep.subr.bf16.mxu0 %v6482
  %6536 = vmatpush1.bf16.msra.mxu0 %v6481
  %6537 = vmatprep.subr.bf16.mxu0 %v6486
  %6538 = vmatpush1.bf16.msra.mxu0 %v6485
  %6539 = vmatprep.subr.bf16.mxu0 %v6490
  %6540 = vmatpush1.bf16.msra.mxu0 %v6489
  %6541 = vmatprep.subr.bf16.mxu0 0
  %6542 = vmatpush1.bf16.msra.mxu0 0
  %6543 = vmatprep.subr.bf16.mxu0 0
  %6544 = vmatpush1.bf16.msra.mxu0 0
  %6545 = vmatprep.subr.bf16.mxu0 0
  %6546 = vmatpush1.bf16.msra.mxu0 0
  %6547 = vmatprep.subr.bf16.mxu0 0
  %6548 = vmatpush1.bf16.msra.mxu0 0
  %6549 = vmatprep.subr.bf16.mxu0 0
  %6550 = vmatpush1.bf16.msra.mxu0 0
  %6551 = vmatprep.subr.bf16.mxu0 0
  %6552 = vmatpush1.bf16.msra.mxu0 0
  %6553 = vmatprep.subr.bf16.mxu0 0
  %6554 = vmatpush1.bf16.msra.mxu0 0
  %6555 = vmatprep.subr.bf16.mxu0 0
  %6556 = vmatpush1.bf16.msra.mxu0 0
  %6557 = vmatprep.mubr.bf16.mxu0 0
  %6558 = vmatmul.mubr.bf16.gmra.mrb[0].mxu0 %v6332
  %v6559 = vpop.f32.mrb[0].mxu0
  %v6560 = vadd.f32 0.0, %v6559
  %v6561 = vpop.f32.mrb[0].mxu0
  %v6562 = vadd.f32 0.0, %v6561
  %v6563 = vpop.f32.mrb[0].mxu0
  %v6564 = vadd.f32 0.0, %v6563
  %v6565 = vpop.f32.mrb[0].mxu0
  %v6566 = vadd.f32 0.0, %v6565
  %6567 = vdwg.mxu0
  %6568 = vmatprep.subr.bf16.mxu0 %v6464
  %6569 = vmatpush1.bf16.msra.mxu0 %v6463
  %6570 = vmatprep.subr.bf16.mxu0 %v6468
  %6571 = vmatpush1.bf16.msra.mxu0 %v6467
  %6572 = vmatprep.subr.bf16.mxu0 %v6472
  %6573 = vmatpush1.bf16.msra.mxu0 %v6471
  %6574 = vmatprep.subr.bf16.mxu0 %v6476
  %6575 = vmatpush1.bf16.msra.mxu0 %v6475
  %6576 = vmatprep.subr.bf16.mxu0 %v6480
  %6577 = vmatpush1.bf16.msra.mxu0 %v6479
  %6578 = vmatprep.subr.bf16.mxu0 %v6484
  %6579 = vmatpush1.bf16.msra.mxu0 %v6483
  %6580 = vmatprep.subr.bf16.mxu0 %v6488
  %6581 = vmatpush1.bf16.msra.mxu0 %v6487
  %6582 = vmatprep.subr.bf16.mxu0 %v6492
  %6583 = vmatpush1.bf16.msra.mxu0 %v6491
  %6584 = vmatprep.subr.bf16.mxu0 0
  %6585 = vmatpush1.bf16.msra.mxu0 0
  %6586 = vmatprep.subr.bf16.mxu0 0
  %6587 = vmatpush1.bf16.msra.mxu0 0
  %6588 = vmatprep.subr.bf16.mxu0 0
  %6589 = vmatpush1.bf16.msra.mxu0 0
  %6590 = vmatprep.subr.bf16.mxu0 0
  %6591 = vmatpush1.bf16.msra.mxu0 0
  %6592 = vmatprep.subr.bf16.mxu0 0
  %6593 = vmatpush1.bf16.msra.mxu0 0
  %6594 = vmatprep.subr.bf16.mxu0 0
  %6595 = vmatpush1.bf16.msra.mxu0 0
  %6596 = vmatprep.subr.bf16.mxu0 0
  %6597 = vmatpush1.bf16.msra.mxu0 0
  %6598 = vmatprep.subr.bf16.mxu0 0
  %6599 = vmatpush1.bf16.msra.mxu0 0
  %6600 = vmatprep.mubr.bf16.mxu0 0
  %6601 = vmatmul.mubr.bf16.gmra.mrb[0].mxu0 %v6332
  %v6602 = vpop.f32.mrb[0].mxu0
  %v6603 = vadd.f32 0.0, %v6602
  %v6604 = vpop.f32.mrb[0].mxu0
  %v6605 = vadd.f32 0.0, %v6604
  %v6606 = vpop.f32.mrb[0].mxu0
  %v6607 = vadd.f32 0.0, %v6606
  %v6608 = vpop.f32.mrb[0].mxu0
  %v6609 = vadd.f32 0.0, %v6608
  %6610 = vdwg.mxu0
  %v6611 = vadd.f32 %v6322, %v6560
  %v6612 = vadd.f32 %v6323, %v6562
  %v6613 = vadd.f32 %v6324, %v6603
  %v6614 = vadd.f32 %v6325, %v6605
  %v6615 = vadd.f32 %v6326, %v6564
  %v6616 = vadd.f32 %v6327, %v6566
  %v6617 = vadd.f32 %v6328, %v6607
  %v6618 = vadd.f32 %v6329, %v6609
  %v6619 = vld [vmem:[#allocation3] sm:$0xff]
  %v6620 = vld [vmem:[#allocation3 + $0x8] sm:$0xff]
  %v6621 = vxor.u32 %v6611, 2147483648
  %v6622 = vxor.u32 %v6615, 2147483648
  %v6623 = vmul.f32 %v6621, 1.442695
  %v6624 = vpow.pop %v6623
  %v6625 = vmul.f32 %v6622, 1.442695
  %v6626 = vpow.pop %v6625
  %v6627 = vadd.f32 %v6624, 1.0
  %v6628 = vadd.f32 %v6626, 1.0
  %v6629 = vrcp.pop %v6627
  %v6630 = vmul.f32 1.0, %v6629
  %v6631 = vrcp.pop %v6628
  %v6632 = vmul.f32 1.0, %v6631
  %v6633 = vxor.u32 %v6612, 2147483648
  %v6634 = vxor.u32 %v6616, 2147483648
  %v6635 = vmul.f32 %v6633, 1.442695
  %v6636 = vpow.pop %v6635
  %v6637 = vmul.f32 %v6634, 1.442695
  %v6638 = vpow.pop %v6637
  %v6639 = vadd.f32 %v6636, 1.0
  %v6640 = vadd.f32 %v6638, 1.0
  %v6641 = vrcp.pop %v6639
  %v6642 = vmul.f32 1.0, %v6641
  %v6643 = vrcp.pop %v6640
  %v6644 = vmul.f32 1.0, %v6643
  %v6645 = vtanh.pop %v6613
  %v6646 = vtanh.pop %v6617
  %v6647 = vxor.u32 %v6614, 2147483648
  %v6648 = vxor.u32 %v6618, 2147483648
  %v6649 = vmul.f32 %v6647, 1.442695
  %v6650 = vpow.pop %v6649
  %v6651 = vmul.f32 %v6648, 1.442695
  %v6652 = vpow.pop %v6651
  %v6653 = vadd.f32 %v6650, 1.0
  %v6654 = vadd.f32 %v6652, 1.0
  %v6655 = vrcp.pop %v6653
  %v6656 = vmul.f32 1.0, %v6655
  %v6657 = vrcp.pop %v6654
  %v6658 = vmul.f32 1.0, %v6657
  %v6659 = vmul.f32 %v6642, %v6619
  %v6660 = vmul.f32 %v6644, %v6620
  %v6661 = vmul.f32 %v6630, %v6645
  %v6662 = vmul.f32 %v6632, %v6646
  %v6663 = vadd.f32 %v6659, %v6661
  %v6664 = vadd.f32 %v6660, %v6662
  %v6665 = vtanh.pop %v6663
  %v6666 = vtanh.pop %v6664
  %v6667 = vmul.f32 %v6656, %v6665
  %v6668 = vmul.f32 %v6658, %v6666
  %6669 = vst [vmem:[#allocation2] sm:$0xff] %v6667
  %6670 = vst [vmem:[#allocation2 + $0x8] sm:$0xff] %v6668
  %6671 = vst [vmem:[#allocation3] sm:$0xff] %v6663
  %6672 = vst [vmem:[#allocation3 + $0x8] sm:$0xff] %v6664
  %v6673 = vpack.c.bf16 %v6668, %v6667
  %v6674 = vld [vmem:[%s408] sm:$0xff]
  %v6675 = vld [vmem:[%s408 + $0x8] sm:$0xff]
  %v6676 = vpack.c.bf16 %v6675, %v6674
  %v6677 = vld [vmem:[%s2] sm:$0xff]
  %v6678 = vld [vmem:[%s2 + $0x8] sm:$0xff]
  %v6679 = vld [vmem:[%s2 + $0x10] sm:$0xff]
  %v6680 = vld [vmem:[%s2 + $0x18] sm:$0xff]
  %v6681 = vld [vmem:[%s2 + $0x20] sm:$0xff]
  %v6682 = vld [vmem:[%s2 + $0x28] sm:$0xff]
  %v6683 = vld [vmem:[%s2 + $0x30] sm:$0xff]
  %v6684 = vld [vmem:[%s2 + $0x38] sm:$0xff]
  %v6685 = vld [vmem:[%s2 + $0x40] sm:$0xff]
  %v6686 = vld [vmem:[%s2 + $0x48] sm:$0xff]
  %v6687 = vld [vmem:[%s2 + $0x50] sm:$0xff]
  %v6688 = vld [vmem:[%s2 + $0x58] sm:$0xff]
  %v6689 = vld [vmem:[%s2 + $0x60] sm:$0xff]
  %v6690 = vld [vmem:[%s2 + $0x68] sm:$0xff]
  %v6691 = vld [vmem:[%s2 + $0x70] sm:$0xff]
  %v6692 = vld [vmem:[%s2 + $0x78] sm:$0xff]
  %v6693 = vld [vmem:[%s2 + $0x80] sm:$0xff]
  %v6694 = vld [vmem:[%s2 + $0x88] sm:$0xff]
  %v6695 = vld [vmem:[%s2 + $0x90] sm:$0xff]
  %v6696 = vld [vmem:[%s2 + $0x98] sm:$0xff]
  %v6697 = vld [vmem:[%s2 + $0xa0] sm:$0xff]
  %v6698 = vld [vmem:[%s2 + $0xa8] sm:$0xff]
  %v6699 = vld [vmem:[%s2 + $0xb0] sm:$0xff]
  %v6700 = vld [vmem:[%s2 + $0xb8] sm:$0xff]
  %v6701 = vld [vmem:[%s2 + $0xc0] sm:$0xff]
  %v6702 = vld [vmem:[%s2 + $0xc8] sm:$0xff]
  %v6703 = vld [vmem:[%s2 + $0xd0] sm:$0xff]
  %v6704 = vld [vmem:[%s2 + $0xd8] sm:$0xff]
  %v6705 = vld [vmem:[%s2 + $0xe0] sm:$0xff]
  %v6706 = vld [vmem:[%s2 + $0xe8] sm:$0xff]
  %v6707 = vld [vmem:[%s2 + $0xf0] sm:$0xff]
  %v6708 = vld [vmem:[%s2 + $0xf8] sm:$0xff]
  %v6709 = vld [vmem:[%s2 + $0x100] sm:$0xff]
  %v6710 = vld [vmem:[%s2 + $0x108] sm:$0xff]
  %v6711 = vld [vmem:[%s2 + $0x110] sm:$0xff]
  %v6712 = vld [vmem:[%s2 + $0x118] sm:$0xff]
  %v6713 = vld [vmem:[%s2 + $0x120] sm:$0xff]
  %v6714 = vld [vmem:[%s2 + $0x128] sm:$0xff]
  %v6715 = vld [vmem:[%s2 + $0x130] sm:$0xff]
  %v6716 = vld [vmem:[%s2 + $0x138] sm:$0xff]
  %v6717 = vld [vmem:[%s2 + $0x140] sm:$0xff]
  %v6718 = vld [vmem:[%s2 + $0x148] sm:$0xff]
  %v6719 = vld [vmem:[%s2 + $0x150] sm:$0xff]
  %v6720 = vld [vmem:[%s2 + $0x158] sm:$0xff]
  %v6721 = vld [vmem:[%s2 + $0x160] sm:$0xff]
  %v6722 = vld [vmem:[%s2 + $0x168] sm:$0xff]
  %v6723 = vld [vmem:[%s2 + $0x170] sm:$0xff]
  %v6724 = vld [vmem:[%s2 + $0x178] sm:$0xff]
  %v6725 = vld [vmem:[%s2 + $0x180] sm:$0xff]
  %v6726 = vld [vmem:[%s2 + $0x188] sm:$0xff]
  %v6727 = vld [vmem:[%s2 + $0x190] sm:$0xff]
  %v6728 = vld [vmem:[%s2 + $0x198] sm:$0xff]
  %v6729 = vld [vmem:[%s2 + $0x1a0] sm:$0xff]
  %v6730 = vld [vmem:[%s2 + $0x1a8] sm:$0xff]
  %v6731 = vld [vmem:[%s2 + $0x1b0] sm:$0xff]
  %v6732 = vld [vmem:[%s2 + $0x1b8] sm:$0xff]
  %v6733 = vld [vmem:[%s2 + $0x1c0] sm:$0xff]
  %v6734 = vld [vmem:[%s2 + $0x1c8] sm:$0xff]
  %v6735 = vld [vmem:[%s2 + $0x1d0] sm:$0xff]
  %v6736 = vld [vmem:[%s2 + $0x1d8] sm:$0xff]
  %v6737 = vld [vmem:[%s2 + $0x1e0] sm:$0xff]
  %v6738 = vld [vmem:[%s2 + $0x1e8] sm:$0xff]
  %v6739 = vld [vmem:[%s2 + $0x1f0] sm:$0xff]
  %v6740 = vld [vmem:[%s2 + $0x1f8] sm:$0xff]
  %v6805 = vunpack.c.l.b16 %v6677
  %v6806 = vunpack.c.h.b16 %v6677
  %v6807 = vunpack.c.l.b16 %v6678
  %v6808 = vunpack.c.h.b16 %v6678
  %v6809 = vunpack.c.l.b16 %v6679
  %v6810 = vunpack.c.h.b16 %v6679
  %v6811 = vunpack.c.l.b16 %v6680
  %v6812 = vunpack.c.h.b16 %v6680
  %v6813 = vunpack.c.l.b16 %v6681
  %v6814 = vunpack.c.h.b16 %v6681
  %v6815 = vunpack.c.l.b16 %v6682
  %v6816 = vunpack.c.h.b16 %v6682
  %v6817 = vunpack.c.l.b16 %v6683
  %v6818 = vunpack.c.h.b16 %v6683
  %v6819 = vunpack.c.l.b16 %v6684
  %v6820 = vunpack.c.h.b16 %v6684
  %v6821 = vunpack.c.l.b16 %v6685
  %v6822 = vunpack.c.h.b16 %v6685
  %v6823 = vunpack.c.l.b16 %v6686
  %v6824 = vunpack.c.h.b16 %v6686
  %v6825 = vunpack.c.l.b16 %v6687
  %v6826 = vunpack.c.h.b16 %v6687
  %v6827 = vunpack.c.l.b16 %v6688
  %v6828 = vunpack.c.h.b16 %v6688
  %v6829 = vunpack.c.l.b16 %v6689
  %v6830 = vunpack.c.h.b16 %v6689
  %v6831 = vunpack.c.l.b16 %v6690
  %v6832 = vunpack.c.h.b16 %v6690
  %v6833 = vunpack.c.l.b16 %v6691
  %v6834 = vunpack.c.h.b16 %v6691
  %v6835 = vunpack.c.l.b16 %v6692
  %v6836 = vunpack.c.h.b16 %v6692
  %v6837 = vunpack.c.l.b16 %v6693
  %v6838 = vunpack.c.h.b16 %v6693
  %v6839 = vunpack.c.l.b16 %v6694
  %v6840 = vunpack.c.h.b16 %v6694
  %v6841 = vunpack.c.l.b16 %v6695
  %v6842 = vunpack.c.h.b16 %v6695
  %v6843 = vunpack.c.l.b16 %v6696
  %v6844 = vunpack.c.h.b16 %v6696
  %v6845 = vunpack.c.l.b16 %v6697
  %v6846 = vunpack.c.h.b16 %v6697
  %v6847 = vunpack.c.l.b16 %v6698
  %v6848 = vunpack.c.h.b16 %v6698
  %v6849 = vunpack.c.l.b16 %v6699
  %v6850 = vunpack.c.h.b16 %v6699
  %v6851 = vunpack.c.l.b16 %v6700
  %v6852 = vunpack.c.h.b16 %v6700
  %v6853 = vunpack.c.l.b16 %v6701
  %v6854 = vunpack.c.h.b16 %v6701
  %v6855 = vunpack.c.l.b16 %v6702
  %v6856 = vunpack.c.h.b16 %v6702
  %v6857 = vunpack.c.l.b16 %v6703
  %v6858 = vunpack.c.h.b16 %v6703
  %v6859 = vunpack.c.l.b16 %v6704
  %v6860 = vunpack.c.h.b16 %v6704
  %v6861 = vunpack.c.l.b16 %v6705
  %v6862 = vunpack.c.h.b16 %v6705
  %v6863 = vunpack.c.l.b16 %v6706
  %v6864 = vunpack.c.h.b16 %v6706
  %v6865 = vunpack.c.l.b16 %v6707
  %v6866 = vunpack.c.h.b16 %v6707
  %v6867 = vunpack.c.l.b16 %v6708
  %v6868 = vunpack.c.h.b16 %v6708
  %v6869 = vunpack.c.l.b16 %v6709
  %v6870 = vunpack.c.h.b16 %v6709
  %v6871 = vunpack.c.l.b16 %v6710
  %v6872 = vunpack.c.h.b16 %v6710
  %v6873 = vunpack.c.l.b16 %v6711
  %v6874 = vunpack.c.h.b16 %v6711
  %v6875 = vunpack.c.l.b16 %v6712
  %v6876 = vunpack.c.h.b16 %v6712
  %v6877 = vunpack.c.l.b16 %v6713
  %v6878 = vunpack.c.h.b16 %v6713
  %v6879 = vunpack.c.l.b16 %v6714
  %v6880 = vunpack.c.h.b16 %v6714
  %v6881 = vunpack.c.l.b16 %v6715
  %v6882 = vunpack.c.h.b16 %v6715
  %v6883 = vunpack.c.l.b16 %v6716
  %v6884 = vunpack.c.h.b16 %v6716
  %v6885 = vunpack.c.l.b16 %v6717
  %v6886 = vunpack.c.h.b16 %v6717
  %v6887 = vunpack.c.l.b16 %v6718
  %v6888 = vunpack.c.h.b16 %v6718
  %v6889 = vunpack.c.l.b16 %v6719
  %v6890 = vunpack.c.h.b16 %v6719
  %v6891 = vunpack.c.l.b16 %v6720
  %v6892 = vunpack.c.h.b16 %v6720
  %v6893 = vunpack.c.l.b16 %v6721
  %v6894 = vunpack.c.h.b16 %v6721
  %v6895 = vunpack.c.l.b16 %v6722
  %v6896 = vunpack.c.h.b16 %v6722
  %v6897 = vunpack.c.l.b16 %v6723
  %v6898 = vunpack.c.h.b16 %v6723
  %v6899 = vunpack.c.l.b16 %v6724
  %v6900 = vunpack.c.h.b16 %v6724
  %v6901 = vunpack.c.l.b16 %v6725
  %v6902 = vunpack.c.h.b16 %v6725
  %v6903 = vunpack.c.l.b16 %v6726
  %v6904 = vunpack.c.h.b16 %v6726
  %v6905 = vunpack.c.l.b16 %v6727
  %v6906 = vunpack.c.h.b16 %v6727
  %v6907 = vunpack.c.l.b16 %v6728
  %v6908 = vunpack.c.h.b16 %v6728
  %v6909 = vunpack.c.l.b16 %v6729
  %v6910 = vunpack.c.h.b16 %v6729
  %v6911 = vunpack.c.l.b16 %v6730
  %v6912 = vunpack.c.h.b16 %v6730
  %v6913 = vunpack.c.l.b16 %v6731
  %v6914 = vunpack.c.h.b16 %v6731
  %v6915 = vunpack.c.l.b16 %v6732
  %v6916 = vunpack.c.h.b16 %v6732
  %v6917 = vunpack.c.l.b16 %v6733
  %v6918 = vunpack.c.h.b16 %v6733
  %v6919 = vunpack.c.l.b16 %v6734
  %v6920 = vunpack.c.h.b16 %v6734
  %v6921 = vunpack.c.l.b16 %v6735
  %v6922 = vunpack.c.h.b16 %v6735
  %v6923 = vunpack.c.l.b16 %v6736
  %v6924 = vunpack.c.h.b16 %v6736
  %v6925 = vunpack.c.l.b16 %v6737
  %v6926 = vunpack.c.h.b16 %v6737
  %v6927 = vunpack.c.l.b16 %v6738
  %v6928 = vunpack.c.h.b16 %v6738
  %v6929 = vunpack.c.l.b16 %v6739
  %v6930 = vunpack.c.h.b16 %v6739
  %v6931 = vunpack.c.l.b16 %v6740
  %v6932 = vunpack.c.h.b16 %v6740
  %v6933 = vpack.c.b16 %v6809, %v6805
  %v6934 = vpack.c.b16 %v6810, %v6806
  %v6935 = vpack.c.b16 %v6811, %v6807
  %v6936 = vpack.c.b16 %v6812, %v6808
  %v6937 = vpack.c.b16 %v6817, %v6813
  %v6938 = vpack.c.b16 %v6818, %v6814
  %v6939 = vpack.c.b16 %v6819, %v6815
  %v6940 = vpack.c.b16 %v6820, %v6816
  %v6941 = vpack.c.b16 %v6825, %v6821
  %v6942 = vpack.c.b16 %v6826, %v6822
  %v6943 = vpack.c.b16 %v6827, %v6823
  %v6944 = vpack.c.b16 %v6828, %v6824
  %v6945 = vpack.c.b16 %v6833, %v6829
  %v6946 = vpack.c.b16 %v6834, %v6830
  %v6947 = vpack.c.b16 %v6835, %v6831
  %v6948 = vpack.c.b16 %v6836, %v6832
  %v6949 = vpack.c.b16 %v6841, %v6837
  %v6950 = vpack.c.b16 %v6842, %v6838
  %v6951 = vpack.c.b16 %v6843, %v6839
  %v6952 = vpack.c.b16 %v6844, %v6840
  %v6953 = vpack.c.b16 %v6849, %v6845
  %v6954 = vpack.c.b16 %v6850, %v6846
  %v6955 = vpack.c.b16 %v6851, %v6847
  %v6956 = vpack.c.b16 %v6852, %v6848
  %v6957 = vpack.c.b16 %v6857, %v6853
  %v6958 = vpack.c.b16 %v6858, %v6854
  %v6959 = vpack.c.b16 %v6859, %v6855
  %v6960 = vpack.c.b16 %v6860, %v6856
  %v6961 = vpack.c.b16 %v6865, %v6861
  %v6962 = vpack.c.b16 %v6866, %v6862
  %v6963 = vpack.c.b16 %v6867, %v6863
  %v6964 = vpack.c.b16 %v6868, %v6864
  %v6965 = vpack.c.b16 %v6873, %v6869
  %v6966 = vpack.c.b16 %v6874, %v6870
  %v6967 = vpack.c.b16 %v6875, %v6871
  %v6968 = vpack.c.b16 %v6876, %v6872
  %v6969 = vpack.c.b16 %v6881, %v6877
  %v6970 = vpack.c.b16 %v6882, %v6878
  %v6971 = vpack.c.b16 %v6883, %v6879
  %v6972 = vpack.c.b16 %v6884, %v6880
  %v6973 = vpack.c.b16 %v6889, %v6885
  %v6974 = vpack.c.b16 %v6890, %v6886
  %v6975 = vpack.c.b16 %v6891, %v6887
  %v6976 = vpack.c.b16 %v6892, %v6888
  %v6977 = vpack.c.b16 %v6897, %v6893
  %v6978 = vpack.c.b16 %v6898, %v6894
  %v6979 = vpack.c.b16 %v6899, %v6895
  %v6980 = vpack.c.b16 %v6900, %v6896
  %v6981 = vpack.c.b16 %v6905, %v6901
  %v6982 = vpack.c.b16 %v6906, %v6902
  %v6983 = vpack.c.b16 %v6907, %v6903
  %v6984 = vpack.c.b16 %v6908, %v6904
  %v6985 = vpack.c.b16 %v6913, %v6909
  %v6986 = vpack.c.b16 %v6914, %v6910
  %v6987 = vpack.c.b16 %v6915, %v6911
  %v6988 = vpack.c.b16 %v6916, %v6912
  %v6989 = vpack.c.b16 %v6921, %v6917
  %v6990 = vpack.c.b16 %v6922, %v6918
  %v6991 = vpack.c.b16 %v6923, %v6919
  %v6992 = vpack.c.b16 %v6924, %v6920
  %v6993 = vpack.c.b16 %v6929, %v6925
  %v6994 = vpack.c.b16 %v6930, %v6926
  %v6995 = vpack.c.b16 %v6931, %v6927
  %v6996 = vpack.c.b16 %v6932, %v6928
  %7061 = vmatprep.subr.bf16.mxu0 %v6934
  %7062 = vmatpush1.bf16.msra.mxu0 %v6933
  %7063 = vmatprep.subr.bf16.mxu0 %v6938
  %7064 = vmatpush1.bf16.msra.mxu0 %v6937
  %7065 = vmatprep.subr.bf16.mxu0 %v6942
  %7066 = vmatpush1.bf16.msra.mxu0 %v6941
  %7067 = vmatprep.subr.bf16.mxu0 %v6946
  %7068 = vmatpush1.bf16.msra.mxu0 %v6945
  %7069 = vmatprep.subr.bf16.mxu0 %v6950
  %7070 = vmatpush1.bf16.msra.mxu0 %v6949
  %7071 = vmatprep.subr.bf16.mxu0 %v6954
  %7072 = vmatpush1.bf16.msra.mxu0 %v6953
  %7073 = vmatprep.subr.bf16.mxu0 %v6958
  %7074 = vmatpush1.bf16.msra.mxu0 %v6957
  %7075 = vmatprep.subr.bf16.mxu0 %v6962
  %7076 = vmatpush1.bf16.msra.mxu0 %v6961
  %7077 = vmatprep.subr.bf16.mxu0 %v6966
  %7078 = vmatpush1.bf16.msra.mxu0 %v6965
  %7079 = vmatprep.subr.bf16.mxu0 %v6970
  %7080 = vmatpush1.bf16.msra.mxu0 %v6969
  %7081 = vmatprep.subr.bf16.mxu0 %v6974
  %7082 = vmatpush1.bf16.msra.mxu0 %v6973
  %7083 = vmatprep.subr.bf16.mxu0 %v6978
  %7084 = vmatpush1.bf16.msra.mxu0 %v6977
  %7085 = vmatprep.subr.bf16.mxu0 %v6982
  %7086 = vmatpush1.bf16.msra.mxu0 %v6981
  %7087 = vmatprep.subr.bf16.mxu0 %v6986
  %7088 = vmatpush1.bf16.msra.mxu0 %v6985
  %7089 = vmatprep.subr.bf16.mxu0 %v6990
  %7090 = vmatpush1.bf16.msra.mxu0 %v6989
  %7091 = vmatprep.subr.bf16.mxu0 %v6994
  %7092 = vmatpush1.bf16.msra.mxu0 %v6993
  %7093 = vmatprep.mubr.bf16.mxu0 %v6676
  %7094 = vmatmul.mubr.bf16.gmra.mrb[0].mxu0 %v6673
  %v7095 = vpop.f32.mrb[0].mxu0
  %v7096 = vadd.f32 %v35, %v7095
  %v7097 = vpop.f32.mrb[0].mxu0
  %v7098 = vadd.f32 %v39, %v7097
  %v7099 = vpop.f32.mrb[0].mxu0
  %v7100 = vadd.f32 %v35, %v7099
  %v7101 = vpop.f32.mrb[0].mxu0
  %v7102 = vadd.f32 %v39, %v7101
  %7103 = vdwg.mxu0
  %7104 = vmatprep.subr.bf16.mxu0 %v6936
  %7105 = vmatpush1.bf16.msra.mxu0 %v6935
  %7106 = vmatprep.subr.bf16.mxu0 %v6940
  %7107 = vmatpush1.bf16.msra.mxu0 %v6939
  %7108 = vmatprep.subr.bf16.mxu0 %v6944
  %7109 = vmatpush1.bf16.msra.mxu0 %v6943
  %7110 = vmatprep.subr.bf16.mxu0 %v6948
  %7111 = vmatpush1.bf16.msra.mxu0 %v6947
  %7112 = vmatprep.subr.bf16.mxu0 %v6952
  %7113 = vmatpush1.bf16.msra.mxu0 %v6951
  %7114 = vmatprep.subr.bf16.mxu0 %v6956
  %7115 = vmatpush1.bf16.msra.mxu0 %v6955
  %7116 = vmatprep.subr.bf16.mxu0 %v6960
  %7117 = vmatpush1.bf16.msra.mxu0 %v6959
  %7118 = vmatprep.subr.bf16.mxu0 %v6964
  %7119 = vmatpush1.bf16.msra.mxu0 %v6963
  %7120 = vmatprep.subr.bf16.mxu0 %v6968
  %7121 = vmatpush1.bf16.msra.mxu0 %v6967
  %7122 = vmatprep.subr.bf16.mxu0 %v6972
  %7123 = vmatpush1.bf16.msra.mxu0 %v6971
  %7124 = vmatprep.subr.bf16.mxu0 %v6976
  %7125 = vmatpush1.bf16.msra.mxu0 %v6975
  %7126 = vmatprep.subr.bf16.mxu0 %v6980
  %7127 = vmatpush1.bf16.msra.mxu0 %v6979
  %7128 = vmatprep.subr.bf16.mxu0 %v6984
  %7129 = vmatpush1.bf16.msra.mxu0 %v6983
  %7130 = vmatprep.subr.bf16.mxu0 %v6988
  %7131 = vmatpush1.bf16.msra.mxu0 %v6987
  %7132 = vmatprep.subr.bf16.mxu0 %v6992
  %7133 = vmatpush1.bf16.msra.mxu0 %v6991
  %7134 = vmatprep.subr.bf16.mxu0 %v6996
  %7135 = vmatpush1.bf16.msra.mxu0 %v6995
  %7136 = vmatprep.mubr.bf16.mxu0 %v6676
  %7137 = vmatmul.mubr.bf16.gmra.mrb[0].mxu0 %v6673
  %v7138 = vpop.f32.mrb[0].mxu0
  %v7139 = vadd.f32 %v43, %v7138
  %v7140 = vpop.f32.mrb[0].mxu0
  %v7141 = vadd.f32 %v47, %v7140
  %v7142 = vpop.f32.mrb[0].mxu0
  %v7143 = vadd.f32 %v43, %v7142
  %v7144 = vpop.f32.mrb[0].mxu0
  %v7145 = vadd.f32 %v47, %v7144
  %7146 = vdwg.mxu0
  %v7147 = vld [vmem:[%s882] sm:$0xff]
  %v7148 = vld [vmem:[%s882 + $0x8] sm:$0xff]
  %v7149 = vxor.u32 %v7096, 2147483648
  %v7150 = vxor.u32 %v7100, 2147483648
  %v7151 = vmul.f32 %v7149, 1.442695
  %v7152 = vpow.pop %v7151
  %v7153 = vmul.f32 %v7150, 1.442695
  %v7154 = vpow.pop %v7153
  %v7155 = vadd.f32 %v7152, 1.0
  %v7156 = vadd.f32 %v7154, 1.0
  %v7157 = vrcp.pop %v7155
  %v7158 = vmul.f32 1.0, %v7157
  %v7159 = vrcp.pop %v7156
  %v7160 = vmul.f32 1.0, %v7159
  %v7161 = vxor.u32 %v7098, 2147483648
  %v7162 = vxor.u32 %v7102, 2147483648
  %v7163 = vmul.f32 %v7161, 1.442695
  %v7164 = vpow.pop %v7163
  %v7165 = vmul.f32 %v7162, 1.442695
  %v7166 = vpow.pop %v7165
  %v7167 = vadd.f32 %v7164, 1.0
  %v7168 = vadd.f32 %v7166, 1.0
  %v7169 = vrcp.pop %v7167
  %v7170 = vmul.f32 1.0, %v7169
  %v7171 = vrcp.pop %v7168
  %v7172 = vmul.f32 1.0, %v7171
  %v7173 = vtanh.pop %v7139
  %v7174 = vtanh.pop %v7143
  %v7175 = vxor.u32 %v7141, 2147483648
  %v7176 = vxor.u32 %v7145, 2147483648
  %v7177 = vmul.f32 %v7175, 1.442695
  %v7178 = vpow.pop %v7177
  %v7179 = vmul.f32 %v7176, 1.442695
  %v7180 = vpow.pop %v7179
  %v7181 = vadd.f32 %v7178, 1.0
  %v7182 = vadd.f32 %v7180, 1.0
  %v7183 = vrcp.pop %v7181
  %v7184 = vmul.f32 1.0, %v7183
  %v7185 = vrcp.pop %v7182
  %v7186 = vmul.f32 1.0, %v7185
  %v7187 = vmul.f32 %v7170, %v7147
  %v7188 = vmul.f32 %v7172, %v7148
  %v7189 = vmul.f32 %v7158, %v7173
  %v7190 = vmul.f32 %v7160, %v7174
  %v7191 = vadd.f32 %v7187, %v7189
  %v7192 = vadd.f32 %v7188, %v7190
  %v7193 = vtanh.pop %v7191
  %v7194 = vtanh.pop %v7192
  %v7195 = vmul.f32 %v7184, %v7193
  %v7196 = vmul.f32 %v7186, %v7194
  %7197 = vst [vmem:[%s408] sm:$0xff] %v7195
  %7198 = vst [vmem:[%s408 + $0x8] sm:$0xff] %v7196
  %7199 = vst [vmem:[%s882] sm:$0xff] %v7191
  %7200 = vst [vmem:[%s882 + $0x8] sm:$0xff] %v7192
  %v7201 = vpack.c.bf16 %v7196, %v7195
  %v7203 = vunpack.c.l.b16 %v7201
  %v7204 = vunpack.c.h.b16 %v7201
  %v7205 = vpack.c.b16 %v7203, %v7203
  %v7206 = vpack.c.b16 %v7204, %v7204
  %s7209 = scalar_lea.vmem %s4, 56
  %7210 = vst [vmem:[%s7209] sm:$0xf] %v7205
  %7211 = vst [vmem:[%s7209 + $0x4] sm:$0xf] %v7206
  // Predicated region
  $region22: #{decoder_rnn_forward.2} parent=0 // pred_check
    _
  $region23: #{decoder_rnn_forward.2} parent=0 // pred_check_branch
    %7213 = sbr.rel (0) target = $region25
  $region24: #{decoder_rnn_forward.2} parent=0 // pred_region
    _
  $region25: #{decoder_rnn_forward.2} parent=0 // pred_fallthru
    _
  // Predicated region
  $region26: #{decoder_rnn_forward.2} parent=0 // pred_check
    _
  $region27: #{decoder_rnn_forward.2} parent=0 // pred_check_branch
    %7215 = sbr.rel (0) target = $region29
  $region28: #{decoder_rnn_forward.2} parent=0 // pred_region
    _
  $region29: #{decoder_rnn_forward.2} parent=0 // pred_fallthru
    _

</llo_original>
